<compile_context>
chip_gen: v7x
topology: tpu7x:2x2x1
jax: 0.10.0
libtpu: 0.0.40
codegen_flags: <defaults>
</compile_context>

<pallas_src>
import numpy as np
import jax
import jax.numpy as jnp
from jax.experimental import pallas as pl
from jax.experimental.pallas import tpu as pltpu

# ---------------- GHMC parameters (bins=30, momentum=0.75, loss_weight=1.0) -------------
GHMC_BINS = 30
GHMC_MMT = 0.75
GHMC_LOSS_WEIGHT = 1.0
_ec = np.arange(GHMC_BINS + 1, dtype=np.float32) / np.float32(GHMC_BINS)
_ec[-1] = _ec[-1] + np.float32(1e-6)
GHMC_EDGES = [float(v) for v in _ec]

# ---------------- GHMR parameters (mu=0.02, bins=10, momentum=0.7, loss_weight=1.0) -----
GHMR_BINS = 10
GHMR_MMT = 0.7
GHMR_MU = 0.02
GHMR_LOSS_WEIGHT = 1.0
_er = np.arange(GHMR_BINS + 1, dtype=np.float32) / np.float32(GHMR_BINS)
_er[-1] = np.float32(1000.0)
GHMR_EDGES = [float(v) for v in _er]

_MAX_A_TILE = 2048  # lanes per anchor tile once A gets large (v7x-safe VMEM footprint)


# =========================================================================================
# Kernel factory: closes over static shapes so the padded-lane handling costs nothing when
# there is no padding (the small-shape test path).
# =========================================================================================
def _make_kernel(A, A_PAD, A_TILE, C, N):
    padded = (A_PAD != A)
    tot_c = float(A * C)          # label weights are statically all-ones (pads excluded)
    tot_r = float(A * 4)
    s0_c = float(C * A_PAD)       # static prefix sum at edge 0 (g >= 0 always; pads included)
    s0_r = float(4 * A_PAD)

    def kernel(acc_c_in, acc_r_in,                        # scalar-prefetch SMEM inputs
               anc_ref, ann_ref, cls_ref, reg_ref,        # VMEM inputs
               cls_loss_ref, reg_loss_ref, acc_c_out, acc_r_out,   # SMEM resident outputs
               cnt_c, cnt_r, wgt_c, wgt_r, msc, dif_ref):          # scratch
        b = pl.program_id(0)
        p = pl.program_id(1)      # 0 = count phase, 1 = apply phase
        t = pl.program_id(2)      # anchor tile

        @pl.when(jnp.logical_and(jnp.logical_and(b == 0, p == 0), t == 0))
        def _init():
            cls_loss_ref[0] = jnp.float32(0.0)
            reg_loss_ref[0] = jnp.float32(0.0)
            for i in range(GHMC_BINS):
                acc_c_out[i] = acc_c_in[i]
            for i in range(GHMR_BINS):
                acc_r_out[i] = acc_r_in[i]

        # ------------------- shared per-tile compute (both phases) -------------------
        anc = anc_ref[...]                                 # [8, At]: y1,x1,y2,x2,w,h,cx,cy
        ann = ann_ref[0]                                   # [N, 5]:  x1,y1,x2,y2,cls
        pred = jnp.clip(cls_ref[0], 1e-4, 1.0 - 1e-4)      # [C, At]
        reg = reg_ref[0]                                   # [4, At]

        ay1, ax1, ay2, ax2 = anc[0:1], anc[1:2], anc[2:3], anc[3:4]
        aw, ah, acx, acy = anc[4:5], anc[5:6], anc[6:7], anc[7:8]

        bx1, by1, bx2, by2, bcls = (ann[:, 0:1], ann[:, 1:2], ann[:, 2:3],
                                    ann[:, 3:4], ann[:, 4:5])                  # [N,1]
        gt_valid = bcls != -1.0
        has_gt = jnp.sum(gt_valid.astype(jnp.float32)) > 0.0

        if padded:
            glane = jax.lax.broadcasted_iota(jnp.int32, (1, A_TILE), 1) + t * A_TILE
            lane_valid = glane < A                                             # [1, At]

        # ---- IoU + first-occurrence argmax (lane-dense [N, At], never leaves VMEM) ----
        area_b = (bx2 - bx1) * (by2 - by1)
        iw = jnp.maximum(jnp.minimum(ax2, bx2) - jnp.maximum(ax1, bx1), 0.0)
        ih = jnp.maximum(jnp.minimum(ay2, by2) - jnp.maximum(ay1, by1), 0.0)
        inter = iw * ih
        ua = jnp.maximum(aw * ah + area_b - inter, 1e-8)
        iou = jnp.where(gt_valid, inter / ua, -1.0)                            # [N, At]
        iou_max = jnp.max(iou, axis=0, keepdims=True)                          # [1, At]
        gt_idx = jax.lax.broadcasted_iota(jnp.int32, (N, A_TILE), 0).astype(jnp.float32)
        argmax = jnp.min(jnp.where(iou == iou_max, gt_idx, float(N)),
                         axis=0, keepdims=True)
        sel = (gt_idx == argmax).astype(jnp.float32)                           # one-hot [N, At]

        # gather assigned gt columns (masked sublane sums; N is tiny)
        # TODO(synk): for realistic N (10s-100s of gt) do this as one MXU dot(ann^T, sel).
        g_x1 = jnp.sum(sel * bx1, axis=0, keepdims=True)
        g_y1 = jnp.sum(sel * by1, axis=0, keepdims=True)
        g_x2 = jnp.sum(sel * bx2, axis=0, keepdims=True)
        g_y2 = jnp.sum(sel * by2, axis=0, keepdims=True)
        g_cls = jnp.sum(sel * bcls, axis=0, keepdims=True)                     # [1, At]

        positive = iou_max >= 0.5
        negative = iou_max < 0.4

        # ---------------- GHM-C gradient norm ----------------
        cls_iota = jax.lax.broadcasted_iota(jnp.int32, (C, A_TILE), 0)
        onehot = cls_iota == g_cls.astype(jnp.int32)
        target = jnp.where(jnp.logical_and(positive, onehot), 1.0,
                           jnp.where(jnp.logical_or(positive, negative), 0.0, -1.0))
        e = jnp.exp(-jnp.abs(pred))                  # shared by sigmoid and the BCE log-term
        inv1pe = 1.0 / (1.0 + e)
        sig = jnp.where(pred >= 0.0, inv1pe, e * inv1pe)
        g_c = jnp.abs(sig - target)
        if padded:                                   # pads land past the last edge: they cancel
            g_c = jnp.where(lane_valid, g_c, 2.0)    # in counts and get weight 0 in phase 1

        # ---------------- GHM-R gradient norm (diff rows written into VMEM scratch) ----
        gw = g_x2 - g_x1
        gh = g_y2 - g_y1
        gcx = g_x1 + 0.5 * gw                        # centers use unclamped sizes
        gcy = g_y1 + 0.5 * gh
        gw = jnp.maximum(gw, 1.0)
        gh = jnp.maximum(gh, 1.0)
        dif_ref[0:1, :] = reg[0:1] - ((gcy - acy) / ah) * 10.0   # dy / 0.1
        dif_ref[1:2, :] = reg[1:2] - ((gcx - acx) / aw) * 10.0   # dx / 0.1
        dif_ref[2:3, :] = reg[2:3] - jnp.log(gh / ah) * 5.0      # dh / 0.2
        dif_ref[3:4, :] = reg[3:4] - jnp.log(gw / aw) * 5.0      # dw / 0.2
        diff = dif_ref[...]                                      # [4, At]
        r2 = diff * diff + GHMR_MU * GHMR_MU
        inv_rad = jax.lax.rsqrt(r2)
        g_r = jnp.abs(diff) * inv_rad
        if padded:
            g_r = jnp.where(lane_valid, g_r, 1.0e9)

        # ------------------------- phase 0: prefix counts -------------------------
        @pl.when(p == 0)
        def _count_phase():
            @pl.when(t == 0)
            def _zero():
                for i in range(1, GHMC_BINS + 1):
                    cnt_c[i] = jnp.float32(0.0)
                for i in range(1, GHMR_BINS + 1):
                    cnt_r[i] = jnp.float32(0.0)
                msc[0] = jnp.float32(0.0)

            pos_f = positive.astype(jnp.float32)
            if padded:
                pos_f = jnp.where(lane_valid, pos_f, 0.0)
            msc[0] = msc[0] + jnp.sum(pos_f)

            # prefix counts S_i = #(g >= edge_i); S_0 is a static constant.
            for i in range(1, GHMC_BINS + 1):
                cnt_c[i] = cnt_c[i] + jnp.sum((g_c >= GHMC_EDGES[i]).astype(jnp.float32))
            for i in range(1, GHMR_BINS + 1):
                cnt_r[i] = cnt_r[i] + jnp.sum((g_r >= GHMR_EDGES[i]).astype(jnp.float32))

            # tile-phase boundary: momentum update + per-bin (un-normalized) weights
            @pl.when(t == pl.num_programs(2) - 1)
            def _acc_update():
                active_c = has_gt
                active_r = jnp.logical_and(has_gt, msc[0] > 0.0)

                n_c = jnp.float32(0.0)
                s_prev = jnp.float32(s0_c)
                for i in range(GHMC_BINS):
                    s_next = cnt_c[i + 1]
                    num = s_prev - s_next
                    has = num > 0.0
                    acc_old = acc_c_out[i]
                    acc_new = jnp.where(jnp.logical_and(has, active_c),
                                        GHMC_MMT * acc_old + (1.0 - GHMC_MMT) * num,
                                        acc_old)
                    acc_c_out[i] = acc_new
                    safe = jnp.maximum(jnp.where(has, acc_new, 1.0), 1e-12)
                    wgt_c[i] = jnp.where(has, tot_c / safe, 0.0)
                    n_c = n_c + has.astype(jnp.float32)
                    s_prev = s_next
                msc[1] = n_c

                n_r = jnp.float32(0.0)
                s_prev = jnp.float32(s0_r)
                for i in range(GHMR_BINS):
                    s_next = cnt_r[i + 1]
                    num = s_prev - s_next
                    has = num > 0.0
                    acc_old = acc_r_out[i]
                    acc_new = jnp.where(jnp.logical_and(has, active_r),
                                        GHMR_MMT * acc_old + (1.0 - GHMR_MMT) * num,
                                        acc_old)
                    acc_r_out[i] = acc_new
                    safe = jnp.maximum(jnp.where(has, acc_new, 1.0), 1e-12)
                    wgt_r[i] = jnp.where(has, tot_r / safe, 0.0)
                    n_r = n_r + has.astype(jnp.float32)
                    s_prev = s_next
                msc[2] = n_r

        # -------------------- phase 1: step-delta weights + loss --------------------
        @pl.when(p == 1)
        def _apply_phase():
            # GHM-C: only g_c, bce and the running weights stay live through the 30-bin loop
            bce = jnp.maximum(pred, 0.0) - pred * target + jnp.log(1.0 + e)
            w_c = jnp.broadcast_to(wgt_c[0], g_c.shape)          # edge 0 == 0 <= g always
            prev = wgt_c[0]
            for i in range(1, GHMC_BINS + 1):                    # final term (-w_last) zeroes
                cur = wgt_c[i] if i < GHMC_BINS else jnp.float32(0.0)   # g past the last edge
                w_c = w_c + jnp.where(g_c >= GHMC_EDGES[i], cur - prev, 0.0)
                prev = cur
            cls_scale = GHMC_LOSS_WEIGHT / tot_c / jnp.maximum(msc[1], 1.0)
            cls_loss_ref[0] = cls_loss_ref[0] + jnp.where(
                has_gt, jnp.sum(bce * w_c) * cls_scale, 0.0)

            # GHM-R
            rad = r2 * inv_rad
            w_r = jnp.broadcast_to(wgt_r[0], g_r.shape)
            prev = wgt_r[0]
            for i in range(1, GHMR_BINS + 1):
                cur = wgt_r[i] if i < GHMR_BINS else jnp.float32(0.0)
                w_r = w_r + jnp.where(g_r >= GHMR_EDGES[i], cur - prev, 0.0)
                prev = cur
            active_r = jnp.logical_and(has_gt, msc[0] > 0.0)
            reg_scale = GHMR_LOSS_WEIGHT / tot_r / jnp.maximum(msc[2], 1.0)
            reg_loss_ref[0] = reg_loss_ref[0] + jnp.where(
                active_r, jnp.sum((rad - GHMR_MU) * w_r) * reg_scale, 0.0)

    return kernel


# =========================================================================================
# Wrapper: lane-dense layouts, anchor hoisting, tiling/padding, pallas_call.
# =========================================================================================
@jax.jit
def ghm_loss_forward(classifications, regressions, anchors, annotations, acc_c, acc_r):
    B, A, C = classifications.shape
    N = annotations.shape[1]

    # Lane-dense layouts: the big anchor axis goes to the 128-lane (last) dimension.
    cls_t = jnp.swapaxes(classifications.astype(jnp.float32), 1, 2)      # [B, C, A]
    reg_t = jnp.swapaxes(regressions.astype(jnp.float32), 1, 2)          # [B, 4, A]
    ann = annotations.astype(jnp.float32)                                 # [B, N, 5]

    # Hoist anchor-derived quantities out of the kernel: [8, A] rows y1,x1,y2,x2,w,h,cx,cy.
    anchor = anchors[0].astype(jnp.float32)                               # [A, 4]
    ay1, ax1, ay2, ax2 = anchor[:, 0], anchor[:, 1], anchor[:, 2], anchor[:, 3]
    aw = ax2 - ax1
    ah = ay2 - ay1
    anc_rows = jnp.stack([ay1, ax1, ay2, ax2, aw, ah,
                          ax1 + 0.5 * aw, ay1 + 0.5 * ah], axis=0)        # [8, A]

    # Anchor tiling: single tile for small A, 128-lane aligned tiles (with padding) otherwise.
    if A <= _MAX_A_TILE:
        a_tile, a_pad = A, A
    else:
        a_tile = _MAX_A_TILE
        a_pad = ((A + a_tile - 1) // a_tile) * a_tile
    if a_pad != A:
        padn = a_pad - A
        pad_rows = jnp.tile(jnp.array([[0.0], [0.0], [1.0], [1.0],
                                       [1.0], [1.0], [0.5], [0.5]], jnp.float32), (1, padn))
        anc_rows = jnp.concatenate([anc_rows, pad_rows], axis=1)
        cls_t = jnp.pad(cls_t, ((0, 0), (0, 0), (0, padn)), constant_values=0.5)
        reg_t = jnp.pad(reg_t, ((0, 0), (0, 0), (0, padn)))
    n_tiles = a_pad // a_tile

    kernel = _make_kernel(A, a_pad, a_tile, C, N)
    grid_spec = pltpu.PrefetchScalarGridSpec(
        num_scalar_prefetch=2,                           # acc_c, acc_r -> SMEM
        grid=(B, 2, n_tiles),                            # (batch, phase{count,apply}, tile)
        in_specs=[
            pl.BlockSpec((8, a_tile), lambda b, p, t, *_: (0, t)),        # anchor rows
            pl.BlockSpec((1, N, 5), lambda b, p, t, *_: (b, 0, 0)),       # annotations
            pl.BlockSpec((1, C, a_tile), lambda b, p, t, *_: (b, 0, t)),  # classifications^T
            pl.BlockSpec((1, 4, a_tile), lambda b, p, t, *_: (b, 0, t)),  # regressions^T
        ],
        out_specs=(
            pl.BlockSpec(memory_space=pltpu.MemorySpace.SMEM),   # cls loss sum (resident)
            pl.BlockSpec(memory_space=pltpu.MemorySpace.SMEM),   # reg loss sum (resident)
            pl.BlockSpec(memory_space=pltpu.MemorySpace.SMEM),   # GHMC acc_sum (resident)
            pl.BlockSpec(memory_space=pltpu.MemorySpace.SMEM),   # GHMR acc_sum (resident)
        ),
        scratch_shapes=[
            pltpu.SMEM((GHMC_BINS + 1,), jnp.float32),   # GHMC prefix counts
            pltpu.SMEM((GHMR_BINS + 1,), jnp.float32),   # GHMR prefix counts
            pltpu.SMEM((GHMC_BINS,), jnp.float32),       # GHMC per-bin un-normalized weights
            pltpu.SMEM((GHMR_BINS,), jnp.float32),       # GHMR per-bin un-normalized weights
            pltpu.SMEM((4,), jnp.float32),               # [num_pos, n_c, n_r, unused]
            pltpu.VMEM((4, a_tile), jnp.float32),        # regression diff rows
        ],
    )
    cls_sum, reg_sum, acc_c_new, acc_r_new = pl.pallas_call(
        kernel,
        grid_spec=grid_spec,
        out_shape=(jax.ShapeDtypeStruct((1,), jnp.float32),
                   jax.ShapeDtypeStruct((1,), jnp.float32),
                   jax.ShapeDtypeStruct((GHMC_BINS,), jnp.float32),
                   jax.ShapeDtypeStruct((GHMR_BINS,), jnp.float32)),
        compiler_params=pltpu.CompilerParams(
            # batch carries the acc_sum momentum; phase/tile carry SMEM partials -> sequential.
            # TODO(synk): make the counting phase core-parallel on v7x (per-core partials).
            dimension_semantics=("arbitrary", "arbitrary", "arbitrary")),
    )(acc_c, acc_r, anc_rows, ann, cls_t, reg_t)
    return cls_sum / B, reg_sum / B, acc_c_new, acc_r_new


class GHMLossJAX:
    """Stateful wrapper mirroring the PyTorch module's acc_sum buffers."""

    def __init__(self):
        self.ghmc_acc_sum = jnp.zeros((GHMC_BINS,), jnp.float32)
        self.ghmr_acc_sum = jnp.zeros((GHMR_BINS,), jnp.float32)

    def __call__(self, classifications, regressions, anchors, annotations):
        cls_loss, reg_loss, acc_c, acc_r = ghm_loss_forward(
            classifications, regressions, anchors, annotations,
            self.ghmc_acc_sum, self.ghmr_acc_sum)
        self.ghmc_acc_sum = acc_c
        self.ghmr_acc_sum = acc_r
        return cls_loss, reg_loss


# =========================================================================================
# Pure-numpy reference (mirrors the PyTorch module) for a correctness check in main.
# =========================================================================================
def _reference_forward_numpy(classifications, regressions, anchors, annotations):
    cls_np = np.asarray(classifications, np.float32)
    reg_np = np.asarray(regressions, np.float32)
    anc_np = np.asarray(anchors, np.float32)
    ann_np = np.asarray(annotations, np.float32)
    acc_c = np.zeros((GHMC_BINS,), np.float32)
    acc_r = np.zeros((GHMR_BINS,), np.float32)

    def ghmc(pred, target, label_weight, acc):
        g = np.abs(1.0 / (1.0 + np.exp(-pred)) - target)
        valid = label_weight > 0
        tot = max(float(valid.sum()), 1.0)
        weights = np.zeros_like(pred)
        n = 0
        for i in range(GHMC_BINS):
            inds = (g >= GHMC_EDGES[i]) & (g < GHMC_EDGES[i + 1]) & valid
            num = float(inds.sum())
            if num > 0:
                acc[i] = GHMC_MMT * acc[i] + (1.0 - GHMC_MMT) * num
                weights[inds] = tot / acc[i]
                n += 1
        if n > 0:
            weights = weights / n
        bce = np.maximum(pred, 0.0) - pred * target + np.log1p(np.exp(-np.abs(pred)))
        return float((bce * weights).sum() / tot) * GHMC_LOSS_WEIGHT

    def ghmr(pred, target, label_weight, acc):
        diff = pred - target
        rad = np.sqrt(diff * diff + GHMR_MU * GHMR_MU)
        loss = rad - GHMR_MU
        g = np.abs(diff / rad)
        valid = label_weight > 0
        tot = max(float(label_weight.sum()), 1.0)
        weights = np.zeros_like(g)
        n = 0
        for i in range(GHMR_BINS):
            inds = (g >= GHMR_EDGES[i]) & (g < GHMR_EDGES[i + 1]) & valid
            num = float(inds.sum())
            if num > 0:
                n += 1
                acc[i] = GHMR_MMT * acc[i] + (1.0 - GHMR_MMT) * num
                weights[inds] = tot / acc[i]
        if n > 0:
            weights = weights / n
        return float((loss * weights).sum() / tot) * GHMR_LOSS_WEIGHT

    anchor = anc_np[0]
    aw = anchor[:, 3] - anchor[:, 1]
    ah = anchor[:, 2] - anchor[:, 0]
    acx = anchor[:, 1] + 0.5 * aw
    acy = anchor[:, 0] + 0.5 * ah
    cls_losses, reg_losses = [], []
    for j in range(cls_np.shape[0]):
        ann = ann_np[j]
        ann = ann[ann[:, 4] != -1]
        if ann.shape[0] == 0:
            cls_losses.append(0.0)
            reg_losses.append(0.0)
            continue
        pred = np.clip(cls_np[j], 1e-4, 1.0 - 1e-4)
        area_b = (ann[:, 2] - ann[:, 0]) * (ann[:, 3] - ann[:, 1])
        iw = np.minimum(anchor[:, 3:4], ann[:, 2]) - np.maximum(anchor[:, 1:2], ann[:, 0])
        ih = np.minimum(anchor[:, 2:3], ann[:, 3]) - np.maximum(anchor[:, 0:1], ann[:, 1])
        iw = np.clip(iw, 0.0, None)
        ih = np.clip(ih, 0.0, None)
        ua = np.maximum((anchor[:, 3:4] - anchor[:, 1:2]) * (anchor[:, 2:3] - anchor[:, 0:1])
                        + area_b - iw * ih, 1e-8)
        iou = iw * ih / ua
        iou_max = iou.max(axis=1)
        iou_argmax = iou.argmax(axis=1)
        targets = -np.ones_like(pred)
        targets[iou_max < 0.4, :] = 0.0
        positive = iou_max >= 0.5
        assigned = ann[iou_argmax]
        targets[positive, :] = 0.0
        targets[positive, assigned[positive, 4].astype(np.int64)] = 1.0
        cls_losses.append(ghmc(pred, targets, np.ones_like(pred), acc_c))
        if positive.sum() > 0:
            asg = assigned[positive]
            gw = asg[:, 2] - asg[:, 0]
            gh = asg[:, 3] - asg[:, 1]
            gcx = asg[:, 0] + 0.5 * gw
            gcy = asg[:, 1] + 0.5 * gh
            gw = np.maximum(gw, 1.0)
            gh = np.maximum(gh, 1.0)
            tdx = (gcx - acx[positive]) / aw[positive]
            tdy = (gcy - acy[positive]) / ah[positive]
            tdw = np.log(gw / aw[positive])
            tdh = np.log(gh / ah[positive])
            treg = np.stack([tdy, tdx, tdh, tdw], axis=1) / np.array([[0.1, 0.1, 0.2, 0.2]],
                                                                     np.float32)
            reg_losses.append(ghmr(reg_np[j], treg,
                                   np.ones((anchor.shape[0], 4), np.float32), acc_r))
        else:
            reg_losses.append(0.0)
    return float(np.mean(cls_losses)), float(np.mean(reg_losses))


# =========================================================================================
if __name__ == "__main__":
    key = jax.random.PRNGKey(0)
    B, A, C, N = 2, 32, 8, 4

    # gt boxes [x1, y1, x2, y2]
    base = np.array([[2.0, 2.0, 14.0, 14.0],
                     [20.0, 20.0, 34.0, 34.0]], dtype=np.float32)

    # Anchors: jittered copies of the gt boxes (guarantees IoU >= 0.5 for every anchor),
    # converted to [y1, x1, y2, x2].
    gt_xyxy = np.tile(base, (A // 2, 1))                            # [A, 4]
    k1, k2, k3 = jax.random.split(key, 3)
    jitter = jax.random.uniform(k1, (A, 4), minval=-0.5, maxval=0.5, dtype=jnp.float32)
    anchor_xyxy = jnp.asarray(gt_xyxy) + jitter
    anchor = jnp.stack([anchor_xyxy[:, 1], anchor_xyxy[:, 0],
                        anchor_xyxy[:, 3], anchor_xyxy[:, 2]], axis=1)
    anchors = anchor[None]                                          # [1, A, 4]

    pad = np.array([0.0, 0.0, 0.0, 0.0, -1.0], np.float32)
    ann0 = np.stack([np.concatenate([base[0], [1.0]]),
                     np.concatenate([base[1], [3.0]]), pad, pad])
    ann1 = np.stack([np.concatenate([base[0], [2.0]]),
                     np.concatenate([base[1], [6.0]]), pad, pad])
    annotations = jnp.asarray(np.stack([ann0, ann1]).astype(np.float32))   # [B, N, 5]

    classifications = jax.random.uniform(k2, (B, A, C), minval=0.05, maxval=0.95,
                                         dtype=jnp.float32)
    regressions = jax.random.normal(k3, (B, A, 4), dtype=jnp.float32) * 0.1

    loss_fn = GHMLossJAX()
    cls_loss, reg_loss = loss_fn(classifications, regressions, anchors, annotations)
    jax.block_until_ready((cls_loss, reg_loss))

    assert cls_loss.shape == (1,) and reg_loss.shape == (1,)
    assert bool(jnp.isfinite(cls_loss).all()) and bool(jnp.isfinite(reg_loss).all())

    ref_cls, ref_reg = _reference_forward_numpy(classifications, regressions,
                                                anchors, annotations)
    assert np.allclose(float(cls_loss[0]), ref_cls, rtol=1e-3, atol=1e-4), \
        (float(cls_loss[0]), ref_cls)
    assert np.allclose(float(reg_loss[0]), ref_reg, rtol=1e-3, atol=1e-4), \
        (float(reg_loss[0]), ref_reg)

    print("KERNEL_OK")
</pallas_src>

<mosaic_0001>
module attributes {stable_mosaic.version = 11 : i64} {
  func.func @kernel(%arg0: i32, %arg1: i32, %arg2: i32, %arg3: memref<30xf32, #tpu.memory_space<smem>>, %arg4: memref<10xf32, #tpu.memory_space<smem>>, %arg5: memref<8x32xf32, #tpu.memory_space<vmem>>, %arg6: memref<1x4x5xf32, #tpu.memory_space<vmem>>, %arg7: memref<1x8x32xf32, #tpu.memory_space<vmem>>, %arg8: memref<1x4x32xf32, #tpu.memory_space<vmem>>, %arg9: memref<1xf32, #tpu.memory_space<smem>>, %arg10: memref<1xf32, #tpu.memory_space<smem>>, %arg11: memref<30xf32, #tpu.memory_space<smem>>, %arg12: memref<10xf32, #tpu.memory_space<smem>>, %arg13: memref<31xf32, #tpu.memory_space<smem>>, %arg14: memref<11xf32, #tpu.memory_space<smem>>, %arg15: memref<30xf32, #tpu.memory_space<smem>>, %arg16: memref<10xf32, #tpu.memory_space<smem>>, %arg17: memref<4xf32, #tpu.memory_space<smem>>, %arg18: memref<4x32xf32, #tpu.memory_space<vmem>>) attributes {dimension_semantics = [#tpu.dimension_semantics<arbitrary>, #tpu.dimension_semantics<arbitrary>, #tpu.dimension_semantics<arbitrary>], iteration_bounds = array<i64: 2, 2, 1>, scalar_prefetch = 2 : i64, scratch_operands = 6 : i64, tpu.core_type = #tpu.core_type<tc>, window_params = [{transform_indices = @transform_0, window_bounds = array<i64: 8, 32>}, {transform_indices = @transform_1, window_bounds = array<i64: 1, 4, 5>}, {transform_indices = @transform_2, window_bounds = array<i64: 1, 8, 32>}, {transform_indices = @transform_3, window_bounds = array<i64: 1, 4, 32>}, {transform_indices = @transform_4, window_bounds = array<i64: 1>}, {transform_indices = @transform_5, window_bounds = array<i64: 1>}, {transform_indices = @transform_6, window_bounds = array<i64: 30>}, {transform_indices = @transform_7, window_bounds = array<i64: 10>}]} {
    %c0_i32 = arith.constant 0 : i32
    %0 = arith.cmpi eq, %arg0, %c0_i32 : i32
    %c0_i32_0 = arith.constant 0 : i32
    %1 = arith.cmpi eq, %arg1, %c0_i32_0 : i32
    %2 = arith.andi %0, %1 : i1
    %c0_i32_1 = arith.constant 0 : i32
    %3 = arith.cmpi eq, %arg2, %c0_i32_1 : i32
    %4 = arith.andi %2, %3 : i1
    %5 = arith.extui %4 : i1 to i32
    %c0_i32_2 = arith.constant 0 : i32
    %6 = arith.cmpi ne, %5, %c0_i32_2 : i32
    scf.if %6 {
      %cst_57 = arith.constant 0.000000e+00 : f32
      %c0_58 = arith.constant 0 : index
      %193 = memref.load %arg9[%c0_58] : memref<1xf32, #tpu.memory_space<smem>>
      memref.store %cst_57, %arg9[%c0_58] : memref<1xf32, #tpu.memory_space<smem>>
      %cst_59 = arith.constant 0.000000e+00 : f32
      %c0_60 = arith.constant 0 : index
      %194 = memref.load %arg10[%c0_60] : memref<1xf32, #tpu.memory_space<smem>>
      memref.store %cst_59, %arg10[%c0_60] : memref<1xf32, #tpu.memory_space<smem>>
      %c0_61 = arith.constant 0 : index
      %195 = memref.load %arg3[%c0_61] : memref<30xf32, #tpu.memory_space<smem>>
      %c0_62 = arith.constant 0 : index
      %196 = memref.load %arg11[%c0_62] : memref<30xf32, #tpu.memory_space<smem>>
      memref.store %195, %arg11[%c0_62] : memref<30xf32, #tpu.memory_space<smem>>
      %c1_63 = arith.constant 1 : index
      %197 = memref.load %arg3[%c1_63] : memref<30xf32, #tpu.memory_space<smem>>
      %c1_64 = arith.constant 1 : index
      %198 = memref.load %arg11[%c1_64] : memref<30xf32, #tpu.memory_space<smem>>
      memref.store %197, %arg11[%c1_64] : memref<30xf32, #tpu.memory_space<smem>>
      %c2_65 = arith.constant 2 : index
      %199 = memref.load %arg3[%c2_65] : memref<30xf32, #tpu.memory_space<smem>>
      %c2_66 = arith.constant 2 : index
      %200 = memref.load %arg11[%c2_66] : memref<30xf32, #tpu.memory_space<smem>>
      memref.store %199, %arg11[%c2_66] : memref<30xf32, #tpu.memory_space<smem>>
      %c3_67 = arith.constant 3 : index
      %201 = memref.load %arg3[%c3_67] : memref<30xf32, #tpu.memory_space<smem>>
      %c3_68 = arith.constant 3 : index
      %202 = memref.load %arg11[%c3_68] : memref<30xf32, #tpu.memory_space<smem>>
      memref.store %201, %arg11[%c3_68] : memref<30xf32, #tpu.memory_space<smem>>
      %c4 = arith.constant 4 : index
      %203 = memref.load %arg3[%c4] : memref<30xf32, #tpu.memory_space<smem>>
      %c4_69 = arith.constant 4 : index
      %204 = memref.load %arg11[%c4_69] : memref<30xf32, #tpu.memory_space<smem>>
      memref.store %203, %arg11[%c4_69] : memref<30xf32, #tpu.memory_space<smem>>
      %c5 = arith.constant 5 : index
      %205 = memref.load %arg3[%c5] : memref<30xf32, #tpu.memory_space<smem>>
      %c5_70 = arith.constant 5 : index
      %206 = memref.load %arg11[%c5_70] : memref<30xf32, #tpu.memory_space<smem>>
      memref.store %205, %arg11[%c5_70] : memref<30xf32, #tpu.memory_space<smem>>
      %c6 = arith.constant 6 : index
      %207 = memref.load %arg3[%c6] : memref<30xf32, #tpu.memory_space<smem>>
      %c6_71 = arith.constant 6 : index
      %208 = memref.load %arg11[%c6_71] : memref<30xf32, #tpu.memory_space<smem>>
      memref.store %207, %arg11[%c6_71] : memref<30xf32, #tpu.memory_space<smem>>
      %c7 = arith.constant 7 : index
      %209 = memref.load %arg3[%c7] : memref<30xf32, #tpu.memory_space<smem>>
      %c7_72 = arith.constant 7 : index
      %210 = memref.load %arg11[%c7_72] : memref<30xf32, #tpu.memory_space<smem>>
      memref.store %209, %arg11[%c7_72] : memref<30xf32, #tpu.memory_space<smem>>
      %c8 = arith.constant 8 : index
      %211 = memref.load %arg3[%c8] : memref<30xf32, #tpu.memory_space<smem>>
      %c8_73 = arith.constant 8 : index
      %212 = memref.load %arg11[%c8_73] : memref<30xf32, #tpu.memory_space<smem>>
      memref.store %211, %arg11[%c8_73] : memref<30xf32, #tpu.memory_space<smem>>
      %c9 = arith.constant 9 : index
      %213 = memref.load %arg3[%c9] : memref<30xf32, #tpu.memory_space<smem>>
      %c9_74 = arith.constant 9 : index
      %214 = memref.load %arg11[%c9_74] : memref<30xf32, #tpu.memory_space<smem>>
      memref.store %213, %arg11[%c9_74] : memref<30xf32, #tpu.memory_space<smem>>
      %c10 = arith.constant 10 : index
      %215 = memref.load %arg3[%c10] : memref<30xf32, #tpu.memory_space<smem>>
      %c10_75 = arith.constant 10 : index
      %216 = memref.load %arg11[%c10_75] : memref<30xf32, #tpu.memory_space<smem>>
      memref.store %215, %arg11[%c10_75] : memref<30xf32, #tpu.memory_space<smem>>
      %c11 = arith.constant 11 : index
      %217 = memref.load %arg3[%c11] : memref<30xf32, #tpu.memory_space<smem>>
      %c11_76 = arith.constant 11 : index
      %218 = memref.load %arg11[%c11_76] : memref<30xf32, #tpu.memory_space<smem>>
      memref.store %217, %arg11[%c11_76] : memref<30xf32, #tpu.memory_space<smem>>
      %c12 = arith.constant 12 : index
      %219 = memref.load %arg3[%c12] : memref<30xf32, #tpu.memory_space<smem>>
      %c12_77 = arith.constant 12 : index
      %220 = memref.load %arg11[%c12_77] : memref<30xf32, #tpu.memory_space<smem>>
      memref.store %219, %arg11[%c12_77] : memref<30xf32, #tpu.memory_space<smem>>
      %c13 = arith.constant 13 : index
      %221 = memref.load %arg3[%c13] : memref<30xf32, #tpu.memory_space<smem>>
      %c13_78 = arith.constant 13 : index
      %222 = memref.load %arg11[%c13_78] : memref<30xf32, #tpu.memory_space<smem>>
      memref.store %221, %arg11[%c13_78] : memref<30xf32, #tpu.memory_space<smem>>
      %c14 = arith.constant 14 : index
      %223 = memref.load %arg3[%c14] : memref<30xf32, #tpu.memory_space<smem>>
      %c14_79 = arith.constant 14 : index
      %224 = memref.load %arg11[%c14_79] : memref<30xf32, #tpu.memory_space<smem>>
      memref.store %223, %arg11[%c14_79] : memref<30xf32, #tpu.memory_space<smem>>
      %c15 = arith.constant 15 : index
      %225 = memref.load %arg3[%c15] : memref<30xf32, #tpu.memory_space<smem>>
      %c15_80 = arith.constant 15 : index
      %226 = memref.load %arg11[%c15_80] : memref<30xf32, #tpu.memory_space<smem>>
      memref.store %225, %arg11[%c15_80] : memref<30xf32, #tpu.memory_space<smem>>
      %c16 = arith.constant 16 : index
      %227 = memref.load %arg3[%c16] : memref<30xf32, #tpu.memory_space<smem>>
      %c16_81 = arith.constant 16 : index
      %228 = memref.load %arg11[%c16_81] : memref<30xf32, #tpu.memory_space<smem>>
      memref.store %227, %arg11[%c16_81] : memref<30xf32, #tpu.memory_space<smem>>
      %c17 = arith.constant 17 : index
      %229 = memref.load %arg3[%c17] : memref<30xf32, #tpu.memory_space<smem>>
      %c17_82 = arith.constant 17 : index
      %230 = memref.load %arg11[%c17_82] : memref<30xf32, #tpu.memory_space<smem>>
      memref.store %229, %arg11[%c17_82] : memref<30xf32, #tpu.memory_space<smem>>
      %c18 = arith.constant 18 : index
      %231 = memref.load %arg3[%c18] : memref<30xf32, #tpu.memory_space<smem>>
      %c18_83 = arith.constant 18 : index
      %232 = memref.load %arg11[%c18_83] : memref<30xf32, #tpu.memory_space<smem>>
      memref.store %231, %arg11[%c18_83] : memref<30xf32, #tpu.memory_space<smem>>
      %c19 = arith.constant 19 : index
      %233 = memref.load %arg3[%c19] : memref<30xf32, #tpu.memory_space<smem>>
      %c19_84 = arith.constant 19 : index
      %234 = memref.load %arg11[%c19_84] : memref<30xf32, #tpu.memory_space<smem>>
      memref.store %233, %arg11[%c19_84] : memref<30xf32, #tpu.memory_space<smem>>
      %c20 = arith.constant 20 : index
      %235 = memref.load %arg3[%c20] : memref<30xf32, #tpu.memory_space<smem>>
      %c20_85 = arith.constant 20 : index
      %236 = memref.load %arg11[%c20_85] : memref<30xf32, #tpu.memory_space<smem>>
      memref.store %235, %arg11[%c20_85] : memref<30xf32, #tpu.memory_space<smem>>
      %c21 = arith.constant 21 : index
      %237 = memref.load %arg3[%c21] : memref<30xf32, #tpu.memory_space<smem>>
      %c21_86 = arith.constant 21 : index
      %238 = memref.load %arg11[%c21_86] : memref<30xf32, #tpu.memory_space<smem>>
      memref.store %237, %arg11[%c21_86] : memref<30xf32, #tpu.memory_space<smem>>
      %c22 = arith.constant 22 : index
      %239 = memref.load %arg3[%c22] : memref<30xf32, #tpu.memory_space<smem>>
      %c22_87 = arith.constant 22 : index
      %240 = memref.load %arg11[%c22_87] : memref<30xf32, #tpu.memory_space<smem>>
      memref.store %239, %arg11[%c22_87] : memref<30xf32, #tpu.memory_space<smem>>
      %c23 = arith.constant 23 : index
      %241 = memref.load %arg3[%c23] : memref<30xf32, #tpu.memory_space<smem>>
      %c23_88 = arith.constant 23 : index
      %242 = memref.load %arg11[%c23_88] : memref<30xf32, #tpu.memory_space<smem>>
      memref.store %241, %arg11[%c23_88] : memref<30xf32, #tpu.memory_space<smem>>
      %c24 = arith.constant 24 : index
      %243 = memref.load %arg3[%c24] : memref<30xf32, #tpu.memory_space<smem>>
      %c24_89 = arith.constant 24 : index
      %244 = memref.load %arg11[%c24_89] : memref<30xf32, #tpu.memory_space<smem>>
      memref.store %243, %arg11[%c24_89] : memref<30xf32, #tpu.memory_space<smem>>
      %c25 = arith.constant 25 : index
      %245 = memref.load %arg3[%c25] : memref<30xf32, #tpu.memory_space<smem>>
      %c25_90 = arith.constant 25 : index
      %246 = memref.load %arg11[%c25_90] : memref<30xf32, #tpu.memory_space<smem>>
      memref.store %245, %arg11[%c25_90] : memref<30xf32, #tpu.memory_space<smem>>
      %c26 = arith.constant 26 : index
      %247 = memref.load %arg3[%c26] : memref<30xf32, #tpu.memory_space<smem>>
      %c26_91 = arith.constant 26 : index
      %248 = memref.load %arg11[%c26_91] : memref<30xf32, #tpu.memory_space<smem>>
      memref.store %247, %arg11[%c26_91] : memref<30xf32, #tpu.memory_space<smem>>
      %c27 = arith.constant 27 : index
      %249 = memref.load %arg3[%c27] : memref<30xf32, #tpu.memory_space<smem>>
      %c27_92 = arith.constant 27 : index
      %250 = memref.load %arg11[%c27_92] : memref<30xf32, #tpu.memory_space<smem>>
      memref.store %249, %arg11[%c27_92] : memref<30xf32, #tpu.memory_space<smem>>
      %c28 = arith.constant 28 : index
      %251 = memref.load %arg3[%c28] : memref<30xf32, #tpu.memory_space<smem>>
      %c28_93 = arith.constant 28 : index
      %252 = memref.load %arg11[%c28_93] : memref<30xf32, #tpu.memory_space<smem>>
      memref.store %251, %arg11[%c28_93] : memref<30xf32, #tpu.memory_space<smem>>
      %c29 = arith.constant 29 : index
      %253 = memref.load %arg3[%c29] : memref<30xf32, #tpu.memory_space<smem>>
      %c29_94 = arith.constant 29 : index
      %254 = memref.load %arg11[%c29_94] : memref<30xf32, #tpu.memory_space<smem>>
      memref.store %253, %arg11[%c29_94] : memref<30xf32, #tpu.memory_space<smem>>
      %c0_95 = arith.constant 0 : index
      %255 = memref.load %arg4[%c0_95] : memref<10xf32, #tpu.memory_space<smem>>
      %c0_96 = arith.constant 0 : index
      %256 = memref.load %arg12[%c0_96] : memref<10xf32, #tpu.memory_space<smem>>
      memref.store %255, %arg12[%c0_96] : memref<10xf32, #tpu.memory_space<smem>>
      %c1_97 = arith.constant 1 : index
      %257 = memref.load %arg4[%c1_97] : memref<10xf32, #tpu.memory_space<smem>>
      %c1_98 = arith.constant 1 : index
      %258 = memref.load %arg12[%c1_98] : memref<10xf32, #tpu.memory_space<smem>>
      memref.store %257, %arg12[%c1_98] : memref<10xf32, #tpu.memory_space<smem>>
      %c2_99 = arith.constant 2 : index
      %259 = memref.load %arg4[%c2_99] : memref<10xf32, #tpu.memory_space<smem>>
      %c2_100 = arith.constant 2 : index
      %260 = memref.load %arg12[%c2_100] : memref<10xf32, #tpu.memory_space<smem>>
      memref.store %259, %arg12[%c2_100] : memref<10xf32, #tpu.memory_space<smem>>
      %c3_101 = arith.constant 3 : index
      %261 = memref.load %arg4[%c3_101] : memref<10xf32, #tpu.memory_space<smem>>
      %c3_102 = arith.constant 3 : index
      %262 = memref.load %arg12[%c3_102] : memref<10xf32, #tpu.memory_space<smem>>
      memref.store %261, %arg12[%c3_102] : memref<10xf32, #tpu.memory_space<smem>>
      %c4_103 = arith.constant 4 : index
      %263 = memref.load %arg4[%c4_103] : memref<10xf32, #tpu.memory_space<smem>>
      %c4_104 = arith.constant 4 : index
      %264 = memref.load %arg12[%c4_104] : memref<10xf32, #tpu.memory_space<smem>>
      memref.store %263, %arg12[%c4_104] : memref<10xf32, #tpu.memory_space<smem>>
      %c5_105 = arith.constant 5 : index
      %265 = memref.load %arg4[%c5_105] : memref<10xf32, #tpu.memory_space<smem>>
      %c5_106 = arith.constant 5 : index
      %266 = memref.load %arg12[%c5_106] : memref<10xf32, #tpu.memory_space<smem>>
      memref.store %265, %arg12[%c5_106] : memref<10xf32, #tpu.memory_space<smem>>
      %c6_107 = arith.constant 6 : index
      %267 = memref.load %arg4[%c6_107] : memref<10xf32, #tpu.memory_space<smem>>
      %c6_108 = arith.constant 6 : index
      %268 = memref.load %arg12[%c6_108] : memref<10xf32, #tpu.memory_space<smem>>
      memref.store %267, %arg12[%c6_108] : memref<10xf32, #tpu.memory_space<smem>>
      %c7_109 = arith.constant 7 : index
      %269 = memref.load %arg4[%c7_109] : memref<10xf32, #tpu.memory_space<smem>>
      %c7_110 = arith.constant 7 : index
      %270 = memref.load %arg12[%c7_110] : memref<10xf32, #tpu.memory_space<smem>>
      memref.store %269, %arg12[%c7_110] : memref<10xf32, #tpu.memory_space<smem>>
      %c8_111 = arith.constant 8 : index
      %271 = memref.load %arg4[%c8_111] : memref<10xf32, #tpu.memory_space<smem>>
      %c8_112 = arith.constant 8 : index
      %272 = memref.load %arg12[%c8_112] : memref<10xf32, #tpu.memory_space<smem>>
      memref.store %271, %arg12[%c8_112] : memref<10xf32, #tpu.memory_space<smem>>
      %c9_113 = arith.constant 9 : index
      %273 = memref.load %arg4[%c9_113] : memref<10xf32, #tpu.memory_space<smem>>
      %c9_114 = arith.constant 9 : index
      %274 = memref.load %arg12[%c9_114] : memref<10xf32, #tpu.memory_space<smem>>
      memref.store %273, %arg12[%c9_114] : memref<10xf32, #tpu.memory_space<smem>>
    } else {
    }
    %c0 = arith.constant 0 : index
    %c0_3 = arith.constant 0 : index
    %7 = vector.load %arg5[%c0, %c0_3] : memref<8x32xf32, #tpu.memory_space<vmem>>, vector<8x32xf32>
    %c0_4 = arith.constant 0 : index
    %c0_5 = arith.constant 0 : index
    %c0_6 = arith.constant 0 : index
    %8 = vector.load %arg6[%c0_4, %c0_5, %c0_6] : memref<1x4x5xf32, #tpu.memory_space<vmem>>, vector<1x4x5xf32>
    %9 = vector.shape_cast %8 : vector<1x4x5xf32> to vector<4x5xf32>
    %c0_7 = arith.constant 0 : index
    %c0_8 = arith.constant 0 : index
    %c0_9 = arith.constant 0 : index
    %10 = vector.load %arg7[%c0_7, %c0_8, %c0_9] : memref<1x8x32xf32, #tpu.memory_space<vmem>>, vector<1x8x32xf32>
    %11 = vector.shape_cast %10 : vector<1x8x32xf32> to vector<8x32xf32>
    %cst = arith.constant 9.99999974E-5 : f32
    %cst_10 = arith.constant 0.999899983 : f32
    %12 = vector.broadcast %cst : f32 to vector<8x32xf32>
    %13 = arith.maximumf %12, %11 : vector<8x32xf32>
    %14 = vector.broadcast %cst_10 : f32 to vector<8x32xf32>
    %15 = arith.minimumf %14, %13 : vector<8x32xf32>
    %c0_11 = arith.constant 0 : index
    %c0_12 = arith.constant 0 : index
    %c0_13 = arith.constant 0 : index
    %16 = vector.load %arg8[%c0_11, %c0_12, %c0_13] : memref<1x4x32xf32, #tpu.memory_space<vmem>>, vector<1x4x32xf32>
    %17 = vector.shape_cast %16 : vector<1x4x32xf32> to vector<4x32xf32>
    %18 = vector.extract_strided_slice %7 {offsets = [0, 0], sizes = [1, 32], strides = [1, 1]} : vector<8x32xf32> to vector<1x32xf32>
    %19 = vector.extract_strided_slice %7 {offsets = [1, 0], sizes = [1, 32], strides = [1, 1]} : vector<8x32xf32> to vector<1x32xf32>
    %20 = vector.extract_strided_slice %7 {offsets = [2, 0], sizes = [1, 32], strides = [1, 1]} : vector<8x32xf32> to vector<1x32xf32>
    %21 = vector.extract_strided_slice %7 {offsets = [3, 0], sizes = [1, 32], strides = [1, 1]} : vector<8x32xf32> to vector<1x32xf32>
    %22 = vector.extract_strided_slice %7 {offsets = [4, 0], sizes = [1, 32], strides = [1, 1]} : vector<8x32xf32> to vector<1x32xf32>
    %23 = vector.extract_strided_slice %7 {offsets = [5, 0], sizes = [1, 32], strides = [1, 1]} : vector<8x32xf32> to vector<1x32xf32>
    %24 = vector.extract_strided_slice %7 {offsets = [6, 0], sizes = [1, 32], strides = [1, 1]} : vector<8x32xf32> to vector<1x32xf32>
    %25 = vector.extract_strided_slice %7 {offsets = [7, 0], sizes = [1, 32], strides = [1, 1]} : vector<8x32xf32> to vector<1x32xf32>
    %26 = vector.extract_strided_slice %9 {offsets = [0, 0], sizes = [4, 1], strides = [1, 1]} : vector<4x5xf32> to vector<4x1xf32>
    %27 = vector.extract_strided_slice %9 {offsets = [0, 1], sizes = [4, 1], strides = [1, 1]} : vector<4x5xf32> to vector<4x1xf32>
    %28 = vector.extract_strided_slice %9 {offsets = [0, 2], sizes = [4, 1], strides = [1, 1]} : vector<4x5xf32> to vector<4x1xf32>
    %29 = vector.extract_strided_slice %9 {offsets = [0, 3], sizes = [4, 1], strides = [1, 1]} : vector<4x5xf32> to vector<4x1xf32>
    %30 = vector.extract_strided_slice %9 {offsets = [0, 4], sizes = [4, 1], strides = [1, 1]} : vector<4x5xf32> to vector<4x1xf32>
    %cst_14 = arith.constant -1.000000e+00 : f32
    %31 = vector.broadcast %cst_14 : f32 to vector<4x1xf32>
    %32 = arith.cmpf one, %30, %31 : vector<4x1xf32>
    %33 = arith.extui %32 : vector<4x1xi1> to vector<4x1xi32>
    %34 = arith.sitofp %33 : vector<4x1xi32> to vector<4x1xf32>
    %35 = vector.shape_cast %34 : vector<4x1xf32> to vector<1x4x1xf32>
    %cst_15 = arith.constant dense<0.000000e+00> : vector<1xf32>
    %36 = vector.multi_reduction <add>, %35, %cst_15 [1, 2] : vector<1x4x1xf32> to vector<1xf32>
    %37 = vector.shape_cast %36 : vector<1xf32> to vector<1x1x1xf32>
    %38 = vector.extract %37[0, 0, 0] : f32 from vector<1x1x1xf32>
    %cst_16 = arith.constant 0.000000e+00 : f32
    %39 = arith.cmpf ogt, %38, %cst_16 : f32
    %40 = arith.subf %28, %26 : vector<4x1xf32>
    %41 = arith.subf %29, %27 : vector<4x1xf32>
    %42 = arith.mulf %40, %41 : vector<4x1xf32>
    %43 = vector.broadcast %21 : vector<1x32xf32> to vector<4x32xf32>
    %44 = vector.broadcast %28 : vector<4x1xf32> to vector<4x32xf32>
    %45 = arith.minimumf %43, %44 : vector<4x32xf32>
    %46 = vector.broadcast %19 : vector<1x32xf32> to vector<4x32xf32>
    %47 = vector.broadcast %26 : vector<4x1xf32> to vector<4x32xf32>
    %48 = arith.maximumf %46, %47 : vector<4x32xf32>
    %49 = arith.subf %45, %48 : vector<4x32xf32>
    %cst_17 = arith.constant 0.000000e+00 : f32
    %50 = vector.broadcast %cst_17 : f32 to vector<4x32xf32>
    %51 = arith.maximumf %49, %50 : vector<4x32xf32>
    %52 = vector.broadcast %20 : vector<1x32xf32> to vector<4x32xf32>
    %53 = vector.broadcast %29 : vector<4x1xf32> to vector<4x32xf32>
    %54 = arith.minimumf %52, %53 : vector<4x32xf32>
    %55 = vector.broadcast %18 : vector<1x32xf32> to vector<4x32xf32>
    %56 = vector.broadcast %27 : vector<4x1xf32> to vector<4x32xf32>
    %57 = arith.maximumf %55, %56 : vector<4x32xf32>
    %58 = arith.subf %54, %57 : vector<4x32xf32>
    %cst_18 = arith.constant 0.000000e+00 : f32
    %59 = vector.broadcast %cst_18 : f32 to vector<4x32xf32>
    %60 = arith.maximumf %58, %59 : vector<4x32xf32>
    %61 = arith.mulf %51, %60 : vector<4x32xf32>
    %62 = arith.mulf %22, %23 : vector<1x32xf32>
    %63 = vector.broadcast %62 : vector<1x32xf32> to vector<4x32xf32>
    %64 = vector.broadcast %42 : vector<4x1xf32> to vector<4x32xf32>
    %65 = arith.addf %63, %64 : vector<4x32xf32>
    %66 = arith.subf %65, %61 : vector<4x32xf32>
    %cst_19 = arith.constant 9.99999993E-9 : f32
    %67 = vector.broadcast %cst_19 : f32 to vector<4x32xf32>
    %68 = arith.maximumf %66, %67 : vector<4x32xf32>
    %69 = arith.divf %61, %68 : vector<4x32xf32>
    %cst_20 = arith.constant -1.000000e+00 : f32
    %70 = vector.shape_cast %32 : vector<4x1xi1> to vector<4x1xi1>
    %71 = vector.broadcast %70 : vector<4x1xi1> to vector<4x32xi1>
    %72 = vector.broadcast %cst_20 : f32 to vector<4x32xf32>
    %73 = arith.select %71, %69, %72 : vector<4x32xi1>, vector<4x32xf32>
    %cst_21 = arith.constant dense<0xFF800000> : vector<32xf32>
    %74 = vector.multi_reduction <maximumf>, %73, %cst_21 [0] : vector<4x32xf32> to vector<32xf32>
    %75 = vector.shape_cast %74 : vector<32xf32> to vector<1x32xf32>
    %76 = tpu.iota {dimensions = array<i32: 0>} : vector<4x32xi32>
    %77 = arith.sitofp %76 : vector<4x32xi32> to vector<4x32xf32>
    %78 = vector.broadcast %75 : vector<1x32xf32> to vector<4x32xf32>
    %79 = arith.cmpf oeq, %73, %78 : vector<4x32xf32>
    %cst_22 = arith.constant 4.000000e+00 : f32
    %80 = vector.broadcast %cst_22 : f32 to vector<4x32xf32>
    %81 = arith.select %79, %77, %80 : vector<4x32xi1>, vector<4x32xf32>
    %cst_23 = arith.constant dense<0x7F800000> : vector<32xf32>
    %82 = vector.multi_reduction <minimumf>, %81, %cst_23 [0] : vector<4x32xf32> to vector<32xf32>
    %83 = vector.shape_cast %82 : vector<32xf32> to vector<1x32xf32>
    %84 = vector.broadcast %83 : vector<1x32xf32> to vector<4x32xf32>
    %85 = arith.cmpf oeq, %77, %84 : vector<4x32xf32>
    %86 = arith.extui %85 : vector<4x32xi1> to vector<4x32xi32>
    %87 = arith.sitofp %86 : vector<4x32xi32> to vector<4x32xf32>
    %88 = vector.broadcast %26 : vector<4x1xf32> to vector<4x32xf32>
    %89 = arith.mulf %87, %88 : vector<4x32xf32>
    %cst_24 = arith.constant dense<0.000000e+00> : vector<32xf32>
    %90 = vector.multi_reduction <add>, %89, %cst_24 [0] : vector<4x32xf32> to vector<32xf32>
    %91 = vector.shape_cast %90 : vector<32xf32> to vector<1x32xf32>
    %92 = vector.broadcast %27 : vector<4x1xf32> to vector<4x32xf32>
    %93 = arith.mulf %87, %92 : vector<4x32xf32>
    %cst_25 = arith.constant dense<0.000000e+00> : vector<32xf32>
    %94 = vector.multi_reduction <add>, %93, %cst_25 [0] : vector<4x32xf32> to vector<32xf32>
    %95 = vector.shape_cast %94 : vector<32xf32> to vector<1x32xf32>
    %96 = vector.broadcast %28 : vector<4x1xf32> to vector<4x32xf32>
    %97 = arith.mulf %87, %96 : vector<4x32xf32>
    %cst_26 = arith.constant dense<0.000000e+00> : vector<32xf32>
    %98 = vector.multi_reduction <add>, %97, %cst_26 [0] : vector<4x32xf32> to vector<32xf32>
    %99 = vector.shape_cast %98 : vector<32xf32> to vector<1x32xf32>
    %100 = vector.broadcast %29 : vector<4x1xf32> to vector<4x32xf32>
    %101 = arith.mulf %87, %100 : vector<4x32xf32>
    %cst_27 = arith.constant dense<0.000000e+00> : vector<32xf32>
    %102 = vector.multi_reduction <add>, %101, %cst_27 [0] : vector<4x32xf32> to vector<32xf32>
    %103 = vector.shape_cast %102 : vector<32xf32> to vector<1x32xf32>
    %104 = vector.broadcast %30 : vector<4x1xf32> to vector<4x32xf32>
    %105 = arith.mulf %87, %104 : vector<4x32xf32>
    %cst_28 = arith.constant dense<0.000000e+00> : vector<32xf32>
    %106 = vector.multi_reduction <add>, %105, %cst_28 [0] : vector<4x32xf32> to vector<32xf32>
    %107 = vector.shape_cast %106 : vector<32xf32> to vector<1x32xf32>
    %cst_29 = arith.constant 5.000000e-01 : f32
    %108 = vector.broadcast %cst_29 : f32 to vector<1x32xf32>
    %109 = arith.cmpf oge, %75, %108 : vector<1x32xf32>
    %cst_30 = arith.constant 4.000000e-01 : f32
    %110 = vector.broadcast %cst_30 : f32 to vector<1x32xf32>
    %111 = arith.cmpf olt, %75, %110 : vector<1x32xf32>
    %112 = tpu.iota {dimensions = array<i32: 0>} : vector<8x32xi32>
    %113 = arith.fptosi %107 : vector<1x32xf32> to vector<1x32xi32>
    %114 = vector.broadcast %113 : vector<1x32xi32> to vector<8x32xi32>
    %115 = arith.cmpi eq, %112, %114 : vector<8x32xi32>
    %116 = vector.broadcast %109 : vector<1x32xi1> to vector<8x32xi1>
    %117 = arith.andi %116, %115 : vector<8x32xi1>
    %118 = arith.ori %109, %111 : vector<1x32xi1>
    %cst_31 = arith.constant 0.000000e+00 : f32
    %cst_32 = arith.constant -1.000000e+00 : f32
    %119 = vector.broadcast %cst_31 : f32 to vector<1x32xf32>
    %120 = vector.broadcast %cst_32 : f32 to vector<1x32xf32>
    %121 = arith.select %118, %119, %120 : vector<1x32xi1>, vector<1x32xf32>
    %cst_33 = arith.constant 1.000000e+00 : f32
    %122 = vector.broadcast %cst_33 : f32 to vector<8x32xf32>
    %123 = vector.shape_cast %121 : vector<1x32xf32> to vector<1x32xf32>
    %124 = vector.broadcast %123 : vector<1x32xf32> to vector<8x32xf32>
    %125 = arith.select %117, %122, %124 : vector<8x32xi1>, vector<8x32xf32>
    %126 = math.absf %15 : vector<8x32xf32>
    %cst_34 = arith.constant 0.000000e+00 : f32
    %127 = vector.broadcast %cst_34 : f32 to vector<8x32xf32>
    %128 = arith.subf %127, %126 : vector<8x32xf32>
    %129 = math.exp %128 : vector<8x32xf32>
    %cst_35 = arith.constant 1.000000e+00 : f32
    %130 = vector.broadcast %cst_35 : f32 to vector<8x32xf32>
    %131 = arith.addf %130, %129 : vector<8x32xf32>
    %cst_36 = arith.constant 1.000000e+00 : f32
    %132 = vector.broadcast %cst_36 : f32 to vector<8x32xf32>
    %133 = arith.divf %132, %131 : vector<8x32xf32>
    %cst_37 = arith.constant 0.000000e+00 : f32
    %134 = vector.broadcast %cst_37 : f32 to vector<8x32xf32>
    %135 = arith.cmpf oge, %15, %134 : vector<8x32xf32>
    %136 = arith.mulf %129, %133 : vector<8x32xf32>
    %137 = arith.select %135, %133, %136 : vector<8x32xi1>, vector<8x32xf32>
    %138 = arith.subf %137, %125 : vector<8x32xf32>
    %139 = math.absf %138 : vector<8x32xf32>
    %140 = arith.subf %99, %91 : vector<1x32xf32>
    %141 = arith.subf %103, %95 : vector<1x32xf32>
    %cst_38 = arith.constant 5.000000e-01 : f32
    %142 = vector.broadcast %cst_38 : f32 to vector<1x32xf32>
    %143 = arith.mulf %142, %140 : vector<1x32xf32>
    %144 = arith.addf %91, %143 : vector<1x32xf32>
    %cst_39 = arith.constant 5.000000e-01 : f32
    %145 = vector.broadcast %cst_39 : f32 to vector<1x32xf32>
    %146 = arith.mulf %145, %141 : vector<1x32xf32>
    %147 = arith.addf %95, %146 : vector<1x32xf32>
    %cst_40 = arith.constant 1.000000e+00 : f32
    %148 = vector.broadcast %cst_40 : f32 to vector<1x32xf32>
    %149 = arith.maximumf %140, %148 : vector<1x32xf32>
    %cst_41 = arith.constant 1.000000e+00 : f32
    %150 = vector.broadcast %cst_41 : f32 to vector<1x32xf32>
    %151 = arith.maximumf %141, %150 : vector<1x32xf32>
    %152 = vector.extract_strided_slice %17 {offsets = [0, 0], sizes = [1, 32], strides = [1, 1]} : vector<4x32xf32> to vector<1x32xf32>
    %153 = arith.subf %147, %25 : vector<1x32xf32>
    %154 = arith.divf %153, %23 : vector<1x32xf32>
    %cst_42 = arith.constant 1.000000e+01 : f32
    %155 = vector.broadcast %cst_42 : f32 to vector<1x32xf32>
    %156 = arith.mulf %154, %155 : vector<1x32xf32>
    %157 = arith.subf %152, %156 : vector<1x32xf32>
    %c0_43 = arith.constant 0 : index
    %c0_44 = arith.constant 0 : index
    %158 = vector.load %arg18[%c0_43, %c0_44] : memref<4x32xf32, #tpu.memory_space<vmem>>, vector<1x32xf32>
    tpu.vector_store %arg18[%c0_43, %c0_44], %157 {strides = array<i32>} : memref<4x32xf32, #tpu.memory_space<vmem>>, vector<1x32xf32>,
    %159 = vector.extract_strided_slice %17 {offsets = [1, 0], sizes = [1, 32], strides = [1, 1]} : vector<4x32xf32> to vector<1x32xf32>
    %160 = arith.subf %144, %24 : vector<1x32xf32>
    %161 = arith.divf %160, %22 : vector<1x32xf32>
    %cst_45 = arith.constant 1.000000e+01 : f32
    %162 = vector.broadcast %cst_45 : f32 to vector<1x32xf32>
    %163 = arith.mulf %161, %162 : vector<1x32xf32>
    %164 = arith.subf %159, %163 : vector<1x32xf32>
    %c1 = arith.constant 1 : index
    %c0_46 = arith.constant 0 : index
    %165 = vector.load %arg18[%c1, %c0_46] : memref<4x32xf32, #tpu.memory_space<vmem>>, vector<1x32xf32>
    tpu.vector_store %arg18[%c1, %c0_46], %164 {strides = array<i32>} : memref<4x32xf32, #tpu.memory_space<vmem>>, vector<1x32xf32>,
    %166 = vector.extract_strided_slice %17 {offsets = [2, 0], sizes = [1, 32], strides = [1, 1]} : vector<4x32xf32> to vector<1x32xf32>
    %167 = arith.divf %151, %23 : vector<1x32xf32>
    %168 = math.log %167 : vector<1x32xf32>
    %cst_47 = arith.constant 5.000000e+00 : f32
    %169 = vector.broadcast %cst_47 : f32 to vector<1x32xf32>
    %170 = arith.mulf %168, %169 : vector<1x32xf32>
    %171 = arith.subf %166, %170 : vector<1x32xf32>
    %c2 = arith.constant 2 : index
    %c0_48 = arith.constant 0 : index
    %172 = vector.load %arg18[%c2, %c0_48] : memref<4x32xf32, #tpu.memory_space<vmem>>, vector<1x32xf32>
    tpu.vector_store %arg18[%c2, %c0_48], %171 {strides = array<i32>} : memref<4x32xf32, #tpu.memory_space<vmem>>, vector<1x32xf32>,
    %173 = vector.extract_strided_slice %17 {offsets = [3, 0], sizes = [1, 32], strides = [1, 1]} : vector<4x32xf32> to vector<1x32xf32>
    %174 = arith.divf %149, %22 : vector<1x32xf32>
    %175 = math.log %174 : vector<1x32xf32>
    %cst_49 = arith.constant 5.000000e+00 : f32
    %176 = vector.broadcast %cst_49 : f32 to vector<1x32xf32>
    %177 = arith.mulf %175, %176 : vector<1x32xf32>
    %178 = arith.subf %173, %177 : vector<1x32xf32>
    %c3 = arith.constant 3 : index
    %c0_50 = arith.constant 0 : index
    %179 = vector.load %arg18[%c3, %c0_50] : memref<4x32xf32, #tpu.memory_space<vmem>>, vector<1x32xf32>
    tpu.vector_store %arg18[%c3, %c0_50], %178 {strides = array<i32>} : memref<4x32xf32, #tpu.memory_space<vmem>>, vector<1x32xf32>,
    %c0_51 = arith.constant 0 : index
    %c0_52 = arith.constant 0 : index
    %180 = vector.load %arg18[%c0_51, %c0_52] : memref<4x32xf32, #tpu.memory_space<vmem>>, vector<4x32xf32>
    %181 = arith.mulf %180, %180 : vector<4x32xf32>
    %cst_53 = arith.constant 4.000000e-04 : f32
    %182 = vector.broadcast %cst_53 : f32 to vector<4x32xf32>
    %183 = arith.addf %181, %182 : vector<4x32xf32>
    %184 = math.rsqrt %183 : vector<4x32xf32>
    %185 = math.absf %180 : vector<4x32xf32>
    %186 = arith.mulf %185, %184 : vector<4x32xf32>
    %c0_i32_54 = arith.constant 0 : i32
    %187 = arith.cmpi eq, %arg1, %c0_i32_54 : i32
    %188 = arith.extui %187 : i1 to i32
    %c0_i32_55 = arith.constant 0 : i32
    %189 = arith.cmpi ne, %188, %c0_i32_55 : i32
    scf.if %189 {
      %c0_i32_57 = arith.constant 0 : i32
      %193 = arith.cmpi eq, %arg2, %c0_i32_57 : i32
      %194 = arith.extui %193 : i1 to i32
      %c0_i32_58 = arith.constant 0 : i32
      %195 = arith.cmpi ne, %194, %c0_i32_58 : i32
      scf.if %195 {
        %cst_197 = arith.constant 0.000000e+00 : f32
        %c1_198 = arith.constant 1 : index
        %648 = memref.load %arg13[%c1_198] : memref<31xf32, #tpu.memory_space<smem>>
        memref.store %cst_197, %arg13[%c1_198] : memref<31xf32, #tpu.memory_space<smem>>
        %cst_199 = arith.constant 0.000000e+00 : f32
        %c2_200 = arith.constant 2 : index
        %649 = memref.load %arg13[%c2_200] : memref<31xf32, #tpu.memory_space<smem>>
        memref.store %cst_199, %arg13[%c2_200] : memref<31xf32, #tpu.memory_space<smem>>
        %cst_201 = arith.constant 0.000000e+00 : f32
        %c3_202 = arith.constant 3 : index
        %650 = memref.load %arg13[%c3_202] : memref<31xf32, #tpu.memory_space<smem>>
        memref.store %cst_201, %arg13[%c3_202] : memref<31xf32, #tpu.memory_space<smem>>
        %cst_203 = arith.constant 0.000000e+00 : f32
        %c4_204 = arith.constant 4 : index
        %651 = memref.load %arg13[%c4_204] : memref<31xf32, #tpu.memory_space<smem>>
        memref.store %cst_203, %arg13[%c4_204] : memref<31xf32, #tpu.memory_space<smem>>
        %cst_205 = arith.constant 0.000000e+00 : f32
        %c5_206 = arith.constant 5 : index
        %652 = memref.load %arg13[%c5_206] : memref<31xf32, #tpu.memory_space<smem>>
        memref.store %cst_205, %arg13[%c5_206] : memref<31xf32, #tpu.memory_space<smem>>
        %cst_207 = arith.constant 0.000000e+00 : f32
        %c6_208 = arith.constant 6 : index
        %653 = memref.load %arg13[%c6_208] : memref<31xf32, #tpu.memory_space<smem>>
        memref.store %cst_207, %arg13[%c6_208] : memref<31xf32, #tpu.memory_space<smem>>
        %cst_209 = arith.constant 0.000000e+00 : f32
        %c7_210 = arith.constant 7 : index
        %654 = memref.load %arg13[%c7_210] : memref<31xf32, #tpu.memory_space<smem>>
        memref.store %cst_209, %arg13[%c7_210] : memref<31xf32, #tpu.memory_space<smem>>
        %cst_211 = arith.constant 0.000000e+00 : f32
        %c8_212 = arith.constant 8 : index
        %655 = memref.load %arg13[%c8_212] : memref<31xf32, #tpu.memory_space<smem>>
        memref.store %cst_211, %arg13[%c8_212] : memref<31xf32, #tpu.memory_space<smem>>
        %cst_213 = arith.constant 0.000000e+00 : f32
        %c9_214 = arith.constant 9 : index
        %656 = memref.load %arg13[%c9_214] : memref<31xf32, #tpu.memory_space<smem>>
        memref.store %cst_213, %arg13[%c9_214] : memref<31xf32, #tpu.memory_space<smem>>
        %cst_215 = arith.constant 0.000000e+00 : f32
        %c10_216 = arith.constant 10 : index
        %657 = memref.load %arg13[%c10_216] : memref<31xf32, #tpu.memory_space<smem>>
        memref.store %cst_215, %arg13[%c10_216] : memref<31xf32, #tpu.memory_space<smem>>
        %cst_217 = arith.constant 0.000000e+00 : f32
        %c11_218 = arith.constant 11 : index
        %658 = memref.load %arg13[%c11_218] : memref<31xf32, #tpu.memory_space<smem>>
        memref.store %cst_217, %arg13[%c11_218] : memref<31xf32, #tpu.memory_space<smem>>
        %cst_219 = arith.constant 0.000000e+00 : f32
        %c12_220 = arith.constant 12 : index
        %659 = memref.load %arg13[%c12_220] : memref<31xf32, #tpu.memory_space<smem>>
        memref.store %cst_219, %arg13[%c12_220] : memref<31xf32, #tpu.memory_space<smem>>
        %cst_221 = arith.constant 0.000000e+00 : f32
        %c13_222 = arith.constant 13 : index
        %660 = memref.load %arg13[%c13_222] : memref<31xf32, #tpu.memory_space<smem>>
        memref.store %cst_221, %arg13[%c13_222] : memref<31xf32, #tpu.memory_space<smem>>
        %cst_223 = arith.constant 0.000000e+00 : f32
        %c14_224 = arith.constant 14 : index
        %661 = memref.load %arg13[%c14_224] : memref<31xf32, #tpu.memory_space<smem>>
        memref.store %cst_223, %arg13[%c14_224] : memref<31xf32, #tpu.memory_space<smem>>
        %cst_225 = arith.constant 0.000000e+00 : f32
        %c15_226 = arith.constant 15 : index
        %662 = memref.load %arg13[%c15_226] : memref<31xf32, #tpu.memory_space<smem>>
        memref.store %cst_225, %arg13[%c15_226] : memref<31xf32, #tpu.memory_space<smem>>
        %cst_227 = arith.constant 0.000000e+00 : f32
        %c16_228 = arith.constant 16 : index
        %663 = memref.load %arg13[%c16_228] : memref<31xf32, #tpu.memory_space<smem>>
        memref.store %cst_227, %arg13[%c16_228] : memref<31xf32, #tpu.memory_space<smem>>
        %cst_229 = arith.constant 0.000000e+00 : f32
        %c17_230 = arith.constant 17 : index
        %664 = memref.load %arg13[%c17_230] : memref<31xf32, #tpu.memory_space<smem>>
        memref.store %cst_229, %arg13[%c17_230] : memref<31xf32, #tpu.memory_space<smem>>
        %cst_231 = arith.constant 0.000000e+00 : f32
        %c18_232 = arith.constant 18 : index
        %665 = memref.load %arg13[%c18_232] : memref<31xf32, #tpu.memory_space<smem>>
        memref.store %cst_231, %arg13[%c18_232] : memref<31xf32, #tpu.memory_space<smem>>
        %cst_233 = arith.constant 0.000000e+00 : f32
        %c19_234 = arith.constant 19 : index
        %666 = memref.load %arg13[%c19_234] : memref<31xf32, #tpu.memory_space<smem>>
        memref.store %cst_233, %arg13[%c19_234] : memref<31xf32, #tpu.memory_space<smem>>
        %cst_235 = arith.constant 0.000000e+00 : f32
        %c20_236 = arith.constant 20 : index
        %667 = memref.load %arg13[%c20_236] : memref<31xf32, #tpu.memory_space<smem>>
        memref.store %cst_235, %arg13[%c20_236] : memref<31xf32, #tpu.memory_space<smem>>
        %cst_237 = arith.constant 0.000000e+00 : f32
        %c21_238 = arith.constant 21 : index
        %668 = memref.load %arg13[%c21_238] : memref<31xf32, #tpu.memory_space<smem>>
        memref.store %cst_237, %arg13[%c21_238] : memref<31xf32, #tpu.memory_space<smem>>
        %cst_239 = arith.constant 0.000000e+00 : f32
        %c22_240 = arith.constant 22 : index
        %669 = memref.load %arg13[%c22_240] : memref<31xf32, #tpu.memory_space<smem>>
        memref.store %cst_239, %arg13[%c22_240] : memref<31xf32, #tpu.memory_space<smem>>
        %cst_241 = arith.constant 0.000000e+00 : f32
        %c23_242 = arith.constant 23 : index
        %670 = memref.load %arg13[%c23_242] : memref<31xf32, #tpu.memory_space<smem>>
        memref.store %cst_241, %arg13[%c23_242] : memref<31xf32, #tpu.memory_space<smem>>
        %cst_243 = arith.constant 0.000000e+00 : f32
        %c24_244 = arith.constant 24 : index
        %671 = memref.load %arg13[%c24_244] : memref<31xf32, #tpu.memory_space<smem>>
        memref.store %cst_243, %arg13[%c24_244] : memref<31xf32, #tpu.memory_space<smem>>
        %cst_245 = arith.constant 0.000000e+00 : f32
        %c25_246 = arith.constant 25 : index
        %672 = memref.load %arg13[%c25_246] : memref<31xf32, #tpu.memory_space<smem>>
        memref.store %cst_245, %arg13[%c25_246] : memref<31xf32, #tpu.memory_space<smem>>
        %cst_247 = arith.constant 0.000000e+00 : f32
        %c26_248 = arith.constant 26 : index
        %673 = memref.load %arg13[%c26_248] : memref<31xf32, #tpu.memory_space<smem>>
        memref.store %cst_247, %arg13[%c26_248] : memref<31xf32, #tpu.memory_space<smem>>
        %cst_249 = arith.constant 0.000000e+00 : f32
        %c27_250 = arith.constant 27 : index
        %674 = memref.load %arg13[%c27_250] : memref<31xf32, #tpu.memory_space<smem>>
        memref.store %cst_249, %arg13[%c27_250] : memref<31xf32, #tpu.memory_space<smem>>
        %cst_251 = arith.constant 0.000000e+00 : f32
        %c28_252 = arith.constant 28 : index
        %675 = memref.load %arg13[%c28_252] : memref<31xf32, #tpu.memory_space<smem>>
        memref.store %cst_251, %arg13[%c28_252] : memref<31xf32, #tpu.memory_space<smem>>
        %cst_253 = arith.constant 0.000000e+00 : f32
        %c29_254 = arith.constant 29 : index
        %676 = memref.load %arg13[%c29_254] : memref<31xf32, #tpu.memory_space<smem>>
        memref.store %cst_253, %arg13[%c29_254] : memref<31xf32, #tpu.memory_space<smem>>
        %cst_255 = arith.constant 0.000000e+00 : f32
        %c30_256 = arith.constant 30 : index
        %677 = memref.load %arg13[%c30_256] : memref<31xf32, #tpu.memory_space<smem>>
        memref.store %cst_255, %arg13[%c30_256] : memref<31xf32, #tpu.memory_space<smem>>
        %cst_257 = arith.constant 0.000000e+00 : f32
        %c1_258 = arith.constant 1 : index
        %678 = memref.load %arg14[%c1_258] : memref<11xf32, #tpu.memory_space<smem>>
        memref.store %cst_257, %arg14[%c1_258] : memref<11xf32, #tpu.memory_space<smem>>
        %cst_259 = arith.constant 0.000000e+00 : f32
        %c2_260 = arith.constant 2 : index
        %679 = memref.load %arg14[%c2_260] : memref<11xf32, #tpu.memory_space<smem>>
        memref.store %cst_259, %arg14[%c2_260] : memref<11xf32, #tpu.memory_space<smem>>
        %cst_261 = arith.constant 0.000000e+00 : f32
        %c3_262 = arith.constant 3 : index
        %680 = memref.load %arg14[%c3_262] : memref<11xf32, #tpu.memory_space<smem>>
        memref.store %cst_261, %arg14[%c3_262] : memref<11xf32, #tpu.memory_space<smem>>
        %cst_263 = arith.constant 0.000000e+00 : f32
        %c4_264 = arith.constant 4 : index
        %681 = memref.load %arg14[%c4_264] : memref<11xf32, #tpu.memory_space<smem>>
        memref.store %cst_263, %arg14[%c4_264] : memref<11xf32, #tpu.memory_space<smem>>
        %cst_265 = arith.constant 0.000000e+00 : f32
        %c5_266 = arith.constant 5 : index
        %682 = memref.load %arg14[%c5_266] : memref<11xf32, #tpu.memory_space<smem>>
        memref.store %cst_265, %arg14[%c5_266] : memref<11xf32, #tpu.memory_space<smem>>
        %cst_267 = arith.constant 0.000000e+00 : f32
        %c6_268 = arith.constant 6 : index
        %683 = memref.load %arg14[%c6_268] : memref<11xf32, #tpu.memory_space<smem>>
        memref.store %cst_267, %arg14[%c6_268] : memref<11xf32, #tpu.memory_space<smem>>
        %cst_269 = arith.constant 0.000000e+00 : f32
        %c7_270 = arith.constant 7 : index
        %684 = memref.load %arg14[%c7_270] : memref<11xf32, #tpu.memory_space<smem>>
        memref.store %cst_269, %arg14[%c7_270] : memref<11xf32, #tpu.memory_space<smem>>
        %cst_271 = arith.constant 0.000000e+00 : f32
        %c8_272 = arith.constant 8 : index
        %685 = memref.load %arg14[%c8_272] : memref<11xf32, #tpu.memory_space<smem>>
        memref.store %cst_271, %arg14[%c8_272] : memref<11xf32, #tpu.memory_space<smem>>
        %cst_273 = arith.constant 0.000000e+00 : f32
        %c9_274 = arith.constant 9 : index
        %686 = memref.load %arg14[%c9_274] : memref<11xf32, #tpu.memory_space<smem>>
        memref.store %cst_273, %arg14[%c9_274] : memref<11xf32, #tpu.memory_space<smem>>
        %cst_275 = arith.constant 0.000000e+00 : f32
        %c10_276 = arith.constant 10 : index
        %687 = memref.load %arg14[%c10_276] : memref<11xf32, #tpu.memory_space<smem>>
        memref.store %cst_275, %arg14[%c10_276] : memref<11xf32, #tpu.memory_space<smem>>
        %cst_277 = arith.constant 0.000000e+00 : f32
        %c0_278 = arith.constant 0 : index
        %688 = memref.load %arg17[%c0_278] : memref<4xf32, #tpu.memory_space<smem>>
        memref.store %cst_277, %arg17[%c0_278] : memref<4xf32, #tpu.memory_space<smem>>
      } else {
      }
      %196 = arith.extui %109 : vector<1x32xi1> to vector<1x32xi32>
      %197 = arith.sitofp %196 : vector<1x32xi32> to vector<1x32xf32>
      %c0_59 = arith.constant 0 : index
      %198 = memref.load %arg17[%c0_59] : memref<4xf32, #tpu.memory_space<smem>>
      %199 = vector.shape_cast %197 : vector<1x32xf32> to vector<1x1x32xf32>
      %cst_60 = arith.constant dense<0.000000e+00> : vector<1xf32>
      %200 = vector.multi_reduction <add>, %199, %cst_60 [1, 2] : vector<1x1x32xf32> to vector<1xf32>
      %201 = vector.shape_cast %200 : vector<1xf32> to vector<1x1x1xf32>
      %202 = vector.extract %201[0, 0, 0] : f32 from vector<1x1x1xf32>
      %203 = arith.addf %198, %202 : f32
      %c0_61 = arith.constant 0 : index
      %204 = memref.load %arg17[%c0_61] : memref<4xf32, #tpu.memory_space<smem>>
      memref.store %203, %arg17[%c0_61] : memref<4xf32, #tpu.memory_space<smem>>
      %c1_62 = arith.constant 1 : index
      %205 = memref.load %arg13[%c1_62] : memref<31xf32, #tpu.memory_space<smem>>
      %cst_63 = arith.constant 0.0333333351 : f32
      %206 = vector.broadcast %cst_63 : f32 to vector<8x32xf32>
      %207 = arith.cmpf oge, %139, %206 : vector<8x32xf32>
      %208 = arith.extui %207 : vector<8x32xi1> to vector<8x32xi32>
      %209 = arith.sitofp %208 : vector<8x32xi32> to vector<8x32xf32>
      %210 = vector.shape_cast %209 : vector<8x32xf32> to vector<1x8x32xf32>
      %cst_64 = arith.constant dense<0.000000e+00> : vector<1xf32>
      %211 = vector.multi_reduction <add>, %210, %cst_64 [1, 2] : vector<1x8x32xf32> to vector<1xf32>
      %212 = vector.shape_cast %211 : vector<1xf32> to vector<1x1x1xf32>
      %213 = vector.extract %212[0, 0, 0] : f32 from vector<1x1x1xf32>
      %214 = arith.addf %205, %213 : f32
      %c1_65 = arith.constant 1 : index
      %215 = memref.load %arg13[%c1_65] : memref<31xf32, #tpu.memory_space<smem>>
      memref.store %214, %arg13[%c1_65] : memref<31xf32, #tpu.memory_space<smem>>
      %c2_66 = arith.constant 2 : index
      %216 = memref.load %arg13[%c2_66] : memref<31xf32, #tpu.memory_space<smem>>
      %cst_67 = arith.constant 0.0666666701 : f32
      %217 = vector.broadcast %cst_67 : f32 to vector<8x32xf32>
      %218 = arith.cmpf oge, %139, %217 : vector<8x32xf32>
      %219 = arith.extui %218 : vector<8x32xi1> to vector<8x32xi32>
      %220 = arith.sitofp %219 : vector<8x32xi32> to vector<8x32xf32>
      %221 = vector.shape_cast %220 : vector<8x32xf32> to vector<1x8x32xf32>
      %cst_68 = arith.constant dense<0.000000e+00> : vector<1xf32>
      %222 = vector.multi_reduction <add>, %221, %cst_68 [1, 2] : vector<1x8x32xf32> to vector<1xf32>
      %223 = vector.shape_cast %222 : vector<1xf32> to vector<1x1x1xf32>
      %224 = vector.extract %223[0, 0, 0] : f32 from vector<1x1x1xf32>
      %225 = arith.addf %216, %224 : f32
      %c2_69 = arith.constant 2 : index
      %226 = memref.load %arg13[%c2_69] : memref<31xf32, #tpu.memory_space<smem>>
      memref.store %225, %arg13[%c2_69] : memref<31xf32, #tpu.memory_space<smem>>
      %c3_70 = arith.constant 3 : index
      %227 = memref.load %arg13[%c3_70] : memref<31xf32, #tpu.memory_space<smem>>
      %cst_71 = arith.constant 1.000000e-01 : f32
      %228 = vector.broadcast %cst_71 : f32 to vector<8x32xf32>
      %229 = arith.cmpf oge, %139, %228 : vector<8x32xf32>
      %230 = arith.extui %229 : vector<8x32xi1> to vector<8x32xi32>
      %231 = arith.sitofp %230 : vector<8x32xi32> to vector<8x32xf32>
      %232 = vector.shape_cast %231 : vector<8x32xf32> to vector<1x8x32xf32>
      %cst_72 = arith.constant dense<0.000000e+00> : vector<1xf32>
      %233 = vector.multi_reduction <add>, %232, %cst_72 [1, 2] : vector<1x8x32xf32> to vector<1xf32>
      %234 = vector.shape_cast %233 : vector<1xf32> to vector<1x1x1xf32>
      %235 = vector.extract %234[0, 0, 0] : f32 from vector<1x1x1xf32>
      %236 = arith.addf %227, %235 : f32
      %c3_73 = arith.constant 3 : index
      %237 = memref.load %arg13[%c3_73] : memref<31xf32, #tpu.memory_space<smem>>
      memref.store %236, %arg13[%c3_73] : memref<31xf32, #tpu.memory_space<smem>>
      %c4 = arith.constant 4 : index
      %238 = memref.load %arg13[%c4] : memref<31xf32, #tpu.memory_space<smem>>
      %cst_74 = arith.constant 0.13333334 : f32
      %239 = vector.broadcast %cst_74 : f32 to vector<8x32xf32>
      %240 = arith.cmpf oge, %139, %239 : vector<8x32xf32>
      %241 = arith.extui %240 : vector<8x32xi1> to vector<8x32xi32>
      %242 = arith.sitofp %241 : vector<8x32xi32> to vector<8x32xf32>
      %243 = vector.shape_cast %242 : vector<8x32xf32> to vector<1x8x32xf32>
      %cst_75 = arith.constant dense<0.000000e+00> : vector<1xf32>
      %244 = vector.multi_reduction <add>, %243, %cst_75 [1, 2] : vector<1x8x32xf32> to vector<1xf32>
      %245 = vector.shape_cast %244 : vector<1xf32> to vector<1x1x1xf32>
      %246 = vector.extract %245[0, 0, 0] : f32 from vector<1x1x1xf32>
      %247 = arith.addf %238, %246 : f32
      %c4_76 = arith.constant 4 : index
      %248 = memref.load %arg13[%c4_76] : memref<31xf32, #tpu.memory_space<smem>>
      memref.store %247, %arg13[%c4_76] : memref<31xf32, #tpu.memory_space<smem>>
      %c5 = arith.constant 5 : index
      %249 = memref.load %arg13[%c5] : memref<31xf32, #tpu.memory_space<smem>>
      %cst_77 = arith.constant 0.166666672 : f32
      %250 = vector.broadcast %cst_77 : f32 to vector<8x32xf32>
      %251 = arith.cmpf oge, %139, %250 : vector<8x32xf32>
      %252 = arith.extui %251 : vector<8x32xi1> to vector<8x32xi32>
      %253 = arith.sitofp %252 : vector<8x32xi32> to vector<8x32xf32>
      %254 = vector.shape_cast %253 : vector<8x32xf32> to vector<1x8x32xf32>
      %cst_78 = arith.constant dense<0.000000e+00> : vector<1xf32>
      %255 = vector.multi_reduction <add>, %254, %cst_78 [1, 2] : vector<1x8x32xf32> to vector<1xf32>
      %256 = vector.shape_cast %255 : vector<1xf32> to vector<1x1x1xf32>
      %257 = vector.extract %256[0, 0, 0] : f32 from vector<1x1x1xf32>
      %258 = arith.addf %249, %257 : f32
      %c5_79 = arith.constant 5 : index
      %259 = memref.load %arg13[%c5_79] : memref<31xf32, #tpu.memory_space<smem>>
      memref.store %258, %arg13[%c5_79] : memref<31xf32, #tpu.memory_space<smem>>
      %c6 = arith.constant 6 : index
      %260 = memref.load %arg13[%c6] : memref<31xf32, #tpu.memory_space<smem>>
      %cst_80 = arith.constant 2.000000e-01 : f32
      %261 = vector.broadcast %cst_80 : f32 to vector<8x32xf32>
      %262 = arith.cmpf oge, %139, %261 : vector<8x32xf32>
      %263 = arith.extui %262 : vector<8x32xi1> to vector<8x32xi32>
      %264 = arith.sitofp %263 : vector<8x32xi32> to vector<8x32xf32>
      %265 = vector.shape_cast %264 : vector<8x32xf32> to vector<1x8x32xf32>
      %cst_81 = arith.constant dense<0.000000e+00> : vector<1xf32>
      %266 = vector.multi_reduction <add>, %265, %cst_81 [1, 2] : vector<1x8x32xf32> to vector<1xf32>
      %267 = vector.shape_cast %266 : vector<1xf32> to vector<1x1x1xf32>
      %268 = vector.extract %267[0, 0, 0] : f32 from vector<1x1x1xf32>
      %269 = arith.addf %260, %268 : f32
      %c6_82 = arith.constant 6 : index
      %270 = memref.load %arg13[%c6_82] : memref<31xf32, #tpu.memory_space<smem>>
      memref.store %269, %arg13[%c6_82] : memref<31xf32, #tpu.memory_space<smem>>
      %c7 = arith.constant 7 : index
      %271 = memref.load %arg13[%c7] : memref<31xf32, #tpu.memory_space<smem>>
      %cst_83 = arith.constant 0.233333334 : f32
      %272 = vector.broadcast %cst_83 : f32 to vector<8x32xf32>
      %273 = arith.cmpf oge, %139, %272 : vector<8x32xf32>
      %274 = arith.extui %273 : vector<8x32xi1> to vector<8x32xi32>
      %275 = arith.sitofp %274 : vector<8x32xi32> to vector<8x32xf32>
      %276 = vector.shape_cast %275 : vector<8x32xf32> to vector<1x8x32xf32>
      %cst_84 = arith.constant dense<0.000000e+00> : vector<1xf32>
      %277 = vector.multi_reduction <add>, %276, %cst_84 [1, 2] : vector<1x8x32xf32> to vector<1xf32>
      %278 = vector.shape_cast %277 : vector<1xf32> to vector<1x1x1xf32>
      %279 = vector.extract %278[0, 0, 0] : f32 from vector<1x1x1xf32>
      %280 = arith.addf %271, %279 : f32
      %c7_85 = arith.constant 7 : index
      %281 = memref.load %arg13[%c7_85] : memref<31xf32, #tpu.memory_space<smem>>
      memref.store %280, %arg13[%c7_85] : memref<31xf32, #tpu.memory_space<smem>>
      %c8 = arith.constant 8 : index
      %282 = memref.load %arg13[%c8] : memref<31xf32, #tpu.memory_space<smem>>
      %cst_86 = arith.constant 0.266666681 : f32
      %283 = vector.broadcast %cst_86 : f32 to vector<8x32xf32>
      %284 = arith.cmpf oge, %139, %283 : vector<8x32xf32>
      %285 = arith.extui %284 : vector<8x32xi1> to vector<8x32xi32>
      %286 = arith.sitofp %285 : vector<8x32xi32> to vector<8x32xf32>
      %287 = vector.shape_cast %286 : vector<8x32xf32> to vector<1x8x32xf32>
      %cst_87 = arith.constant dense<0.000000e+00> : vector<1xf32>
      %288 = vector.multi_reduction <add>, %287, %cst_87 [1, 2] : vector<1x8x32xf32> to vector<1xf32>
      %289 = vector.shape_cast %288 : vector<1xf32> to vector<1x1x1xf32>
      %290 = vector.extract %289[0, 0, 0] : f32 from vector<1x1x1xf32>
      %291 = arith.addf %282, %290 : f32
      %c8_88 = arith.constant 8 : index
      %292 = memref.load %arg13[%c8_88] : memref<31xf32, #tpu.memory_space<smem>>
      memref.store %291, %arg13[%c8_88] : memref<31xf32, #tpu.memory_space<smem>>
      %c9 = arith.constant 9 : index
      %293 = memref.load %arg13[%c9] : memref<31xf32, #tpu.memory_space<smem>>
      %cst_89 = arith.constant 3.000000e-01 : f32
      %294 = vector.broadcast %cst_89 : f32 to vector<8x32xf32>
      %295 = arith.cmpf oge, %139, %294 : vector<8x32xf32>
      %296 = arith.extui %295 : vector<8x32xi1> to vector<8x32xi32>
      %297 = arith.sitofp %296 : vector<8x32xi32> to vector<8x32xf32>
      %298 = vector.shape_cast %297 : vector<8x32xf32> to vector<1x8x32xf32>
      %cst_90 = arith.constant dense<0.000000e+00> : vector<1xf32>
      %299 = vector.multi_reduction <add>, %298, %cst_90 [1, 2] : vector<1x8x32xf32> to vector<1xf32>
      %300 = vector.shape_cast %299 : vector<1xf32> to vector<1x1x1xf32>
      %301 = vector.extract %300[0, 0, 0] : f32 from vector<1x1x1xf32>
      %302 = arith.addf %293, %301 : f32
      %c9_91 = arith.constant 9 : index
      %303 = memref.load %arg13[%c9_91] : memref<31xf32, #tpu.memory_space<smem>>
      memref.store %302, %arg13[%c9_91] : memref<31xf32, #tpu.memory_space<smem>>
      %c10 = arith.constant 10 : index
      %304 = memref.load %arg13[%c10] : memref<31xf32, #tpu.memory_space<smem>>
      %cst_92 = arith.constant 0.333333343 : f32
      %305 = vector.broadcast %cst_92 : f32 to vector<8x32xf32>
      %306 = arith.cmpf oge, %139, %305 : vector<8x32xf32>
      %307 = arith.extui %306 : vector<8x32xi1> to vector<8x32xi32>
      %308 = arith.sitofp %307 : vector<8x32xi32> to vector<8x32xf32>
      %309 = vector.shape_cast %308 : vector<8x32xf32> to vector<1x8x32xf32>
      %cst_93 = arith.constant dense<0.000000e+00> : vector<1xf32>
      %310 = vector.multi_reduction <add>, %309, %cst_93 [1, 2] : vector<1x8x32xf32> to vector<1xf32>
      %311 = vector.shape_cast %310 : vector<1xf32> to vector<1x1x1xf32>
      %312 = vector.extract %311[0, 0, 0] : f32 from vector<1x1x1xf32>
      %313 = arith.addf %304, %312 : f32
      %c10_94 = arith.constant 10 : index
      %314 = memref.load %arg13[%c10_94] : memref<31xf32, #tpu.memory_space<smem>>
      memref.store %313, %arg13[%c10_94] : memref<31xf32, #tpu.memory_space<smem>>
      %c11 = arith.constant 11 : index
      %315 = memref.load %arg13[%c11] : memref<31xf32, #tpu.memory_space<smem>>
      %cst_95 = arith.constant 0.366666675 : f32
      %316 = vector.broadcast %cst_95 : f32 to vector<8x32xf32>
      %317 = arith.cmpf oge, %139, %316 : vector<8x32xf32>
      %318 = arith.extui %317 : vector<8x32xi1> to vector<8x32xi32>
      %319 = arith.sitofp %318 : vector<8x32xi32> to vector<8x32xf32>
      %320 = vector.shape_cast %319 : vector<8x32xf32> to vector<1x8x32xf32>
      %cst_96 = arith.constant dense<0.000000e+00> : vector<1xf32>
      %321 = vector.multi_reduction <add>, %320, %cst_96 [1, 2] : vector<1x8x32xf32> to vector<1xf32>
      %322 = vector.shape_cast %321 : vector<1xf32> to vector<1x1x1xf32>
      %323 = vector.extract %322[0, 0, 0] : f32 from vector<1x1x1xf32>
      %324 = arith.addf %315, %323 : f32
      %c11_97 = arith.constant 11 : index
      %325 = memref.load %arg13[%c11_97] : memref<31xf32, #tpu.memory_space<smem>>
      memref.store %324, %arg13[%c11_97] : memref<31xf32, #tpu.memory_space<smem>>
      %c12 = arith.constant 12 : index
      %326 = memref.load %arg13[%c12] : memref<31xf32, #tpu.memory_space<smem>>
      %cst_98 = arith.constant 4.000000e-01 : f32
      %327 = vector.broadcast %cst_98 : f32 to vector<8x32xf32>
      %328 = arith.cmpf oge, %139, %327 : vector<8x32xf32>
      %329 = arith.extui %328 : vector<8x32xi1> to vector<8x32xi32>
      %330 = arith.sitofp %329 : vector<8x32xi32> to vector<8x32xf32>
      %331 = vector.shape_cast %330 : vector<8x32xf32> to vector<1x8x32xf32>
      %cst_99 = arith.constant dense<0.000000e+00> : vector<1xf32>
      %332 = vector.multi_reduction <add>, %331, %cst_99 [1, 2] : vector<1x8x32xf32> to vector<1xf32>
      %333 = vector.shape_cast %332 : vector<1xf32> to vector<1x1x1xf32>
      %334 = vector.extract %333[0, 0, 0] : f32 from vector<1x1x1xf32>
      %335 = arith.addf %326, %334 : f32
      %c12_100 = arith.constant 12 : index
      %336 = memref.load %arg13[%c12_100] : memref<31xf32, #tpu.memory_space<smem>>
      memref.store %335, %arg13[%c12_100] : memref<31xf32, #tpu.memory_space<smem>>
      %c13 = arith.constant 13 : index
      %337 = memref.load %arg13[%c13] : memref<31xf32, #tpu.memory_space<smem>>
      %cst_101 = arith.constant 0.433333337 : f32
      %338 = vector.broadcast %cst_101 : f32 to vector<8x32xf32>
      %339 = arith.cmpf oge, %139, %338 : vector<8x32xf32>
      %340 = arith.extui %339 : vector<8x32xi1> to vector<8x32xi32>
      %341 = arith.sitofp %340 : vector<8x32xi32> to vector<8x32xf32>
      %342 = vector.shape_cast %341 : vector<8x32xf32> to vector<1x8x32xf32>
      %cst_102 = arith.constant dense<0.000000e+00> : vector<1xf32>
      %343 = vector.multi_reduction <add>, %342, %cst_102 [1, 2] : vector<1x8x32xf32> to vector<1xf32>
      %344 = vector.shape_cast %343 : vector<1xf32> to vector<1x1x1xf32>
      %345 = vector.extract %344[0, 0, 0] : f32 from vector<1x1x1xf32>
      %346 = arith.addf %337, %345 : f32
      %c13_103 = arith.constant 13 : index
      %347 = memref.load %arg13[%c13_103] : memref<31xf32, #tpu.memory_space<smem>>
      memref.store %346, %arg13[%c13_103] : memref<31xf32, #tpu.memory_space<smem>>
      %c14 = arith.constant 14 : index
      %348 = memref.load %arg13[%c14] : memref<31xf32, #tpu.memory_space<smem>>
      %cst_104 = arith.constant 0.466666669 : f32
      %349 = vector.broadcast %cst_104 : f32 to vector<8x32xf32>
      %350 = arith.cmpf oge, %139, %349 : vector<8x32xf32>
      %351 = arith.extui %350 : vector<8x32xi1> to vector<8x32xi32>
      %352 = arith.sitofp %351 : vector<8x32xi32> to vector<8x32xf32>
      %353 = vector.shape_cast %352 : vector<8x32xf32> to vector<1x8x32xf32>
      %cst_105 = arith.constant dense<0.000000e+00> : vector<1xf32>
      %354 = vector.multi_reduction <add>, %353, %cst_105 [1, 2] : vector<1x8x32xf32> to vector<1xf32>
      %355 = vector.shape_cast %354 : vector<1xf32> to vector<1x1x1xf32>
      %356 = vector.extract %355[0, 0, 0] : f32 from vector<1x1x1xf32>
      %357 = arith.addf %348, %356 : f32
      %c14_106 = arith.constant 14 : index
      %358 = memref.load %arg13[%c14_106] : memref<31xf32, #tpu.memory_space<smem>>
      memref.store %357, %arg13[%c14_106] : memref<31xf32, #tpu.memory_space<smem>>
      %c15 = arith.constant 15 : index
      %359 = memref.load %arg13[%c15] : memref<31xf32, #tpu.memory_space<smem>>
      %cst_107 = arith.constant 5.000000e-01 : f32
      %360 = vector.broadcast %cst_107 : f32 to vector<8x32xf32>
      %361 = arith.cmpf oge, %139, %360 : vector<8x32xf32>
      %362 = arith.extui %361 : vector<8x32xi1> to vector<8x32xi32>
      %363 = arith.sitofp %362 : vector<8x32xi32> to vector<8x32xf32>
      %364 = vector.shape_cast %363 : vector<8x32xf32> to vector<1x8x32xf32>
      %cst_108 = arith.constant dense<0.000000e+00> : vector<1xf32>
      %365 = vector.multi_reduction <add>, %364, %cst_108 [1, 2] : vector<1x8x32xf32> to vector<1xf32>
      %366 = vector.shape_cast %365 : vector<1xf32> to vector<1x1x1xf32>
      %367 = vector.extract %366[0, 0, 0] : f32 from vector<1x1x1xf32>
      %368 = arith.addf %359, %367 : f32
      %c15_109 = arith.constant 15 : index
      %369 = memref.load %arg13[%c15_109] : memref<31xf32, #tpu.memory_space<smem>>
      memref.store %368, %arg13[%c15_109] : memref<31xf32, #tpu.memory_space<smem>>
      %c16 = arith.constant 16 : index
      %370 = memref.load %arg13[%c16] : memref<31xf32, #tpu.memory_space<smem>>
      %cst_110 = arith.constant 0.533333361 : f32
      %371 = vector.broadcast %cst_110 : f32 to vector<8x32xf32>
      %372 = arith.cmpf oge, %139, %371 : vector<8x32xf32>
      %373 = arith.extui %372 : vector<8x32xi1> to vector<8x32xi32>
      %374 = arith.sitofp %373 : vector<8x32xi32> to vector<8x32xf32>
      %375 = vector.shape_cast %374 : vector<8x32xf32> to vector<1x8x32xf32>
      %cst_111 = arith.constant dense<0.000000e+00> : vector<1xf32>
      %376 = vector.multi_reduction <add>, %375, %cst_111 [1, 2] : vector<1x8x32xf32> to vector<1xf32>
      %377 = vector.shape_cast %376 : vector<1xf32> to vector<1x1x1xf32>
      %378 = vector.extract %377[0, 0, 0] : f32 from vector<1x1x1xf32>
      %379 = arith.addf %370, %378 : f32
      %c16_112 = arith.constant 16 : index
      %380 = memref.load %arg13[%c16_112] : memref<31xf32, #tpu.memory_space<smem>>
      memref.store %379, %arg13[%c16_112] : memref<31xf32, #tpu.memory_space<smem>>
      %c17 = arith.constant 17 : index
      %381 = memref.load %arg13[%c17] : memref<31xf32, #tpu.memory_space<smem>>
      %cst_113 = arith.constant 0.566666663 : f32
      %382 = vector.broadcast %cst_113 : f32 to vector<8x32xf32>
      %383 = arith.cmpf oge, %139, %382 : vector<8x32xf32>
      %384 = arith.extui %383 : vector<8x32xi1> to vector<8x32xi32>
      %385 = arith.sitofp %384 : vector<8x32xi32> to vector<8x32xf32>
      %386 = vector.shape_cast %385 : vector<8x32xf32> to vector<1x8x32xf32>
      %cst_114 = arith.constant dense<0.000000e+00> : vector<1xf32>
      %387 = vector.multi_reduction <add>, %386, %cst_114 [1, 2] : vector<1x8x32xf32> to vector<1xf32>
      %388 = vector.shape_cast %387 : vector<1xf32> to vector<1x1x1xf32>
      %389 = vector.extract %388[0, 0, 0] : f32 from vector<1x1x1xf32>
      %390 = arith.addf %381, %389 : f32
      %c17_115 = arith.constant 17 : index
      %391 = memref.load %arg13[%c17_115] : memref<31xf32, #tpu.memory_space<smem>>
      memref.store %390, %arg13[%c17_115] : memref<31xf32, #tpu.memory_space<smem>>
      %c18 = arith.constant 18 : index
      %392 = memref.load %arg13[%c18] : memref<31xf32, #tpu.memory_space<smem>>
      %cst_116 = arith.constant 6.000000e-01 : f32
      %393 = vector.broadcast %cst_116 : f32 to vector<8x32xf32>
      %394 = arith.cmpf oge, %139, %393 : vector<8x32xf32>
      %395 = arith.extui %394 : vector<8x32xi1> to vector<8x32xi32>
      %396 = arith.sitofp %395 : vector<8x32xi32> to vector<8x32xf32>
      %397 = vector.shape_cast %396 : vector<8x32xf32> to vector<1x8x32xf32>
      %cst_117 = arith.constant dense<0.000000e+00> : vector<1xf32>
      %398 = vector.multi_reduction <add>, %397, %cst_117 [1, 2] : vector<1x8x32xf32> to vector<1xf32>
      %399 = vector.shape_cast %398 : vector<1xf32> to vector<1x1x1xf32>
      %400 = vector.extract %399[0, 0, 0] : f32 from vector<1x1x1xf32>
      %401 = arith.addf %392, %400 : f32
      %c18_118 = arith.constant 18 : index
      %402 = memref.load %arg13[%c18_118] : memref<31xf32, #tpu.memory_space<smem>>
      memref.store %401, %arg13[%c18_118] : memref<31xf32, #tpu.memory_space<smem>>
      %c19 = arith.constant 19 : index
      %403 = memref.load %arg13[%c19] : memref<31xf32, #tpu.memory_space<smem>>
      %cst_119 = arith.constant 0.633333325 : f32
      %404 = vector.broadcast %cst_119 : f32 to vector<8x32xf32>
      %405 = arith.cmpf oge, %139, %404 : vector<8x32xf32>
      %406 = arith.extui %405 : vector<8x32xi1> to vector<8x32xi32>
      %407 = arith.sitofp %406 : vector<8x32xi32> to vector<8x32xf32>
      %408 = vector.shape_cast %407 : vector<8x32xf32> to vector<1x8x32xf32>
      %cst_120 = arith.constant dense<0.000000e+00> : vector<1xf32>
      %409 = vector.multi_reduction <add>, %408, %cst_120 [1, 2] : vector<1x8x32xf32> to vector<1xf32>
      %410 = vector.shape_cast %409 : vector<1xf32> to vector<1x1x1xf32>
      %411 = vector.extract %410[0, 0, 0] : f32 from vector<1x1x1xf32>
      %412 = arith.addf %403, %411 : f32
      %c19_121 = arith.constant 19 : index
      %413 = memref.load %arg13[%c19_121] : memref<31xf32, #tpu.memory_space<smem>>
      memref.store %412, %arg13[%c19_121] : memref<31xf32, #tpu.memory_space<smem>>
      %c20 = arith.constant 20 : index
      %414 = memref.load %arg13[%c20] : memref<31xf32, #tpu.memory_space<smem>>
      %cst_122 = arith.constant 0.666666686 : f32
      %415 = vector.broadcast %cst_122 : f32 to vector<8x32xf32>
      %416 = arith.cmpf oge, %139, %415 : vector<8x32xf32>
      %417 = arith.extui %416 : vector<8x32xi1> to vector<8x32xi32>
      %418 = arith.sitofp %417 : vector<8x32xi32> to vector<8x32xf32>
      %419 = vector.shape_cast %418 : vector<8x32xf32> to vector<1x8x32xf32>
      %cst_123 = arith.constant dense<0.000000e+00> : vector<1xf32>
      %420 = vector.multi_reduction <add>, %419, %cst_123 [1, 2] : vector<1x8x32xf32> to vector<1xf32>
      %421 = vector.shape_cast %420 : vector<1xf32> to vector<1x1x1xf32>
      %422 = vector.extract %421[0, 0, 0] : f32 from vector<1x1x1xf32>
      %423 = arith.addf %414, %422 : f32
      %c20_124 = arith.constant 20 : index
      %424 = memref.load %arg13[%c20_124] : memref<31xf32, #tpu.memory_space<smem>>
      memref.store %423, %arg13[%c20_124] : memref<31xf32, #tpu.memory_space<smem>>
      %c21 = arith.constant 21 : index
      %425 = memref.load %arg13[%c21] : memref<31xf32, #tpu.memory_space<smem>>
      %cst_125 = arith.constant 0.699999988 : f32
      %426 = vector.broadcast %cst_125 : f32 to vector<8x32xf32>
      %427 = arith.cmpf oge, %139, %426 : vector<8x32xf32>
      %428 = arith.extui %427 : vector<8x32xi1> to vector<8x32xi32>
      %429 = arith.sitofp %428 : vector<8x32xi32> to vector<8x32xf32>
      %430 = vector.shape_cast %429 : vector<8x32xf32> to vector<1x8x32xf32>
      %cst_126 = arith.constant dense<0.000000e+00> : vector<1xf32>
      %431 = vector.multi_reduction <add>, %430, %cst_126 [1, 2] : vector<1x8x32xf32> to vector<1xf32>
      %432 = vector.shape_cast %431 : vector<1xf32> to vector<1x1x1xf32>
      %433 = vector.extract %432[0, 0, 0] : f32 from vector<1x1x1xf32>
      %434 = arith.addf %425, %433 : f32
      %c21_127 = arith.constant 21 : index
      %435 = memref.load %arg13[%c21_127] : memref<31xf32, #tpu.memory_space<smem>>
      memref.store %434, %arg13[%c21_127] : memref<31xf32, #tpu.memory_space<smem>>
      %c22 = arith.constant 22 : index
      %436 = memref.load %arg13[%c22] : memref<31xf32, #tpu.memory_space<smem>>
      %cst_128 = arith.constant 0.733333349 : f32
      %437 = vector.broadcast %cst_128 : f32 to vector<8x32xf32>
      %438 = arith.cmpf oge, %139, %437 : vector<8x32xf32>
      %439 = arith.extui %438 : vector<8x32xi1> to vector<8x32xi32>
      %440 = arith.sitofp %439 : vector<8x32xi32> to vector<8x32xf32>
      %441 = vector.shape_cast %440 : vector<8x32xf32> to vector<1x8x32xf32>
      %cst_129 = arith.constant dense<0.000000e+00> : vector<1xf32>
      %442 = vector.multi_reduction <add>, %441, %cst_129 [1, 2] : vector<1x8x32xf32> to vector<1xf32>
      %443 = vector.shape_cast %442 : vector<1xf32> to vector<1x1x1xf32>
      %444 = vector.extract %443[0, 0, 0] : f32 from vector<1x1x1xf32>
      %445 = arith.addf %436, %444 : f32
      %c22_130 = arith.constant 22 : index
      %446 = memref.load %arg13[%c22_130] : memref<31xf32, #tpu.memory_space<smem>>
      memref.store %445, %arg13[%c22_130] : memref<31xf32, #tpu.memory_space<smem>>
      %c23 = arith.constant 23 : index
      %447 = memref.load %arg13[%c23] : memref<31xf32, #tpu.memory_space<smem>>
      %cst_131 = arith.constant 0.766666651 : f32
      %448 = vector.broadcast %cst_131 : f32 to vector<8x32xf32>
      %449 = arith.cmpf oge, %139, %448 : vector<8x32xf32>
      %450 = arith.extui %449 : vector<8x32xi1> to vector<8x32xi32>
      %451 = arith.sitofp %450 : vector<8x32xi32> to vector<8x32xf32>
      %452 = vector.shape_cast %451 : vector<8x32xf32> to vector<1x8x32xf32>
      %cst_132 = arith.constant dense<0.000000e+00> : vector<1xf32>
      %453 = vector.multi_reduction <add>, %452, %cst_132 [1, 2] : vector<1x8x32xf32> to vector<1xf32>
      %454 = vector.shape_cast %453 : vector<1xf32> to vector<1x1x1xf32>
      %455 = vector.extract %454[0, 0, 0] : f32 from vector<1x1x1xf32>
      %456 = arith.addf %447, %455 : f32
      %c23_133 = arith.constant 23 : index
      %457 = memref.load %arg13[%c23_133] : memref<31xf32, #tpu.memory_space<smem>>
      memref.store %456, %arg13[%c23_133] : memref<31xf32, #tpu.memory_space<smem>>
      %c24 = arith.constant 24 : index
      %458 = memref.load %arg13[%c24] : memref<31xf32, #tpu.memory_space<smem>>
      %cst_134 = arith.constant 8.000000e-01 : f32
      %459 = vector.broadcast %cst_134 : f32 to vector<8x32xf32>
      %460 = arith.cmpf oge, %139, %459 : vector<8x32xf32>
      %461 = arith.extui %460 : vector<8x32xi1> to vector<8x32xi32>
      %462 = arith.sitofp %461 : vector<8x32xi32> to vector<8x32xf32>
      %463 = vector.shape_cast %462 : vector<8x32xf32> to vector<1x8x32xf32>
      %cst_135 = arith.constant dense<0.000000e+00> : vector<1xf32>
      %464 = vector.multi_reduction <add>, %463, %cst_135 [1, 2] : vector<1x8x32xf32> to vector<1xf32>
      %465 = vector.shape_cast %464 : vector<1xf32> to vector<1x1x1xf32>
      %466 = vector.extract %465[0, 0, 0] : f32 from vector<1x1x1xf32>
      %467 = arith.addf %458, %466 : f32
      %c24_136 = arith.constant 24 : index
      %468 = memref.load %arg13[%c24_136] : memref<31xf32, #tpu.memory_space<smem>>
      memref.store %467, %arg13[%c24_136] : memref<31xf32, #tpu.memory_space<smem>>
      %c25 = arith.constant 25 : index
      %469 = memref.load %arg13[%c25] : memref<31xf32, #tpu.memory_space<smem>>
      %cst_137 = arith.constant 0.833333313 : f32
      %470 = vector.broadcast %cst_137 : f32 to vector<8x32xf32>
      %471 = arith.cmpf oge, %139, %470 : vector<8x32xf32>
      %472 = arith.extui %471 : vector<8x32xi1> to vector<8x32xi32>
      %473 = arith.sitofp %472 : vector<8x32xi32> to vector<8x32xf32>
      %474 = vector.shape_cast %473 : vector<8x32xf32> to vector<1x8x32xf32>
      %cst_138 = arith.constant dense<0.000000e+00> : vector<1xf32>
      %475 = vector.multi_reduction <add>, %474, %cst_138 [1, 2] : vector<1x8x32xf32> to vector<1xf32>
      %476 = vector.shape_cast %475 : vector<1xf32> to vector<1x1x1xf32>
      %477 = vector.extract %476[0, 0, 0] : f32 from vector<1x1x1xf32>
      %478 = arith.addf %469, %477 : f32
      %c25_139 = arith.constant 25 : index
      %479 = memref.load %arg13[%c25_139] : memref<31xf32, #tpu.memory_space<smem>>
      memref.store %478, %arg13[%c25_139] : memref<31xf32, #tpu.memory_space<smem>>
      %c26 = arith.constant 26 : index
      %480 = memref.load %arg13[%c26] : memref<31xf32, #tpu.memory_space<smem>>
      %cst_140 = arith.constant 0.866666674 : f32
      %481 = vector.broadcast %cst_140 : f32 to vector<8x32xf32>
      %482 = arith.cmpf oge, %139, %481 : vector<8x32xf32>
      %483 = arith.extui %482 : vector<8x32xi1> to vector<8x32xi32>
      %484 = arith.sitofp %483 : vector<8x32xi32> to vector<8x32xf32>
      %485 = vector.shape_cast %484 : vector<8x32xf32> to vector<1x8x32xf32>
      %cst_141 = arith.constant dense<0.000000e+00> : vector<1xf32>
      %486 = vector.multi_reduction <add>, %485, %cst_141 [1, 2] : vector<1x8x32xf32> to vector<1xf32>
      %487 = vector.shape_cast %486 : vector<1xf32> to vector<1x1x1xf32>
      %488 = vector.extract %487[0, 0, 0] : f32 from vector<1x1x1xf32>
      %489 = arith.addf %480, %488 : f32
      %c26_142 = arith.constant 26 : index
      %490 = memref.load %arg13[%c26_142] : memref<31xf32, #tpu.memory_space<smem>>
      memref.store %489, %arg13[%c26_142] : memref<31xf32, #tpu.memory_space<smem>>
      %c27 = arith.constant 27 : index
      %491 = memref.load %arg13[%c27] : memref<31xf32, #tpu.memory_space<smem>>
      %cst_143 = arith.constant 0.899999976 : f32
      %492 = vector.broadcast %cst_143 : f32 to vector<8x32xf32>
      %493 = arith.cmpf oge, %139, %492 : vector<8x32xf32>
      %494 = arith.extui %493 : vector<8x32xi1> to vector<8x32xi32>
      %495 = arith.sitofp %494 : vector<8x32xi32> to vector<8x32xf32>
      %496 = vector.shape_cast %495 : vector<8x32xf32> to vector<1x8x32xf32>
      %cst_144 = arith.constant dense<0.000000e+00> : vector<1xf32>
      %497 = vector.multi_reduction <add>, %496, %cst_144 [1, 2] : vector<1x8x32xf32> to vector<1xf32>
      %498 = vector.shape_cast %497 : vector<1xf32> to vector<1x1x1xf32>
      %499 = vector.extract %498[0, 0, 0] : f32 from vector<1x1x1xf32>
      %500 = arith.addf %491, %499 : f32
      %c27_145 = arith.constant 27 : index
      %501 = memref.load %arg13[%c27_145] : memref<31xf32, #tpu.memory_space<smem>>
      memref.store %500, %arg13[%c27_145] : memref<31xf32, #tpu.memory_space<smem>>
      %c28 = arith.constant 28 : index
      %502 = memref.load %arg13[%c28] : memref<31xf32, #tpu.memory_space<smem>>
      %cst_146 = arith.constant 0.933333337 : f32
      %503 = vector.broadcast %cst_146 : f32 to vector<8x32xf32>
      %504 = arith.cmpf oge, %139, %503 : vector<8x32xf32>
      %505 = arith.extui %504 : vector<8x32xi1> to vector<8x32xi32>
      %506 = arith.sitofp %505 : vector<8x32xi32> to vector<8x32xf32>
      %507 = vector.shape_cast %506 : vector<8x32xf32> to vector<1x8x32xf32>
      %cst_147 = arith.constant dense<0.000000e+00> : vector<1xf32>
      %508 = vector.multi_reduction <add>, %507, %cst_147 [1, 2] : vector<1x8x32xf32> to vector<1xf32>
      %509 = vector.shape_cast %508 : vector<1xf32> to vector<1x1x1xf32>
      %510 = vector.extract %509[0, 0, 0] : f32 from vector<1x1x1xf32>
      %511 = arith.addf %502, %510 : f32
      %c28_148 = arith.constant 28 : index
      %512 = memref.load %arg13[%c28_148] : memref<31xf32, #tpu.memory_space<smem>>
      memref.store %511, %arg13[%c28_148] : memref<31xf32, #tpu.memory_space<smem>>
      %c29 = arith.constant 29 : index
      %513 = memref.load %arg13[%c29] : memref<31xf32, #tpu.memory_space<smem>>
      %cst_149 = arith.constant 0.966666638 : f32
      %514 = vector.broadcast %cst_149 : f32 to vector<8x32xf32>
      %515 = arith.cmpf oge, %139, %514 : vector<8x32xf32>
      %516 = arith.extui %515 : vector<8x32xi1> to vector<8x32xi32>
      %517 = arith.sitofp %516 : vector<8x32xi32> to vector<8x32xf32>
      %518 = vector.shape_cast %517 : vector<8x32xf32> to vector<1x8x32xf32>
      %cst_150 = arith.constant dense<0.000000e+00> : vector<1xf32>
      %519 = vector.multi_reduction <add>, %518, %cst_150 [1, 2] : vector<1x8x32xf32> to vector<1xf32>
      %520 = vector.shape_cast %519 : vector<1xf32> to vector<1x1x1xf32>
      %521 = vector.extract %520[0, 0, 0] : f32 from vector<1x1x1xf32>
      %522 = arith.addf %513, %521 : f32
      %c29_151 = arith.constant 29 : index
      %523 = memref.load %arg13[%c29_151] : memref<31xf32, #tpu.memory_space<smem>>
      memref.store %522, %arg13[%c29_151] : memref<31xf32, #tpu.memory_space<smem>>
      %c30 = arith.constant 30 : index
      %524 = memref.load %arg13[%c30] : memref<31xf32, #tpu.memory_space<smem>>
      %cst_152 = arith.constant 1.00000095 : f32
      %525 = vector.broadcast %cst_152 : f32 to vector<8x32xf32>
      %526 = arith.cmpf oge, %139, %525 : vector<8x32xf32>
      %527 = arith.extui %526 : vector<8x32xi1> to vector<8x32xi32>
      %528 = arith.sitofp %527 : vector<8x32xi32> to vector<8x32xf32>
      %529 = vector.shape_cast %528 : vector<8x32xf32> to vector<1x8x32xf32>
      %cst_153 = arith.constant dense<0.000000e+00> : vector<1xf32>
      %530 = vector.multi_reduction <add>, %529, %cst_153 [1, 2] : vector<1x8x32xf32> to vector<1xf32>
      %531 = vector.shape_cast %530 : vector<1xf32> to vector<1x1x1xf32>
      %532 = vector.extract %531[0, 0, 0] : f32 from vector<1x1x1xf32>
      %533 = arith.addf %524, %532 : f32
      %c30_154 = arith.constant 30 : index
      %534 = memref.load %arg13[%c30_154] : memref<31xf32, #tpu.memory_space<smem>>
      memref.store %533, %arg13[%c30_154] : memref<31xf32, #tpu.memory_space<smem>>
      %c1_155 = arith.constant 1 : index
      %535 = memref.load %arg14[%c1_155] : memref<11xf32, #tpu.memory_space<smem>>
      %cst_156 = arith.constant 1.000000e-01 : f32
      %536 = vector.broadcast %cst_156 : f32 to vector<4x32xf32>
      %537 = arith.cmpf oge, %186, %536 : vector<4x32xf32>
      %538 = arith.extui %537 : vector<4x32xi1> to vector<4x32xi32>
      %539 = arith.sitofp %538 : vector<4x32xi32> to vector<4x32xf32>
      %540 = vector.shape_cast %539 : vector<4x32xf32> to vector<1x4x32xf32>
      %cst_157 = arith.constant dense<0.000000e+00> : vector<1xf32>
      %541 = vector.multi_reduction <add>, %540, %cst_157 [1, 2] : vector<1x4x32xf32> to vector<1xf32>
      %542 = vector.shape_cast %541 : vector<1xf32> to vector<1x1x1xf32>
      %543 = vector.extract %542[0, 0, 0] : f32 from vector<1x1x1xf32>
      %544 = arith.addf %535, %543 : f32
      %c1_158 = arith.constant 1 : index
      %545 = memref.load %arg14[%c1_158] : memref<11xf32, #tpu.memory_space<smem>>
      memref.store %544, %arg14[%c1_158] : memref<11xf32, #tpu.memory_space<smem>>
      %c2_159 = arith.constant 2 : index
      %546 = memref.load %arg14[%c2_159] : memref<11xf32, #tpu.memory_space<smem>>
      %cst_160 = arith.constant 2.000000e-01 : f32
      %547 = vector.broadcast %cst_160 : f32 to vector<4x32xf32>
      %548 = arith.cmpf oge, %186, %547 : vector<4x32xf32>
      %549 = arith.extui %548 : vector<4x32xi1> to vector<4x32xi32>
      %550 = arith.sitofp %549 : vector<4x32xi32> to vector<4x32xf32>
      %551 = vector.shape_cast %550 : vector<4x32xf32> to vector<1x4x32xf32>
      %cst_161 = arith.constant dense<0.000000e+00> : vector<1xf32>
      %552 = vector.multi_reduction <add>, %551, %cst_161 [1, 2] : vector<1x4x32xf32> to vector<1xf32>
      %553 = vector.shape_cast %552 : vector<1xf32> to vector<1x1x1xf32>
      %554 = vector.extract %553[0, 0, 0] : f32 from vector<1x1x1xf32>
      %555 = arith.addf %546, %554 : f32
      %c2_162 = arith.constant 2 : index
      %556 = memref.load %arg14[%c2_162] : memref<11xf32, #tpu.memory_space<smem>>
      memref.store %555, %arg14[%c2_162] : memref<11xf32, #tpu.memory_space<smem>>
      %c3_163 = arith.constant 3 : index
      %557 = memref.load %arg14[%c3_163] : memref<11xf32, #tpu.memory_space<smem>>
      %cst_164 = arith.constant 3.000000e-01 : f32
      %558 = vector.broadcast %cst_164 : f32 to vector<4x32xf32>
      %559 = arith.cmpf oge, %186, %558 : vector<4x32xf32>
      %560 = arith.extui %559 : vector<4x32xi1> to vector<4x32xi32>
      %561 = arith.sitofp %560 : vector<4x32xi32> to vector<4x32xf32>
      %562 = vector.shape_cast %561 : vector<4x32xf32> to vector<1x4x32xf32>
      %cst_165 = arith.constant dense<0.000000e+00> : vector<1xf32>
      %563 = vector.multi_reduction <add>, %562, %cst_165 [1, 2] : vector<1x4x32xf32> to vector<1xf32>
      %564 = vector.shape_cast %563 : vector<1xf32> to vector<1x1x1xf32>
      %565 = vector.extract %564[0, 0, 0] : f32 from vector<1x1x1xf32>
      %566 = arith.addf %557, %565 : f32
      %c3_166 = arith.constant 3 : index
      %567 = memref.load %arg14[%c3_166] : memref<11xf32, #tpu.memory_space<smem>>
      memref.store %566, %arg14[%c3_166] : memref<11xf32, #tpu.memory_space<smem>>
      %c4_167 = arith.constant 4 : index
      %568 = memref.load %arg14[%c4_167] : memref<11xf32, #tpu.memory_space<smem>>
      %cst_168 = arith.constant 4.000000e-01 : f32
      %569 = vector.broadcast %cst_168 : f32 to vector<4x32xf32>
      %570 = arith.cmpf oge, %186, %569 : vector<4x32xf32>
      %571 = arith.extui %570 : vector<4x32xi1> to vector<4x32xi32>
      %572 = arith.sitofp %571 : vector<4x32xi32> to vector<4x32xf32>
      %573 = vector.shape_cast %572 : vector<4x32xf32> to vector<1x4x32xf32>
      %cst_169 = arith.constant dense<0.000000e+00> : vector<1xf32>
      %574 = vector.multi_reduction <add>, %573, %cst_169 [1, 2] : vector<1x4x32xf32> to vector<1xf32>
      %575 = vector.shape_cast %574 : vector<1xf32> to vector<1x1x1xf32>
      %576 = vector.extract %575[0, 0, 0] : f32 from vector<1x1x1xf32>
      %577 = arith.addf %568, %576 : f32
      %c4_170 = arith.constant 4 : index
      %578 = memref.load %arg14[%c4_170] : memref<11xf32, #tpu.memory_space<smem>>
      memref.store %577, %arg14[%c4_170] : memref<11xf32, #tpu.memory_space<smem>>
      %c5_171 = arith.constant 5 : index
      %579 = memref.load %arg14[%c5_171] : memref<11xf32, #tpu.memory_space<smem>>
      %cst_172 = arith.constant 5.000000e-01 : f32
      %580 = vector.broadcast %cst_172 : f32 to vector<4x32xf32>
      %581 = arith.cmpf oge, %186, %580 : vector<4x32xf32>
      %582 = arith.extui %581 : vector<4x32xi1> to vector<4x32xi32>
      %583 = arith.sitofp %582 : vector<4x32xi32> to vector<4x32xf32>
      %584 = vector.shape_cast %583 : vector<4x32xf32> to vector<1x4x32xf32>
      %cst_173 = arith.constant dense<0.000000e+00> : vector<1xf32>
      %585 = vector.multi_reduction <add>, %584, %cst_173 [1, 2] : vector<1x4x32xf32> to vector<1xf32>
      %586 = vector.shape_cast %585 : vector<1xf32> to vector<1x1x1xf32>
      %587 = vector.extract %586[0, 0, 0] : f32 from vector<1x1x1xf32>
      %588 = arith.addf %579, %587 : f32
      %c5_174 = arith.constant 5 : index
      %589 = memref.load %arg14[%c5_174] : memref<11xf32, #tpu.memory_space<smem>>
      memref.store %588, %arg14[%c5_174] : memref<11xf32, #tpu.memory_space<smem>>
      %c6_175 = arith.constant 6 : index
      %590 = memref.load %arg14[%c6_175] : memref<11xf32, #tpu.memory_space<smem>>
      %cst_176 = arith.constant 6.000000e-01 : f32
      %591 = vector.broadcast %cst_176 : f32 to vector<4x32xf32>
      %592 = arith.cmpf oge, %186, %591 : vector<4x32xf32>
      %593 = arith.extui %592 : vector<4x32xi1> to vector<4x32xi32>
      %594 = arith.sitofp %593 : vector<4x32xi32> to vector<4x32xf32>
      %595 = vector.shape_cast %594 : vector<4x32xf32> to vector<1x4x32xf32>
      %cst_177 = arith.constant dense<0.000000e+00> : vector<1xf32>
      %596 = vector.multi_reduction <add>, %595, %cst_177 [1, 2] : vector<1x4x32xf32> to vector<1xf32>
      %597 = vector.shape_cast %596 : vector<1xf32> to vector<1x1x1xf32>
      %598 = vector.extract %597[0, 0, 0] : f32 from vector<1x1x1xf32>
      %599 = arith.addf %590, %598 : f32
      %c6_178 = arith.constant 6 : index
      %600 = memref.load %arg14[%c6_178] : memref<11xf32, #tpu.memory_space<smem>>
      memref.store %599, %arg14[%c6_178] : memref<11xf32, #tpu.memory_space<smem>>
      %c7_179 = arith.constant 7 : index
      %601 = memref.load %arg14[%c7_179] : memref<11xf32, #tpu.memory_space<smem>>
      %cst_180 = arith.constant 0.699999988 : f32
      %602 = vector.broadcast %cst_180 : f32 to vector<4x32xf32>
      %603 = arith.cmpf oge, %186, %602 : vector<4x32xf32>
      %604 = arith.extui %603 : vector<4x32xi1> to vector<4x32xi32>
      %605 = arith.sitofp %604 : vector<4x32xi32> to vector<4x32xf32>
      %606 = vector.shape_cast %605 : vector<4x32xf32> to vector<1x4x32xf32>
      %cst_181 = arith.constant dense<0.000000e+00> : vector<1xf32>
      %607 = vector.multi_reduction <add>, %606, %cst_181 [1, 2] : vector<1x4x32xf32> to vector<1xf32>
      %608 = vector.shape_cast %607 : vector<1xf32> to vector<1x1x1xf32>
      %609 = vector.extract %608[0, 0, 0] : f32 from vector<1x1x1xf32>
      %610 = arith.addf %601, %609 : f32
      %c7_182 = arith.constant 7 : index
      %611 = memref.load %arg14[%c7_182] : memref<11xf32, #tpu.memory_space<smem>>
      memref.store %610, %arg14[%c7_182] : memref<11xf32, #tpu.memory_space<smem>>
      %c8_183 = arith.constant 8 : index
      %612 = memref.load %arg14[%c8_183] : memref<11xf32, #tpu.memory_space<smem>>
      %cst_184 = arith.constant 8.000000e-01 : f32
      %613 = vector.broadcast %cst_184 : f32 to vector<4x32xf32>
      %614 = arith.cmpf oge, %186, %613 : vector<4x32xf32>
      %615 = arith.extui %614 : vector<4x32xi1> to vector<4x32xi32>
      %616 = arith.sitofp %615 : vector<4x32xi32> to vector<4x32xf32>
      %617 = vector.shape_cast %616 : vector<4x32xf32> to vector<1x4x32xf32>
      %cst_185 = arith.constant dense<0.000000e+00> : vector<1xf32>
      %618 = vector.multi_reduction <add>, %617, %cst_185 [1, 2] : vector<1x4x32xf32> to vector<1xf32>
      %619 = vector.shape_cast %618 : vector<1xf32> to vector<1x1x1xf32>
      %620 = vector.extract %619[0, 0, 0] : f32 from vector<1x1x1xf32>
      %621 = arith.addf %612, %620 : f32
      %c8_186 = arith.constant 8 : index
      %622 = memref.load %arg14[%c8_186] : memref<11xf32, #tpu.memory_space<smem>>
      memref.store %621, %arg14[%c8_186] : memref<11xf32, #tpu.memory_space<smem>>
      %c9_187 = arith.constant 9 : index
      %623 = memref.load %arg14[%c9_187] : memref<11xf32, #tpu.memory_space<smem>>
      %cst_188 = arith.constant 0.899999976 : f32
      %624 = vector.broadcast %cst_188 : f32 to vector<4x32xf32>
      %625 = arith.cmpf oge, %186, %624 : vector<4x32xf32>
      %626 = arith.extui %625 : vector<4x32xi1> to vector<4x32xi32>
      %627 = arith.sitofp %626 : vector<4x32xi32> to vector<4x32xf32>
      %628 = vector.shape_cast %627 : vector<4x32xf32> to vector<1x4x32xf32>
      %cst_189 = arith.constant dense<0.000000e+00> : vector<1xf32>
      %629 = vector.multi_reduction <add>, %628, %cst_189 [1, 2] : vector<1x4x32xf32> to vector<1xf32>
      %630 = vector.shape_cast %629 : vector<1xf32> to vector<1x1x1xf32>
      %631 = vector.extract %630[0, 0, 0] : f32 from vector<1x1x1xf32>
      %632 = arith.addf %623, %631 : f32
      %c9_190 = arith.constant 9 : index
      %633 = memref.load %arg14[%c9_190] : memref<11xf32, #tpu.memory_space<smem>>
      memref.store %632, %arg14[%c9_190] : memref<11xf32, #tpu.memory_space<smem>>
      %c10_191 = arith.constant 10 : index
      %634 = memref.load %arg14[%c10_191] : memref<11xf32, #tpu.memory_space<smem>>
      %cst_192 = arith.constant 1.000000e+03 : f32
      %635 = vector.broadcast %cst_192 : f32 to vector<4x32xf32>
      %636 = arith.cmpf oge, %186, %635 : vector<4x32xf32>
      %637 = arith.extui %636 : vector<4x32xi1> to vector<4x32xi32>
      %638 = arith.sitofp %637 : vector<4x32xi32> to vector<4x32xf32>
      %639 = vector.shape_cast %638 : vector<4x32xf32> to vector<1x4x32xf32>
      %cst_193 = arith.constant dense<0.000000e+00> : vector<1xf32>
      %640 = vector.multi_reduction <add>, %639, %cst_193 [1, 2] : vector<1x4x32xf32> to vector<1xf32>
      %641 = vector.shape_cast %640 : vector<1xf32> to vector<1x1x1xf32>
      %642 = vector.extract %641[0, 0, 0] : f32 from vector<1x1x1xf32>
      %643 = arith.addf %634, %642 : f32
      %c10_194 = arith.constant 10 : index
      %644 = memref.load %arg14[%c10_194] : memref<11xf32, #tpu.memory_space<smem>>
      memref.store %643, %arg14[%c10_194] : memref<11xf32, #tpu.memory_space<smem>>
      %c0_i32_195 = arith.constant 0 : i32
      %645 = arith.cmpi eq, %arg2, %c0_i32_195 : i32
      %646 = arith.extui %645 : i1 to i32
      %c0_i32_196 = arith.constant 0 : i32
      %647 = arith.cmpi ne, %646, %c0_i32_196 : i32
      scf.if %647 {
        %c0_197 = arith.constant 0 : index
        %648 = memref.load %arg17[%c0_197] : memref<4xf32, #tpu.memory_space<smem>>
        %cst_198 = arith.constant 0.000000e+00 : f32
        %649 = arith.cmpf ogt, %648, %cst_198 : f32
        %650 = arith.andi %39, %649 : i1
        %c1_199 = arith.constant 1 : index
        %651 = memref.load %arg13[%c1_199] : memref<31xf32, #tpu.memory_space<smem>>
        %cst_200 = arith.constant 2.560000e+02 : f32
        %652 = arith.subf %cst_200, %651 : f32
        %cst_201 = arith.constant 0.000000e+00 : f32
        %653 = arith.cmpf ogt, %652, %cst_201 : f32
        %c0_202 = arith.constant 0 : index
        %654 = memref.load %arg11[%c0_202] : memref<30xf32, #tpu.memory_space<smem>>
        %655 = arith.andi %653, %39 : i1
        %cst_203 = arith.constant 7.500000e-01 : f32
        %656 = arith.mulf %cst_203, %654 : f32
        %cst_204 = arith.constant 2.500000e-01 : f32
        %657 = arith.mulf %cst_204, %652 : f32
        %658 = arith.addf %656, %657 : f32
        %659 = arith.select %655, %658, %654 : f32
        %c0_205 = arith.constant 0 : index
        %660 = memref.load %arg11[%c0_205] : memref<30xf32, #tpu.memory_space<smem>>
        memref.store %659, %arg11[%c0_205] : memref<30xf32, #tpu.memory_space<smem>>
        %cst_206 = arith.constant 1.000000e+00 : f32
        %661 = arith.select %653, %659, %cst_206 : f32
        %cst_207 = arith.constant 9.99999996E-13 : f32
        %662 = arith.maximumf %661, %cst_207 : f32
        %cst_208 = arith.constant 2.560000e+02 : f32
        %663 = arith.divf %cst_208, %662 : f32
        %cst_209 = arith.constant 0.000000e+00 : f32
        %664 = arith.select %653, %663, %cst_209 : f32
        %c0_210 = arith.constant 0 : index
        %665 = memref.load %arg15[%c0_210] : memref<30xf32, #tpu.memory_space<smem>>
        memref.store %664, %arg15[%c0_210] : memref<30xf32, #tpu.memory_space<smem>>
        %666 = arith.extui %653 : i1 to i32
        %667 = arith.sitofp %666 : i32 to f32
        %cst_211 = arith.constant 0.000000e+00 : f32
        %668 = arith.addf %cst_211, %667 : f32
        %c2_212 = arith.constant 2 : index
        %669 = memref.load %arg13[%c2_212] : memref<31xf32, #tpu.memory_space<smem>>
        %670 = arith.subf %651, %669 : f32
        %cst_213 = arith.constant 0.000000e+00 : f32
        %671 = arith.cmpf ogt, %670, %cst_213 : f32
        %c1_214 = arith.constant 1 : index
        %672 = memref.load %arg11[%c1_214] : memref<30xf32, #tpu.memory_space<smem>>
        %673 = arith.andi %671, %39 : i1
        %cst_215 = arith.constant 7.500000e-01 : f32
        %674 = arith.mulf %cst_215, %672 : f32
        %cst_216 = arith.constant 2.500000e-01 : f32
        %675 = arith.mulf %cst_216, %670 : f32
        %676 = arith.addf %674, %675 : f32
        %677 = arith.select %673, %676, %672 : f32
        %c1_217 = arith.constant 1 : index
        %678 = memref.load %arg11[%c1_217] : memref<30xf32, #tpu.memory_space<smem>>
        memref.store %677, %arg11[%c1_217] : memref<30xf32, #tpu.memory_space<smem>>
        %cst_218 = arith.constant 1.000000e+00 : f32
        %679 = arith.select %671, %677, %cst_218 : f32
        %cst_219 = arith.constant 9.99999996E-13 : f32
        %680 = arith.maximumf %679, %cst_219 : f32
        %cst_220 = arith.constant 2.560000e+02 : f32
        %681 = arith.divf %cst_220, %680 : f32
        %cst_221 = arith.constant 0.000000e+00 : f32
        %682 = arith.select %671, %681, %cst_221 : f32
        %c1_222 = arith.constant 1 : index
        %683 = memref.load %arg15[%c1_222] : memref<30xf32, #tpu.memory_space<smem>>
        memref.store %682, %arg15[%c1_222] : memref<30xf32, #tpu.memory_space<smem>>
        %684 = arith.extui %671 : i1 to i32
        %685 = arith.sitofp %684 : i32 to f32
        %686 = arith.addf %668, %685 : f32
        %c3_223 = arith.constant 3 : index
        %687 = memref.load %arg13[%c3_223] : memref<31xf32, #tpu.memory_space<smem>>
        %688 = arith.subf %669, %687 : f32
        %cst_224 = arith.constant 0.000000e+00 : f32
        %689 = arith.cmpf ogt, %688, %cst_224 : f32
        %c2_225 = arith.constant 2 : index
        %690 = memref.load %arg11[%c2_225] : memref<30xf32, #tpu.memory_space<smem>>
        %691 = arith.andi %689, %39 : i1
        %cst_226 = arith.constant 7.500000e-01 : f32
        %692 = arith.mulf %cst_226, %690 : f32
        %cst_227 = arith.constant 2.500000e-01 : f32
        %693 = arith.mulf %cst_227, %688 : f32
        %694 = arith.addf %692, %693 : f32
        %695 = arith.select %691, %694, %690 : f32
        %c2_228 = arith.constant 2 : index
        %696 = memref.load %arg11[%c2_228] : memref<30xf32, #tpu.memory_space<smem>>
        memref.store %695, %arg11[%c2_228] : memref<30xf32, #tpu.memory_space<smem>>
        %cst_229 = arith.constant 1.000000e+00 : f32
        %697 = arith.select %689, %695, %cst_229 : f32
        %cst_230 = arith.constant 9.99999996E-13 : f32
        %698 = arith.maximumf %697, %cst_230 : f32
        %cst_231 = arith.constant 2.560000e+02 : f32
        %699 = arith.divf %cst_231, %698 : f32
        %cst_232 = arith.constant 0.000000e+00 : f32
        %700 = arith.select %689, %699, %cst_232 : f32
        %c2_233 = arith.constant 2 : index
        %701 = memref.load %arg15[%c2_233] : memref<30xf32, #tpu.memory_space<smem>>
        memref.store %700, %arg15[%c2_233] : memref<30xf32, #tpu.memory_space<smem>>
        %702 = arith.extui %689 : i1 to i32
        %703 = arith.sitofp %702 : i32 to f32
        %704 = arith.addf %686, %703 : f32
        %c4_234 = arith.constant 4 : index
        %705 = memref.load %arg13[%c4_234] : memref<31xf32, #tpu.memory_space<smem>>
        %706 = arith.subf %687, %705 : f32
        %cst_235 = arith.constant 0.000000e+00 : f32
        %707 = arith.cmpf ogt, %706, %cst_235 : f32
        %c3_236 = arith.constant 3 : index
        %708 = memref.load %arg11[%c3_236] : memref<30xf32, #tpu.memory_space<smem>>
        %709 = arith.andi %707, %39 : i1
        %cst_237 = arith.constant 7.500000e-01 : f32
        %710 = arith.mulf %cst_237, %708 : f32
        %cst_238 = arith.constant 2.500000e-01 : f32
        %711 = arith.mulf %cst_238, %706 : f32
        %712 = arith.addf %710, %711 : f32
        %713 = arith.select %709, %712, %708 : f32
        %c3_239 = arith.constant 3 : index
        %714 = memref.load %arg11[%c3_239] : memref<30xf32, #tpu.memory_space<smem>>
        memref.store %713, %arg11[%c3_239] : memref<30xf32, #tpu.memory_space<smem>>
        %cst_240 = arith.constant 1.000000e+00 : f32
        %715 = arith.select %707, %713, %cst_240 : f32
        %cst_241 = arith.constant 9.99999996E-13 : f32
        %716 = arith.maximumf %715, %cst_241 : f32
        %cst_242 = arith.constant 2.560000e+02 : f32
        %717 = arith.divf %cst_242, %716 : f32
        %cst_243 = arith.constant 0.000000e+00 : f32
        %718 = arith.select %707, %717, %cst_243 : f32
        %c3_244 = arith.constant 3 : index
        %719 = memref.load %arg15[%c3_244] : memref<30xf32, #tpu.memory_space<smem>>
        memref.store %718, %arg15[%c3_244] : memref<30xf32, #tpu.memory_space<smem>>
        %720 = arith.extui %707 : i1 to i32
        %721 = arith.sitofp %720 : i32 to f32
        %722 = arith.addf %704, %721 : f32
        %c5_245 = arith.constant 5 : index
        %723 = memref.load %arg13[%c5_245] : memref<31xf32, #tpu.memory_space<smem>>
        %724 = arith.subf %705, %723 : f32
        %cst_246 = arith.constant 0.000000e+00 : f32
        %725 = arith.cmpf ogt, %724, %cst_246 : f32
        %c4_247 = arith.constant 4 : index
        %726 = memref.load %arg11[%c4_247] : memref<30xf32, #tpu.memory_space<smem>>
        %727 = arith.andi %725, %39 : i1
        %cst_248 = arith.constant 7.500000e-01 : f32
        %728 = arith.mulf %cst_248, %726 : f32
        %cst_249 = arith.constant 2.500000e-01 : f32
        %729 = arith.mulf %cst_249, %724 : f32
        %730 = arith.addf %728, %729 : f32
        %731 = arith.select %727, %730, %726 : f32
        %c4_250 = arith.constant 4 : index
        %732 = memref.load %arg11[%c4_250] : memref<30xf32, #tpu.memory_space<smem>>
        memref.store %731, %arg11[%c4_250] : memref<30xf32, #tpu.memory_space<smem>>
        %cst_251 = arith.constant 1.000000e+00 : f32
        %733 = arith.select %725, %731, %cst_251 : f32
        %cst_252 = arith.constant 9.99999996E-13 : f32
        %734 = arith.maximumf %733, %cst_252 : f32
        %cst_253 = arith.constant 2.560000e+02 : f32
        %735 = arith.divf %cst_253, %734 : f32
        %cst_254 = arith.constant 0.000000e+00 : f32
        %736 = arith.select %725, %735, %cst_254 : f32
        %c4_255 = arith.constant 4 : index
        %737 = memref.load %arg15[%c4_255] : memref<30xf32, #tpu.memory_space<smem>>
        memref.store %736, %arg15[%c4_255] : memref<30xf32, #tpu.memory_space<smem>>
        %738 = arith.extui %725 : i1 to i32
        %739 = arith.sitofp %738 : i32 to f32
        %740 = arith.addf %722, %739 : f32
        %c6_256 = arith.constant 6 : index
        %741 = memref.load %arg13[%c6_256] : memref<31xf32, #tpu.memory_space<smem>>
        %742 = arith.subf %723, %741 : f32
        %cst_257 = arith.constant 0.000000e+00 : f32
        %743 = arith.cmpf ogt, %742, %cst_257 : f32
        %c5_258 = arith.constant 5 : index
        %744 = memref.load %arg11[%c5_258] : memref<30xf32, #tpu.memory_space<smem>>
        %745 = arith.andi %743, %39 : i1
        %cst_259 = arith.constant 7.500000e-01 : f32
        %746 = arith.mulf %cst_259, %744 : f32
        %cst_260 = arith.constant 2.500000e-01 : f32
        %747 = arith.mulf %cst_260, %742 : f32
        %748 = arith.addf %746, %747 : f32
        %749 = arith.select %745, %748, %744 : f32
        %c5_261 = arith.constant 5 : index
        %750 = memref.load %arg11[%c5_261] : memref<30xf32, #tpu.memory_space<smem>>
        memref.store %749, %arg11[%c5_261] : memref<30xf32, #tpu.memory_space<smem>>
        %cst_262 = arith.constant 1.000000e+00 : f32
        %751 = arith.select %743, %749, %cst_262 : f32
        %cst_263 = arith.constant 9.99999996E-13 : f32
        %752 = arith.maximumf %751, %cst_263 : f32
        %cst_264 = arith.constant 2.560000e+02 : f32
        %753 = arith.divf %cst_264, %752 : f32
        %cst_265 = arith.constant 0.000000e+00 : f32
        %754 = arith.select %743, %753, %cst_265 : f32
        %c5_266 = arith.constant 5 : index
        %755 = memref.load %arg15[%c5_266] : memref<30xf32, #tpu.memory_space<smem>>
        memref.store %754, %arg15[%c5_266] : memref<30xf32, #tpu.memory_space<smem>>
        %756 = arith.extui %743 : i1 to i32
        %757 = arith.sitofp %756 : i32 to f32
        %758 = arith.addf %740, %757 : f32
        %c7_267 = arith.constant 7 : index
        %759 = memref.load %arg13[%c7_267] : memref<31xf32, #tpu.memory_space<smem>>
        %760 = arith.subf %741, %759 : f32
        %cst_268 = arith.constant 0.000000e+00 : f32
        %761 = arith.cmpf ogt, %760, %cst_268 : f32
        %c6_269 = arith.constant 6 : index
        %762 = memref.load %arg11[%c6_269] : memref<30xf32, #tpu.memory_space<smem>>
        %763 = arith.andi %761, %39 : i1
        %cst_270 = arith.constant 7.500000e-01 : f32
        %764 = arith.mulf %cst_270, %762 : f32
        %cst_271 = arith.constant 2.500000e-01 : f32
        %765 = arith.mulf %cst_271, %760 : f32
        %766 = arith.addf %764, %765 : f32
        %767 = arith.select %763, %766, %762 : f32
        %c6_272 = arith.constant 6 : index
        %768 = memref.load %arg11[%c6_272] : memref<30xf32, #tpu.memory_space<smem>>
        memref.store %767, %arg11[%c6_272] : memref<30xf32, #tpu.memory_space<smem>>
        %cst_273 = arith.constant 1.000000e+00 : f32
        %769 = arith.select %761, %767, %cst_273 : f32
        %cst_274 = arith.constant 9.99999996E-13 : f32
        %770 = arith.maximumf %769, %cst_274 : f32
        %cst_275 = arith.constant 2.560000e+02 : f32
        %771 = arith.divf %cst_275, %770 : f32
        %cst_276 = arith.constant 0.000000e+00 : f32
        %772 = arith.select %761, %771, %cst_276 : f32
        %c6_277 = arith.constant 6 : index
        %773 = memref.load %arg15[%c6_277] : memref<30xf32, #tpu.memory_space<smem>>
        memref.store %772, %arg15[%c6_277] : memref<30xf32, #tpu.memory_space<smem>>
        %774 = arith.extui %761 : i1 to i32
        %775 = arith.sitofp %774 : i32 to f32
        %776 = arith.addf %758, %775 : f32
        %c8_278 = arith.constant 8 : index
        %777 = memref.load %arg13[%c8_278] : memref<31xf32, #tpu.memory_space<smem>>
        %778 = arith.subf %759, %777 : f32
        %cst_279 = arith.constant 0.000000e+00 : f32
        %779 = arith.cmpf ogt, %778, %cst_279 : f32
        %c7_280 = arith.constant 7 : index
        %780 = memref.load %arg11[%c7_280] : memref<30xf32, #tpu.memory_space<smem>>
        %781 = arith.andi %779, %39 : i1
        %cst_281 = arith.constant 7.500000e-01 : f32
        %782 = arith.mulf %cst_281, %780 : f32
        %cst_282 = arith.constant 2.500000e-01 : f32
        %783 = arith.mulf %cst_282, %778 : f32
        %784 = arith.addf %782, %783 : f32
        %785 = arith.select %781, %784, %780 : f32
        %c7_283 = arith.constant 7 : index
        %786 = memref.load %arg11[%c7_283] : memref<30xf32, #tpu.memory_space<smem>>
        memref.store %785, %arg11[%c7_283] : memref<30xf32, #tpu.memory_space<smem>>
        %cst_284 = arith.constant 1.000000e+00 : f32
        %787 = arith.select %779, %785, %cst_284 : f32
        %cst_285 = arith.constant 9.99999996E-13 : f32
        %788 = arith.maximumf %787, %cst_285 : f32
        %cst_286 = arith.constant 2.560000e+02 : f32
        %789 = arith.divf %cst_286, %788 : f32
        %cst_287 = arith.constant 0.000000e+00 : f32
        %790 = arith.select %779, %789, %cst_287 : f32
        %c7_288 = arith.constant 7 : index
        %791 = memref.load %arg15[%c7_288] : memref<30xf32, #tpu.memory_space<smem>>
        memref.store %790, %arg15[%c7_288] : memref<30xf32, #tpu.memory_space<smem>>
        %792 = arith.extui %779 : i1 to i32
        %793 = arith.sitofp %792 : i32 to f32
        %794 = arith.addf %776, %793 : f32
        %c9_289 = arith.constant 9 : index
        %795 = memref.load %arg13[%c9_289] : memref<31xf32, #tpu.memory_space<smem>>
        %796 = arith.subf %777, %795 : f32
        %cst_290 = arith.constant 0.000000e+00 : f32
        %797 = arith.cmpf ogt, %796, %cst_290 : f32
        %c8_291 = arith.constant 8 : index
        %798 = memref.load %arg11[%c8_291] : memref<30xf32, #tpu.memory_space<smem>>
        %799 = arith.andi %797, %39 : i1
        %cst_292 = arith.constant 7.500000e-01 : f32
        %800 = arith.mulf %cst_292, %798 : f32
        %cst_293 = arith.constant 2.500000e-01 : f32
        %801 = arith.mulf %cst_293, %796 : f32
        %802 = arith.addf %800, %801 : f32
        %803 = arith.select %799, %802, %798 : f32
        %c8_294 = arith.constant 8 : index
        %804 = memref.load %arg11[%c8_294] : memref<30xf32, #tpu.memory_space<smem>>
        memref.store %803, %arg11[%c8_294] : memref<30xf32, #tpu.memory_space<smem>>
        %cst_295 = arith.constant 1.000000e+00 : f32
        %805 = arith.select %797, %803, %cst_295 : f32
        %cst_296 = arith.constant 9.99999996E-13 : f32
        %806 = arith.maximumf %805, %cst_296 : f32
        %cst_297 = arith.constant 2.560000e+02 : f32
        %807 = arith.divf %cst_297, %806 : f32
        %cst_298 = arith.constant 0.000000e+00 : f32
        %808 = arith.select %797, %807, %cst_298 : f32
        %c8_299 = arith.constant 8 : index
        %809 = memref.load %arg15[%c8_299] : memref<30xf32, #tpu.memory_space<smem>>
        memref.store %808, %arg15[%c8_299] : memref<30xf32, #tpu.memory_space<smem>>
        %810 = arith.extui %797 : i1 to i32
        %811 = arith.sitofp %810 : i32 to f32
        %812 = arith.addf %794, %811 : f32
        %c10_300 = arith.constant 10 : index
        %813 = memref.load %arg13[%c10_300] : memref<31xf32, #tpu.memory_space<smem>>
        %814 = arith.subf %795, %813 : f32
        %cst_301 = arith.constant 0.000000e+00 : f32
        %815 = arith.cmpf ogt, %814, %cst_301 : f32
        %c9_302 = arith.constant 9 : index
        %816 = memref.load %arg11[%c9_302] : memref<30xf32, #tpu.memory_space<smem>>
        %817 = arith.andi %815, %39 : i1
        %cst_303 = arith.constant 7.500000e-01 : f32
        %818 = arith.mulf %cst_303, %816 : f32
        %cst_304 = arith.constant 2.500000e-01 : f32
        %819 = arith.mulf %cst_304, %814 : f32
        %820 = arith.addf %818, %819 : f32
        %821 = arith.select %817, %820, %816 : f32
        %c9_305 = arith.constant 9 : index
        %822 = memref.load %arg11[%c9_305] : memref<30xf32, #tpu.memory_space<smem>>
        memref.store %821, %arg11[%c9_305] : memref<30xf32, #tpu.memory_space<smem>>
        %cst_306 = arith.constant 1.000000e+00 : f32
        %823 = arith.select %815, %821, %cst_306 : f32
        %cst_307 = arith.constant 9.99999996E-13 : f32
        %824 = arith.maximumf %823, %cst_307 : f32
        %cst_308 = arith.constant 2.560000e+02 : f32
        %825 = arith.divf %cst_308, %824 : f32
        %cst_309 = arith.constant 0.000000e+00 : f32
        %826 = arith.select %815, %825, %cst_309 : f32
        %c9_310 = arith.constant 9 : index
        %827 = memref.load %arg15[%c9_310] : memref<30xf32, #tpu.memory_space<smem>>
        memref.store %826, %arg15[%c9_310] : memref<30xf32, #tpu.memory_space<smem>>
        %828 = arith.extui %815 : i1 to i32
        %829 = arith.sitofp %828 : i32 to f32
        %830 = arith.addf %812, %829 : f32
        %c11_311 = arith.constant 11 : index
        %831 = memref.load %arg13[%c11_311] : memref<31xf32, #tpu.memory_space<smem>>
        %832 = arith.subf %813, %831 : f32
        %cst_312 = arith.constant 0.000000e+00 : f32
        %833 = arith.cmpf ogt, %832, %cst_312 : f32
        %c10_313 = arith.constant 10 : index
        %834 = memref.load %arg11[%c10_313] : memref<30xf32, #tpu.memory_space<smem>>
        %835 = arith.andi %833, %39 : i1
        %cst_314 = arith.constant 7.500000e-01 : f32
        %836 = arith.mulf %cst_314, %834 : f32
        %cst_315 = arith.constant 2.500000e-01 : f32
        %837 = arith.mulf %cst_315, %832 : f32
        %838 = arith.addf %836, %837 : f32
        %839 = arith.select %835, %838, %834 : f32
        %c10_316 = arith.constant 10 : index
        %840 = memref.load %arg11[%c10_316] : memref<30xf32, #tpu.memory_space<smem>>
        memref.store %839, %arg11[%c10_316] : memref<30xf32, #tpu.memory_space<smem>>
        %cst_317 = arith.constant 1.000000e+00 : f32
        %841 = arith.select %833, %839, %cst_317 : f32
        %cst_318 = arith.constant 9.99999996E-13 : f32
        %842 = arith.maximumf %841, %cst_318 : f32
        %cst_319 = arith.constant 2.560000e+02 : f32
        %843 = arith.divf %cst_319, %842 : f32
        %cst_320 = arith.constant 0.000000e+00 : f32
        %844 = arith.select %833, %843, %cst_320 : f32
        %c10_321 = arith.constant 10 : index
        %845 = memref.load %arg15[%c10_321] : memref<30xf32, #tpu.memory_space<smem>>
        memref.store %844, %arg15[%c10_321] : memref<30xf32, #tpu.memory_space<smem>>
        %846 = arith.extui %833 : i1 to i32
        %847 = arith.sitofp %846 : i32 to f32
        %848 = arith.addf %830, %847 : f32
        %c12_322 = arith.constant 12 : index
        %849 = memref.load %arg13[%c12_322] : memref<31xf32, #tpu.memory_space<smem>>
        %850 = arith.subf %831, %849 : f32
        %cst_323 = arith.constant 0.000000e+00 : f32
        %851 = arith.cmpf ogt, %850, %cst_323 : f32
        %c11_324 = arith.constant 11 : index
        %852 = memref.load %arg11[%c11_324] : memref<30xf32, #tpu.memory_space<smem>>
        %853 = arith.andi %851, %39 : i1
        %cst_325 = arith.constant 7.500000e-01 : f32
        %854 = arith.mulf %cst_325, %852 : f32
        %cst_326 = arith.constant 2.500000e-01 : f32
        %855 = arith.mulf %cst_326, %850 : f32
        %856 = arith.addf %854, %855 : f32
        %857 = arith.select %853, %856, %852 : f32
        %c11_327 = arith.constant 11 : index
        %858 = memref.load %arg11[%c11_327] : memref<30xf32, #tpu.memory_space<smem>>
        memref.store %857, %arg11[%c11_327] : memref<30xf32, #tpu.memory_space<smem>>
        %cst_328 = arith.constant 1.000000e+00 : f32
        %859 = arith.select %851, %857, %cst_328 : f32
        %cst_329 = arith.constant 9.99999996E-13 : f32
        %860 = arith.maximumf %859, %cst_329 : f32
        %cst_330 = arith.constant 2.560000e+02 : f32
        %861 = arith.divf %cst_330, %860 : f32
        %cst_331 = arith.constant 0.000000e+00 : f32
        %862 = arith.select %851, %861, %cst_331 : f32
        %c11_332 = arith.constant 11 : index
        %863 = memref.load %arg15[%c11_332] : memref<30xf32, #tpu.memory_space<smem>>
        memref.store %862, %arg15[%c11_332] : memref<30xf32, #tpu.memory_space<smem>>
        %864 = arith.extui %851 : i1 to i32
        %865 = arith.sitofp %864 : i32 to f32
        %866 = arith.addf %848, %865 : f32
        %c13_333 = arith.constant 13 : index
        %867 = memref.load %arg13[%c13_333] : memref<31xf32, #tpu.memory_space<smem>>
        %868 = arith.subf %849, %867 : f32
        %cst_334 = arith.constant 0.000000e+00 : f32
        %869 = arith.cmpf ogt, %868, %cst_334 : f32
        %c12_335 = arith.constant 12 : index
        %870 = memref.load %arg11[%c12_335] : memref<30xf32, #tpu.memory_space<smem>>
        %871 = arith.andi %869, %39 : i1
        %cst_336 = arith.constant 7.500000e-01 : f32
        %872 = arith.mulf %cst_336, %870 : f32
        %cst_337 = arith.constant 2.500000e-01 : f32
        %873 = arith.mulf %cst_337, %868 : f32
        %874 = arith.addf %872, %873 : f32
        %875 = arith.select %871, %874, %870 : f32
        %c12_338 = arith.constant 12 : index
        %876 = memref.load %arg11[%c12_338] : memref<30xf32, #tpu.memory_space<smem>>
        memref.store %875, %arg11[%c12_338] : memref<30xf32, #tpu.memory_space<smem>>
        %cst_339 = arith.constant 1.000000e+00 : f32
        %877 = arith.select %869, %875, %cst_339 : f32
        %cst_340 = arith.constant 9.99999996E-13 : f32
        %878 = arith.maximumf %877, %cst_340 : f32
        %cst_341 = arith.constant 2.560000e+02 : f32
        %879 = arith.divf %cst_341, %878 : f32
        %cst_342 = arith.constant 0.000000e+00 : f32
        %880 = arith.select %869, %879, %cst_342 : f32
        %c12_343 = arith.constant 12 : index
        %881 = memref.load %arg15[%c12_343] : memref<30xf32, #tpu.memory_space<smem>>
        memref.store %880, %arg15[%c12_343] : memref<30xf32, #tpu.memory_space<smem>>
        %882 = arith.extui %869 : i1 to i32
        %883 = arith.sitofp %882 : i32 to f32
        %884 = arith.addf %866, %883 : f32
        %c14_344 = arith.constant 14 : index
        %885 = memref.load %arg13[%c14_344] : memref<31xf32, #tpu.memory_space<smem>>
        %886 = arith.subf %867, %885 : f32
        %cst_345 = arith.constant 0.000000e+00 : f32
        %887 = arith.cmpf ogt, %886, %cst_345 : f32
        %c13_346 = arith.constant 13 : index
        %888 = memref.load %arg11[%c13_346] : memref<30xf32, #tpu.memory_space<smem>>
        %889 = arith.andi %887, %39 : i1
        %cst_347 = arith.constant 7.500000e-01 : f32
        %890 = arith.mulf %cst_347, %888 : f32
        %cst_348 = arith.constant 2.500000e-01 : f32
        %891 = arith.mulf %cst_348, %886 : f32
        %892 = arith.addf %890, %891 : f32
        %893 = arith.select %889, %892, %888 : f32
        %c13_349 = arith.constant 13 : index
        %894 = memref.load %arg11[%c13_349] : memref<30xf32, #tpu.memory_space<smem>>
        memref.store %893, %arg11[%c13_349] : memref<30xf32, #tpu.memory_space<smem>>
        %cst_350 = arith.constant 1.000000e+00 : f32
        %895 = arith.select %887, %893, %cst_350 : f32
        %cst_351 = arith.constant 9.99999996E-13 : f32
        %896 = arith.maximumf %895, %cst_351 : f32
        %cst_352 = arith.constant 2.560000e+02 : f32
        %897 = arith.divf %cst_352, %896 : f32
        %cst_353 = arith.constant 0.000000e+00 : f32
        %898 = arith.select %887, %897, %cst_353 : f32
        %c13_354 = arith.constant 13 : index
        %899 = memref.load %arg15[%c13_354] : memref<30xf32, #tpu.memory_space<smem>>
        memref.store %898, %arg15[%c13_354] : memref<30xf32, #tpu.memory_space<smem>>
        %900 = arith.extui %887 : i1 to i32
        %901 = arith.sitofp %900 : i32 to f32
        %902 = arith.addf %884, %901 : f32
        %c15_355 = arith.constant 15 : index
        %903 = memref.load %arg13[%c15_355] : memref<31xf32, #tpu.memory_space<smem>>
        %904 = arith.subf %885, %903 : f32
        %cst_356 = arith.constant 0.000000e+00 : f32
        %905 = arith.cmpf ogt, %904, %cst_356 : f32
        %c14_357 = arith.constant 14 : index
        %906 = memref.load %arg11[%c14_357] : memref<30xf32, #tpu.memory_space<smem>>
        %907 = arith.andi %905, %39 : i1
        %cst_358 = arith.constant 7.500000e-01 : f32
        %908 = arith.mulf %cst_358, %906 : f32
        %cst_359 = arith.constant 2.500000e-01 : f32
        %909 = arith.mulf %cst_359, %904 : f32
        %910 = arith.addf %908, %909 : f32
        %911 = arith.select %907, %910, %906 : f32
        %c14_360 = arith.constant 14 : index
        %912 = memref.load %arg11[%c14_360] : memref<30xf32, #tpu.memory_space<smem>>
        memref.store %911, %arg11[%c14_360] : memref<30xf32, #tpu.memory_space<smem>>
        %cst_361 = arith.constant 1.000000e+00 : f32
        %913 = arith.select %905, %911, %cst_361 : f32
        %cst_362 = arith.constant 9.99999996E-13 : f32
        %914 = arith.maximumf %913, %cst_362 : f32
        %cst_363 = arith.constant 2.560000e+02 : f32
        %915 = arith.divf %cst_363, %914 : f32
        %cst_364 = arith.constant 0.000000e+00 : f32
        %916 = arith.select %905, %915, %cst_364 : f32
        %c14_365 = arith.constant 14 : index
        %917 = memref.load %arg15[%c14_365] : memref<30xf32, #tpu.memory_space<smem>>
        memref.store %916, %arg15[%c14_365] : memref<30xf32, #tpu.memory_space<smem>>
        %918 = arith.extui %905 : i1 to i32
        %919 = arith.sitofp %918 : i32 to f32
        %920 = arith.addf %902, %919 : f32
        %c16_366 = arith.constant 16 : index
        %921 = memref.load %arg13[%c16_366] : memref<31xf32, #tpu.memory_space<smem>>
        %922 = arith.subf %903, %921 : f32
        %cst_367 = arith.constant 0.000000e+00 : f32
        %923 = arith.cmpf ogt, %922, %cst_367 : f32
        %c15_368 = arith.constant 15 : index
        %924 = memref.load %arg11[%c15_368] : memref<30xf32, #tpu.memory_space<smem>>
        %925 = arith.andi %923, %39 : i1
        %cst_369 = arith.constant 7.500000e-01 : f32
        %926 = arith.mulf %cst_369, %924 : f32
        %cst_370 = arith.constant 2.500000e-01 : f32
        %927 = arith.mulf %cst_370, %922 : f32
        %928 = arith.addf %926, %927 : f32
        %929 = arith.select %925, %928, %924 : f32
        %c15_371 = arith.constant 15 : index
        %930 = memref.load %arg11[%c15_371] : memref<30xf32, #tpu.memory_space<smem>>
        memref.store %929, %arg11[%c15_371] : memref<30xf32, #tpu.memory_space<smem>>
        %cst_372 = arith.constant 1.000000e+00 : f32
        %931 = arith.select %923, %929, %cst_372 : f32
        %cst_373 = arith.constant 9.99999996E-13 : f32
        %932 = arith.maximumf %931, %cst_373 : f32
        %cst_374 = arith.constant 2.560000e+02 : f32
        %933 = arith.divf %cst_374, %932 : f32
        %cst_375 = arith.constant 0.000000e+00 : f32
        %934 = arith.select %923, %933, %cst_375 : f32
        %c15_376 = arith.constant 15 : index
        %935 = memref.load %arg15[%c15_376] : memref<30xf32, #tpu.memory_space<smem>>
        memref.store %934, %arg15[%c15_376] : memref<30xf32, #tpu.memory_space<smem>>
        %936 = arith.extui %923 : i1 to i32
        %937 = arith.sitofp %936 : i32 to f32
        %938 = arith.addf %920, %937 : f32
        %c17_377 = arith.constant 17 : index
        %939 = memref.load %arg13[%c17_377] : memref<31xf32, #tpu.memory_space<smem>>
        %940 = arith.subf %921, %939 : f32
        %cst_378 = arith.constant 0.000000e+00 : f32
        %941 = arith.cmpf ogt, %940, %cst_378 : f32
        %c16_379 = arith.constant 16 : index
        %942 = memref.load %arg11[%c16_379] : memref<30xf32, #tpu.memory_space<smem>>
        %943 = arith.andi %941, %39 : i1
        %cst_380 = arith.constant 7.500000e-01 : f32
        %944 = arith.mulf %cst_380, %942 : f32
        %cst_381 = arith.constant 2.500000e-01 : f32
        %945 = arith.mulf %cst_381, %940 : f32
        %946 = arith.addf %944, %945 : f32
        %947 = arith.select %943, %946, %942 : f32
        %c16_382 = arith.constant 16 : index
        %948 = memref.load %arg11[%c16_382] : memref<30xf32, #tpu.memory_space<smem>>
        memref.store %947, %arg11[%c16_382] : memref<30xf32, #tpu.memory_space<smem>>
        %cst_383 = arith.constant 1.000000e+00 : f32
        %949 = arith.select %941, %947, %cst_383 : f32
        %cst_384 = arith.constant 9.99999996E-13 : f32
        %950 = arith.maximumf %949, %cst_384 : f32
        %cst_385 = arith.constant 2.560000e+02 : f32
        %951 = arith.divf %cst_385, %950 : f32
        %cst_386 = arith.constant 0.000000e+00 : f32
        %952 = arith.select %941, %951, %cst_386 : f32
        %c16_387 = arith.constant 16 : index
        %953 = memref.load %arg15[%c16_387] : memref<30xf32, #tpu.memory_space<smem>>
        memref.store %952, %arg15[%c16_387] : memref<30xf32, #tpu.memory_space<smem>>
        %954 = arith.extui %941 : i1 to i32
        %955 = arith.sitofp %954 : i32 to f32
        %956 = arith.addf %938, %955 : f32
        %c18_388 = arith.constant 18 : index
        %957 = memref.load %arg13[%c18_388] : memref<31xf32, #tpu.memory_space<smem>>
        %958 = arith.subf %939, %957 : f32
        %cst_389 = arith.constant 0.000000e+00 : f32
        %959 = arith.cmpf ogt, %958, %cst_389 : f32
        %c17_390 = arith.constant 17 : index
        %960 = memref.load %arg11[%c17_390] : memref<30xf32, #tpu.memory_space<smem>>
        %961 = arith.andi %959, %39 : i1
        %cst_391 = arith.constant 7.500000e-01 : f32
        %962 = arith.mulf %cst_391, %960 : f32
        %cst_392 = arith.constant 2.500000e-01 : f32
        %963 = arith.mulf %cst_392, %958 : f32
        %964 = arith.addf %962, %963 : f32
        %965 = arith.select %961, %964, %960 : f32
        %c17_393 = arith.constant 17 : index
        %966 = memref.load %arg11[%c17_393] : memref<30xf32, #tpu.memory_space<smem>>
        memref.store %965, %arg11[%c17_393] : memref<30xf32, #tpu.memory_space<smem>>
        %cst_394 = arith.constant 1.000000e+00 : f32
        %967 = arith.select %959, %965, %cst_394 : f32
        %cst_395 = arith.constant 9.99999996E-13 : f32
        %968 = arith.maximumf %967, %cst_395 : f32
        %cst_396 = arith.constant 2.560000e+02 : f32
        %969 = arith.divf %cst_396, %968 : f32
        %cst_397 = arith.constant 0.000000e+00 : f32
        %970 = arith.select %959, %969, %cst_397 : f32
        %c17_398 = arith.constant 17 : index
        %971 = memref.load %arg15[%c17_398] : memref<30xf32, #tpu.memory_space<smem>>
        memref.store %970, %arg15[%c17_398] : memref<30xf32, #tpu.memory_space<smem>>
        %972 = arith.extui %959 : i1 to i32
        %973 = arith.sitofp %972 : i32 to f32
        %974 = arith.addf %956, %973 : f32
        %c19_399 = arith.constant 19 : index
        %975 = memref.load %arg13[%c19_399] : memref<31xf32, #tpu.memory_space<smem>>
        %976 = arith.subf %957, %975 : f32
        %cst_400 = arith.constant 0.000000e+00 : f32
        %977 = arith.cmpf ogt, %976, %cst_400 : f32
        %c18_401 = arith.constant 18 : index
        %978 = memref.load %arg11[%c18_401] : memref<30xf32, #tpu.memory_space<smem>>
        %979 = arith.andi %977, %39 : i1
        %cst_402 = arith.constant 7.500000e-01 : f32
        %980 = arith.mulf %cst_402, %978 : f32
        %cst_403 = arith.constant 2.500000e-01 : f32
        %981 = arith.mulf %cst_403, %976 : f32
        %982 = arith.addf %980, %981 : f32
        %983 = arith.select %979, %982, %978 : f32
        %c18_404 = arith.constant 18 : index
        %984 = memref.load %arg11[%c18_404] : memref<30xf32, #tpu.memory_space<smem>>
        memref.store %983, %arg11[%c18_404] : memref<30xf32, #tpu.memory_space<smem>>
        %cst_405 = arith.constant 1.000000e+00 : f32
        %985 = arith.select %977, %983, %cst_405 : f32
        %cst_406 = arith.constant 9.99999996E-13 : f32
        %986 = arith.maximumf %985, %cst_406 : f32
        %cst_407 = arith.constant 2.560000e+02 : f32
        %987 = arith.divf %cst_407, %986 : f32
        %cst_408 = arith.constant 0.000000e+00 : f32
        %988 = arith.select %977, %987, %cst_408 : f32
        %c18_409 = arith.constant 18 : index
        %989 = memref.load %arg15[%c18_409] : memref<30xf32, #tpu.memory_space<smem>>
        memref.store %988, %arg15[%c18_409] : memref<30xf32, #tpu.memory_space<smem>>
        %990 = arith.extui %977 : i1 to i32
        %991 = arith.sitofp %990 : i32 to f32
        %992 = arith.addf %974, %991 : f32
        %c20_410 = arith.constant 20 : index
        %993 = memref.load %arg13[%c20_410] : memref<31xf32, #tpu.memory_space<smem>>
        %994 = arith.subf %975, %993 : f32
        %cst_411 = arith.constant 0.000000e+00 : f32
        %995 = arith.cmpf ogt, %994, %cst_411 : f32
        %c19_412 = arith.constant 19 : index
        %996 = memref.load %arg11[%c19_412] : memref<30xf32, #tpu.memory_space<smem>>
        %997 = arith.andi %995, %39 : i1
        %cst_413 = arith.constant 7.500000e-01 : f32
        %998 = arith.mulf %cst_413, %996 : f32
        %cst_414 = arith.constant 2.500000e-01 : f32
        %999 = arith.mulf %cst_414, %994 : f32
        %1000 = arith.addf %998, %999 : f32
        %1001 = arith.select %997, %1000, %996 : f32
        %c19_415 = arith.constant 19 : index
        %1002 = memref.load %arg11[%c19_415] : memref<30xf32, #tpu.memory_space<smem>>
        memref.store %1001, %arg11[%c19_415] : memref<30xf32, #tpu.memory_space<smem>>
        %cst_416 = arith.constant 1.000000e+00 : f32
        %1003 = arith.select %995, %1001, %cst_416 : f32
        %cst_417 = arith.constant 9.99999996E-13 : f32
        %1004 = arith.maximumf %1003, %cst_417 : f32
        %cst_418 = arith.constant 2.560000e+02 : f32
        %1005 = arith.divf %cst_418, %1004 : f32
        %cst_419 = arith.constant 0.000000e+00 : f32
        %1006 = arith.select %995, %1005, %cst_419 : f32
        %c19_420 = arith.constant 19 : index
        %1007 = memref.load %arg15[%c19_420] : memref<30xf32, #tpu.memory_space<smem>>
        memref.store %1006, %arg15[%c19_420] : memref<30xf32, #tpu.memory_space<smem>>
        %1008 = arith.extui %995 : i1 to i32
        %1009 = arith.sitofp %1008 : i32 to f32
        %1010 = arith.addf %992, %1009 : f32
        %c21_421 = arith.constant 21 : index
        %1011 = memref.load %arg13[%c21_421] : memref<31xf32, #tpu.memory_space<smem>>
        %1012 = arith.subf %993, %1011 : f32
        %cst_422 = arith.constant 0.000000e+00 : f32
        %1013 = arith.cmpf ogt, %1012, %cst_422 : f32
        %c20_423 = arith.constant 20 : index
        %1014 = memref.load %arg11[%c20_423] : memref<30xf32, #tpu.memory_space<smem>>
        %1015 = arith.andi %1013, %39 : i1
        %cst_424 = arith.constant 7.500000e-01 : f32
        %1016 = arith.mulf %cst_424, %1014 : f32
        %cst_425 = arith.constant 2.500000e-01 : f32
        %1017 = arith.mulf %cst_425, %1012 : f32
        %1018 = arith.addf %1016, %1017 : f32
        %1019 = arith.select %1015, %1018, %1014 : f32
        %c20_426 = arith.constant 20 : index
        %1020 = memref.load %arg11[%c20_426] : memref<30xf32, #tpu.memory_space<smem>>
        memref.store %1019, %arg11[%c20_426] : memref<30xf32, #tpu.memory_space<smem>>
        %cst_427 = arith.constant 1.000000e+00 : f32
        %1021 = arith.select %1013, %1019, %cst_427 : f32
        %cst_428 = arith.constant 9.99999996E-13 : f32
        %1022 = arith.maximumf %1021, %cst_428 : f32
        %cst_429 = arith.constant 2.560000e+02 : f32
        %1023 = arith.divf %cst_429, %1022 : f32
        %cst_430 = arith.constant 0.000000e+00 : f32
        %1024 = arith.select %1013, %1023, %cst_430 : f32
        %c20_431 = arith.constant 20 : index
        %1025 = memref.load %arg15[%c20_431] : memref<30xf32, #tpu.memory_space<smem>>
        memref.store %1024, %arg15[%c20_431] : memref<30xf32, #tpu.memory_space<smem>>
        %1026 = arith.extui %1013 : i1 to i32
        %1027 = arith.sitofp %1026 : i32 to f32
        %1028 = arith.addf %1010, %1027 : f32
        %c22_432 = arith.constant 22 : index
        %1029 = memref.load %arg13[%c22_432] : memref<31xf32, #tpu.memory_space<smem>>
        %1030 = arith.subf %1011, %1029 : f32
        %cst_433 = arith.constant 0.000000e+00 : f32
        %1031 = arith.cmpf ogt, %1030, %cst_433 : f32
        %c21_434 = arith.constant 21 : index
        %1032 = memref.load %arg11[%c21_434] : memref<30xf32, #tpu.memory_space<smem>>
        %1033 = arith.andi %1031, %39 : i1
        %cst_435 = arith.constant 7.500000e-01 : f32
        %1034 = arith.mulf %cst_435, %1032 : f32
        %cst_436 = arith.constant 2.500000e-01 : f32
        %1035 = arith.mulf %cst_436, %1030 : f32
        %1036 = arith.addf %1034, %1035 : f32
        %1037 = arith.select %1033, %1036, %1032 : f32
        %c21_437 = arith.constant 21 : index
        %1038 = memref.load %arg11[%c21_437] : memref<30xf32, #tpu.memory_space<smem>>
        memref.store %1037, %arg11[%c21_437] : memref<30xf32, #tpu.memory_space<smem>>
        %cst_438 = arith.constant 1.000000e+00 : f32
        %1039 = arith.select %1031, %1037, %cst_438 : f32
        %cst_439 = arith.constant 9.99999996E-13 : f32
        %1040 = arith.maximumf %1039, %cst_439 : f32
        %cst_440 = arith.constant 2.560000e+02 : f32
        %1041 = arith.divf %cst_440, %1040 : f32
        %cst_441 = arith.constant 0.000000e+00 : f32
        %1042 = arith.select %1031, %1041, %cst_441 : f32
        %c21_442 = arith.constant 21 : index
        %1043 = memref.load %arg15[%c21_442] : memref<30xf32, #tpu.memory_space<smem>>
        memref.store %1042, %arg15[%c21_442] : memref<30xf32, #tpu.memory_space<smem>>
        %1044 = arith.extui %1031 : i1 to i32
        %1045 = arith.sitofp %1044 : i32 to f32
        %1046 = arith.addf %1028, %1045 : f32
        %c23_443 = arith.constant 23 : index
        %1047 = memref.load %arg13[%c23_443] : memref<31xf32, #tpu.memory_space<smem>>
        %1048 = arith.subf %1029, %1047 : f32
        %cst_444 = arith.constant 0.000000e+00 : f32
        %1049 = arith.cmpf ogt, %1048, %cst_444 : f32
        %c22_445 = arith.constant 22 : index
        %1050 = memref.load %arg11[%c22_445] : memref<30xf32, #tpu.memory_space<smem>>
        %1051 = arith.andi %1049, %39 : i1
        %cst_446 = arith.constant 7.500000e-01 : f32
        %1052 = arith.mulf %cst_446, %1050 : f32
        %cst_447 = arith.constant 2.500000e-01 : f32
        %1053 = arith.mulf %cst_447, %1048 : f32
        %1054 = arith.addf %1052, %1053 : f32
        %1055 = arith.select %1051, %1054, %1050 : f32
        %c22_448 = arith.constant 22 : index
        %1056 = memref.load %arg11[%c22_448] : memref<30xf32, #tpu.memory_space<smem>>
        memref.store %1055, %arg11[%c22_448] : memref<30xf32, #tpu.memory_space<smem>>
        %cst_449 = arith.constant 1.000000e+00 : f32
        %1057 = arith.select %1049, %1055, %cst_449 : f32
        %cst_450 = arith.constant 9.99999996E-13 : f32
        %1058 = arith.maximumf %1057, %cst_450 : f32
        %cst_451 = arith.constant 2.560000e+02 : f32
        %1059 = arith.divf %cst_451, %1058 : f32
        %cst_452 = arith.constant 0.000000e+00 : f32
        %1060 = arith.select %1049, %1059, %cst_452 : f32
        %c22_453 = arith.constant 22 : index
        %1061 = memref.load %arg15[%c22_453] : memref<30xf32, #tpu.memory_space<smem>>
        memref.store %1060, %arg15[%c22_453] : memref<30xf32, #tpu.memory_space<smem>>
        %1062 = arith.extui %1049 : i1 to i32
        %1063 = arith.sitofp %1062 : i32 to f32
        %1064 = arith.addf %1046, %1063 : f32
        %c24_454 = arith.constant 24 : index
        %1065 = memref.load %arg13[%c24_454] : memref<31xf32, #tpu.memory_space<smem>>
        %1066 = arith.subf %1047, %1065 : f32
        %cst_455 = arith.constant 0.000000e+00 : f32
        %1067 = arith.cmpf ogt, %1066, %cst_455 : f32
        %c23_456 = arith.constant 23 : index
        %1068 = memref.load %arg11[%c23_456] : memref<30xf32, #tpu.memory_space<smem>>
        %1069 = arith.andi %1067, %39 : i1
        %cst_457 = arith.constant 7.500000e-01 : f32
        %1070 = arith.mulf %cst_457, %1068 : f32
        %cst_458 = arith.constant 2.500000e-01 : f32
        %1071 = arith.mulf %cst_458, %1066 : f32
        %1072 = arith.addf %1070, %1071 : f32
        %1073 = arith.select %1069, %1072, %1068 : f32
        %c23_459 = arith.constant 23 : index
        %1074 = memref.load %arg11[%c23_459] : memref<30xf32, #tpu.memory_space<smem>>
        memref.store %1073, %arg11[%c23_459] : memref<30xf32, #tpu.memory_space<smem>>
        %cst_460 = arith.constant 1.000000e+00 : f32
        %1075 = arith.select %1067, %1073, %cst_460 : f32
        %cst_461 = arith.constant 9.99999996E-13 : f32
        %1076 = arith.maximumf %1075, %cst_461 : f32
        %cst_462 = arith.constant 2.560000e+02 : f32
        %1077 = arith.divf %cst_462, %1076 : f32
        %cst_463 = arith.constant 0.000000e+00 : f32
        %1078 = arith.select %1067, %1077, %cst_463 : f32
        %c23_464 = arith.constant 23 : index
        %1079 = memref.load %arg15[%c23_464] : memref<30xf32, #tpu.memory_space<smem>>
        memref.store %1078, %arg15[%c23_464] : memref<30xf32, #tpu.memory_space<smem>>
        %1080 = arith.extui %1067 : i1 to i32
        %1081 = arith.sitofp %1080 : i32 to f32
        %1082 = arith.addf %1064, %1081 : f32
        %c25_465 = arith.constant 25 : index
        %1083 = memref.load %arg13[%c25_465] : memref<31xf32, #tpu.memory_space<smem>>
        %1084 = arith.subf %1065, %1083 : f32
        %cst_466 = arith.constant 0.000000e+00 : f32
        %1085 = arith.cmpf ogt, %1084, %cst_466 : f32
        %c24_467 = arith.constant 24 : index
        %1086 = memref.load %arg11[%c24_467] : memref<30xf32, #tpu.memory_space<smem>>
        %1087 = arith.andi %1085, %39 : i1
        %cst_468 = arith.constant 7.500000e-01 : f32
        %1088 = arith.mulf %cst_468, %1086 : f32
        %cst_469 = arith.constant 2.500000e-01 : f32
        %1089 = arith.mulf %cst_469, %1084 : f32
        %1090 = arith.addf %1088, %1089 : f32
        %1091 = arith.select %1087, %1090, %1086 : f32
        %c24_470 = arith.constant 24 : index
        %1092 = memref.load %arg11[%c24_470] : memref<30xf32, #tpu.memory_space<smem>>
        memref.store %1091, %arg11[%c24_470] : memref<30xf32, #tpu.memory_space<smem>>
        %cst_471 = arith.constant 1.000000e+00 : f32
        %1093 = arith.select %1085, %1091, %cst_471 : f32
        %cst_472 = arith.constant 9.99999996E-13 : f32
        %1094 = arith.maximumf %1093, %cst_472 : f32
        %cst_473 = arith.constant 2.560000e+02 : f32
        %1095 = arith.divf %cst_473, %1094 : f32
        %cst_474 = arith.constant 0.000000e+00 : f32
        %1096 = arith.select %1085, %1095, %cst_474 : f32
        %c24_475 = arith.constant 24 : index
        %1097 = memref.load %arg15[%c24_475] : memref<30xf32, #tpu.memory_space<smem>>
        memref.store %1096, %arg15[%c24_475] : memref<30xf32, #tpu.memory_space<smem>>
        %1098 = arith.extui %1085 : i1 to i32
        %1099 = arith.sitofp %1098 : i32 to f32
        %1100 = arith.addf %1082, %1099 : f32
        %c26_476 = arith.constant 26 : index
        %1101 = memref.load %arg13[%c26_476] : memref<31xf32, #tpu.memory_space<smem>>
        %1102 = arith.subf %1083, %1101 : f32
        %cst_477 = arith.constant 0.000000e+00 : f32
        %1103 = arith.cmpf ogt, %1102, %cst_477 : f32
        %c25_478 = arith.constant 25 : index
        %1104 = memref.load %arg11[%c25_478] : memref<30xf32, #tpu.memory_space<smem>>
        %1105 = arith.andi %1103, %39 : i1
        %cst_479 = arith.constant 7.500000e-01 : f32
        %1106 = arith.mulf %cst_479, %1104 : f32
        %cst_480 = arith.constant 2.500000e-01 : f32
        %1107 = arith.mulf %cst_480, %1102 : f32
        %1108 = arith.addf %1106, %1107 : f32
        %1109 = arith.select %1105, %1108, %1104 : f32
        %c25_481 = arith.constant 25 : index
        %1110 = memref.load %arg11[%c25_481] : memref<30xf32, #tpu.memory_space<smem>>
        memref.store %1109, %arg11[%c25_481] : memref<30xf32, #tpu.memory_space<smem>>
        %cst_482 = arith.constant 1.000000e+00 : f32
        %1111 = arith.select %1103, %1109, %cst_482 : f32
        %cst_483 = arith.constant 9.99999996E-13 : f32
        %1112 = arith.maximumf %1111, %cst_483 : f32
        %cst_484 = arith.constant 2.560000e+02 : f32
        %1113 = arith.divf %cst_484, %1112 : f32
        %cst_485 = arith.constant 0.000000e+00 : f32
        %1114 = arith.select %1103, %1113, %cst_485 : f32
        %c25_486 = arith.constant 25 : index
        %1115 = memref.load %arg15[%c25_486] : memref<30xf32, #tpu.memory_space<smem>>
        memref.store %1114, %arg15[%c25_486] : memref<30xf32, #tpu.memory_space<smem>>
        %1116 = arith.extui %1103 : i1 to i32
        %1117 = arith.sitofp %1116 : i32 to f32
        %1118 = arith.addf %1100, %1117 : f32
        %c27_487 = arith.constant 27 : index
        %1119 = memref.load %arg13[%c27_487] : memref<31xf32, #tpu.memory_space<smem>>
        %1120 = arith.subf %1101, %1119 : f32
        %cst_488 = arith.constant 0.000000e+00 : f32
        %1121 = arith.cmpf ogt, %1120, %cst_488 : f32
        %c26_489 = arith.constant 26 : index
        %1122 = memref.load %arg11[%c26_489] : memref<30xf32, #tpu.memory_space<smem>>
        %1123 = arith.andi %1121, %39 : i1
        %cst_490 = arith.constant 7.500000e-01 : f32
        %1124 = arith.mulf %cst_490, %1122 : f32
        %cst_491 = arith.constant 2.500000e-01 : f32
        %1125 = arith.mulf %cst_491, %1120 : f32
        %1126 = arith.addf %1124, %1125 : f32
        %1127 = arith.select %1123, %1126, %1122 : f32
        %c26_492 = arith.constant 26 : index
        %1128 = memref.load %arg11[%c26_492] : memref<30xf32, #tpu.memory_space<smem>>
        memref.store %1127, %arg11[%c26_492] : memref<30xf32, #tpu.memory_space<smem>>
        %cst_493 = arith.constant 1.000000e+00 : f32
        %1129 = arith.select %1121, %1127, %cst_493 : f32
        %cst_494 = arith.constant 9.99999996E-13 : f32
        %1130 = arith.maximumf %1129, %cst_494 : f32
        %cst_495 = arith.constant 2.560000e+02 : f32
        %1131 = arith.divf %cst_495, %1130 : f32
        %cst_496 = arith.constant 0.000000e+00 : f32
        %1132 = arith.select %1121, %1131, %cst_496 : f32
        %c26_497 = arith.constant 26 : index
        %1133 = memref.load %arg15[%c26_497] : memref<30xf32, #tpu.memory_space<smem>>
        memref.store %1132, %arg15[%c26_497] : memref<30xf32, #tpu.memory_space<smem>>
        %1134 = arith.extui %1121 : i1 to i32
        %1135 = arith.sitofp %1134 : i32 to f32
        %1136 = arith.addf %1118, %1135 : f32
        %c28_498 = arith.constant 28 : index
        %1137 = memref.load %arg13[%c28_498] : memref<31xf32, #tpu.memory_space<smem>>
        %1138 = arith.subf %1119, %1137 : f32
        %cst_499 = arith.constant 0.000000e+00 : f32
        %1139 = arith.cmpf ogt, %1138, %cst_499 : f32
        %c27_500 = arith.constant 27 : index
        %1140 = memref.load %arg11[%c27_500] : memref<30xf32, #tpu.memory_space<smem>>
        %1141 = arith.andi %1139, %39 : i1
        %cst_501 = arith.constant 7.500000e-01 : f32
        %1142 = arith.mulf %cst_501, %1140 : f32
        %cst_502 = arith.constant 2.500000e-01 : f32
        %1143 = arith.mulf %cst_502, %1138 : f32
        %1144 = arith.addf %1142, %1143 : f32
        %1145 = arith.select %1141, %1144, %1140 : f32
        %c27_503 = arith.constant 27 : index
        %1146 = memref.load %arg11[%c27_503] : memref<30xf32, #tpu.memory_space<smem>>
        memref.store %1145, %arg11[%c27_503] : memref<30xf32, #tpu.memory_space<smem>>
        %cst_504 = arith.constant 1.000000e+00 : f32
        %1147 = arith.select %1139, %1145, %cst_504 : f32
        %cst_505 = arith.constant 9.99999996E-13 : f32
        %1148 = arith.maximumf %1147, %cst_505 : f32
        %cst_506 = arith.constant 2.560000e+02 : f32
        %1149 = arith.divf %cst_506, %1148 : f32
        %cst_507 = arith.constant 0.000000e+00 : f32
        %1150 = arith.select %1139, %1149, %cst_507 : f32
        %c27_508 = arith.constant 27 : index
        %1151 = memref.load %arg15[%c27_508] : memref<30xf32, #tpu.memory_space<smem>>
        memref.store %1150, %arg15[%c27_508] : memref<30xf32, #tpu.memory_space<smem>>
        %1152 = arith.extui %1139 : i1 to i32
        %1153 = arith.sitofp %1152 : i32 to f32
        %1154 = arith.addf %1136, %1153 : f32
        %c29_509 = arith.constant 29 : index
        %1155 = memref.load %arg13[%c29_509] : memref<31xf32, #tpu.memory_space<smem>>
        %1156 = arith.subf %1137, %1155 : f32
        %cst_510 = arith.constant 0.000000e+00 : f32
        %1157 = arith.cmpf ogt, %1156, %cst_510 : f32
        %c28_511 = arith.constant 28 : index
        %1158 = memref.load %arg11[%c28_511] : memref<30xf32, #tpu.memory_space<smem>>
        %1159 = arith.andi %1157, %39 : i1
        %cst_512 = arith.constant 7.500000e-01 : f32
        %1160 = arith.mulf %cst_512, %1158 : f32
        %cst_513 = arith.constant 2.500000e-01 : f32
        %1161 = arith.mulf %cst_513, %1156 : f32
        %1162 = arith.addf %1160, %1161 : f32
        %1163 = arith.select %1159, %1162, %1158 : f32
        %c28_514 = arith.constant 28 : index
        %1164 = memref.load %arg11[%c28_514] : memref<30xf32, #tpu.memory_space<smem>>
        memref.store %1163, %arg11[%c28_514] : memref<30xf32, #tpu.memory_space<smem>>
        %cst_515 = arith.constant 1.000000e+00 : f32
        %1165 = arith.select %1157, %1163, %cst_515 : f32
        %cst_516 = arith.constant 9.99999996E-13 : f32
        %1166 = arith.maximumf %1165, %cst_516 : f32
        %cst_517 = arith.constant 2.560000e+02 : f32
        %1167 = arith.divf %cst_517, %1166 : f32
        %cst_518 = arith.constant 0.000000e+00 : f32
        %1168 = arith.select %1157, %1167, %cst_518 : f32
        %c28_519 = arith.constant 28 : index
        %1169 = memref.load %arg15[%c28_519] : memref<30xf32, #tpu.memory_space<smem>>
        memref.store %1168, %arg15[%c28_519] : memref<30xf32, #tpu.memory_space<smem>>
        %1170 = arith.extui %1157 : i1 to i32
        %1171 = arith.sitofp %1170 : i32 to f32
        %1172 = arith.addf %1154, %1171 : f32
        %c30_520 = arith.constant 30 : index
        %1173 = memref.load %arg13[%c30_520] : memref<31xf32, #tpu.memory_space<smem>>
        %1174 = arith.subf %1155, %1173 : f32
        %cst_521 = arith.constant 0.000000e+00 : f32
        %1175 = arith.cmpf ogt, %1174, %cst_521 : f32
        %c29_522 = arith.constant 29 : index
        %1176 = memref.load %arg11[%c29_522] : memref<30xf32, #tpu.memory_space<smem>>
        %1177 = arith.andi %1175, %39 : i1
        %cst_523 = arith.constant 7.500000e-01 : f32
        %1178 = arith.mulf %cst_523, %1176 : f32
        %cst_524 = arith.constant 2.500000e-01 : f32
        %1179 = arith.mulf %cst_524, %1174 : f32
        %1180 = arith.addf %1178, %1179 : f32
        %1181 = arith.select %1177, %1180, %1176 : f32
        %c29_525 = arith.constant 29 : index
        %1182 = memref.load %arg11[%c29_525] : memref<30xf32, #tpu.memory_space<smem>>
        memref.store %1181, %arg11[%c29_525] : memref<30xf32, #tpu.memory_space<smem>>
        %cst_526 = arith.constant 1.000000e+00 : f32
        %1183 = arith.select %1175, %1181, %cst_526 : f32
        %cst_527 = arith.constant 9.99999996E-13 : f32
        %1184 = arith.maximumf %1183, %cst_527 : f32
        %cst_528 = arith.constant 2.560000e+02 : f32
        %1185 = arith.divf %cst_528, %1184 : f32
        %cst_529 = arith.constant 0.000000e+00 : f32
        %1186 = arith.select %1175, %1185, %cst_529 : f32
        %c29_530 = arith.constant 29 : index
        %1187 = memref.load %arg15[%c29_530] : memref<30xf32, #tpu.memory_space<smem>>
        memref.store %1186, %arg15[%c29_530] : memref<30xf32, #tpu.memory_space<smem>>
        %1188 = arith.extui %1175 : i1 to i32
        %1189 = arith.sitofp %1188 : i32 to f32
        %1190 = arith.addf %1172, %1189 : f32
        %c1_531 = arith.constant 1 : index
        %1191 = memref.load %arg17[%c1_531] : memref<4xf32, #tpu.memory_space<smem>>
        memref.store %1190, %arg17[%c1_531] : memref<4xf32, #tpu.memory_space<smem>>
        %c1_532 = arith.constant 1 : index
        %1192 = memref.load %arg14[%c1_532] : memref<11xf32, #tpu.memory_space<smem>>
        %cst_533 = arith.constant 1.280000e+02 : f32
        %1193 = arith.subf %cst_533, %1192 : f32
        %cst_534 = arith.constant 0.000000e+00 : f32
        %1194 = arith.cmpf ogt, %1193, %cst_534 : f32
        %c0_535 = arith.constant 0 : index
        %1195 = memref.load %arg12[%c0_535] : memref<10xf32, #tpu.memory_space<smem>>
        %1196 = arith.andi %1194, %650 : i1
        %cst_536 = arith.constant 0.699999988 : f32
        %1197 = arith.mulf %cst_536, %1195 : f32
        %cst_537 = arith.constant 3.000000e-01 : f32
        %1198 = arith.mulf %cst_537, %1193 : f32
        %1199 = arith.addf %1197, %1198 : f32
        %1200 = arith.select %1196, %1199, %1195 : f32
        %c0_538 = arith.constant 0 : index
        %1201 = memref.load %arg12[%c0_538] : memref<10xf32, #tpu.memory_space<smem>>
        memref.store %1200, %arg12[%c0_538] : memref<10xf32, #tpu.memory_space<smem>>
        %cst_539 = arith.constant 1.000000e+00 : f32
        %1202 = arith.select %1194, %1200, %cst_539 : f32
        %cst_540 = arith.constant 9.99999996E-13 : f32
        %1203 = arith.maximumf %1202, %cst_540 : f32
        %cst_541 = arith.constant 1.280000e+02 : f32
        %1204 = arith.divf %cst_541, %1203 : f32
        %cst_542 = arith.constant 0.000000e+00 : f32
        %1205 = arith.select %1194, %1204, %cst_542 : f32
        %c0_543 = arith.constant 0 : index
        %1206 = memref.load %arg16[%c0_543] : memref<10xf32, #tpu.memory_space<smem>>
        memref.store %1205, %arg16[%c0_543] : memref<10xf32, #tpu.memory_space<smem>>
        %1207 = arith.extui %1194 : i1 to i32
        %1208 = arith.sitofp %1207 : i32 to f32
        %cst_544 = arith.constant 0.000000e+00 : f32
        %1209 = arith.addf %cst_544, %1208 : f32
        %c2_545 = arith.constant 2 : index
        %1210 = memref.load %arg14[%c2_545] : memref<11xf32, #tpu.memory_space<smem>>
        %1211 = arith.subf %1192, %1210 : f32
        %cst_546 = arith.constant 0.000000e+00 : f32
        %1212 = arith.cmpf ogt, %1211, %cst_546 : f32
        %c1_547 = arith.constant 1 : index
        %1213 = memref.load %arg12[%c1_547] : memref<10xf32, #tpu.memory_space<smem>>
        %1214 = arith.andi %1212, %650 : i1
        %cst_548 = arith.constant 0.699999988 : f32
        %1215 = arith.mulf %cst_548, %1213 : f32
        %cst_549 = arith.constant 3.000000e-01 : f32
        %1216 = arith.mulf %cst_549, %1211 : f32
        %1217 = arith.addf %1215, %1216 : f32
        %1218 = arith.select %1214, %1217, %1213 : f32
        %c1_550 = arith.constant 1 : index
        %1219 = memref.load %arg12[%c1_550] : memref<10xf32, #tpu.memory_space<smem>>
        memref.store %1218, %arg12[%c1_550] : memref<10xf32, #tpu.memory_space<smem>>
        %cst_551 = arith.constant 1.000000e+00 : f32
        %1220 = arith.select %1212, %1218, %cst_551 : f32
        %cst_552 = arith.constant 9.99999996E-13 : f32
        %1221 = arith.maximumf %1220, %cst_552 : f32
        %cst_553 = arith.constant 1.280000e+02 : f32
        %1222 = arith.divf %cst_553, %1221 : f32
        %cst_554 = arith.constant 0.000000e+00 : f32
        %1223 = arith.select %1212, %1222, %cst_554 : f32
        %c1_555 = arith.constant 1 : index
        %1224 = memref.load %arg16[%c1_555] : memref<10xf32, #tpu.memory_space<smem>>
        memref.store %1223, %arg16[%c1_555] : memref<10xf32, #tpu.memory_space<smem>>
        %1225 = arith.extui %1212 : i1 to i32
        %1226 = arith.sitofp %1225 : i32 to f32
        %1227 = arith.addf %1209, %1226 : f32
        %c3_556 = arith.constant 3 : index
        %1228 = memref.load %arg14[%c3_556] : memref<11xf32, #tpu.memory_space<smem>>
        %1229 = arith.subf %1210, %1228 : f32
        %cst_557 = arith.constant 0.000000e+00 : f32
        %1230 = arith.cmpf ogt, %1229, %cst_557 : f32
        %c2_558 = arith.constant 2 : index
        %1231 = memref.load %arg12[%c2_558] : memref<10xf32, #tpu.memory_space<smem>>
        %1232 = arith.andi %1230, %650 : i1
        %cst_559 = arith.constant 0.699999988 : f32
        %1233 = arith.mulf %cst_559, %1231 : f32
        %cst_560 = arith.constant 3.000000e-01 : f32
        %1234 = arith.mulf %cst_560, %1229 : f32
        %1235 = arith.addf %1233, %1234 : f32
        %1236 = arith.select %1232, %1235, %1231 : f32
        %c2_561 = arith.constant 2 : index
        %1237 = memref.load %arg12[%c2_561] : memref<10xf32, #tpu.memory_space<smem>>
        memref.store %1236, %arg12[%c2_561] : memref<10xf32, #tpu.memory_space<smem>>
        %cst_562 = arith.constant 1.000000e+00 : f32
        %1238 = arith.select %1230, %1236, %cst_562 : f32
        %cst_563 = arith.constant 9.99999996E-13 : f32
        %1239 = arith.maximumf %1238, %cst_563 : f32
        %cst_564 = arith.constant 1.280000e+02 : f32
        %1240 = arith.divf %cst_564, %1239 : f32
        %cst_565 = arith.constant 0.000000e+00 : f32
        %1241 = arith.select %1230, %1240, %cst_565 : f32
        %c2_566 = arith.constant 2 : index
        %1242 = memref.load %arg16[%c2_566] : memref<10xf32, #tpu.memory_space<smem>>
        memref.store %1241, %arg16[%c2_566] : memref<10xf32, #tpu.memory_space<smem>>
        %1243 = arith.extui %1230 : i1 to i32
        %1244 = arith.sitofp %1243 : i32 to f32
        %1245 = arith.addf %1227, %1244 : f32
        %c4_567 = arith.constant 4 : index
        %1246 = memref.load %arg14[%c4_567] : memref<11xf32, #tpu.memory_space<smem>>
        %1247 = arith.subf %1228, %1246 : f32
        %cst_568 = arith.constant 0.000000e+00 : f32
        %1248 = arith.cmpf ogt, %1247, %cst_568 : f32
        %c3_569 = arith.constant 3 : index
        %1249 = memref.load %arg12[%c3_569] : memref<10xf32, #tpu.memory_space<smem>>
        %1250 = arith.andi %1248, %650 : i1
        %cst_570 = arith.constant 0.699999988 : f32
        %1251 = arith.mulf %cst_570, %1249 : f32
        %cst_571 = arith.constant 3.000000e-01 : f32
        %1252 = arith.mulf %cst_571, %1247 : f32
        %1253 = arith.addf %1251, %1252 : f32
        %1254 = arith.select %1250, %1253, %1249 : f32
        %c3_572 = arith.constant 3 : index
        %1255 = memref.load %arg12[%c3_572] : memref<10xf32, #tpu.memory_space<smem>>
        memref.store %1254, %arg12[%c3_572] : memref<10xf32, #tpu.memory_space<smem>>
        %cst_573 = arith.constant 1.000000e+00 : f32
        %1256 = arith.select %1248, %1254, %cst_573 : f32
        %cst_574 = arith.constant 9.99999996E-13 : f32
        %1257 = arith.maximumf %1256, %cst_574 : f32
        %cst_575 = arith.constant 1.280000e+02 : f32
        %1258 = arith.divf %cst_575, %1257 : f32
        %cst_576 = arith.constant 0.000000e+00 : f32
        %1259 = arith.select %1248, %1258, %cst_576 : f32
        %c3_577 = arith.constant 3 : index
        %1260 = memref.load %arg16[%c3_577] : memref<10xf32, #tpu.memory_space<smem>>
        memref.store %1259, %arg16[%c3_577] : memref<10xf32, #tpu.memory_space<smem>>
        %1261 = arith.extui %1248 : i1 to i32
        %1262 = arith.sitofp %1261 : i32 to f32
        %1263 = arith.addf %1245, %1262 : f32
        %c5_578 = arith.constant 5 : index
        %1264 = memref.load %arg14[%c5_578] : memref<11xf32, #tpu.memory_space<smem>>
        %1265 = arith.subf %1246, %1264 : f32
        %cst_579 = arith.constant 0.000000e+00 : f32
        %1266 = arith.cmpf ogt, %1265, %cst_579 : f32
        %c4_580 = arith.constant 4 : index
        %1267 = memref.load %arg12[%c4_580] : memref<10xf32, #tpu.memory_space<smem>>
        %1268 = arith.andi %1266, %650 : i1
        %cst_581 = arith.constant 0.699999988 : f32
        %1269 = arith.mulf %cst_581, %1267 : f32
        %cst_582 = arith.constant 3.000000e-01 : f32
        %1270 = arith.mulf %cst_582, %1265 : f32
        %1271 = arith.addf %1269, %1270 : f32
        %1272 = arith.select %1268, %1271, %1267 : f32
        %c4_583 = arith.constant 4 : index
        %1273 = memref.load %arg12[%c4_583] : memref<10xf32, #tpu.memory_space<smem>>
        memref.store %1272, %arg12[%c4_583] : memref<10xf32, #tpu.memory_space<smem>>
        %cst_584 = arith.constant 1.000000e+00 : f32
        %1274 = arith.select %1266, %1272, %cst_584 : f32
        %cst_585 = arith.constant 9.99999996E-13 : f32
        %1275 = arith.maximumf %1274, %cst_585 : f32
        %cst_586 = arith.constant 1.280000e+02 : f32
        %1276 = arith.divf %cst_586, %1275 : f32
        %cst_587 = arith.constant 0.000000e+00 : f32
        %1277 = arith.select %1266, %1276, %cst_587 : f32
        %c4_588 = arith.constant 4 : index
        %1278 = memref.load %arg16[%c4_588] : memref<10xf32, #tpu.memory_space<smem>>
        memref.store %1277, %arg16[%c4_588] : memref<10xf32, #tpu.memory_space<smem>>
        %1279 = arith.extui %1266 : i1 to i32
        %1280 = arith.sitofp %1279 : i32 to f32
        %1281 = arith.addf %1263, %1280 : f32
        %c6_589 = arith.constant 6 : index
        %1282 = memref.load %arg14[%c6_589] : memref<11xf32, #tpu.memory_space<smem>>
        %1283 = arith.subf %1264, %1282 : f32
        %cst_590 = arith.constant 0.000000e+00 : f32
        %1284 = arith.cmpf ogt, %1283, %cst_590 : f32
        %c5_591 = arith.constant 5 : index
        %1285 = memref.load %arg12[%c5_591] : memref<10xf32, #tpu.memory_space<smem>>
        %1286 = arith.andi %1284, %650 : i1
        %cst_592 = arith.constant 0.699999988 : f32
        %1287 = arith.mulf %cst_592, %1285 : f32
        %cst_593 = arith.constant 3.000000e-01 : f32
        %1288 = arith.mulf %cst_593, %1283 : f32
        %1289 = arith.addf %1287, %1288 : f32
        %1290 = arith.select %1286, %1289, %1285 : f32
        %c5_594 = arith.constant 5 : index
        %1291 = memref.load %arg12[%c5_594] : memref<10xf32, #tpu.memory_space<smem>>
        memref.store %1290, %arg12[%c5_594] : memref<10xf32, #tpu.memory_space<smem>>
        %cst_595 = arith.constant 1.000000e+00 : f32
        %1292 = arith.select %1284, %1290, %cst_595 : f32
        %cst_596 = arith.constant 9.99999996E-13 : f32
        %1293 = arith.maximumf %1292, %cst_596 : f32
        %cst_597 = arith.constant 1.280000e+02 : f32
        %1294 = arith.divf %cst_597, %1293 : f32
        %cst_598 = arith.constant 0.000000e+00 : f32
        %1295 = arith.select %1284, %1294, %cst_598 : f32
        %c5_599 = arith.constant 5 : index
        %1296 = memref.load %arg16[%c5_599] : memref<10xf32, #tpu.memory_space<smem>>
        memref.store %1295, %arg16[%c5_599] : memref<10xf32, #tpu.memory_space<smem>>
        %1297 = arith.extui %1284 : i1 to i32
        %1298 = arith.sitofp %1297 : i32 to f32
        %1299 = arith.addf %1281, %1298 : f32
        %c7_600 = arith.constant 7 : index
        %1300 = memref.load %arg14[%c7_600] : memref<11xf32, #tpu.memory_space<smem>>
        %1301 = arith.subf %1282, %1300 : f32
        %cst_601 = arith.constant 0.000000e+00 : f32
        %1302 = arith.cmpf ogt, %1301, %cst_601 : f32
        %c6_602 = arith.constant 6 : index
        %1303 = memref.load %arg12[%c6_602] : memref<10xf32, #tpu.memory_space<smem>>
        %1304 = arith.andi %1302, %650 : i1
        %cst_603 = arith.constant 0.699999988 : f32
        %1305 = arith.mulf %cst_603, %1303 : f32
        %cst_604 = arith.constant 3.000000e-01 : f32
        %1306 = arith.mulf %cst_604, %1301 : f32
        %1307 = arith.addf %1305, %1306 : f32
        %1308 = arith.select %1304, %1307, %1303 : f32
        %c6_605 = arith.constant 6 : index
        %1309 = memref.load %arg12[%c6_605] : memref<10xf32, #tpu.memory_space<smem>>
        memref.store %1308, %arg12[%c6_605] : memref<10xf32, #tpu.memory_space<smem>>
        %cst_606 = arith.constant 1.000000e+00 : f32
        %1310 = arith.select %1302, %1308, %cst_606 : f32
        %cst_607 = arith.constant 9.99999996E-13 : f32
        %1311 = arith.maximumf %1310, %cst_607 : f32
        %cst_608 = arith.constant 1.280000e+02 : f32
        %1312 = arith.divf %cst_608, %1311 : f32
        %cst_609 = arith.constant 0.000000e+00 : f32
        %1313 = arith.select %1302, %1312, %cst_609 : f32
        %c6_610 = arith.constant 6 : index
        %1314 = memref.load %arg16[%c6_610] : memref<10xf32, #tpu.memory_space<smem>>
        memref.store %1313, %arg16[%c6_610] : memref<10xf32, #tpu.memory_space<smem>>
        %1315 = arith.extui %1302 : i1 to i32
        %1316 = arith.sitofp %1315 : i32 to f32
        %1317 = arith.addf %1299, %1316 : f32
        %c8_611 = arith.constant 8 : index
        %1318 = memref.load %arg14[%c8_611] : memref<11xf32, #tpu.memory_space<smem>>
        %1319 = arith.subf %1300, %1318 : f32
        %cst_612 = arith.constant 0.000000e+00 : f32
        %1320 = arith.cmpf ogt, %1319, %cst_612 : f32
        %c7_613 = arith.constant 7 : index
        %1321 = memref.load %arg12[%c7_613] : memref<10xf32, #tpu.memory_space<smem>>
        %1322 = arith.andi %1320, %650 : i1
        %cst_614 = arith.constant 0.699999988 : f32
        %1323 = arith.mulf %cst_614, %1321 : f32
        %cst_615 = arith.constant 3.000000e-01 : f32
        %1324 = arith.mulf %cst_615, %1319 : f32
        %1325 = arith.addf %1323, %1324 : f32
        %1326 = arith.select %1322, %1325, %1321 : f32
        %c7_616 = arith.constant 7 : index
        %1327 = memref.load %arg12[%c7_616] : memref<10xf32, #tpu.memory_space<smem>>
        memref.store %1326, %arg12[%c7_616] : memref<10xf32, #tpu.memory_space<smem>>
        %cst_617 = arith.constant 1.000000e+00 : f32
        %1328 = arith.select %1320, %1326, %cst_617 : f32
        %cst_618 = arith.constant 9.99999996E-13 : f32
        %1329 = arith.maximumf %1328, %cst_618 : f32
        %cst_619 = arith.constant 1.280000e+02 : f32
        %1330 = arith.divf %cst_619, %1329 : f32
        %cst_620 = arith.constant 0.000000e+00 : f32
        %1331 = arith.select %1320, %1330, %cst_620 : f32
        %c7_621 = arith.constant 7 : index
        %1332 = memref.load %arg16[%c7_621] : memref<10xf32, #tpu.memory_space<smem>>
        memref.store %1331, %arg16[%c7_621] : memref<10xf32, #tpu.memory_space<smem>>
        %1333 = arith.extui %1320 : i1 to i32
        %1334 = arith.sitofp %1333 : i32 to f32
        %1335 = arith.addf %1317, %1334 : f32
        %c9_622 = arith.constant 9 : index
        %1336 = memref.load %arg14[%c9_622] : memref<11xf32, #tpu.memory_space<smem>>
        %1337 = arith.subf %1318, %1336 : f32
        %cst_623 = arith.constant 0.000000e+00 : f32
        %1338 = arith.cmpf ogt, %1337, %cst_623 : f32
        %c8_624 = arith.constant 8 : index
        %1339 = memref.load %arg12[%c8_624] : memref<10xf32, #tpu.memory_space<smem>>
        %1340 = arith.andi %1338, %650 : i1
        %cst_625 = arith.constant 0.699999988 : f32
        %1341 = arith.mulf %cst_625, %1339 : f32
        %cst_626 = arith.constant 3.000000e-01 : f32
        %1342 = arith.mulf %cst_626, %1337 : f32
        %1343 = arith.addf %1341, %1342 : f32
        %1344 = arith.select %1340, %1343, %1339 : f32
        %c8_627 = arith.constant 8 : index
        %1345 = memref.load %arg12[%c8_627] : memref<10xf32, #tpu.memory_space<smem>>
        memref.store %1344, %arg12[%c8_627] : memref<10xf32, #tpu.memory_space<smem>>
        %cst_628 = arith.constant 1.000000e+00 : f32
        %1346 = arith.select %1338, %1344, %cst_628 : f32
        %cst_629 = arith.constant 9.99999996E-13 : f32
        %1347 = arith.maximumf %1346, %cst_629 : f32
        %cst_630 = arith.constant 1.280000e+02 : f32
        %1348 = arith.divf %cst_630, %1347 : f32
        %cst_631 = arith.constant 0.000000e+00 : f32
        %1349 = arith.select %1338, %1348, %cst_631 : f32
        %c8_632 = arith.constant 8 : index
        %1350 = memref.load %arg16[%c8_632] : memref<10xf32, #tpu.memory_space<smem>>
        memref.store %1349, %arg16[%c8_632] : memref<10xf32, #tpu.memory_space<smem>>
        %1351 = arith.extui %1338 : i1 to i32
        %1352 = arith.sitofp %1351 : i32 to f32
        %1353 = arith.addf %1335, %1352 : f32
        %c10_633 = arith.constant 10 : index
        %1354 = memref.load %arg14[%c10_633] : memref<11xf32, #tpu.memory_space<smem>>
        %1355 = arith.subf %1336, %1354 : f32
        %cst_634 = arith.constant 0.000000e+00 : f32
        %1356 = arith.cmpf ogt, %1355, %cst_634 : f32
        %c9_635 = arith.constant 9 : index
        %1357 = memref.load %arg12[%c9_635] : memref<10xf32, #tpu.memory_space<smem>>
        %1358 = arith.andi %1356, %650 : i1
        %cst_636 = arith.constant 0.699999988 : f32
        %1359 = arith.mulf %cst_636, %1357 : f32
        %cst_637 = arith.constant 3.000000e-01 : f32
        %1360 = arith.mulf %cst_637, %1355 : f32
        %1361 = arith.addf %1359, %1360 : f32
        %1362 = arith.select %1358, %1361, %1357 : f32
        %c9_638 = arith.constant 9 : index
        %1363 = memref.load %arg12[%c9_638] : memref<10xf32, #tpu.memory_space<smem>>
        memref.store %1362, %arg12[%c9_638] : memref<10xf32, #tpu.memory_space<smem>>
        %cst_639 = arith.constant 1.000000e+00 : f32
        %1364 = arith.select %1356, %1362, %cst_639 : f32
        %cst_640 = arith.constant 9.99999996E-13 : f32
        %1365 = arith.maximumf %1364, %cst_640 : f32
        %cst_641 = arith.constant 1.280000e+02 : f32
        %1366 = arith.divf %cst_641, %1365 : f32
        %cst_642 = arith.constant 0.000000e+00 : f32
        %1367 = arith.select %1356, %1366, %cst_642 : f32
        %c9_643 = arith.constant 9 : index
        %1368 = memref.load %arg16[%c9_643] : memref<10xf32, #tpu.memory_space<smem>>
        memref.store %1367, %arg16[%c9_643] : memref<10xf32, #tpu.memory_space<smem>>
        %1369 = arith.extui %1356 : i1 to i32
        %1370 = arith.sitofp %1369 : i32 to f32
        %1371 = arith.addf %1353, %1370 : f32
        %c2_644 = arith.constant 2 : index
        %1372 = memref.load %arg17[%c2_644] : memref<4xf32, #tpu.memory_space<smem>>
        memref.store %1371, %arg17[%c2_644] : memref<4xf32, #tpu.memory_space<smem>>
      } else {
      }
    } else {
    }
    %c1_i32 = arith.constant 1 : i32
    %190 = arith.cmpi eq, %arg1, %c1_i32 : i32
    %191 = arith.extui %190 : i1 to i32
    %c0_i32_56 = arith.constant 0 : i32
    %192 = arith.cmpi ne, %191, %c0_i32_56 : i32
    scf.if %192 {
      %cst_57 = arith.constant 0.000000e+00 : f32
      %193 = vector.broadcast %cst_57 : f32 to vector<8x32xf32>
      %194 = arith.maximumf %15, %193 : vector<8x32xf32>
      %195 = arith.mulf %15, %125 : vector<8x32xf32>
      %196 = arith.subf %194, %195 : vector<8x32xf32>
      %cst_58 = arith.constant 1.000000e+00 : f32
      %197 = vector.broadcast %cst_58 : f32 to vector<8x32xf32>
      %198 = arith.addf %197, %129 : vector<8x32xf32>
      %199 = math.log %198 : vector<8x32xf32>
      %200 = arith.addf %196, %199 : vector<8x32xf32>
      %c0_59 = arith.constant 0 : index
      %201 = memref.load %arg15[%c0_59] : memref<30xf32, #tpu.memory_space<smem>>
      %202 = vector.broadcast %201 : f32 to vector<8x32xf32>
      %c0_60 = arith.constant 0 : index
      %203 = memref.load %arg15[%c0_60] : memref<30xf32, #tpu.memory_space<smem>>
      %c1_61 = arith.constant 1 : index
      %204 = memref.load %arg15[%c1_61] : memref<30xf32, #tpu.memory_space<smem>>
      %cst_62 = arith.constant 0.0333333351 : f32
      %205 = vector.broadcast %cst_62 : f32 to vector<8x32xf32>
      %206 = arith.cmpf oge, %139, %205 : vector<8x32xf32>
      %207 = arith.subf %204, %203 : f32
      %cst_63 = arith.constant 0.000000e+00 : f32
      %208 = vector.broadcast %207 : f32 to vector<8x32xf32>
      %209 = vector.broadcast %cst_63 : f32 to vector<8x32xf32>
      %210 = arith.select %206, %208, %209 : vector<8x32xi1>, vector<8x32xf32>
      %211 = arith.addf %202, %210 : vector<8x32xf32>
      %c2_64 = arith.constant 2 : index
      %212 = memref.load %arg15[%c2_64] : memref<30xf32, #tpu.memory_space<smem>>
      %cst_65 = arith.constant 0.0666666701 : f32
      %213 = vector.broadcast %cst_65 : f32 to vector<8x32xf32>
      %214 = arith.cmpf oge, %139, %213 : vector<8x32xf32>
      %215 = arith.subf %212, %204 : f32
      %cst_66 = arith.constant 0.000000e+00 : f32
      %216 = vector.broadcast %215 : f32 to vector<8x32xf32>
      %217 = vector.broadcast %cst_66 : f32 to vector<8x32xf32>
      %218 = arith.select %214, %216, %217 : vector<8x32xi1>, vector<8x32xf32>
      %219 = arith.addf %211, %218 : vector<8x32xf32>
      %c3_67 = arith.constant 3 : index
      %220 = memref.load %arg15[%c3_67] : memref<30xf32, #tpu.memory_space<smem>>
      %cst_68 = arith.constant 1.000000e-01 : f32
      %221 = vector.broadcast %cst_68 : f32 to vector<8x32xf32>
      %222 = arith.cmpf oge, %139, %221 : vector<8x32xf32>
      %223 = arith.subf %220, %212 : f32
      %cst_69 = arith.constant 0.000000e+00 : f32
      %224 = vector.broadcast %223 : f32 to vector<8x32xf32>
      %225 = vector.broadcast %cst_69 : f32 to vector<8x32xf32>
      %226 = arith.select %222, %224, %225 : vector<8x32xi1>, vector<8x32xf32>
      %227 = arith.addf %219, %226 : vector<8x32xf32>
      %c4 = arith.constant 4 : index
      %228 = memref.load %arg15[%c4] : memref<30xf32, #tpu.memory_space<smem>>
      %cst_70 = arith.constant 0.13333334 : f32
      %229 = vector.broadcast %cst_70 : f32 to vector<8x32xf32>
      %230 = arith.cmpf oge, %139, %229 : vector<8x32xf32>
      %231 = arith.subf %228, %220 : f32
      %cst_71 = arith.constant 0.000000e+00 : f32
      %232 = vector.broadcast %231 : f32 to vector<8x32xf32>
      %233 = vector.broadcast %cst_71 : f32 to vector<8x32xf32>
      %234 = arith.select %230, %232, %233 : vector<8x32xi1>, vector<8x32xf32>
      %235 = arith.addf %227, %234 : vector<8x32xf32>
      %c5 = arith.constant 5 : index
      %236 = memref.load %arg15[%c5] : memref<30xf32, #tpu.memory_space<smem>>
      %cst_72 = arith.constant 0.166666672 : f32
      %237 = vector.broadcast %cst_72 : f32 to vector<8x32xf32>
      %238 = arith.cmpf oge, %139, %237 : vector<8x32xf32>
      %239 = arith.subf %236, %228 : f32
      %cst_73 = arith.constant 0.000000e+00 : f32
      %240 = vector.broadcast %239 : f32 to vector<8x32xf32>
      %241 = vector.broadcast %cst_73 : f32 to vector<8x32xf32>
      %242 = arith.select %238, %240, %241 : vector<8x32xi1>, vector<8x32xf32>
      %243 = arith.addf %235, %242 : vector<8x32xf32>
      %c6 = arith.constant 6 : index
      %244 = memref.load %arg15[%c6] : memref<30xf32, #tpu.memory_space<smem>>
      %cst_74 = arith.constant 2.000000e-01 : f32
      %245 = vector.broadcast %cst_74 : f32 to vector<8x32xf32>
      %246 = arith.cmpf oge, %139, %245 : vector<8x32xf32>
      %247 = arith.subf %244, %236 : f32
      %cst_75 = arith.constant 0.000000e+00 : f32
      %248 = vector.broadcast %247 : f32 to vector<8x32xf32>
      %249 = vector.broadcast %cst_75 : f32 to vector<8x32xf32>
      %250 = arith.select %246, %248, %249 : vector<8x32xi1>, vector<8x32xf32>
      %251 = arith.addf %243, %250 : vector<8x32xf32>
      %c7 = arith.constant 7 : index
      %252 = memref.load %arg15[%c7] : memref<30xf32, #tpu.memory_space<smem>>
      %cst_76 = arith.constant 0.233333334 : f32
      %253 = vector.broadcast %cst_76 : f32 to vector<8x32xf32>
      %254 = arith.cmpf oge, %139, %253 : vector<8x32xf32>
      %255 = arith.subf %252, %244 : f32
      %cst_77 = arith.constant 0.000000e+00 : f32
      %256 = vector.broadcast %255 : f32 to vector<8x32xf32>
      %257 = vector.broadcast %cst_77 : f32 to vector<8x32xf32>
      %258 = arith.select %254, %256, %257 : vector<8x32xi1>, vector<8x32xf32>
      %259 = arith.addf %251, %258 : vector<8x32xf32>
      %c8 = arith.constant 8 : index
      %260 = memref.load %arg15[%c8] : memref<30xf32, #tpu.memory_space<smem>>
      %cst_78 = arith.constant 0.266666681 : f32
      %261 = vector.broadcast %cst_78 : f32 to vector<8x32xf32>
      %262 = arith.cmpf oge, %139, %261 : vector<8x32xf32>
      %263 = arith.subf %260, %252 : f32
      %cst_79 = arith.constant 0.000000e+00 : f32
      %264 = vector.broadcast %263 : f32 to vector<8x32xf32>
      %265 = vector.broadcast %cst_79 : f32 to vector<8x32xf32>
      %266 = arith.select %262, %264, %265 : vector<8x32xi1>, vector<8x32xf32>
      %267 = arith.addf %259, %266 : vector<8x32xf32>
      %c9 = arith.constant 9 : index
      %268 = memref.load %arg15[%c9] : memref<30xf32, #tpu.memory_space<smem>>
      %cst_80 = arith.constant 3.000000e-01 : f32
      %269 = vector.broadcast %cst_80 : f32 to vector<8x32xf32>
      %270 = arith.cmpf oge, %139, %269 : vector<8x32xf32>
      %271 = arith.subf %268, %260 : f32
      %cst_81 = arith.constant 0.000000e+00 : f32
      %272 = vector.broadcast %271 : f32 to vector<8x32xf32>
      %273 = vector.broadcast %cst_81 : f32 to vector<8x32xf32>
      %274 = arith.select %270, %272, %273 : vector<8x32xi1>, vector<8x32xf32>
      %275 = arith.addf %267, %274 : vector<8x32xf32>
      %c10 = arith.constant 10 : index
      %276 = memref.load %arg15[%c10] : memref<30xf32, #tpu.memory_space<smem>>
      %cst_82 = arith.constant 0.333333343 : f32
      %277 = vector.broadcast %cst_82 : f32 to vector<8x32xf32>
      %278 = arith.cmpf oge, %139, %277 : vector<8x32xf32>
      %279 = arith.subf %276, %268 : f32
      %cst_83 = arith.constant 0.000000e+00 : f32
      %280 = vector.broadcast %279 : f32 to vector<8x32xf32>
      %281 = vector.broadcast %cst_83 : f32 to vector<8x32xf32>
      %282 = arith.select %278, %280, %281 : vector<8x32xi1>, vector<8x32xf32>
      %283 = arith.addf %275, %282 : vector<8x32xf32>
      %c11 = arith.constant 11 : index
      %284 = memref.load %arg15[%c11] : memref<30xf32, #tpu.memory_space<smem>>
      %cst_84 = arith.constant 0.366666675 : f32
      %285 = vector.broadcast %cst_84 : f32 to vector<8x32xf32>
      %286 = arith.cmpf oge, %139, %285 : vector<8x32xf32>
      %287 = arith.subf %284, %276 : f32
      %cst_85 = arith.constant 0.000000e+00 : f32
      %288 = vector.broadcast %287 : f32 to vector<8x32xf32>
      %289 = vector.broadcast %cst_85 : f32 to vector<8x32xf32>
      %290 = arith.select %286, %288, %289 : vector<8x32xi1>, vector<8x32xf32>
      %291 = arith.addf %283, %290 : vector<8x32xf32>
      %c12 = arith.constant 12 : index
      %292 = memref.load %arg15[%c12] : memref<30xf32, #tpu.memory_space<smem>>
      %cst_86 = arith.constant 4.000000e-01 : f32
      %293 = vector.broadcast %cst_86 : f32 to vector<8x32xf32>
      %294 = arith.cmpf oge, %139, %293 : vector<8x32xf32>
      %295 = arith.subf %292, %284 : f32
      %cst_87 = arith.constant 0.000000e+00 : f32
      %296 = vector.broadcast %295 : f32 to vector<8x32xf32>
      %297 = vector.broadcast %cst_87 : f32 to vector<8x32xf32>
      %298 = arith.select %294, %296, %297 : vector<8x32xi1>, vector<8x32xf32>
      %299 = arith.addf %291, %298 : vector<8x32xf32>
      %c13 = arith.constant 13 : index
      %300 = memref.load %arg15[%c13] : memref<30xf32, #tpu.memory_space<smem>>
      %cst_88 = arith.constant 0.433333337 : f32
      %301 = vector.broadcast %cst_88 : f32 to vector<8x32xf32>
      %302 = arith.cmpf oge, %139, %301 : vector<8x32xf32>
      %303 = arith.subf %300, %292 : f32
      %cst_89 = arith.constant 0.000000e+00 : f32
      %304 = vector.broadcast %303 : f32 to vector<8x32xf32>
      %305 = vector.broadcast %cst_89 : f32 to vector<8x32xf32>
      %306 = arith.select %302, %304, %305 : vector<8x32xi1>, vector<8x32xf32>
      %307 = arith.addf %299, %306 : vector<8x32xf32>
      %c14 = arith.constant 14 : index
      %308 = memref.load %arg15[%c14] : memref<30xf32, #tpu.memory_space<smem>>
      %cst_90 = arith.constant 0.466666669 : f32
      %309 = vector.broadcast %cst_90 : f32 to vector<8x32xf32>
      %310 = arith.cmpf oge, %139, %309 : vector<8x32xf32>
      %311 = arith.subf %308, %300 : f32
      %cst_91 = arith.constant 0.000000e+00 : f32
      %312 = vector.broadcast %311 : f32 to vector<8x32xf32>
      %313 = vector.broadcast %cst_91 : f32 to vector<8x32xf32>
      %314 = arith.select %310, %312, %313 : vector<8x32xi1>, vector<8x32xf32>
      %315 = arith.addf %307, %314 : vector<8x32xf32>
      %c15 = arith.constant 15 : index
      %316 = memref.load %arg15[%c15] : memref<30xf32, #tpu.memory_space<smem>>
      %cst_92 = arith.constant 5.000000e-01 : f32
      %317 = vector.broadcast %cst_92 : f32 to vector<8x32xf32>
      %318 = arith.cmpf oge, %139, %317 : vector<8x32xf32>
      %319 = arith.subf %316, %308 : f32
      %cst_93 = arith.constant 0.000000e+00 : f32
      %320 = vector.broadcast %319 : f32 to vector<8x32xf32>
      %321 = vector.broadcast %cst_93 : f32 to vector<8x32xf32>
      %322 = arith.select %318, %320, %321 : vector<8x32xi1>, vector<8x32xf32>
      %323 = arith.addf %315, %322 : vector<8x32xf32>
      %c16 = arith.constant 16 : index
      %324 = memref.load %arg15[%c16] : memref<30xf32, #tpu.memory_space<smem>>
      %cst_94 = arith.constant 0.533333361 : f32
      %325 = vector.broadcast %cst_94 : f32 to vector<8x32xf32>
      %326 = arith.cmpf oge, %139, %325 : vector<8x32xf32>
      %327 = arith.subf %324, %316 : f32
      %cst_95 = arith.constant 0.000000e+00 : f32
      %328 = vector.broadcast %327 : f32 to vector<8x32xf32>
      %329 = vector.broadcast %cst_95 : f32 to vector<8x32xf32>
      %330 = arith.select %326, %328, %329 : vector<8x32xi1>, vector<8x32xf32>
      %331 = arith.addf %323, %330 : vector<8x32xf32>
      %c17 = arith.constant 17 : index
      %332 = memref.load %arg15[%c17] : memref<30xf32, #tpu.memory_space<smem>>
      %cst_96 = arith.constant 0.566666663 : f32
      %333 = vector.broadcast %cst_96 : f32 to vector<8x32xf32>
      %334 = arith.cmpf oge, %139, %333 : vector<8x32xf32>
      %335 = arith.subf %332, %324 : f32
      %cst_97 = arith.constant 0.000000e+00 : f32
      %336 = vector.broadcast %335 : f32 to vector<8x32xf32>
      %337 = vector.broadcast %cst_97 : f32 to vector<8x32xf32>
      %338 = arith.select %334, %336, %337 : vector<8x32xi1>, vector<8x32xf32>
      %339 = arith.addf %331, %338 : vector<8x32xf32>
      %c18 = arith.constant 18 : index
      %340 = memref.load %arg15[%c18] : memref<30xf32, #tpu.memory_space<smem>>
      %cst_98 = arith.constant 6.000000e-01 : f32
      %341 = vector.broadcast %cst_98 : f32 to vector<8x32xf32>
      %342 = arith.cmpf oge, %139, %341 : vector<8x32xf32>
      %343 = arith.subf %340, %332 : f32
      %cst_99 = arith.constant 0.000000e+00 : f32
      %344 = vector.broadcast %343 : f32 to vector<8x32xf32>
      %345 = vector.broadcast %cst_99 : f32 to vector<8x32xf32>
      %346 = arith.select %342, %344, %345 : vector<8x32xi1>, vector<8x32xf32>
      %347 = arith.addf %339, %346 : vector<8x32xf32>
      %c19 = arith.constant 19 : index
      %348 = memref.load %arg15[%c19] : memref<30xf32, #tpu.memory_space<smem>>
      %cst_100 = arith.constant 0.633333325 : f32
      %349 = vector.broadcast %cst_100 : f32 to vector<8x32xf32>
      %350 = arith.cmpf oge, %139, %349 : vector<8x32xf32>
      %351 = arith.subf %348, %340 : f32
      %cst_101 = arith.constant 0.000000e+00 : f32
      %352 = vector.broadcast %351 : f32 to vector<8x32xf32>
      %353 = vector.broadcast %cst_101 : f32 to vector<8x32xf32>
      %354 = arith.select %350, %352, %353 : vector<8x32xi1>, vector<8x32xf32>
      %355 = arith.addf %347, %354 : vector<8x32xf32>
      %c20 = arith.constant 20 : index
      %356 = memref.load %arg15[%c20] : memref<30xf32, #tpu.memory_space<smem>>
      %cst_102 = arith.constant 0.666666686 : f32
      %357 = vector.broadcast %cst_102 : f32 to vector<8x32xf32>
      %358 = arith.cmpf oge, %139, %357 : vector<8x32xf32>
      %359 = arith.subf %356, %348 : f32
      %cst_103 = arith.constant 0.000000e+00 : f32
      %360 = vector.broadcast %359 : f32 to vector<8x32xf32>
      %361 = vector.broadcast %cst_103 : f32 to vector<8x32xf32>
      %362 = arith.select %358, %360, %361 : vector<8x32xi1>, vector<8x32xf32>
      %363 = arith.addf %355, %362 : vector<8x32xf32>
      %c21 = arith.constant 21 : index
      %364 = memref.load %arg15[%c21] : memref<30xf32, #tpu.memory_space<smem>>
      %cst_104 = arith.constant 0.699999988 : f32
      %365 = vector.broadcast %cst_104 : f32 to vector<8x32xf32>
      %366 = arith.cmpf oge, %139, %365 : vector<8x32xf32>
      %367 = arith.subf %364, %356 : f32
      %cst_105 = arith.constant 0.000000e+00 : f32
      %368 = vector.broadcast %367 : f32 to vector<8x32xf32>
      %369 = vector.broadcast %cst_105 : f32 to vector<8x32xf32>
      %370 = arith.select %366, %368, %369 : vector<8x32xi1>, vector<8x32xf32>
      %371 = arith.addf %363, %370 : vector<8x32xf32>
      %c22 = arith.constant 22 : index
      %372 = memref.load %arg15[%c22] : memref<30xf32, #tpu.memory_space<smem>>
      %cst_106 = arith.constant 0.733333349 : f32
      %373 = vector.broadcast %cst_106 : f32 to vector<8x32xf32>
      %374 = arith.cmpf oge, %139, %373 : vector<8x32xf32>
      %375 = arith.subf %372, %364 : f32
      %cst_107 = arith.constant 0.000000e+00 : f32
      %376 = vector.broadcast %375 : f32 to vector<8x32xf32>
      %377 = vector.broadcast %cst_107 : f32 to vector<8x32xf32>
      %378 = arith.select %374, %376, %377 : vector<8x32xi1>, vector<8x32xf32>
      %379 = arith.addf %371, %378 : vector<8x32xf32>
      %c23 = arith.constant 23 : index
      %380 = memref.load %arg15[%c23] : memref<30xf32, #tpu.memory_space<smem>>
      %cst_108 = arith.constant 0.766666651 : f32
      %381 = vector.broadcast %cst_108 : f32 to vector<8x32xf32>
      %382 = arith.cmpf oge, %139, %381 : vector<8x32xf32>
      %383 = arith.subf %380, %372 : f32
      %cst_109 = arith.constant 0.000000e+00 : f32
      %384 = vector.broadcast %383 : f32 to vector<8x32xf32>
      %385 = vector.broadcast %cst_109 : f32 to vector<8x32xf32>
      %386 = arith.select %382, %384, %385 : vector<8x32xi1>, vector<8x32xf32>
      %387 = arith.addf %379, %386 : vector<8x32xf32>
      %c24 = arith.constant 24 : index
      %388 = memref.load %arg15[%c24] : memref<30xf32, #tpu.memory_space<smem>>
      %cst_110 = arith.constant 8.000000e-01 : f32
      %389 = vector.broadcast %cst_110 : f32 to vector<8x32xf32>
      %390 = arith.cmpf oge, %139, %389 : vector<8x32xf32>
      %391 = arith.subf %388, %380 : f32
      %cst_111 = arith.constant 0.000000e+00 : f32
      %392 = vector.broadcast %391 : f32 to vector<8x32xf32>
      %393 = vector.broadcast %cst_111 : f32 to vector<8x32xf32>
      %394 = arith.select %390, %392, %393 : vector<8x32xi1>, vector<8x32xf32>
      %395 = arith.addf %387, %394 : vector<8x32xf32>
      %c25 = arith.constant 25 : index
      %396 = memref.load %arg15[%c25] : memref<30xf32, #tpu.memory_space<smem>>
      %cst_112 = arith.constant 0.833333313 : f32
      %397 = vector.broadcast %cst_112 : f32 to vector<8x32xf32>
      %398 = arith.cmpf oge, %139, %397 : vector<8x32xf32>
      %399 = arith.subf %396, %388 : f32
      %cst_113 = arith.constant 0.000000e+00 : f32
      %400 = vector.broadcast %399 : f32 to vector<8x32xf32>
      %401 = vector.broadcast %cst_113 : f32 to vector<8x32xf32>
      %402 = arith.select %398, %400, %401 : vector<8x32xi1>, vector<8x32xf32>
      %403 = arith.addf %395, %402 : vector<8x32xf32>
      %c26 = arith.constant 26 : index
      %404 = memref.load %arg15[%c26] : memref<30xf32, #tpu.memory_space<smem>>
      %cst_114 = arith.constant 0.866666674 : f32
      %405 = vector.broadcast %cst_114 : f32 to vector<8x32xf32>
      %406 = arith.cmpf oge, %139, %405 : vector<8x32xf32>
      %407 = arith.subf %404, %396 : f32
      %cst_115 = arith.constant 0.000000e+00 : f32
      %408 = vector.broadcast %407 : f32 to vector<8x32xf32>
      %409 = vector.broadcast %cst_115 : f32 to vector<8x32xf32>
      %410 = arith.select %406, %408, %409 : vector<8x32xi1>, vector<8x32xf32>
      %411 = arith.addf %403, %410 : vector<8x32xf32>
      %c27 = arith.constant 27 : index
      %412 = memref.load %arg15[%c27] : memref<30xf32, #tpu.memory_space<smem>>
      %cst_116 = arith.constant 0.899999976 : f32
      %413 = vector.broadcast %cst_116 : f32 to vector<8x32xf32>
      %414 = arith.cmpf oge, %139, %413 : vector<8x32xf32>
      %415 = arith.subf %412, %404 : f32
      %cst_117 = arith.constant 0.000000e+00 : f32
      %416 = vector.broadcast %415 : f32 to vector<8x32xf32>
      %417 = vector.broadcast %cst_117 : f32 to vector<8x32xf32>
      %418 = arith.select %414, %416, %417 : vector<8x32xi1>, vector<8x32xf32>
      %419 = arith.addf %411, %418 : vector<8x32xf32>
      %c28 = arith.constant 28 : index
      %420 = memref.load %arg15[%c28] : memref<30xf32, #tpu.memory_space<smem>>
      %cst_118 = arith.constant 0.933333337 : f32
      %421 = vector.broadcast %cst_118 : f32 to vector<8x32xf32>
      %422 = arith.cmpf oge, %139, %421 : vector<8x32xf32>
      %423 = arith.subf %420, %412 : f32
      %cst_119 = arith.constant 0.000000e+00 : f32
      %424 = vector.broadcast %423 : f32 to vector<8x32xf32>
      %425 = vector.broadcast %cst_119 : f32 to vector<8x32xf32>
      %426 = arith.select %422, %424, %425 : vector<8x32xi1>, vector<8x32xf32>
      %427 = arith.addf %419, %426 : vector<8x32xf32>
      %c29 = arith.constant 29 : index
      %428 = memref.load %arg15[%c29] : memref<30xf32, #tpu.memory_space<smem>>
      %cst_120 = arith.constant 0.966666638 : f32
      %429 = vector.broadcast %cst_120 : f32 to vector<8x32xf32>
      %430 = arith.cmpf oge, %139, %429 : vector<8x32xf32>
      %431 = arith.subf %428, %420 : f32
      %cst_121 = arith.constant 0.000000e+00 : f32
      %432 = vector.broadcast %431 : f32 to vector<8x32xf32>
      %433 = vector.broadcast %cst_121 : f32 to vector<8x32xf32>
      %434 = arith.select %430, %432, %433 : vector<8x32xi1>, vector<8x32xf32>
      %435 = arith.addf %427, %434 : vector<8x32xf32>
      %cst_122 = arith.constant 1.00000095 : f32
      %436 = vector.broadcast %cst_122 : f32 to vector<8x32xf32>
      %437 = arith.cmpf oge, %139, %436 : vector<8x32xf32>
      %cst_123 = arith.constant 0.000000e+00 : f32
      %438 = arith.subf %cst_123, %428 : f32
      %cst_124 = arith.constant 0.000000e+00 : f32
      %439 = vector.broadcast %438 : f32 to vector<8x32xf32>
      %440 = vector.broadcast %cst_124 : f32 to vector<8x32xf32>
      %441 = arith.select %437, %439, %440 : vector<8x32xi1>, vector<8x32xf32>
      %442 = arith.addf %435, %441 : vector<8x32xf32>
      %c1_125 = arith.constant 1 : index
      %443 = memref.load %arg17[%c1_125] : memref<4xf32, #tpu.memory_space<smem>>
      %cst_126 = arith.constant 1.000000e+00 : f32
      %444 = arith.maximumf %443, %cst_126 : f32
      %cst_127 = arith.constant 3.906250e-03 : f32
      %445 = arith.divf %cst_127, %444 : f32
      %c0_128 = arith.constant 0 : index
      %446 = memref.load %arg9[%c0_128] : memref<1xf32, #tpu.memory_space<smem>>
      %447 = arith.mulf %200, %442 : vector<8x32xf32>
      %448 = vector.shape_cast %447 : vector<8x32xf32> to vector<1x8x32xf32>
      %cst_129 = arith.constant dense<0.000000e+00> : vector<1xf32>
      %449 = vector.multi_reduction <add>, %448, %cst_129 [1, 2] : vector<1x8x32xf32> to vector<1xf32>
      %450 = vector.shape_cast %449 : vector<1xf32> to vector<1x1x1xf32>
      %451 = vector.extract %450[0, 0, 0] : f32 from vector<1x1x1xf32>
      %452 = arith.mulf %451, %445 : f32
      %cst_130 = arith.constant 0.000000e+00 : f32
      %453 = arith.select %39, %452, %cst_130 : f32
      %454 = arith.addf %446, %453 : f32
      %c0_131 = arith.constant 0 : index
      %455 = memref.load %arg9[%c0_131] : memref<1xf32, #tpu.memory_space<smem>>
      memref.store %454, %arg9[%c0_131] : memref<1xf32, #tpu.memory_space<smem>>
      %456 = arith.mulf %183, %184 : vector<4x32xf32>
      %c0_132 = arith.constant 0 : index
      %457 = memref.load %arg16[%c0_132] : memref<10xf32, #tpu.memory_space<smem>>
      %458 = vector.broadcast %457 : f32 to vector<4x32xf32>
      %c0_133 = arith.constant 0 : index
      %459 = memref.load %arg16[%c0_133] : memref<10xf32, #tpu.memory_space<smem>>
      %c1_134 = arith.constant 1 : index
      %460 = memref.load %arg16[%c1_134] : memref<10xf32, #tpu.memory_space<smem>>
      %cst_135 = arith.constant 1.000000e-01 : f32
      %461 = vector.broadcast %cst_135 : f32 to vector<4x32xf32>
      %462 = arith.cmpf oge, %186, %461 : vector<4x32xf32>
      %463 = arith.subf %460, %459 : f32
      %cst_136 = arith.constant 0.000000e+00 : f32
      %464 = vector.broadcast %463 : f32 to vector<4x32xf32>
      %465 = vector.broadcast %cst_136 : f32 to vector<4x32xf32>
      %466 = arith.select %462, %464, %465 : vector<4x32xi1>, vector<4x32xf32>
      %467 = arith.addf %458, %466 : vector<4x32xf32>
      %c2_137 = arith.constant 2 : index
      %468 = memref.load %arg16[%c2_137] : memref<10xf32, #tpu.memory_space<smem>>
      %cst_138 = arith.constant 2.000000e-01 : f32
      %469 = vector.broadcast %cst_138 : f32 to vector<4x32xf32>
      %470 = arith.cmpf oge, %186, %469 : vector<4x32xf32>
      %471 = arith.subf %468, %460 : f32
      %cst_139 = arith.constant 0.000000e+00 : f32
      %472 = vector.broadcast %471 : f32 to vector<4x32xf32>
      %473 = vector.broadcast %cst_139 : f32 to vector<4x32xf32>
      %474 = arith.select %470, %472, %473 : vector<4x32xi1>, vector<4x32xf32>
      %475 = arith.addf %467, %474 : vector<4x32xf32>
      %c3_140 = arith.constant 3 : index
      %476 = memref.load %arg16[%c3_140] : memref<10xf32, #tpu.memory_space<smem>>
      %cst_141 = arith.constant 3.000000e-01 : f32
      %477 = vector.broadcast %cst_141 : f32 to vector<4x32xf32>
      %478 = arith.cmpf oge, %186, %477 : vector<4x32xf32>
      %479 = arith.subf %476, %468 : f32
      %cst_142 = arith.constant 0.000000e+00 : f32
      %480 = vector.broadcast %479 : f32 to vector<4x32xf32>
      %481 = vector.broadcast %cst_142 : f32 to vector<4x32xf32>
      %482 = arith.select %478, %480, %481 : vector<4x32xi1>, vector<4x32xf32>
      %483 = arith.addf %475, %482 : vector<4x32xf32>
      %c4_143 = arith.constant 4 : index
      %484 = memref.load %arg16[%c4_143] : memref<10xf32, #tpu.memory_space<smem>>
      %cst_144 = arith.constant 4.000000e-01 : f32
      %485 = vector.broadcast %cst_144 : f32 to vector<4x32xf32>
      %486 = arith.cmpf oge, %186, %485 : vector<4x32xf32>
      %487 = arith.subf %484, %476 : f32
      %cst_145 = arith.constant 0.000000e+00 : f32
      %488 = vector.broadcast %487 : f32 to vector<4x32xf32>
      %489 = vector.broadcast %cst_145 : f32 to vector<4x32xf32>
      %490 = arith.select %486, %488, %489 : vector<4x32xi1>, vector<4x32xf32>
      %491 = arith.addf %483, %490 : vector<4x32xf32>
      %c5_146 = arith.constant 5 : index
      %492 = memref.load %arg16[%c5_146] : memref<10xf32, #tpu.memory_space<smem>>
      %cst_147 = arith.constant 5.000000e-01 : f32
      %493 = vector.broadcast %cst_147 : f32 to vector<4x32xf32>
      %494 = arith.cmpf oge, %186, %493 : vector<4x32xf32>
      %495 = arith.subf %492, %484 : f32
      %cst_148 = arith.constant 0.000000e+00 : f32
      %496 = vector.broadcast %495 : f32 to vector<4x32xf32>
      %497 = vector.broadcast %cst_148 : f32 to vector<4x32xf32>
      %498 = arith.select %494, %496, %497 : vector<4x32xi1>, vector<4x32xf32>
      %499 = arith.addf %491, %498 : vector<4x32xf32>
      %c6_149 = arith.constant 6 : index
      %500 = memref.load %arg16[%c6_149] : memref<10xf32, #tpu.memory_space<smem>>
      %cst_150 = arith.constant 6.000000e-01 : f32
      %501 = vector.broadcast %cst_150 : f32 to vector<4x32xf32>
      %502 = arith.cmpf oge, %186, %501 : vector<4x32xf32>
      %503 = arith.subf %500, %492 : f32
      %cst_151 = arith.constant 0.000000e+00 : f32
      %504 = vector.broadcast %503 : f32 to vector<4x32xf32>
      %505 = vector.broadcast %cst_151 : f32 to vector<4x32xf32>
      %506 = arith.select %502, %504, %505 : vector<4x32xi1>, vector<4x32xf32>
      %507 = arith.addf %499, %506 : vector<4x32xf32>
      %c7_152 = arith.constant 7 : index
      %508 = memref.load %arg16[%c7_152] : memref<10xf32, #tpu.memory_space<smem>>
      %cst_153 = arith.constant 0.699999988 : f32
      %509 = vector.broadcast %cst_153 : f32 to vector<4x32xf32>
      %510 = arith.cmpf oge, %186, %509 : vector<4x32xf32>
      %511 = arith.subf %508, %500 : f32
      %cst_154 = arith.constant 0.000000e+00 : f32
      %512 = vector.broadcast %511 : f32 to vector<4x32xf32>
      %513 = vector.broadcast %cst_154 : f32 to vector<4x32xf32>
      %514 = arith.select %510, %512, %513 : vector<4x32xi1>, vector<4x32xf32>
      %515 = arith.addf %507, %514 : vector<4x32xf32>
      %c8_155 = arith.constant 8 : index
      %516 = memref.load %arg16[%c8_155] : memref<10xf32, #tpu.memory_space<smem>>
      %cst_156 = arith.constant 8.000000e-01 : f32
      %517 = vector.broadcast %cst_156 : f32 to vector<4x32xf32>
      %518 = arith.cmpf oge, %186, %517 : vector<4x32xf32>
      %519 = arith.subf %516, %508 : f32
      %cst_157 = arith.constant 0.000000e+00 : f32
      %520 = vector.broadcast %519 : f32 to vector<4x32xf32>
      %521 = vector.broadcast %cst_157 : f32 to vector<4x32xf32>
      %522 = arith.select %518, %520, %521 : vector<4x32xi1>, vector<4x32xf32>
      %523 = arith.addf %515, %522 : vector<4x32xf32>
      %c9_158 = arith.constant 9 : index
      %524 = memref.load %arg16[%c9_158] : memref<10xf32, #tpu.memory_space<smem>>
      %cst_159 = arith.constant 0.899999976 : f32
      %525 = vector.broadcast %cst_159 : f32 to vector<4x32xf32>
      %526 = arith.cmpf oge, %186, %525 : vector<4x32xf32>
      %527 = arith.subf %524, %516 : f32
      %cst_160 = arith.constant 0.000000e+00 : f32
      %528 = vector.broadcast %527 : f32 to vector<4x32xf32>
      %529 = vector.broadcast %cst_160 : f32 to vector<4x32xf32>
      %530 = arith.select %526, %528, %529 : vector<4x32xi1>, vector<4x32xf32>
      %531 = arith.addf %523, %530 : vector<4x32xf32>
      %cst_161 = arith.constant 1.000000e+03 : f32
      %532 = vector.broadcast %cst_161 : f32 to vector<4x32xf32>
      %533 = arith.cmpf oge, %186, %532 : vector<4x32xf32>
      %cst_162 = arith.constant 0.000000e+00 : f32
      %534 = arith.subf %cst_162, %524 : f32
      %cst_163 = arith.constant 0.000000e+00 : f32
      %535 = vector.broadcast %534 : f32 to vector<4x32xf32>
      %536 = vector.broadcast %cst_163 : f32 to vector<4x32xf32>
      %537 = arith.select %533, %535, %536 : vector<4x32xi1>, vector<4x32xf32>
      %538 = arith.addf %531, %537 : vector<4x32xf32>
      %c0_164 = arith.constant 0 : index
      %539 = memref.load %arg17[%c0_164] : memref<4xf32, #tpu.memory_space<smem>>
      %cst_165 = arith.constant 0.000000e+00 : f32
      %540 = arith.cmpf ogt, %539, %cst_165 : f32
      %541 = arith.andi %39, %540 : i1
      %c2_166 = arith.constant 2 : index
      %542 = memref.load %arg17[%c2_166] : memref<4xf32, #tpu.memory_space<smem>>
      %cst_167 = arith.constant 1.000000e+00 : f32
      %543 = arith.maximumf %542, %cst_167 : f32
      %cst_168 = arith.constant 7.812500e-03 : f32
      %544 = arith.divf %cst_168, %543 : f32
      %c0_169 = arith.constant 0 : index
      %545 = memref.load %arg10[%c0_169] : memref<1xf32, #tpu.memory_space<smem>>
      %cst_170 = arith.constant 2.000000e-02 : f32
      %546 = vector.broadcast %cst_170 : f32 to vector<4x32xf32>
      %547 = arith.subf %456, %546 : vector<4x32xf32>
      %548 = arith.mulf %547, %538 : vector<4x32xf32>
      %549 = vector.shape_cast %548 : vector<4x32xf32> to vector<1x4x32xf32>
      %cst_171 = arith.constant dense<0.000000e+00> : vector<1xf32>
      %550 = vector.multi_reduction <add>, %549, %cst_171 [1, 2] : vector<1x4x32xf32> to vector<1xf32>
      %551 = vector.shape_cast %550 : vector<1xf32> to vector<1x1x1xf32>
      %552 = vector.extract %551[0, 0, 0] : f32 from vector<1x1x1xf32>
      %553 = arith.mulf %552, %544 : f32
      %cst_172 = arith.constant 0.000000e+00 : f32
      %554 = arith.select %541, %553, %cst_172 : f32
      %555 = arith.addf %545, %554 : f32
      %c0_173 = arith.constant 0 : index
      %556 = memref.load %arg10[%c0_173] : memref<1xf32, #tpu.memory_space<smem>>
      memref.store %555, %arg10[%c0_173] : memref<1xf32, #tpu.memory_space<smem>>
    } else {
    }
    return
  }
  func.func @transform_0(%arg0: i32, %arg1: i32, %arg2: i32, %arg3: memref<30xf32, #tpu.memory_space<smem>>, %arg4: memref<10xf32, #tpu.memory_space<smem>>) -> (i32, i32) {
    %c0_i32 = arith.constant 0 : i32
    %c0_i32_0 = arith.constant 0 : i32
    return %c0_i32, %arg2 : i32, i32
  }
  func.func @transform_1(%arg0: i32, %arg1: i32, %arg2: i32, %arg3: memref<30xf32, #tpu.memory_space<smem>>, %arg4: memref<10xf32, #tpu.memory_space<smem>>) -> (i32, i32, i32) {
    %c0_i32 = arith.constant 0 : i32
    %c0_i32_0 = arith.constant 0 : i32
    %c0_i32_1 = arith.constant 0 : i32
    return %arg0, %c0_i32, %c0_i32_0 : i32, i32, i32
  }
  func.func @transform_2(%arg0: i32, %arg1: i32, %arg2: i32, %arg3: memref<30xf32, #tpu.memory_space<smem>>, %arg4: memref<10xf32, #tpu.memory_space<smem>>) -> (i32, i32, i32) {
    %c0_i32 = arith.constant 0 : i32
    %c0_i32_0 = arith.constant 0 : i32
    return %arg0, %c0_i32, %arg2 : i32, i32, i32
  }
  func.func @transform_3(%arg0: i32, %arg1: i32, %arg2: i32, %arg3: memref<30xf32, #tpu.memory_space<smem>>, %arg4: memref<10xf32, #tpu.memory_space<smem>>) -> (i32, i32, i32) {
    %c0_i32 = arith.constant 0 : i32
    %c0_i32_0 = arith.constant 0 : i32
    return %arg0, %c0_i32, %arg2 : i32, i32, i32
  }
  func.func @transform_4(%arg0: i32, %arg1: i32, %arg2: i32, %arg3: memref<30xf32, #tpu.memory_space<smem>>, %arg4: memref<10xf32, #tpu.memory_space<smem>>) -> i32 {
    %c0_i32 = arith.constant 0 : i32
    %c0_i32_0 = arith.constant 0 : i32
    return %c0_i32 : i32
  }
  func.func @transform_5(%arg0: i32, %arg1: i32, %arg2: i32, %arg3: memref<30xf32, #tpu.memory_space<smem>>, %arg4: memref<10xf32, #tpu.memory_space<smem>>) -> i32 {
    %c0_i32 = arith.constant 0 : i32
    %c0_i32_0 = arith.constant 0 : i32
    return %c0_i32 : i32
  }
  func.func @transform_6(%arg0: i32, %arg1: i32, %arg2: i32, %arg3: memref<30xf32, #tpu.memory_space<smem>>, %arg4: memref<10xf32, #tpu.memory_space<smem>>) -> i32 {
    %c0_i32 = arith.constant 0 : i32
    %c0_i32_0 = arith.constant 0 : i32
    return %c0_i32 : i32
  }
  func.func @transform_7(%arg0: i32, %arg1: i32, %arg2: i32, %arg3: memref<30xf32, #tpu.memory_space<smem>>, %arg4: memref<10xf32, #tpu.memory_space<smem>>) -> i32 {
    %c0_i32 = arith.constant 0 : i32
    %c0_i32_0 = arith.constant 0 : i32
    return %c0_i32 : i32
  }
}

</mosaic_0001>

<llo_original>
// kernel: ghm_loss_forward.1
$region0: #{ghm_loss_forward.1}
  #allocation0 [shape = 'u32[]', space=smem, size = 0x4, offset = 0x4, fixed_abs, tag = 'smem constant byte address 0x4 - core index']
  #allocation1 [shape = 'u32[144,128]{1,0:T(1,128)}', space=vmem, size = 0x12000, scoped, tag = 'internal scratch']
  #allocation2 [shape = 'f32[31]{0:T(128)}', space=smem, size = 0x200, scoped, tag = 'scratch operand']
  #allocation3 [shape = 'f32[11]{0:T(128)}', space=smem, size = 0x200, scoped, tag = 'scratch operand']
  #allocation4 [shape = 'f32[30]{0:T(128)}', space=smem, size = 0x200, scoped, tag = 'scratch operand']
  #allocation5 [shape = 'f32[10]{0:T(128)}', space=smem, size = 0x200, scoped, tag = 'scratch operand']
  #allocation6 [shape = 'f32[4]{0:T(128)}', space=smem, size = 0x200, scoped, tag = 'scratch operand']
  #allocation7 [shape = 'f32[4,32]{1,0:T(4,128)}', space=vmem, size = 0x800, scoped, tag = 'scratch operand']
  #allocation8 [shape = 's32[1]{0}', space=sflag, size = 0x4, scoped, tag = 'scoped memory for ghm_loss_forward.1']
  #allocation9 [shape = 'u8[512]{0}', space=smem, size = 0x200, scoped, tag = 'prefetched SMEM operand 0']
  #allocation10 [shape = 'u8[512]{0}', space=smem, size = 0x200, scoped, tag = 'prefetched SMEM operand 1']
  %s0 = inlined_call_operand.vmem [shape: f32[30], index: 0, kind: input, shape index: {}]
  %s1 = inlined_call_operand.vmem [shape: f32[10], index: 1, kind: input, shape index: {}]
  %s2 = inlined_call_operand.vmem [shape: f32[8,32], index: 2, kind: input, shape index: {}]
  %s3 = inlined_call_operand.vmem [shape: f32[2,4,5], index: 3, kind: input, shape index: {}]
  %s4 = inlined_call_operand.vmem [shape: f32[2,8,32], index: 4, kind: input, shape index: {}]
  %s5 = inlined_call_operand.vmem [shape: f32[2,4,32], index: 5, kind: input, shape index: {}]
  %s6 = inlined_call_operand.hbm [shape: f32[1], index: 6, kind: output, shape index: {0}]
  %s7 = inlined_call_operand.hbm [shape: f32[1], index: 7, kind: output, shape index: {1}]
  %s8 = inlined_call_operand.hbm [shape: f32[30], index: 8, kind: output, shape index: {2}]
  %s9 = inlined_call_operand.hbm [shape: f32[10], index: 9, kind: output, shape index: {3}]
  %10 = xla_tuple %s6, %s7, %s8, %s9
  %s11 = sld [smem:[#allocation0]]
  $region93: #{ghm_loss_forward.1} parent=0
    _
  %s13 = ssub.s32 1, %s11
  %s14 = scalar_select 0, %s13, %s11
  %s15 = sshll.u32 %s0, 4
  %s16 = int_to_ptr.vmem [resolvable:$true] %s15
  %18 = dma.vmem_to_smem %s16, 16, [#allocation9], [#allocation8]
  %s19 = sshll.u32 %s1, 4
  %s20 = int_to_ptr.vmem [resolvable:$true] %s19
  %22 = dma.vmem_to_smem %s20, 16, [#allocation10], [#allocation8]
  %23 = dma.done [#allocation8], 32
  %24 = sfence
  $region1: #{ghm_loss_forward.1} parent=0
    #allocation11 [shape = 'u8[512]{0}', space=smem, size = 0x200, scoped, tag = 'output window, operand 0, single buffered']
    #allocation12 [shape = 's32[2]{0}', space=sflag, size = 0x8, scoped, tag = 'scoped memory for ghm_loss_forward.1']
    #allocation13 [shape = 'u8[512]{0}', space=smem, size = 0x200, scoped, tag = 'output window, operand 1, single buffered']
    #allocation14 [shape = 's32[1]{0}', space=sflag, size = 0x4, scoped, tag = 'scoped memory for ghm_loss_forward.1']
    #allocation15 [shape = 'u8[512]{0}', space=smem, size = 0x200, scoped, tag = 'output window, operand 2, single buffered']
    #allocation16 [shape = 'u8[512]{0}', space=smem, size = 0x200, scoped, tag = 'output window, operand 3, single buffered']
    #allocation17 [shape = 's32[1]{0}', space=sflag, size = 0x4, scoped, tag = 'scoped memory for ghm_loss_forward.1']
    %25 = vsyncpa [#allocation12], 0
    %26 = vsyncpa [#allocation14], 0
    %27 = vsyncpa [#allocation17], 0
    loop: start=0, step=1, limit=6
    $region2: #{ghm_loss_forward.1} parent=1 // loop_pre_header
      _
    $region3: #{ghm_loss_forward.1} parent=1 // loop_header
      %s29 = sphi 0, %s33
      %p30 = scmp.ge.s32.totalorder %s29, 6
      %s36 = sphi 0, %s55
      %s37 = sphi 0, %s51
      %s38 = sphi 0, %s47
      %s39 = sphi 0, %s36
      %s40 = sphi 0, %s37
      %s41 = sphi 0, %s38
      %s42 = sphi 0, %s39
      %s43 = sphi 0, %s40
      %s44 = sphi 0, %s41
      %s58 = sphi 0, %s60
      %s61 = sphi 0, %s58
      %s62 = sphi 0, %s61
      %s78 = sphi 0, %s62
      %s84 = sphi 0, %s86
      %s87 = sphi 0, %s84
      %s88 = sphi 0, %s87
      %s104 = sphi 0, %s88
      %s112 = sphi 0, %s114
      %s115 = sphi 0, %s112
      %s116 = sphi 0, %s115
      %s132 = sphi 0, %s116
      %s140 = sphi 0, %s142
      %s143 = sphi 0, %s140
      %s144 = sphi 0, %s143
      %s160 = sphi 0, %s144
      %s164 = sphi 0, %s164
      %s166 = sphi 0, %s164
      %s167 = sphi 0, %s166
      %s181 = sphi 0, %s167
      %s185 = sphi 0, %s185
      %s187 = sphi 0, %s185
      %s188 = sphi 0, %s187
      %s202 = sphi 0, %s188
      %s206 = sphi 0, %s206
      %s208 = sphi 0, %s206
      %s209 = sphi 0, %s208
      %s223 = sphi 0, %s209
      %s227 = sphi 0, %s227
      %s229 = sphi 0, %s227
      %s230 = sphi 0, %s229
      %s244 = sphi 0, %s230
    $region4: #{ghm_loss_forward.1} parent=1 // loop_header_branch
      %32 = sbr.rel (%p30) target = $region8
    $region5: #{ghm_loss_forward.1} parent=1 // loop_body
      %s34 = ssub.s32 %s29, 1
      %s35 = ssub.s32 %s29, 2
      %s45 = sadd.s32 1, %s38
      %p46 = scmp.ge.s32.totalorder %s45, 1
      %s47 = scalar_select %p46, 0, %s45
      %s48 = sadd.s32 1, %s37
      %s49 = scalar_select %p46, %s48, %s37
      %p50 = scmp.ge.s32.totalorder %s49, 2
      %s51 = scalar_select %p50, 0, %s49
      %s52 = sadd.s32 1, %s36
      %s53 = scalar_select %p50, %s52, %s36
      %p54 = scmp.ge.s32.totalorder %s53, 2
      %s55 = scalar_select %p54, 0, %s53
      %s56 = ssub.s32 %s38, %s47
      %p57 = scmp.eq.s32.totalorder %s56, 0
      %s59 = sadd.s32 %s58, 1
      %s60 = scalar_select %p57, %s58, %s59
      %p63 = pneg %p57
      %p64 = scmp.eq.s32.totalorder %s29, 3
      %p65 = por %p63, %p64
      %p66 = scmp.ne.s32.totalorder %s58, %s61
      %p67 = scmp.eq.s32.totalorder %s29, 0
      %p68 = por %p66, %p67
      %p69 = scmp.ne.s32.totalorder %s58, %s61
      %p70 = scmp.eq.s32.totalorder %s34, 3
      %p71 = por %p69, %p70
      %p72 = scmp.ne.s32.totalorder %s61, %s62
      %p73 = scmp.eq.s32.totalorder %s34, 0
      %p74 = por %p72, %p73
      %p75 = scmp.ne.s32.totalorder %s61, %s62
      %p76 = scmp.eq.s32.totalorder %s35, 3
      %p77 = por %p75, %p76
      %p79 = scmp.ne.s32.totalorder %s62, %s78
      %p80 = scmp.eq.s32.totalorder %s35, 0
      %p81 = por %p79, %p80
      %s82 = ssub.s32 %s36, %s55
      %p83 = scmp.eq.s32.totalorder %s82, 0
      %s85 = sadd.s32 %s84, 1
      %s86 = scalar_select %p83, %s84, %s85
      %p89 = pneg %p83
      %p90 = scmp.eq.s32.totalorder %s29, 3
      %p91 = por %p89, %p90
      %p92 = scmp.ne.s32.totalorder %s84, %s87
      %p93 = scmp.eq.s32.totalorder %s29, 0
      %p94 = por %p92, %p93
      %p95 = scmp.ne.s32.totalorder %s84, %s87
      %p96 = scmp.eq.s32.totalorder %s34, 3
      %p97 = por %p95, %p96
      %p98 = scmp.ne.s32.totalorder %s87, %s88
      %p99 = scmp.eq.s32.totalorder %s34, 0
      %p100 = por %p98, %p99
      %p101 = scmp.ne.s32.totalorder %s87, %s88
      %p102 = scmp.eq.s32.totalorder %s35, 3
      %p103 = por %p101, %p102
      %p105 = scmp.ne.s32.totalorder %s88, %s104
      %p106 = scmp.eq.s32.totalorder %s35, 0
      %p107 = por %p105, %p106
      %s108 = ssub.s32 %s36, %s55
      %s109 = ssub.s32 %s38, %s47
      %s110 = sor.u32 %s108, %s109
      %p111 = scmp.eq.s32.totalorder %s110, 0
      %s113 = sadd.s32 %s112, 1
      %s114 = scalar_select %p111, %s112, %s113
      %p117 = pneg %p111
      %p118 = scmp.eq.s32.totalorder %s29, 3
      %p119 = por %p117, %p118
      %p120 = scmp.ne.s32.totalorder %s112, %s115
      %p121 = scmp.eq.s32.totalorder %s29, 0
      %p122 = por %p120, %p121
      %p123 = scmp.ne.s32.totalorder %s112, %s115
      %p124 = scmp.eq.s32.totalorder %s34, 3
      %p125 = por %p123, %p124
      %p126 = scmp.ne.s32.totalorder %s115, %s116
      %p127 = scmp.eq.s32.totalorder %s34, 0
      %p128 = por %p126, %p127
      %p129 = scmp.ne.s32.totalorder %s115, %s116
      %p130 = scmp.eq.s32.totalorder %s35, 3
      %p131 = por %p129, %p130
      %p133 = scmp.ne.s32.totalorder %s116, %s132
      %p134 = scmp.eq.s32.totalorder %s35, 0
      %p135 = por %p133, %p134
      %s136 = ssub.s32 %s36, %s55
      %s137 = ssub.s32 %s38, %s47
      %s138 = sor.u32 %s136, %s137
      %p139 = scmp.eq.s32.totalorder %s138, 0
      %s141 = sadd.s32 %s140, 1
      %s142 = scalar_select %p139, %s140, %s141
      %p145 = pneg %p139
      %p146 = scmp.eq.s32.totalorder %s29, 3
      %p147 = por %p145, %p146
      %p148 = scmp.ne.s32.totalorder %s140, %s143
      %p149 = scmp.eq.s32.totalorder %s29, 0
      %p150 = por %p148, %p149
      %p151 = scmp.ne.s32.totalorder %s140, %s143
      %p152 = scmp.eq.s32.totalorder %s34, 3
      %p153 = por %p151, %p152
      %p154 = scmp.ne.s32.totalorder %s143, %s144
      %p155 = scmp.eq.s32.totalorder %s34, 0
      %p156 = por %p154, %p155
      %p157 = scmp.ne.s32.totalorder %s143, %s144
      %p158 = scmp.eq.s32.totalorder %s35, 3
      %p159 = por %p157, %p158
      %p161 = scmp.ne.s32.totalorder %s144, %s160
      %p162 = scmp.eq.s32.totalorder %s35, 0
      %p163 = por %p161, %p162
      %s165 = sadd.s32 %s164, 1
      %p168 = scmp.eq.s32.totalorder %s29, 3
      %p169 = scmp.ne.s32.totalorder %s164, %s166
      %p170 = scmp.eq.s32.totalorder %s29, 0
      %p171 = por %p169, %p170
      %p172 = scmp.ne.s32.totalorder %s164, %s166
      %p173 = scmp.eq.s32.totalorder %s34, 3
      %p174 = por %p172, %p173
      %p175 = scmp.ne.s32.totalorder %s166, %s167
      %p176 = scmp.eq.s32.totalorder %s34, 0
      %p177 = por %p175, %p176
      %p178 = scmp.ne.s32.totalorder %s166, %s167
      %p179 = scmp.eq.s32.totalorder %s35, 3
      %p180 = por %p178, %p179
      %p182 = scmp.ne.s32.totalorder %s167, %s181
      %p183 = scmp.eq.s32.totalorder %s35, 0
      %p184 = por %p182, %p183
      %s186 = sadd.s32 %s185, 1
      %p189 = scmp.eq.s32.totalorder %s29, 3
      %p190 = scmp.ne.s32.totalorder %s185, %s187
      %p191 = scmp.eq.s32.totalorder %s29, 0
      %p192 = por %p190, %p191
      %p193 = scmp.ne.s32.totalorder %s185, %s187
      %p194 = scmp.eq.s32.totalorder %s34, 3
      %p195 = por %p193, %p194
      %p196 = scmp.ne.s32.totalorder %s187, %s188
      %p197 = scmp.eq.s32.totalorder %s34, 0
      %p198 = por %p196, %p197
      %p199 = scmp.ne.s32.totalorder %s187, %s188
      %p200 = scmp.eq.s32.totalorder %s35, 3
      %p201 = por %p199, %p200
      %p203 = scmp.ne.s32.totalorder %s188, %s202
      %p204 = scmp.eq.s32.totalorder %s35, 0
      %p205 = por %p203, %p204
      %s207 = sadd.s32 %s206, 1
      %p210 = scmp.eq.s32.totalorder %s29, 3
      %p211 = scmp.ne.s32.totalorder %s206, %s208
      %p212 = scmp.eq.s32.totalorder %s29, 0
      %p213 = por %p211, %p212
      %p214 = scmp.ne.s32.totalorder %s206, %s208
      %p215 = scmp.eq.s32.totalorder %s34, 3
      %p216 = por %p214, %p215
      %p217 = scmp.ne.s32.totalorder %s208, %s209
      %p218 = scmp.eq.s32.totalorder %s34, 0
      %p219 = por %p217, %p218
      %p220 = scmp.ne.s32.totalorder %s208, %s209
      %p221 = scmp.eq.s32.totalorder %s35, 3
      %p222 = por %p220, %p221
      %p224 = scmp.ne.s32.totalorder %s209, %s223
      %p225 = scmp.eq.s32.totalorder %s35, 0
      %p226 = por %p224, %p225
      %s228 = sadd.s32 %s227, 1
      %p231 = scmp.eq.s32.totalorder %s29, 3
      %p232 = scmp.ne.s32.totalorder %s227, %s229
      %p233 = scmp.eq.s32.totalorder %s29, 0
      %p234 = por %p232, %p233
      %p235 = scmp.ne.s32.totalorder %s227, %s229
      %p236 = scmp.eq.s32.totalorder %s34, 3
      %p237 = por %p235, %p236
      %p238 = scmp.ne.s32.totalorder %s229, %s230
      %p239 = scmp.eq.s32.totalorder %s34, 0
      %p240 = por %p238, %p239
      %p241 = scmp.ne.s32.totalorder %s229, %s230
      %p242 = scmp.eq.s32.totalorder %s35, 3
      %p243 = por %p241, %p242
      %p245 = scmp.ne.s32.totalorder %s230, %s244
      %p246 = scmp.eq.s32.totalorder %s35, 0
      %p247 = por %p245, %p246
      %p248 = scmp.le.s32.totalorder 1, %s29
      %p249 = scmp.lt.s32.totalorder %s29, 5
      %p250 = pnand %p248, %p249
      %p251 = pneg %p250
      // Predicated region
      $region9: #{ghm_loss_forward.1} parent=5 // pred_check
        _
      $region10: #{ghm_loss_forward.1} parent=5 // pred_check_branch
        %253 = sbr.rel (%p250) target = $region12
      $region11: #{ghm_loss_forward.1} parent=5 // pred_region
        %s254 = ssub.s32 %s29, 1
        // Predicated region
        $region13: #{ghm_loss_forward.1} parent=11 // pred_check
          %p255 = pneg %p74
        $region14: #{ghm_loss_forward.1} parent=11 // pred_check_branch
          %257 = sbr.rel (%p255) target = $region16
        $region15: #{ghm_loss_forward.1} parent=11 // pred_region
          %p258 = scmp.lt.s32.totalorder %s41, 0
          %s259 = scalar_select %p258, %s41, 0
          %s260 = smul.addr %s259, 8
          %s261 = scalar_lea.vmem %s2, %s260
        $region16: #{ghm_loss_forward.1} parent=11 // pred_fallthru
          _
      $region12: #{ghm_loss_forward.1} parent=5 // pred_fallthru
        _
      %p262 = scmp.lt.s32.totalorder %s29, 4
      // Predicated region
      $region17: #{ghm_loss_forward.1} parent=5 // pred_check
        %p263 = pneg %p262
      $region18: #{ghm_loss_forward.1} parent=5 // pred_check_branch
        %265 = sbr.rel (%p263) target = $region20
      $region19: #{ghm_loss_forward.1} parent=5 // pred_region
        // Predicated region
        $region21: #{ghm_loss_forward.1} parent=19 // pred_check
          %p266 = pneg %p94
        $region22: #{ghm_loss_forward.1} parent=19 // pred_check_branch
          %268 = sbr.rel (%p266) target = $region24
        $region23: #{ghm_loss_forward.1} parent=19 // pred_region
          %p269 = scmp.lt.s32.totalorder %s36, 1
          %s270 = scalar_select %p269, %s36, 1
          %s271 = smul.addr %s270, 4
          %s272 = scalar_lea.vmem %s3, %s271
        $region24: #{ghm_loss_forward.1} parent=19 // pred_fallthru
          _
        // Predicated region
        $region25: #{ghm_loss_forward.1} parent=19 // pred_check
          %p273 = pneg %p122
        $region26: #{ghm_loss_forward.1} parent=19 // pred_check_branch
          %275 = sbr.rel (%p273) target = $region28
        $region27: #{ghm_loss_forward.1} parent=19 // pred_region
          %p276 = scmp.lt.s32.totalorder %s36, 1
          %s277 = scalar_select %p276, %s36, 1
          %p278 = scmp.lt.s32.totalorder %s38, 0
          %s279 = scalar_select %p278, %s38, 0
          %s280 = sadd.s32 %s279, %s277
          %s281 = smul.addr %s280, 8
          %s282 = scalar_lea.vmem %s4, %s281
        $region28: #{ghm_loss_forward.1} parent=19 // pred_fallthru
          _
        // Predicated region
        $region29: #{ghm_loss_forward.1} parent=19 // pred_check
          %p283 = pneg %p150
        $region30: #{ghm_loss_forward.1} parent=19 // pred_check_branch
          %285 = sbr.rel (%p283) target = $region32
        $region31: #{ghm_loss_forward.1} parent=19 // pred_region
          %p286 = scmp.lt.s32.totalorder %s36, 1
          %s287 = scalar_select %p286, %s36, 1
          %p288 = scmp.lt.s32.totalorder %s38, 0
          %s289 = scalar_select %p288, %s38, 0
          %s290 = sadd.s32 %s289, %s287
          %s291 = smul.addr %s290, 4
          %s292 = scalar_lea.vmem %s5, %s291
        $region32: #{ghm_loss_forward.1} parent=19 // pred_fallthru
          _
      $region20: #{ghm_loss_forward.1} parent=5 // pred_fallthru
        _
      %p293 = scmp.le.s32.totalorder 1, %s29
      %p294 = scmp.lt.s32.totalorder %s29, 5
      %p295 = pnand %p293, %p294
      %p296 = pneg %p295
      // Predicated region
      $region33: #{ghm_loss_forward.1} parent=5 // pred_check
        _
      $region34: #{ghm_loss_forward.1} parent=5 // pred_check_branch
        %298 = sbr.rel (%p295) target = $region36
      $region35: #{ghm_loss_forward.1} parent=5 // pred_region
        %s299 = ssub.s32 %s29, 1
        %p300 = scmp.lt.s32.totalorder %s41, 0
        %s301 = scalar_select %p300, %s41, 0
        %s302 = smul.addr %s301, 8
        %s303 = scalar_lea.vmem %s2, %s302
        %p304 = pneg %p74
        %p305 = pneg %p71
        %p306 = scmp.lt.s32.totalorder %s39, 1
        %s307 = scalar_select %p306, %s39, 1
        %s308 = smul.addr %s307, 4
        %s309 = scalar_lea.vmem %s3, %s308
        %p310 = pneg %p100
        %p311 = pneg %p97
        %p312 = scmp.lt.s32.totalorder %s39, 1
        %s313 = scalar_select %p312, %s39, 1
        %p314 = scmp.lt.s32.totalorder %s41, 0
        %s315 = scalar_select %p314, %s41, 0
        %s316 = sadd.s32 %s315, %s313
        %s317 = smul.addr %s316, 8
        %s318 = scalar_lea.vmem %s4, %s317
        %p319 = pneg %p128
        %p320 = pneg %p125
        %p321 = scmp.lt.s32.totalorder %s39, 1
        %s322 = scalar_select %p321, %s39, 1
        %p323 = scmp.lt.s32.totalorder %s41, 0
        %s324 = scalar_select %p323, %s41, 0
        %s325 = sadd.s32 %s324, %s322
        %s326 = smul.addr %s325, 4
        %s327 = scalar_lea.vmem %s5, %s326
        %p328 = pneg %p156
        %p329 = pneg %p153
        %p330 = pneg %p177
        %p331 = pneg %p174
        %p332 = pneg %p198
        %p333 = pneg %p195
        %p334 = pneg %p219
        %p335 = pneg %p216
        %p336 = pneg %p240
        %p337 = pneg %p237
        %p338 = scmp.lt.s32.totalorder %s41, 0
        %s339 = scalar_select %p338, %s41, 0
        %s340 = smul.addr %s339, 8
        %s341 = scalar_lea.vmem %s2, %s340
        %p342 = scmp.lt.s32.totalorder %s39, 1
        %s343 = scalar_select %p342, %s39, 1
        %s344 = smul.addr %s343, 4
        %s345 = scalar_lea.vmem %s3, %s344
        %p346 = scmp.lt.s32.totalorder %s39, 1
        %s347 = scalar_select %p346, %s39, 1
        %p348 = scmp.lt.s32.totalorder %s41, 0
        %s349 = scalar_select %p348, %s41, 0
        %s350 = sadd.s32 %s349, %s347
        %s351 = smul.addr %s350, 8
        %s352 = scalar_lea.vmem %s4, %s351
        %p353 = scmp.lt.s32.totalorder %s39, 1
        %s354 = scalar_select %p353, %s39, 1
        %p355 = scmp.lt.s32.totalorder %s41, 0
        %s356 = scalar_select %p355, %s41, 0
        %s357 = sadd.s32 %s356, %s354
        %s358 = smul.addr %s357, 4
        %s359 = scalar_lea.vmem %s5, %s358
        %p360 = scmp.eq.s32.totalorder %s39, 0
        %p361 = scmp.eq.s32.totalorder %s40, 0
        %p362 = pnand %p360, %p361
        %p363 = pneg %p362
        %p364 = scmp.eq.s32.totalorder %s41, 0
        %p365 = pnand %p363, %p364
        %p366 = pneg %p365
        // Predicated region
        $region37: #{ghm_loss_forward.1} parent=35 // pred_check
          _
        $region38: #{ghm_loss_forward.1} parent=35 // pred_check_branch
          %368 = sbr.rel (%p365) target = $region40
        $region39: #{ghm_loss_forward.1} parent=35 // pred_region
          %s369 = scalar_lea.smem [#allocation11], 0
          %370 = sst [smem:[%s369]] 0.0
          %s371 = scalar_lea.smem [#allocation13], 0
          %372 = sst [smem:[%s371]] 0.0
          %s373 = sld [smem:[#allocation9]]
          %s374 = scalar_lea.smem [#allocation15], 0
          %375 = sst [smem:[%s374]] %s373
          %s376 = sld [smem:[#allocation9 + $0x1]]
          %s377 = scalar_lea.smem [#allocation15], 1
          %378 = sst [smem:[%s377]] %s376
          %s379 = sld [smem:[#allocation9 + $0x2]]
          %s380 = scalar_lea.smem [#allocation15], 2
          %381 = sst [smem:[%s380]] %s379
          %s382 = sld [smem:[#allocation9 + $0x3]]
          %s383 = scalar_lea.smem [#allocation15], 3
          %384 = sst [smem:[%s383]] %s382
          %s385 = sld [smem:[#allocation9 + $0x4]]
          %s386 = scalar_lea.smem [#allocation15], 4
          %387 = sst [smem:[%s386]] %s385
          %s388 = sld [smem:[#allocation9 + $0x5]]
          %s389 = scalar_lea.smem [#allocation15], 5
          %390 = sst [smem:[%s389]] %s388
          %s391 = sld [smem:[#allocation9 + $0x6]]
          %s392 = scalar_lea.smem [#allocation15], 6
          %393 = sst [smem:[%s392]] %s391
          %s394 = sld [smem:[#allocation9 + $0x7]]
          %s395 = scalar_lea.smem [#allocation15], 7
          %396 = sst [smem:[%s395]] %s394
          %s397 = sld [smem:[#allocation9 + $0x8]]
          %s398 = scalar_lea.smem [#allocation15], 8
          %399 = sst [smem:[%s398]] %s397
          %s400 = sld [smem:[#allocation9 + $0x9]]
          %s401 = scalar_lea.smem [#allocation15], 9
          %402 = sst [smem:[%s401]] %s400
          %s403 = sld [smem:[#allocation9 + $0xa]]
          %s404 = scalar_lea.smem [#allocation15], 10
          %405 = sst [smem:[%s404]] %s403
          %s406 = sld [smem:[#allocation9 + $0xb]]
          %s407 = scalar_lea.smem [#allocation15], 11
          %408 = sst [smem:[%s407]] %s406
          %s409 = sld [smem:[#allocation9 + $0xc]]
          %s410 = scalar_lea.smem [#allocation15], 12
          %411 = sst [smem:[%s410]] %s409
          %s412 = sld [smem:[#allocation9 + $0xd]]
          %s413 = scalar_lea.smem [#allocation15], 13
          %414 = sst [smem:[%s413]] %s412
          %s415 = sld [smem:[#allocation9 + $0xe]]
          %s416 = scalar_lea.smem [#allocation15], 14
          %417 = sst [smem:[%s416]] %s415
          %s418 = sld [smem:[#allocation9 + $0xf]]
          %s419 = scalar_lea.smem [#allocation15], 15
          %420 = sst [smem:[%s419]] %s418
          %s421 = sld [smem:[#allocation9 + $0x10]]
          %s422 = scalar_lea.smem [#allocation15], 16
          %423 = sst [smem:[%s422]] %s421
          %s424 = sld [smem:[#allocation9 + $0x11]]
          %s425 = scalar_lea.smem [#allocation15], 17
          %426 = sst [smem:[%s425]] %s424
          %s427 = sld [smem:[#allocation9 + $0x12]]
          %s428 = scalar_lea.smem [#allocation15], 18
          %429 = sst [smem:[%s428]] %s427
          %s430 = sld [smem:[#allocation9 + $0x13]]
          %s431 = scalar_lea.smem [#allocation15], 19
          %432 = sst [smem:[%s431]] %s430
          %s433 = sld [smem:[#allocation9 + $0x14]]
          %s434 = scalar_lea.smem [#allocation15], 20
          %435 = sst [smem:[%s434]] %s433
          %s436 = sld [smem:[#allocation9 + $0x15]]
          %s437 = scalar_lea.smem [#allocation15], 21
          %438 = sst [smem:[%s437]] %s436
          %s439 = sld [smem:[#allocation9 + $0x16]]
          %s440 = scalar_lea.smem [#allocation15], 22
          %441 = sst [smem:[%s440]] %s439
          %s442 = sld [smem:[#allocation9 + $0x17]]
          %s443 = scalar_lea.smem [#allocation15], 23
          %444 = sst [smem:[%s443]] %s442
          %s445 = sld [smem:[#allocation9 + $0x18]]
          %s446 = scalar_lea.smem [#allocation15], 24
          %447 = sst [smem:[%s446]] %s445
          %s448 = sld [smem:[#allocation9 + $0x19]]
          %s449 = scalar_lea.smem [#allocation15], 25
          %450 = sst [smem:[%s449]] %s448
          %s451 = sld [smem:[#allocation9 + $0x1a]]
          %s452 = scalar_lea.smem [#allocation15], 26
          %453 = sst [smem:[%s452]] %s451
          %s454 = sld [smem:[#allocation9 + $0x1b]]
          %s455 = scalar_lea.smem [#allocation15], 27
          %456 = sst [smem:[%s455]] %s454
          %s457 = sld [smem:[#allocation9 + $0x1c]]
          %s458 = scalar_lea.smem [#allocation15], 28
          %459 = sst [smem:[%s458]] %s457
          %s460 = sld [smem:[#allocation9 + $0x1d]]
          %s461 = scalar_lea.smem [#allocation15], 29
          %462 = sst [smem:[%s461]] %s460
          %s463 = sld [smem:[#allocation10]]
          %s464 = scalar_lea.smem [#allocation16], 0
          %465 = sst [smem:[%s464]] %s463
          %s466 = sld [smem:[#allocation10 + $0x1]]
          %s467 = scalar_lea.smem [#allocation16], 1
          %468 = sst [smem:[%s467]] %s466
          %s469 = sld [smem:[#allocation10 + $0x2]]
          %s470 = scalar_lea.smem [#allocation16], 2
          %471 = sst [smem:[%s470]] %s469
          %s472 = sld [smem:[#allocation10 + $0x3]]
          %s473 = scalar_lea.smem [#allocation16], 3
          %474 = sst [smem:[%s473]] %s472
          %s475 = sld [smem:[#allocation10 + $0x4]]
          %s476 = scalar_lea.smem [#allocation16], 4
          %477 = sst [smem:[%s476]] %s475
          %s478 = sld [smem:[#allocation10 + $0x5]]
          %s479 = scalar_lea.smem [#allocation16], 5
          %480 = sst [smem:[%s479]] %s478
          %s481 = sld [smem:[#allocation10 + $0x6]]
          %s482 = scalar_lea.smem [#allocation16], 6
          %483 = sst [smem:[%s482]] %s481
          %s484 = sld [smem:[#allocation10 + $0x7]]
          %s485 = scalar_lea.smem [#allocation16], 7
          %486 = sst [smem:[%s485]] %s484
          %s487 = sld [smem:[#allocation10 + $0x8]]
          %s488 = scalar_lea.smem [#allocation16], 8
          %489 = sst [smem:[%s488]] %s487
          %s490 = sld [smem:[#allocation10 + $0x9]]
          %s491 = scalar_lea.smem [#allocation16], 9
          %492 = sst [smem:[%s491]] %s490
        $region40: #{ghm_loss_forward.1} parent=35 // pred_fallthru
          _
        %v493 = vld [vmem:[%s341] sm:$0xff]
        %v494 = vld [vmem:[%s345] sm:$0xf]
        %v495 = vld [vmem:[%s352] sm:$0xff]
        %v496 = vmax.f32 %v495, 0.0001
        %v497 = vmin.f32 %v496, 0.9999
        %v498 = vld [vmem:[%s359] sm:$0xf]
        %vm499 = vcmp.ne.f32.partialorder %v494, -1.0
        %v500 = vsel %vm499, 1, 0
        %v501 = vcvt.s32.f32 %v500
        %503 = vrot.lane.b32.xlu0 %v501, 124
        %v504 = vpop.permute.xlu0 %503
        %vm506 = vcmask 3072
        %v507 = vsel %vm506, %v504, 0.0
        %508 = vadd.xlane.f32.xlu0 %v507
        %v509 = vpop.xlane.xlu0 %508
        %v510 = vrot.slane %v509, 4
        %v511 = vadd.f32 %v509, %v510
        %v512 = vrot.slane %v511, 2
        %v513 = vadd.f32 %v511, %v512
        %v514 = vrot.slane %v513, 1
        %v515 = vadd.f32 %v513, %v514
        %s516 = vtos %v515
        %p517 = scmp.gt.f32.partialorder %s516, 0.0
        %519 = vrot.lane.b32.xlu0 %v494, 2
        %v520 = vpop.permute.xlu0 %519
        %v522 = vsub.f32 %v494, %v520
        %524 = vrot.lane.b32.xlu0 %v522, 127
        %v525 = vpop.permute.xlu0 %524
        %v527 = vmul.f32 %v522, %v525
        %v528 = vlaneseq
        %v529 = vshrl.u32 %v528, 7
        %v530 = vsub.s32 3, %v529
        %v531 = vrot.slane %v493, %v530
        %532 = vset.pattern.permute.xlu0 2
        %533 = vperm.xlu0 %532, %v494
        %v534 = vpop.permute.xlu0 %533
        %v536 = vmin.f32 %v531, %v534
        %v537 = vlaneseq
        %v538 = vshrl.u32 %v537, 7
        %v539 = vsub.s32 1, %v538
        %v540 = vrot.slane %v493, %v539
        %541 = vset.pattern.permute.xlu0 0
        %542 = vperm.xlu0 %541, %v494
        %v543 = vpop.permute.xlu0 %542
        %v545 = vmax.f32 %v540, %v543
        %v546 = vsub.f32 %v536, %v545
        %v547 = vmax.f32 %v546, 0.0
        %v548 = vlaneseq
        %v549 = vshrl.u32 %v548, 7
        %v550 = vsub.s32 2, %v549
        %v551 = vrot.slane %v493, %v550
        %552 = vset.pattern.permute.xlu0 3
        %553 = vperm.xlu0 %552, %v494
        %v554 = vpop.permute.xlu0 %553
        %v556 = vmin.f32 %v551, %v554
        %v557 = vlaneseq
        %v558 = vshrl.u32 %v557, 7
        %v559 = vsub.s32 0, %v558
        %v560 = vrot.slane %v493, %v559
        %561 = vset.pattern.permute.xlu0 1
        %562 = vperm.xlu0 %561, %v494
        %v563 = vpop.permute.xlu0 %562
        %v565 = vmax.f32 %v560, %v563
        %v566 = vsub.f32 %v556, %v565
        %v567 = vmax.f32 %v566, 0.0
        %v568 = vmul.f32 %v547, %v567
        %v570 = vrot.slane %v493, 1
        %v572 = vmul.f32 %v493, %v570
        %v573 = vlaneseq
        %v574 = vshrl.u32 %v573, 7
        %v575 = vsub.s32 4, %v574
        %v576 = vrot.slane %v572, %v575
        %578 = vset.pattern.permute.xlu0 2
        %579 = vperm.xlu0 %578, %v527
        %v580 = vpop.permute.xlu0 %579
        %v582 = vadd.f32 %v576, %v580
        %v583 = vsub.f32 %v582, %v568
        %v584 = vmax.f32 %v583, 1e-08
        %v585 = vrcp.pop %v584
        %v586 = vmul.f32 %v568, %v585
        %587 = vset.pattern.permute.xlu0 4
        %588 = vperm.xlu0 %587, %v500
        %v589 = vpop.permute.xlu0 %588
        %vm590 = vcmp.eq.s32.totalorder %v589, 1
        %v591 = vsel %vm590, %v586, -1.0
        %vm592 = vcmask 257024
        %v593 = vsel %vm592, %v591, -inf
        %v594 = vrot.slane %v593, 4
        %v595 = vmax.f32 %v593, %v594
        %v596 = vrot.slane %v595, 2
        %v597 = vmax.f32 %v595, %v596
        %v598 = vrot.slane %v597, 1
        %v599 = vmax.f32 %v597, %v598
        %v600 = vlaneseq
        %v601 = vshrl.u32 %v600, 7
        %v602 = vcvt.s32.f32 %v601
        %vm603 = vcmp.eq.f32.partialorder %v591, %v599
        %v604 = vsel %vm603, %v602, 4.0
        %v605 = vsel %vm592, %v604, inf
        %v606 = vrot.slane %v605, 4
        %v607 = vmin.f32 %v605, %v606
        %v608 = vrot.slane %v607, 2
        %v609 = vmin.f32 %v607, %v608
        %v610 = vrot.slane %v609, 1
        %v611 = vmin.f32 %v609, %v610
        %vm612 = vcmp.eq.f32.partialorder %v602, %v611
        %v613 = vsel %vm612, 1, 0
        %v614 = vcvt.s32.f32 %v613
        %v615 = vmul.f32 %v614, %v543
        %v616 = vsel %vm592, %v615, 0.0
        %v617 = vrot.slane %v616, 4
        %v618 = vadd.f32 %v616, %v617
        %v619 = vrot.slane %v618, 2
        %v620 = vadd.f32 %v618, %v619
        %v621 = vrot.slane %v620, 1
        %v622 = vadd.f32 %v620, %v621
        %v623 = vmul.f32 %v614, %v563
        %v624 = vsel %vm592, %v623, 0.0
        %v625 = vrot.slane %v624, 4
        %v626 = vadd.f32 %v624, %v625
        %v627 = vrot.slane %v626, 2
        %v628 = vadd.f32 %v626, %v627
        %v629 = vrot.slane %v628, 1
        %v630 = vadd.f32 %v628, %v629
        %v631 = vmul.f32 %v614, %v534
        %v632 = vsel %vm592, %v631, 0.0
        %v633 = vrot.slane %v632, 4
        %v634 = vadd.f32 %v632, %v633
        %v635 = vrot.slane %v634, 2
        %v636 = vadd.f32 %v634, %v635
        %v637 = vrot.slane %v636, 1
        %v638 = vadd.f32 %v636, %v637
        %v639 = vmul.f32 %v614, %v554
        %v640 = vsel %vm592, %v639, 0.0
        %v641 = vrot.slane %v640, 4
        %v642 = vadd.f32 %v640, %v641
        %v643 = vrot.slane %v642, 2
        %v644 = vadd.f32 %v642, %v643
        %v645 = vrot.slane %v644, 1
        %v646 = vadd.f32 %v644, %v645
        %647 = vset.pattern.permute.xlu0 4
        %648 = vperm.xlu0 %647, %v494
        %v649 = vpop.permute.xlu0 %648
        %v651 = vmul.f32 %v614, %v649
        %v652 = vsel %vm592, %v651, 0.0
        %v653 = vrot.slane %v652, 4
        %v654 = vadd.f32 %v652, %v653
        %v655 = vrot.slane %v654, 2
        %v656 = vadd.f32 %v654, %v655
        %v657 = vrot.slane %v656, 1
        %v658 = vadd.f32 %v656, %v657
        %vm659 = vcmp.ge.f32.partialorder %v599, 0.5
        %vm660 = vcmp.lt.f32.partialorder %v599, 0.4
        %v661 = vcvt.f32.s32.to.zero.pseudo %v658
        %vm662 = vcmp.eq.s32.totalorder %v601, %v661
        %v663 = vsel %vm659, 1, 0
        %vm664 = vcmp.eq.s32.totalorder %v663, 1
        %vm665 = vmand %vm664, %vm662
        %vm666 = vmor %vm659, %vm660
        %v667 = vsel %vm666, 0.0, -1.0
        %v668 = vsel %vm665, 1.0, %v667
        %v669 = vand.u32 2147483647, %v497
        %v670 = vsub.f32 0.0, %v669
        %v671 = vmul.f32 %v670, 1.442695
        %v672 = vpow.pop %v671
        %v673 = vadd.f32 %v672, 1.0
        %v674 = vrcp.pop %v673
        %v675 = vmul.f32 1.0, %v674
        %vm676 = vcmp.ge.f32.partialorder %v497, 0.0
        %v677 = vmul.f32 %v672, %v675
        %v678 = vsel %vm676, %v675, %v677
        %v679 = vsub.f32 %v678, %v668
        %v680 = vand.u32 2147483647, %v679
        %v681 = vsub.f32 %v638, %v622
        %v682 = vsub.f32 %v646, %v630
        %v683 = vmul.f32 %v681, 0.5
        %v684 = vadd.f32 %v622, %v683
        %v685 = vmul.f32 %v682, 0.5
        %v686 = vadd.f32 %v630, %v685
        %v687 = vmax.f32 %v681, 1.0
        %v688 = vmax.f32 %v682, 1.0
        %v689 = vsub.f32 %v686, %v493
        %v690 = vrot.slane %v493, 6
        %v692 = vrcp.pop %v690
        %v693 = vmul.f32 %v689, %v692
        %v694 = vmul.f32 %v693, 10.0
        %v696 = vrot.slane %v694, 7
        %v698 = vsub.f32 %v498, %v696
        %vm699 = vcmask 253952
        %700 = vst.msk [vmem:[#allocation7] sm:$0x1] %vm699, %v698
        %v701 = vsub.f32 %v684, %v493
        %v702 = vmul.f32 %v701, %v692
        %v703 = vmul.f32 %v702, 10.0
        %v705 = vrot.slane %v703, 5
        %v707 = vsub.f32 %v498, %v705
        %vm708 = vcmask 254977
        %709 = vst.msk [vmem:[#allocation7] sm:$0x2] %vm708, %v707
        %v710 = vrcp.pop %v493
        %v711 = vmul.f32 %v688, %v710
        %v712 = vlog2.pop %v711
        %v713 = vmul.f32 %v712, 0.6931472
        %v714 = vmul.f32 %v713, 5.0
        %v716 = vrot.slane %v714, 3
        %v718 = vsub.f32 %v498, %v716
        %vm719 = vcmask 256002
        %720 = vst.msk [vmem:[#allocation7] sm:$0x4] %vm719, %v718
        %v721 = vmul.f32 %v687, %v710
        %v722 = vlog2.pop %v721
        %v723 = vmul.f32 %v722, 0.6931472
        %v724 = vmul.f32 %v723, 5.0
        %v726 = vrot.slane %v724, 1
        %v728 = vsub.f32 %v498, %v726
        %vm729 = vcmask 257027
        %730 = vst.msk [vmem:[#allocation7] sm:$0x8] %vm729, %v728
        %v731 = vld [vmem:[#allocation7] sm:$0xf]
        %v732 = vmul.f32 %v731, %v731
        %v733 = vadd.f32 %v732, 0.0004
        %v734 = vrsqrt.pop %v733
        %v735 = vand.u32 2147483647, %v731
        %v736 = vmul.f32 %v735, %v734
        // Predicated region
        $region41: #{ghm_loss_forward.1} parent=35 // pred_check
          %p737 = pneg %p361
        $region42: #{ghm_loss_forward.1} parent=35 // pred_check_branch
          %739 = sbr.rel (%p737) target = $region44
        $region43: #{ghm_loss_forward.1} parent=35 // pred_region
          // Predicated region
          $region45: #{ghm_loss_forward.1} parent=43 // pred_check
            %p740 = pneg %p364
          $region46: #{ghm_loss_forward.1} parent=43 // pred_check_branch
            %742 = sbr.rel (%p740) target = $region48
          $region47: #{ghm_loss_forward.1} parent=43 // pred_region
            %s743 = scalar_lea.smem [#allocation2], 1
            %744 = sst [smem:[%s743]] 0.0
            %s745 = scalar_lea.smem [#allocation2], 2
            %746 = sst [smem:[%s745]] 0.0
            %s747 = scalar_lea.smem [#allocation2], 3
            %748 = sst [smem:[%s747]] 0.0
            %s749 = scalar_lea.smem [#allocation2], 4
            %750 = sst [smem:[%s749]] 0.0
            %s751 = scalar_lea.smem [#allocation2], 5
            %752 = sst [smem:[%s751]] 0.0
            %s753 = scalar_lea.smem [#allocation2], 6
            %754 = sst [smem:[%s753]] 0.0
            %s755 = scalar_lea.smem [#allocation2], 7
            %756 = sst [smem:[%s755]] 0.0
            %s757 = scalar_lea.smem [#allocation2], 8
            %758 = sst [smem:[%s757]] 0.0
            %s759 = scalar_lea.smem [#allocation2], 9
            %760 = sst [smem:[%s759]] 0.0
            %s761 = scalar_lea.smem [#allocation2], 10
            %762 = sst [smem:[%s761]] 0.0
            %s763 = scalar_lea.smem [#allocation2], 11
            %764 = sst [smem:[%s763]] 0.0
            %s765 = scalar_lea.smem [#allocation2], 12
            %766 = sst [smem:[%s765]] 0.0
            %s767 = scalar_lea.smem [#allocation2], 13
            %768 = sst [smem:[%s767]] 0.0
            %s769 = scalar_lea.smem [#allocation2], 14
            %770 = sst [smem:[%s769]] 0.0
            %s771 = scalar_lea.smem [#allocation2], 15
            %772 = sst [smem:[%s771]] 0.0
            %s773 = scalar_lea.smem [#allocation2], 16
            %774 = sst [smem:[%s773]] 0.0
            %s775 = scalar_lea.smem [#allocation2], 17
            %776 = sst [smem:[%s775]] 0.0
            %s777 = scalar_lea.smem [#allocation2], 18
            %778 = sst [smem:[%s777]] 0.0
            %s779 = scalar_lea.smem [#allocation2], 19
            %780 = sst [smem:[%s779]] 0.0
            %s781 = scalar_lea.smem [#allocation2], 20
            %782 = sst [smem:[%s781]] 0.0
            %s783 = scalar_lea.smem [#allocation2], 21
            %784 = sst [smem:[%s783]] 0.0
            %s785 = scalar_lea.smem [#allocation2], 22
            %786 = sst [smem:[%s785]] 0.0
            %s787 = scalar_lea.smem [#allocation2], 23
            %788 = sst [smem:[%s787]] 0.0
            %s789 = scalar_lea.smem [#allocation2], 24
            %790 = sst [smem:[%s789]] 0.0
            %s791 = scalar_lea.smem [#allocation2], 25
            %792 = sst [smem:[%s791]] 0.0
            %s793 = scalar_lea.smem [#allocation2], 26
            %794 = sst [smem:[%s793]] 0.0
            %s795 = scalar_lea.smem [#allocation2], 27
            %796 = sst [smem:[%s795]] 0.0
            %s797 = scalar_lea.smem [#allocation2], 28
            %798 = sst [smem:[%s797]] 0.0
            %s799 = scalar_lea.smem [#allocation2], 29
            %800 = sst [smem:[%s799]] 0.0
            %s801 = scalar_lea.smem [#allocation2], 30
            %802 = sst [smem:[%s801]] 0.0
            %s803 = scalar_lea.smem [#allocation3], 1
            %804 = sst [smem:[%s803]] 0.0
            %s805 = scalar_lea.smem [#allocation3], 2
            %806 = sst [smem:[%s805]] 0.0
            %s807 = scalar_lea.smem [#allocation3], 3
            %808 = sst [smem:[%s807]] 0.0
            %s809 = scalar_lea.smem [#allocation3], 4
            %810 = sst [smem:[%s809]] 0.0
            %s811 = scalar_lea.smem [#allocation3], 5
            %812 = sst [smem:[%s811]] 0.0
            %s813 = scalar_lea.smem [#allocation3], 6
            %814 = sst [smem:[%s813]] 0.0
            %s815 = scalar_lea.smem [#allocation3], 7
            %816 = sst [smem:[%s815]] 0.0
            %s817 = scalar_lea.smem [#allocation3], 8
            %818 = sst [smem:[%s817]] 0.0
            %s819 = scalar_lea.smem [#allocation3], 9
            %820 = sst [smem:[%s819]] 0.0
            %s821 = scalar_lea.smem [#allocation3], 10
            %822 = sst [smem:[%s821]] 0.0
            %s823 = scalar_lea.smem [#allocation6], 0
            %824 = sst [smem:[%s823]] 0.0
          $region48: #{ghm_loss_forward.1} parent=43 // pred_fallthru
            _
          %v825 = vcvt.s32.f32 %v663
          %s826 = sld [smem:[#allocation6]]
          %v827 = vsel %vm699, %v825, 0.0
          %828 = vadd.xlane.f32.xlu0 %v827
          %v829 = vpop.xlane.xlu0 %828
          %v830 = vrot.slane %v829, 4
          %v831 = vadd.f32 %v829, %v830
          %v832 = vrot.slane %v831, 2
          %v833 = vadd.f32 %v831, %v832
          %v834 = vrot.slane %v833, 1
          %v835 = vadd.f32 %v833, %v834
          %s836 = vtos %v835
          %s837 = sadd.f32 %s826, %s836
          %s838 = scalar_lea.smem [#allocation6], 0
          %839 = sst [smem:[%s838]] %s837
          %s840 = sld [smem:[#allocation2 + $0x1]]
          %vm841 = vcmp.ge.f32.partialorder %v680, 0.033333335
          %v842 = vsel %vm841, 1, 0
          %v843 = vcvt.s32.f32 %v842
          %vm844 = vcmask 261120
          %v845 = vsel %vm844, %v843, 0.0
          %846 = vadd.xlane.f32.xlu0 %v845
          %v847 = vpop.xlane.xlu0 %846
          %v848 = vrot.slane %v847, 4
          %v849 = vadd.f32 %v847, %v848
          %v850 = vrot.slane %v849, 2
          %v851 = vadd.f32 %v849, %v850
          %v852 = vrot.slane %v851, 1
          %v853 = vadd.f32 %v851, %v852
          %s854 = vtos %v853
          %s855 = sadd.f32 %s840, %s854
          %s856 = scalar_lea.smem [#allocation2], 1
          %857 = sst [smem:[%s856]] %s855
          %s858 = sld [smem:[#allocation2 + $0x2]]
          %vm859 = vcmp.ge.f32.partialorder %v680, 0.06666667
          %v860 = vsel %vm859, 1, 0
          %v861 = vcvt.s32.f32 %v860
          %v862 = vsel %vm844, %v861, 0.0
          %863 = vadd.xlane.f32.xlu0 %v862
          %v864 = vpop.xlane.xlu0 %863
          %v865 = vrot.slane %v864, 4
          %v866 = vadd.f32 %v864, %v865
          %v867 = vrot.slane %v866, 2
          %v868 = vadd.f32 %v866, %v867
          %v869 = vrot.slane %v868, 1
          %v870 = vadd.f32 %v868, %v869
          %s871 = vtos %v870
          %s872 = sadd.f32 %s858, %s871
          %s873 = scalar_lea.smem [#allocation2], 2
          %874 = sst [smem:[%s873]] %s872
          %s875 = sld [smem:[#allocation2 + $0x3]]
          %vm876 = vcmp.ge.f32.partialorder %v680, 0.1
          %v877 = vsel %vm876, 1, 0
          %v878 = vcvt.s32.f32 %v877
          %v879 = vsel %vm844, %v878, 0.0
          %880 = vadd.xlane.f32.xlu0 %v879
          %v881 = vpop.xlane.xlu0 %880
          %v882 = vrot.slane %v881, 4
          %v883 = vadd.f32 %v881, %v882
          %v884 = vrot.slane %v883, 2
          %v885 = vadd.f32 %v883, %v884
          %v886 = vrot.slane %v885, 1
          %v887 = vadd.f32 %v885, %v886
          %s888 = vtos %v887
          %s889 = sadd.f32 %s875, %s888
          %s890 = scalar_lea.smem [#allocation2], 3
          %891 = sst [smem:[%s890]] %s889
          %s892 = sld [smem:[#allocation2 + $0x4]]
          %vm893 = vcmp.ge.f32.partialorder %v680, 0.13333334
          %v894 = vsel %vm893, 1, 0
          %v895 = vcvt.s32.f32 %v894
          %v896 = vsel %vm844, %v895, 0.0
          %897 = vadd.xlane.f32.xlu0 %v896
          %v898 = vpop.xlane.xlu0 %897
          %v899 = vrot.slane %v898, 4
          %v900 = vadd.f32 %v898, %v899
          %v901 = vrot.slane %v900, 2
          %v902 = vadd.f32 %v900, %v901
          %v903 = vrot.slane %v902, 1
          %v904 = vadd.f32 %v902, %v903
          %s905 = vtos %v904
          %s906 = sadd.f32 %s892, %s905
          %s907 = scalar_lea.smem [#allocation2], 4
          %908 = sst [smem:[%s907]] %s906
          %s909 = sld [smem:[#allocation2 + $0x5]]
          %vm910 = vcmp.ge.f32.partialorder %v680, 0.16666667
          %v911 = vsel %vm910, 1, 0
          %v912 = vcvt.s32.f32 %v911
          %v913 = vsel %vm844, %v912, 0.0
          %914 = vadd.xlane.f32.xlu0 %v913
          %v915 = vpop.xlane.xlu0 %914
          %v916 = vrot.slane %v915, 4
          %v917 = vadd.f32 %v915, %v916
          %v918 = vrot.slane %v917, 2
          %v919 = vadd.f32 %v917, %v918
          %v920 = vrot.slane %v919, 1
          %v921 = vadd.f32 %v919, %v920
          %s922 = vtos %v921
          %s923 = sadd.f32 %s909, %s922
          %s924 = scalar_lea.smem [#allocation2], 5
          %925 = sst [smem:[%s924]] %s923
          %s926 = sld [smem:[#allocation2 + $0x6]]
          %vm927 = vcmp.ge.f32.partialorder %v680, 0.2
          %v928 = vsel %vm927, 1, 0
          %v929 = vcvt.s32.f32 %v928
          %v930 = vsel %vm844, %v929, 0.0
          %931 = vadd.xlane.f32.xlu0 %v930
          %v932 = vpop.xlane.xlu0 %931
          %v933 = vrot.slane %v932, 4
          %v934 = vadd.f32 %v932, %v933
          %v935 = vrot.slane %v934, 2
          %v936 = vadd.f32 %v934, %v935
          %v937 = vrot.slane %v936, 1
          %v938 = vadd.f32 %v936, %v937
          %s939 = vtos %v938
          %s940 = sadd.f32 %s926, %s939
          %s941 = scalar_lea.smem [#allocation2], 6
          %942 = sst [smem:[%s941]] %s940
          %s943 = sld [smem:[#allocation2 + $0x7]]
          %vm944 = vcmp.ge.f32.partialorder %v680, 0.23333333
          %v945 = vsel %vm944, 1, 0
          %v946 = vcvt.s32.f32 %v945
          %v947 = vsel %vm844, %v946, 0.0
          %948 = vadd.xlane.f32.xlu0 %v947
          %v949 = vpop.xlane.xlu0 %948
          %v950 = vrot.slane %v949, 4
          %v951 = vadd.f32 %v949, %v950
          %v952 = vrot.slane %v951, 2
          %v953 = vadd.f32 %v951, %v952
          %v954 = vrot.slane %v953, 1
          %v955 = vadd.f32 %v953, %v954
          %s956 = vtos %v955
          %s957 = sadd.f32 %s943, %s956
          %s958 = scalar_lea.smem [#allocation2], 7
          %959 = sst [smem:[%s958]] %s957
          %s960 = sld [smem:[#allocation2 + $0x8]]
          %vm961 = vcmp.ge.f32.partialorder %v680, 0.26666668
          %v962 = vsel %vm961, 1, 0
          %v963 = vcvt.s32.f32 %v962
          %v964 = vsel %vm844, %v963, 0.0
          %965 = vadd.xlane.f32.xlu0 %v964
          %v966 = vpop.xlane.xlu0 %965
          %v967 = vrot.slane %v966, 4
          %v968 = vadd.f32 %v966, %v967
          %v969 = vrot.slane %v968, 2
          %v970 = vadd.f32 %v968, %v969
          %v971 = vrot.slane %v970, 1
          %v972 = vadd.f32 %v970, %v971
          %s973 = vtos %v972
          %s974 = sadd.f32 %s960, %s973
          %s975 = scalar_lea.smem [#allocation2], 8
          %976 = sst [smem:[%s975]] %s974
          %s977 = sld [smem:[#allocation2 + $0x9]]
          %vm978 = vcmp.ge.f32.partialorder %v680, 0.3
          %v979 = vsel %vm978, 1, 0
          %v980 = vcvt.s32.f32 %v979
          %v981 = vsel %vm844, %v980, 0.0
          %982 = vadd.xlane.f32.xlu0 %v981
          %v983 = vpop.xlane.xlu0 %982
          %v984 = vrot.slane %v983, 4
          %v985 = vadd.f32 %v983, %v984
          %v986 = vrot.slane %v985, 2
          %v987 = vadd.f32 %v985, %v986
          %v988 = vrot.slane %v987, 1
          %v989 = vadd.f32 %v987, %v988
          %s990 = vtos %v989
          %s991 = sadd.f32 %s977, %s990
          %s992 = scalar_lea.smem [#allocation2], 9
          %993 = sst [smem:[%s992]] %s991
          %s994 = sld [smem:[#allocation2 + $0xa]]
          %vm995 = vcmp.ge.f32.partialorder %v680, 0.33333334
          %v996 = vsel %vm995, 1, 0
          %v997 = vcvt.s32.f32 %v996
          %v998 = vsel %vm844, %v997, 0.0
          %999 = vadd.xlane.f32.xlu0 %v998
          %v1000 = vpop.xlane.xlu0 %999
          %v1001 = vrot.slane %v1000, 4
          %v1002 = vadd.f32 %v1000, %v1001
          %v1003 = vrot.slane %v1002, 2
          %v1004 = vadd.f32 %v1002, %v1003
          %v1005 = vrot.slane %v1004, 1
          %v1006 = vadd.f32 %v1004, %v1005
          %s1007 = vtos %v1006
          %s1008 = sadd.f32 %s994, %s1007
          %s1009 = scalar_lea.smem [#allocation2], 10
          %1010 = sst [smem:[%s1009]] %s1008
          %s1011 = sld [smem:[#allocation2 + $0xb]]
          %vm1012 = vcmp.ge.f32.partialorder %v680, 0.36666667
          %v1013 = vsel %vm1012, 1, 0
          %v1014 = vcvt.s32.f32 %v1013
          %v1015 = vsel %vm844, %v1014, 0.0
          %1016 = vadd.xlane.f32.xlu0 %v1015
          %v1017 = vpop.xlane.xlu0 %1016
          %v1018 = vrot.slane %v1017, 4
          %v1019 = vadd.f32 %v1017, %v1018
          %v1020 = vrot.slane %v1019, 2
          %v1021 = vadd.f32 %v1019, %v1020
          %v1022 = vrot.slane %v1021, 1
          %v1023 = vadd.f32 %v1021, %v1022
          %s1024 = vtos %v1023
          %s1025 = sadd.f32 %s1011, %s1024
          %s1026 = scalar_lea.smem [#allocation2], 11
          %1027 = sst [smem:[%s1026]] %s1025
          %s1028 = sld [smem:[#allocation2 + $0xc]]
          %vm1029 = vcmp.ge.f32.partialorder %v680, 0.4
          %v1030 = vsel %vm1029, 1, 0
          %v1031 = vcvt.s32.f32 %v1030
          %v1032 = vsel %vm844, %v1031, 0.0
          %1033 = vadd.xlane.f32.xlu0 %v1032
          %v1034 = vpop.xlane.xlu0 %1033
          %v1035 = vrot.slane %v1034, 4
          %v1036 = vadd.f32 %v1034, %v1035
          %v1037 = vrot.slane %v1036, 2
          %v1038 = vadd.f32 %v1036, %v1037
          %v1039 = vrot.slane %v1038, 1
          %v1040 = vadd.f32 %v1038, %v1039
          %s1041 = vtos %v1040
          %s1042 = sadd.f32 %s1028, %s1041
          %s1043 = scalar_lea.smem [#allocation2], 12
          %1044 = sst [smem:[%s1043]] %s1042
          %s1045 = sld [smem:[#allocation2 + $0xd]]
          %vm1046 = vcmp.ge.f32.partialorder %v680, 0.43333334
          %v1047 = vsel %vm1046, 1, 0
          %v1048 = vcvt.s32.f32 %v1047
          %v1049 = vsel %vm844, %v1048, 0.0
          %1050 = vadd.xlane.f32.xlu0 %v1049
          %v1051 = vpop.xlane.xlu0 %1050
          %v1052 = vrot.slane %v1051, 4
          %v1053 = vadd.f32 %v1051, %v1052
          %v1054 = vrot.slane %v1053, 2
          %v1055 = vadd.f32 %v1053, %v1054
          %v1056 = vrot.slane %v1055, 1
          %v1057 = vadd.f32 %v1055, %v1056
          %s1058 = vtos %v1057
          %s1059 = sadd.f32 %s1045, %s1058
          %s1060 = scalar_lea.smem [#allocation2], 13
          %1061 = sst [smem:[%s1060]] %s1059
          %s1062 = sld [smem:[#allocation2 + $0xe]]
          %vm1063 = vcmp.ge.f32.partialorder %v680, 0.46666667
          %v1064 = vsel %vm1063, 1, 0
          %v1065 = vcvt.s32.f32 %v1064
          %v1066 = vsel %vm844, %v1065, 0.0
          %1067 = vadd.xlane.f32.xlu0 %v1066
          %v1068 = vpop.xlane.xlu0 %1067
          %v1069 = vrot.slane %v1068, 4
          %v1070 = vadd.f32 %v1068, %v1069
          %v1071 = vrot.slane %v1070, 2
          %v1072 = vadd.f32 %v1070, %v1071
          %v1073 = vrot.slane %v1072, 1
          %v1074 = vadd.f32 %v1072, %v1073
          %s1075 = vtos %v1074
          %s1076 = sadd.f32 %s1062, %s1075
          %s1077 = scalar_lea.smem [#allocation2], 14
          %1078 = sst [smem:[%s1077]] %s1076
          %s1079 = sld [smem:[#allocation2 + $0xf]]
          %vm1080 = vcmp.ge.f32.partialorder %v680, 0.5
          %v1081 = vsel %vm1080, 1, 0
          %v1082 = vcvt.s32.f32 %v1081
          %v1083 = vsel %vm844, %v1082, 0.0
          %1084 = vadd.xlane.f32.xlu0 %v1083
          %v1085 = vpop.xlane.xlu0 %1084
          %v1086 = vrot.slane %v1085, 4
          %v1087 = vadd.f32 %v1085, %v1086
          %v1088 = vrot.slane %v1087, 2
          %v1089 = vadd.f32 %v1087, %v1088
          %v1090 = vrot.slane %v1089, 1
          %v1091 = vadd.f32 %v1089, %v1090
          %s1092 = vtos %v1091
          %s1093 = sadd.f32 %s1079, %s1092
          %s1094 = scalar_lea.smem [#allocation2], 15
          %1095 = sst [smem:[%s1094]] %s1093
          %s1096 = sld [smem:[#allocation2 + $0x10]]
          %vm1097 = vcmp.ge.f32.partialorder %v680, 0.53333336
          %v1098 = vsel %vm1097, 1, 0
          %v1099 = vcvt.s32.f32 %v1098
          %v1100 = vsel %vm844, %v1099, 0.0
          %1101 = vadd.xlane.f32.xlu0 %v1100
          %v1102 = vpop.xlane.xlu0 %1101
          %v1103 = vrot.slane %v1102, 4
          %v1104 = vadd.f32 %v1102, %v1103
          %v1105 = vrot.slane %v1104, 2
          %v1106 = vadd.f32 %v1104, %v1105
          %v1107 = vrot.slane %v1106, 1
          %v1108 = vadd.f32 %v1106, %v1107
          %s1109 = vtos %v1108
          %s1110 = sadd.f32 %s1096, %s1109
          %s1111 = scalar_lea.smem [#allocation2], 16
          %1112 = sst [smem:[%s1111]] %s1110
          %s1113 = sld [smem:[#allocation2 + $0x11]]
          %vm1114 = vcmp.ge.f32.partialorder %v680, 0.56666666
          %v1115 = vsel %vm1114, 1, 0
          %v1116 = vcvt.s32.f32 %v1115
          %v1117 = vsel %vm844, %v1116, 0.0
          %1118 = vadd.xlane.f32.xlu0 %v1117
          %v1119 = vpop.xlane.xlu0 %1118
          %v1120 = vrot.slane %v1119, 4
          %v1121 = vadd.f32 %v1119, %v1120
          %v1122 = vrot.slane %v1121, 2
          %v1123 = vadd.f32 %v1121, %v1122
          %v1124 = vrot.slane %v1123, 1
          %v1125 = vadd.f32 %v1123, %v1124
          %s1126 = vtos %v1125
          %s1127 = sadd.f32 %s1113, %s1126
          %s1128 = scalar_lea.smem [#allocation2], 17
          %1129 = sst [smem:[%s1128]] %s1127
          %s1130 = sld [smem:[#allocation2 + $0x12]]
          %vm1131 = vcmp.ge.f32.partialorder %v680, 0.6
          %v1132 = vsel %vm1131, 1, 0
          %v1133 = vcvt.s32.f32 %v1132
          %v1134 = vsel %vm844, %v1133, 0.0
          %1135 = vadd.xlane.f32.xlu0 %v1134
          %v1136 = vpop.xlane.xlu0 %1135
          %v1137 = vrot.slane %v1136, 4
          %v1138 = vadd.f32 %v1136, %v1137
          %v1139 = vrot.slane %v1138, 2
          %v1140 = vadd.f32 %v1138, %v1139
          %v1141 = vrot.slane %v1140, 1
          %v1142 = vadd.f32 %v1140, %v1141
          %s1143 = vtos %v1142
          %s1144 = sadd.f32 %s1130, %s1143
          %s1145 = scalar_lea.smem [#allocation2], 18
          %1146 = sst [smem:[%s1145]] %s1144
          %s1147 = sld [smem:[#allocation2 + $0x13]]
          %vm1148 = vcmp.ge.f32.partialorder %v680, 0.6333333
          %v1149 = vsel %vm1148, 1, 0
          %v1150 = vcvt.s32.f32 %v1149
          %v1151 = vsel %vm844, %v1150, 0.0
          %1152 = vadd.xlane.f32.xlu0 %v1151
          %v1153 = vpop.xlane.xlu0 %1152
          %v1154 = vrot.slane %v1153, 4
          %v1155 = vadd.f32 %v1153, %v1154
          %v1156 = vrot.slane %v1155, 2
          %v1157 = vadd.f32 %v1155, %v1156
          %v1158 = vrot.slane %v1157, 1
          %v1159 = vadd.f32 %v1157, %v1158
          %s1160 = vtos %v1159
          %s1161 = sadd.f32 %s1147, %s1160
          %s1162 = scalar_lea.smem [#allocation2], 19
          %1163 = sst [smem:[%s1162]] %s1161
          %s1164 = sld [smem:[#allocation2 + $0x14]]
          %vm1165 = vcmp.ge.f32.partialorder %v680, 0.6666667
          %v1166 = vsel %vm1165, 1, 0
          %v1167 = vcvt.s32.f32 %v1166
          %v1168 = vsel %vm844, %v1167, 0.0
          %1169 = vadd.xlane.f32.xlu0 %v1168
          %v1170 = vpop.xlane.xlu0 %1169
          %v1171 = vrot.slane %v1170, 4
          %v1172 = vadd.f32 %v1170, %v1171
          %v1173 = vrot.slane %v1172, 2
          %v1174 = vadd.f32 %v1172, %v1173
          %v1175 = vrot.slane %v1174, 1
          %v1176 = vadd.f32 %v1174, %v1175
          %s1177 = vtos %v1176
          %s1178 = sadd.f32 %s1164, %s1177
          %s1179 = scalar_lea.smem [#allocation2], 20
          %1180 = sst [smem:[%s1179]] %s1178
          %s1181 = sld [smem:[#allocation2 + $0x15]]
          %vm1182 = vcmp.ge.f32.partialorder %v680, 0.7
          %v1183 = vsel %vm1182, 1, 0
          %v1184 = vcvt.s32.f32 %v1183
          %v1185 = vsel %vm844, %v1184, 0.0
          %1186 = vadd.xlane.f32.xlu0 %v1185
          %v1187 = vpop.xlane.xlu0 %1186
          %v1188 = vrot.slane %v1187, 4
          %v1189 = vadd.f32 %v1187, %v1188
          %v1190 = vrot.slane %v1189, 2
          %v1191 = vadd.f32 %v1189, %v1190
          %v1192 = vrot.slane %v1191, 1
          %v1193 = vadd.f32 %v1191, %v1192
          %s1194 = vtos %v1193
          %s1195 = sadd.f32 %s1181, %s1194
          %s1196 = scalar_lea.smem [#allocation2], 21
          %1197 = sst [smem:[%s1196]] %s1195
          %s1198 = sld [smem:[#allocation2 + $0x16]]
          %vm1199 = vcmp.ge.f32.partialorder %v680, 0.73333335
          %v1200 = vsel %vm1199, 1, 0
          %v1201 = vcvt.s32.f32 %v1200
          %v1202 = vsel %vm844, %v1201, 0.0
          %1203 = vadd.xlane.f32.xlu0 %v1202
          %v1204 = vpop.xlane.xlu0 %1203
          %v1205 = vrot.slane %v1204, 4
          %v1206 = vadd.f32 %v1204, %v1205
          %v1207 = vrot.slane %v1206, 2
          %v1208 = vadd.f32 %v1206, %v1207
          %v1209 = vrot.slane %v1208, 1
          %v1210 = vadd.f32 %v1208, %v1209
          %s1211 = vtos %v1210
          %s1212 = sadd.f32 %s1198, %s1211
          %s1213 = scalar_lea.smem [#allocation2], 22
          %1214 = sst [smem:[%s1213]] %s1212
          %s1215 = sld [smem:[#allocation2 + $0x17]]
          %vm1216 = vcmp.ge.f32.partialorder %v680, 0.76666665
          %v1217 = vsel %vm1216, 1, 0
          %v1218 = vcvt.s32.f32 %v1217
          %v1219 = vsel %vm844, %v1218, 0.0
          %1220 = vadd.xlane.f32.xlu0 %v1219
          %v1221 = vpop.xlane.xlu0 %1220
          %v1222 = vrot.slane %v1221, 4
          %v1223 = vadd.f32 %v1221, %v1222
          %v1224 = vrot.slane %v1223, 2
          %v1225 = vadd.f32 %v1223, %v1224
          %v1226 = vrot.slane %v1225, 1
          %v1227 = vadd.f32 %v1225, %v1226
          %s1228 = vtos %v1227
          %s1229 = sadd.f32 %s1215, %s1228
          %s1230 = scalar_lea.smem [#allocation2], 23
          %1231 = sst [smem:[%s1230]] %s1229
          %s1232 = sld [smem:[#allocation2 + $0x18]]
          %vm1233 = vcmp.ge.f32.partialorder %v680, 0.8
          %v1234 = vsel %vm1233, 1, 0
          %v1235 = vcvt.s32.f32 %v1234
          %v1236 = vsel %vm844, %v1235, 0.0
          %1237 = vadd.xlane.f32.xlu0 %v1236
          %v1238 = vpop.xlane.xlu0 %1237
          %v1239 = vrot.slane %v1238, 4
          %v1240 = vadd.f32 %v1238, %v1239
          %v1241 = vrot.slane %v1240, 2
          %v1242 = vadd.f32 %v1240, %v1241
          %v1243 = vrot.slane %v1242, 1
          %v1244 = vadd.f32 %v1242, %v1243
          %s1245 = vtos %v1244
          %s1246 = sadd.f32 %s1232, %s1245
          %s1247 = scalar_lea.smem [#allocation2], 24
          %1248 = sst [smem:[%s1247]] %s1246
          %s1249 = sld [smem:[#allocation2 + $0x19]]
          %vm1250 = vcmp.ge.f32.partialorder %v680, 0.8333333
          %v1251 = vsel %vm1250, 1, 0
          %v1252 = vcvt.s32.f32 %v1251
          %v1253 = vsel %vm844, %v1252, 0.0
          %1254 = vadd.xlane.f32.xlu0 %v1253
          %v1255 = vpop.xlane.xlu0 %1254
          %v1256 = vrot.slane %v1255, 4
          %v1257 = vadd.f32 %v1255, %v1256
          %v1258 = vrot.slane %v1257, 2
          %v1259 = vadd.f32 %v1257, %v1258
          %v1260 = vrot.slane %v1259, 1
          %v1261 = vadd.f32 %v1259, %v1260
          %s1262 = vtos %v1261
          %s1263 = sadd.f32 %s1249, %s1262
          %s1264 = scalar_lea.smem [#allocation2], 25
          %1265 = sst [smem:[%s1264]] %s1263
          %s1266 = sld [smem:[#allocation2 + $0x1a]]
          %vm1267 = vcmp.ge.f32.partialorder %v680, 0.8666667
          %v1268 = vsel %vm1267, 1, 0
          %v1269 = vcvt.s32.f32 %v1268
          %v1270 = vsel %vm844, %v1269, 0.0
          %1271 = vadd.xlane.f32.xlu0 %v1270
          %v1272 = vpop.xlane.xlu0 %1271
          %v1273 = vrot.slane %v1272, 4
          %v1274 = vadd.f32 %v1272, %v1273
          %v1275 = vrot.slane %v1274, 2
          %v1276 = vadd.f32 %v1274, %v1275
          %v1277 = vrot.slane %v1276, 1
          %v1278 = vadd.f32 %v1276, %v1277
          %s1279 = vtos %v1278
          %s1280 = sadd.f32 %s1266, %s1279
          %s1281 = scalar_lea.smem [#allocation2], 26
          %1282 = sst [smem:[%s1281]] %s1280
          %s1283 = sld [smem:[#allocation2 + $0x1b]]
          %vm1284 = vcmp.ge.f32.partialorder %v680, 0.9
          %v1285 = vsel %vm1284, 1, 0
          %v1286 = vcvt.s32.f32 %v1285
          %v1287 = vsel %vm844, %v1286, 0.0
          %1288 = vadd.xlane.f32.xlu0 %v1287
          %v1289 = vpop.xlane.xlu0 %1288
          %v1290 = vrot.slane %v1289, 4
          %v1291 = vadd.f32 %v1289, %v1290
          %v1292 = vrot.slane %v1291, 2
          %v1293 = vadd.f32 %v1291, %v1292
          %v1294 = vrot.slane %v1293, 1
          %v1295 = vadd.f32 %v1293, %v1294
          %s1296 = vtos %v1295
          %s1297 = sadd.f32 %s1283, %s1296
          %s1298 = scalar_lea.smem [#allocation2], 27
          %1299 = sst [smem:[%s1298]] %s1297
          %s1300 = sld [smem:[#allocation2 + $0x1c]]
          %vm1301 = vcmp.ge.f32.partialorder %v680, 0.93333334
          %v1302 = vsel %vm1301, 1, 0
          %v1303 = vcvt.s32.f32 %v1302
          %v1304 = vsel %vm844, %v1303, 0.0
          %1305 = vadd.xlane.f32.xlu0 %v1304
          %v1306 = vpop.xlane.xlu0 %1305
          %v1307 = vrot.slane %v1306, 4
          %v1308 = vadd.f32 %v1306, %v1307
          %v1309 = vrot.slane %v1308, 2
          %v1310 = vadd.f32 %v1308, %v1309
          %v1311 = vrot.slane %v1310, 1
          %v1312 = vadd.f32 %v1310, %v1311
          %s1313 = vtos %v1312
          %s1314 = sadd.f32 %s1300, %s1313
          %s1315 = scalar_lea.smem [#allocation2], 28
          %1316 = sst [smem:[%s1315]] %s1314
          %s1317 = sld [smem:[#allocation2 + $0x1d]]
          %vm1318 = vcmp.ge.f32.partialorder %v680, 0.96666664
          %v1319 = vsel %vm1318, 1, 0
          %v1320 = vcvt.s32.f32 %v1319
          %v1321 = vsel %vm844, %v1320, 0.0
          %1322 = vadd.xlane.f32.xlu0 %v1321
          %v1323 = vpop.xlane.xlu0 %1322
          %v1324 = vrot.slane %v1323, 4
          %v1325 = vadd.f32 %v1323, %v1324
          %v1326 = vrot.slane %v1325, 2
          %v1327 = vadd.f32 %v1325, %v1326
          %v1328 = vrot.slane %v1327, 1
          %v1329 = vadd.f32 %v1327, %v1328
          %s1330 = vtos %v1329
          %s1331 = sadd.f32 %s1317, %s1330
          %s1332 = scalar_lea.smem [#allocation2], 29
          %1333 = sst [smem:[%s1332]] %s1331
          %s1334 = sld [smem:[#allocation2 + $0x1e]]
          %vm1335 = vcmp.ge.f32.partialorder %v680, 1.000001
          %v1336 = vsel %vm1335, 1, 0
          %v1337 = vcvt.s32.f32 %v1336
          %v1338 = vsel %vm844, %v1337, 0.0
          %1339 = vadd.xlane.f32.xlu0 %v1338
          %v1340 = vpop.xlane.xlu0 %1339
          %v1341 = vrot.slane %v1340, 4
          %v1342 = vadd.f32 %v1340, %v1341
          %v1343 = vrot.slane %v1342, 2
          %v1344 = vadd.f32 %v1342, %v1343
          %v1345 = vrot.slane %v1344, 1
          %v1346 = vadd.f32 %v1344, %v1345
          %s1347 = vtos %v1346
          %s1348 = sadd.f32 %s1334, %s1347
          %s1349 = scalar_lea.smem [#allocation2], 30
          %1350 = sst [smem:[%s1349]] %s1348
          %s1351 = sld [smem:[#allocation3 + $0x1]]
          %vm1352 = vcmp.ge.f32.partialorder %v736, 0.1
          %v1353 = vsel %vm1352, 1, 0
          %v1354 = vcvt.s32.f32 %v1353
          %v1355 = vsel %vm592, %v1354, 0.0
          %1356 = vadd.xlane.f32.xlu0 %v1355
          %v1357 = vpop.xlane.xlu0 %1356
          %v1358 = vrot.slane %v1357, 4
          %v1359 = vadd.f32 %v1357, %v1358
          %v1360 = vrot.slane %v1359, 2
          %v1361 = vadd.f32 %v1359, %v1360
          %v1362 = vrot.slane %v1361, 1
          %v1363 = vadd.f32 %v1361, %v1362
          %s1364 = vtos %v1363
          %s1365 = sadd.f32 %s1351, %s1364
          %s1366 = scalar_lea.smem [#allocation3], 1
          %1367 = sst [smem:[%s1366]] %s1365
          %s1368 = sld [smem:[#allocation3 + $0x2]]
          %vm1369 = vcmp.ge.f32.partialorder %v736, 0.2
          %v1370 = vsel %vm1369, 1, 0
          %v1371 = vcvt.s32.f32 %v1370
          %v1372 = vsel %vm592, %v1371, 0.0
          %1373 = vadd.xlane.f32.xlu0 %v1372
          %v1374 = vpop.xlane.xlu0 %1373
          %v1375 = vrot.slane %v1374, 4
          %v1376 = vadd.f32 %v1374, %v1375
          %v1377 = vrot.slane %v1376, 2
          %v1378 = vadd.f32 %v1376, %v1377
          %v1379 = vrot.slane %v1378, 1
          %v1380 = vadd.f32 %v1378, %v1379
          %s1381 = vtos %v1380
          %s1382 = sadd.f32 %s1368, %s1381
          %s1383 = scalar_lea.smem [#allocation3], 2
          %1384 = sst [smem:[%s1383]] %s1382
          %s1385 = sld [smem:[#allocation3 + $0x3]]
          %vm1386 = vcmp.ge.f32.partialorder %v736, 0.3
          %v1387 = vsel %vm1386, 1, 0
          %v1388 = vcvt.s32.f32 %v1387
          %v1389 = vsel %vm592, %v1388, 0.0
          %1390 = vadd.xlane.f32.xlu0 %v1389
          %v1391 = vpop.xlane.xlu0 %1390
          %v1392 = vrot.slane %v1391, 4
          %v1393 = vadd.f32 %v1391, %v1392
          %v1394 = vrot.slane %v1393, 2
          %v1395 = vadd.f32 %v1393, %v1394
          %v1396 = vrot.slane %v1395, 1
          %v1397 = vadd.f32 %v1395, %v1396
          %s1398 = vtos %v1397
          %s1399 = sadd.f32 %s1385, %s1398
          %s1400 = scalar_lea.smem [#allocation3], 3
          %1401 = sst [smem:[%s1400]] %s1399
          %s1402 = sld [smem:[#allocation3 + $0x4]]
          %vm1403 = vcmp.ge.f32.partialorder %v736, 0.4
          %v1404 = vsel %vm1403, 1, 0
          %v1405 = vcvt.s32.f32 %v1404
          %v1406 = vsel %vm592, %v1405, 0.0
          %1407 = vadd.xlane.f32.xlu0 %v1406
          %v1408 = vpop.xlane.xlu0 %1407
          %v1409 = vrot.slane %v1408, 4
          %v1410 = vadd.f32 %v1408, %v1409
          %v1411 = vrot.slane %v1410, 2
          %v1412 = vadd.f32 %v1410, %v1411
          %v1413 = vrot.slane %v1412, 1
          %v1414 = vadd.f32 %v1412, %v1413
          %s1415 = vtos %v1414
          %s1416 = sadd.f32 %s1402, %s1415
          %s1417 = scalar_lea.smem [#allocation3], 4
          %1418 = sst [smem:[%s1417]] %s1416
          %s1419 = sld [smem:[#allocation3 + $0x5]]
          %vm1420 = vcmp.ge.f32.partialorder %v736, 0.5
          %v1421 = vsel %vm1420, 1, 0
          %v1422 = vcvt.s32.f32 %v1421
          %v1423 = vsel %vm592, %v1422, 0.0
          %1424 = vadd.xlane.f32.xlu0 %v1423
          %v1425 = vpop.xlane.xlu0 %1424
          %v1426 = vrot.slane %v1425, 4
          %v1427 = vadd.f32 %v1425, %v1426
          %v1428 = vrot.slane %v1427, 2
          %v1429 = vadd.f32 %v1427, %v1428
          %v1430 = vrot.slane %v1429, 1
          %v1431 = vadd.f32 %v1429, %v1430
          %s1432 = vtos %v1431
          %s1433 = sadd.f32 %s1419, %s1432
          %s1434 = scalar_lea.smem [#allocation3], 5
          %1435 = sst [smem:[%s1434]] %s1433
          %s1436 = sld [smem:[#allocation3 + $0x6]]
          %vm1437 = vcmp.ge.f32.partialorder %v736, 0.6
          %v1438 = vsel %vm1437, 1, 0
          %v1439 = vcvt.s32.f32 %v1438
          %v1440 = vsel %vm592, %v1439, 0.0
          %1441 = vadd.xlane.f32.xlu0 %v1440
          %v1442 = vpop.xlane.xlu0 %1441
          %v1443 = vrot.slane %v1442, 4
          %v1444 = vadd.f32 %v1442, %v1443
          %v1445 = vrot.slane %v1444, 2
          %v1446 = vadd.f32 %v1444, %v1445
          %v1447 = vrot.slane %v1446, 1
          %v1448 = vadd.f32 %v1446, %v1447
          %s1449 = vtos %v1448
          %s1450 = sadd.f32 %s1436, %s1449
          %s1451 = scalar_lea.smem [#allocation3], 6
          %1452 = sst [smem:[%s1451]] %s1450
          %s1453 = sld [smem:[#allocation3 + $0x7]]
          %vm1454 = vcmp.ge.f32.partialorder %v736, 0.7
          %v1455 = vsel %vm1454, 1, 0
          %v1456 = vcvt.s32.f32 %v1455
          %v1457 = vsel %vm592, %v1456, 0.0
          %1458 = vadd.xlane.f32.xlu0 %v1457
          %v1459 = vpop.xlane.xlu0 %1458
          %v1460 = vrot.slane %v1459, 4
          %v1461 = vadd.f32 %v1459, %v1460
          %v1462 = vrot.slane %v1461, 2
          %v1463 = vadd.f32 %v1461, %v1462
          %v1464 = vrot.slane %v1463, 1
          %v1465 = vadd.f32 %v1463, %v1464
          %s1466 = vtos %v1465
          %s1467 = sadd.f32 %s1453, %s1466
          %s1468 = scalar_lea.smem [#allocation3], 7
          %1469 = sst [smem:[%s1468]] %s1467
          %s1470 = sld [smem:[#allocation3 + $0x8]]
          %vm1471 = vcmp.ge.f32.partialorder %v736, 0.8
          %v1472 = vsel %vm1471, 1, 0
          %v1473 = vcvt.s32.f32 %v1472
          %v1474 = vsel %vm592, %v1473, 0.0
          %1475 = vadd.xlane.f32.xlu0 %v1474
          %v1476 = vpop.xlane.xlu0 %1475
          %v1477 = vrot.slane %v1476, 4
          %v1478 = vadd.f32 %v1476, %v1477
          %v1479 = vrot.slane %v1478, 2
          %v1480 = vadd.f32 %v1478, %v1479
          %v1481 = vrot.slane %v1480, 1
          %v1482 = vadd.f32 %v1480, %v1481
          %s1483 = vtos %v1482
          %s1484 = sadd.f32 %s1470, %s1483
          %s1485 = scalar_lea.smem [#allocation3], 8
          %1486 = sst [smem:[%s1485]] %s1484
          %s1487 = sld [smem:[#allocation3 + $0x9]]
          %vm1488 = vcmp.ge.f32.partialorder %v736, 0.9
          %v1489 = vsel %vm1488, 1, 0
          %v1490 = vcvt.s32.f32 %v1489
          %v1491 = vsel %vm592, %v1490, 0.0
          %1492 = vadd.xlane.f32.xlu0 %v1491
          %v1493 = vpop.xlane.xlu0 %1492
          %v1494 = vrot.slane %v1493, 4
          %v1495 = vadd.f32 %v1493, %v1494
          %v1496 = vrot.slane %v1495, 2
          %v1497 = vadd.f32 %v1495, %v1496
          %v1498 = vrot.slane %v1497, 1
          %v1499 = vadd.f32 %v1497, %v1498
          %s1500 = vtos %v1499
          %s1501 = sadd.f32 %s1487, %s1500
          %s1502 = scalar_lea.smem [#allocation3], 9
          %1503 = sst [smem:[%s1502]] %s1501
          %s1504 = sld [smem:[#allocation3 + $0xa]]
          %vm1505 = vcmp.ge.f32.partialorder %v736, 1000.0
          %v1506 = vsel %vm1505, 1, 0
          %v1507 = vcvt.s32.f32 %v1506
          %v1508 = vsel %vm592, %v1507, 0.0
          %1509 = vadd.xlane.f32.xlu0 %v1508
          %v1510 = vpop.xlane.xlu0 %1509
          %v1511 = vrot.slane %v1510, 4
          %v1512 = vadd.f32 %v1510, %v1511
          %v1513 = vrot.slane %v1512, 2
          %v1514 = vadd.f32 %v1512, %v1513
          %v1515 = vrot.slane %v1514, 1
          %v1516 = vadd.f32 %v1514, %v1515
          %s1517 = vtos %v1516
          %s1518 = sadd.f32 %s1504, %s1517
          %s1519 = scalar_lea.smem [#allocation3], 10
          %1520 = sst [smem:[%s1519]] %s1518
          // Predicated region
          $region49: #{ghm_loss_forward.1} parent=43 // pred_check
            %p1521 = pneg %p364
          $region50: #{ghm_loss_forward.1} parent=43 // pred_check_branch
            %1523 = sbr.rel (%p1521) target = $region52
          $region51: #{ghm_loss_forward.1} parent=43 // pred_region
            %s1524 = sld [smem:[#allocation6]]
            %p1525 = scmp.gt.f32.partialorder %s1524, 0.0
            %p1526 = pnand %p517, %p1525
            %p1527 = pneg %p1526
            %s1528 = sld [smem:[#allocation2 + $0x1]]
            %s1529 = ssub.f32 256.0, %s1528
            %p1530 = scmp.gt.f32.partialorder %s1529, 0.0
            %s1531 = sld [smem:[#allocation15]]
            %p1532 = pnand %p1530, %p517
            %p1533 = pneg %p1532
            %s1534 = smul.f32 %s1531, 0.75
            %s1535 = smul.f32 %s1529, 0.25
            %s1536 = sadd.f32 %s1534, %s1535
            %s1537 = scalar_select %p1533, %s1536, %s1531
            %s1538 = scalar_lea.smem [#allocation15], 0
            %1539 = sst [smem:[%s1538]] %s1537
            %s1540 = scalar_select %p1530, %s1537, 1.0
            %s1541 = smax.f32 %s1540, 1e-12
            %v1542 = vstv %s1541
            %v1543 = vrcp.pop %v1542
            %s1544 = vtos %v1543
            %s1545 = smul.f32 256.0, %s1544
            %s1546 = scalar_select %p1530, %s1545, 0.0
            %s1547 = scalar_lea.smem [#allocation4], 0
            %1548 = sst [smem:[%s1547]] %s1546
            %s1549 = scalar_select %p1530, 1, 0
            %s1550 = scvt.s32.f32 %s1549
            %s1551 = sadd.f32 %s1550, 0.0
            %s1552 = sld [smem:[#allocation2 + $0x2]]
            %s1553 = ssub.f32 %s1528, %s1552
            %p1554 = scmp.gt.f32.partialorder %s1553, 0.0
            %s1555 = sld [smem:[#allocation15 + $0x1]]
            %p1556 = pnand %p1554, %p517
            %p1557 = pneg %p1556
            %s1558 = smul.f32 %s1555, 0.75
            %s1559 = smul.f32 %s1553, 0.25
            %s1560 = sadd.f32 %s1558, %s1559
            %s1561 = scalar_select %p1557, %s1560, %s1555
            %s1562 = scalar_lea.smem [#allocation15], 1
            %1563 = sst [smem:[%s1562]] %s1561
            %s1564 = scalar_select %p1554, %s1561, 1.0
            %s1565 = smax.f32 %s1564, 1e-12
            %v1566 = vstv %s1565
            %v1567 = vrcp.pop %v1566
            %s1568 = vtos %v1567
            %s1569 = smul.f32 256.0, %s1568
            %s1570 = scalar_select %p1554, %s1569, 0.0
            %s1571 = scalar_lea.smem [#allocation4], 1
            %1572 = sst [smem:[%s1571]] %s1570
            %s1573 = scalar_select %p1554, 1, 0
            %s1574 = scvt.s32.f32 %s1573
            %s1575 = sadd.f32 %s1551, %s1574
            %s1576 = sld [smem:[#allocation2 + $0x3]]
            %s1577 = ssub.f32 %s1552, %s1576
            %p1578 = scmp.gt.f32.partialorder %s1577, 0.0
            %s1579 = sld [smem:[#allocation15 + $0x2]]
            %p1580 = pnand %p1578, %p517
            %p1581 = pneg %p1580
            %s1582 = smul.f32 %s1579, 0.75
            %s1583 = smul.f32 %s1577, 0.25
            %s1584 = sadd.f32 %s1582, %s1583
            %s1585 = scalar_select %p1581, %s1584, %s1579
            %s1586 = scalar_lea.smem [#allocation15], 2
            %1587 = sst [smem:[%s1586]] %s1585
            %s1588 = scalar_select %p1578, %s1585, 1.0
            %s1589 = smax.f32 %s1588, 1e-12
            %v1590 = vstv %s1589
            %v1591 = vrcp.pop %v1590
            %s1592 = vtos %v1591
            %s1593 = smul.f32 256.0, %s1592
            %s1594 = scalar_select %p1578, %s1593, 0.0
            %s1595 = scalar_lea.smem [#allocation4], 2
            %1596 = sst [smem:[%s1595]] %s1594
            %s1597 = scalar_select %p1578, 1, 0
            %s1598 = scvt.s32.f32 %s1597
            %s1599 = sadd.f32 %s1575, %s1598
            %s1600 = sld [smem:[#allocation2 + $0x4]]
            %s1601 = ssub.f32 %s1576, %s1600
            %p1602 = scmp.gt.f32.partialorder %s1601, 0.0
            %s1603 = sld [smem:[#allocation15 + $0x3]]
            %p1604 = pnand %p1602, %p517
            %p1605 = pneg %p1604
            %s1606 = smul.f32 %s1603, 0.75
            %s1607 = smul.f32 %s1601, 0.25
            %s1608 = sadd.f32 %s1606, %s1607
            %s1609 = scalar_select %p1605, %s1608, %s1603
            %s1610 = scalar_lea.smem [#allocation15], 3
            %1611 = sst [smem:[%s1610]] %s1609
            %s1612 = scalar_select %p1602, %s1609, 1.0
            %s1613 = smax.f32 %s1612, 1e-12
            %v1614 = vstv %s1613
            %v1615 = vrcp.pop %v1614
            %s1616 = vtos %v1615
            %s1617 = smul.f32 256.0, %s1616
            %s1618 = scalar_select %p1602, %s1617, 0.0
            %s1619 = scalar_lea.smem [#allocation4], 3
            %1620 = sst [smem:[%s1619]] %s1618
            %s1621 = scalar_select %p1602, 1, 0
            %s1622 = scvt.s32.f32 %s1621
            %s1623 = sadd.f32 %s1599, %s1622
            %s1624 = sld [smem:[#allocation2 + $0x5]]
            %s1625 = ssub.f32 %s1600, %s1624
            %p1626 = scmp.gt.f32.partialorder %s1625, 0.0
            %s1627 = sld [smem:[#allocation15 + $0x4]]
            %p1628 = pnand %p1626, %p517
            %p1629 = pneg %p1628
            %s1630 = smul.f32 %s1627, 0.75
            %s1631 = smul.f32 %s1625, 0.25
            %s1632 = sadd.f32 %s1630, %s1631
            %s1633 = scalar_select %p1629, %s1632, %s1627
            %s1634 = scalar_lea.smem [#allocation15], 4
            %1635 = sst [smem:[%s1634]] %s1633
            %s1636 = scalar_select %p1626, %s1633, 1.0
            %s1637 = smax.f32 %s1636, 1e-12
            %v1638 = vstv %s1637
            %v1639 = vrcp.pop %v1638
            %s1640 = vtos %v1639
            %s1641 = smul.f32 256.0, %s1640
            %s1642 = scalar_select %p1626, %s1641, 0.0
            %s1643 = scalar_lea.smem [#allocation4], 4
            %1644 = sst [smem:[%s1643]] %s1642
            %s1645 = scalar_select %p1626, 1, 0
            %s1646 = scvt.s32.f32 %s1645
            %s1647 = sadd.f32 %s1623, %s1646
            %s1648 = sld [smem:[#allocation2 + $0x6]]
            %s1649 = ssub.f32 %s1624, %s1648
            %p1650 = scmp.gt.f32.partialorder %s1649, 0.0
            %s1651 = sld [smem:[#allocation15 + $0x5]]
            %p1652 = pnand %p1650, %p517
            %p1653 = pneg %p1652
            %s1654 = smul.f32 %s1651, 0.75
            %s1655 = smul.f32 %s1649, 0.25
            %s1656 = sadd.f32 %s1654, %s1655
            %s1657 = scalar_select %p1653, %s1656, %s1651
            %s1658 = scalar_lea.smem [#allocation15], 5
            %1659 = sst [smem:[%s1658]] %s1657
            %s1660 = scalar_select %p1650, %s1657, 1.0
            %s1661 = smax.f32 %s1660, 1e-12
            %v1662 = vstv %s1661
            %v1663 = vrcp.pop %v1662
            %s1664 = vtos %v1663
            %s1665 = smul.f32 256.0, %s1664
            %s1666 = scalar_select %p1650, %s1665, 0.0
            %s1667 = scalar_lea.smem [#allocation4], 5
            %1668 = sst [smem:[%s1667]] %s1666
            %s1669 = scalar_select %p1650, 1, 0
            %s1670 = scvt.s32.f32 %s1669
            %s1671 = sadd.f32 %s1647, %s1670
            %s1672 = sld [smem:[#allocation2 + $0x7]]
            %s1673 = ssub.f32 %s1648, %s1672
            %p1674 = scmp.gt.f32.partialorder %s1673, 0.0
            %s1675 = sld [smem:[#allocation15 + $0x6]]
            %p1676 = pnand %p1674, %p517
            %p1677 = pneg %p1676
            %s1678 = smul.f32 %s1675, 0.75
            %s1679 = smul.f32 %s1673, 0.25
            %s1680 = sadd.f32 %s1678, %s1679
            %s1681 = scalar_select %p1677, %s1680, %s1675
            %s1682 = scalar_lea.smem [#allocation15], 6
            %1683 = sst [smem:[%s1682]] %s1681
            %s1684 = scalar_select %p1674, %s1681, 1.0
            %s1685 = smax.f32 %s1684, 1e-12
            %v1686 = vstv %s1685
            %v1687 = vrcp.pop %v1686
            %s1688 = vtos %v1687
            %s1689 = smul.f32 256.0, %s1688
            %s1690 = scalar_select %p1674, %s1689, 0.0
            %s1691 = scalar_lea.smem [#allocation4], 6
            %1692 = sst [smem:[%s1691]] %s1690
            %s1693 = scalar_select %p1674, 1, 0
            %s1694 = scvt.s32.f32 %s1693
            %s1695 = sadd.f32 %s1671, %s1694
            %s1696 = sld [smem:[#allocation2 + $0x8]]
            %s1697 = ssub.f32 %s1672, %s1696
            %p1698 = scmp.gt.f32.partialorder %s1697, 0.0
            %s1699 = sld [smem:[#allocation15 + $0x7]]
            %p1700 = pnand %p1698, %p517
            %p1701 = pneg %p1700
            %s1702 = smul.f32 %s1699, 0.75
            %s1703 = smul.f32 %s1697, 0.25
            %s1704 = sadd.f32 %s1702, %s1703
            %s1705 = scalar_select %p1701, %s1704, %s1699
            %s1706 = scalar_lea.smem [#allocation15], 7
            %1707 = sst [smem:[%s1706]] %s1705
            %s1708 = scalar_select %p1698, %s1705, 1.0
            %s1709 = smax.f32 %s1708, 1e-12
            %v1710 = vstv %s1709
            %v1711 = vrcp.pop %v1710
            %s1712 = vtos %v1711
            %s1713 = smul.f32 256.0, %s1712
            %s1714 = scalar_select %p1698, %s1713, 0.0
            %s1715 = scalar_lea.smem [#allocation4], 7
            %1716 = sst [smem:[%s1715]] %s1714
            %s1717 = scalar_select %p1698, 1, 0
            %s1718 = scvt.s32.f32 %s1717
            %s1719 = sadd.f32 %s1695, %s1718
            %s1720 = sld [smem:[#allocation2 + $0x9]]
            %s1721 = ssub.f32 %s1696, %s1720
            %p1722 = scmp.gt.f32.partialorder %s1721, 0.0
            %s1723 = sld [smem:[#allocation15 + $0x8]]
            %p1724 = pnand %p1722, %p517
            %p1725 = pneg %p1724
            %s1726 = smul.f32 %s1723, 0.75
            %s1727 = smul.f32 %s1721, 0.25
            %s1728 = sadd.f32 %s1726, %s1727
            %s1729 = scalar_select %p1725, %s1728, %s1723
            %s1730 = scalar_lea.smem [#allocation15], 8
            %1731 = sst [smem:[%s1730]] %s1729
            %s1732 = scalar_select %p1722, %s1729, 1.0
            %s1733 = smax.f32 %s1732, 1e-12
            %v1734 = vstv %s1733
            %v1735 = vrcp.pop %v1734
            %s1736 = vtos %v1735
            %s1737 = smul.f32 256.0, %s1736
            %s1738 = scalar_select %p1722, %s1737, 0.0
            %s1739 = scalar_lea.smem [#allocation4], 8
            %1740 = sst [smem:[%s1739]] %s1738
            %s1741 = scalar_select %p1722, 1, 0
            %s1742 = scvt.s32.f32 %s1741
            %s1743 = sadd.f32 %s1719, %s1742
            %s1744 = sld [smem:[#allocation2 + $0xa]]
            %s1745 = ssub.f32 %s1720, %s1744
            %p1746 = scmp.gt.f32.partialorder %s1745, 0.0
            %s1747 = sld [smem:[#allocation15 + $0x9]]
            %p1748 = pnand %p1746, %p517
            %p1749 = pneg %p1748
            %s1750 = smul.f32 %s1747, 0.75
            %s1751 = smul.f32 %s1745, 0.25
            %s1752 = sadd.f32 %s1750, %s1751
            %s1753 = scalar_select %p1749, %s1752, %s1747
            %s1754 = scalar_lea.smem [#allocation15], 9
            %1755 = sst [smem:[%s1754]] %s1753
            %s1756 = scalar_select %p1746, %s1753, 1.0
            %s1757 = smax.f32 %s1756, 1e-12
            %v1758 = vstv %s1757
            %v1759 = vrcp.pop %v1758
            %s1760 = vtos %v1759
            %s1761 = smul.f32 256.0, %s1760
            %s1762 = scalar_select %p1746, %s1761, 0.0
            %s1763 = scalar_lea.smem [#allocation4], 9
            %1764 = sst [smem:[%s1763]] %s1762
            %s1765 = scalar_select %p1746, 1, 0
            %s1766 = scvt.s32.f32 %s1765
            %s1767 = sadd.f32 %s1743, %s1766
            %s1768 = sld [smem:[#allocation2 + $0xb]]
            %s1769 = ssub.f32 %s1744, %s1768
            %p1770 = scmp.gt.f32.partialorder %s1769, 0.0
            %s1771 = sld [smem:[#allocation15 + $0xa]]
            %p1772 = pnand %p1770, %p517
            %p1773 = pneg %p1772
            %s1774 = smul.f32 %s1771, 0.75
            %s1775 = smul.f32 %s1769, 0.25
            %s1776 = sadd.f32 %s1774, %s1775
            %s1777 = scalar_select %p1773, %s1776, %s1771
            %s1778 = scalar_lea.smem [#allocation15], 10
            %1779 = sst [smem:[%s1778]] %s1777
            %s1780 = scalar_select %p1770, %s1777, 1.0
            %s1781 = smax.f32 %s1780, 1e-12
            %v1782 = vstv %s1781
            %v1783 = vrcp.pop %v1782
            %s1784 = vtos %v1783
            %s1785 = smul.f32 256.0, %s1784
            %s1786 = scalar_select %p1770, %s1785, 0.0
            %s1787 = scalar_lea.smem [#allocation4], 10
            %1788 = sst [smem:[%s1787]] %s1786
            %s1789 = scalar_select %p1770, 1, 0
            %s1790 = scvt.s32.f32 %s1789
            %s1791 = sadd.f32 %s1767, %s1790
            %s1792 = sld [smem:[#allocation2 + $0xc]]
            %s1793 = ssub.f32 %s1768, %s1792
            %p1794 = scmp.gt.f32.partialorder %s1793, 0.0
            %s1795 = sld [smem:[#allocation15 + $0xb]]
            %p1796 = pnand %p1794, %p517
            %p1797 = pneg %p1796
            %s1798 = smul.f32 %s1795, 0.75
            %s1799 = smul.f32 %s1793, 0.25
            %s1800 = sadd.f32 %s1798, %s1799
            %s1801 = scalar_select %p1797, %s1800, %s1795
            %s1802 = scalar_lea.smem [#allocation15], 11
            %1803 = sst [smem:[%s1802]] %s1801
            %s1804 = scalar_select %p1794, %s1801, 1.0
            %s1805 = smax.f32 %s1804, 1e-12
            %v1806 = vstv %s1805
            %v1807 = vrcp.pop %v1806
            %s1808 = vtos %v1807
            %s1809 = smul.f32 256.0, %s1808
            %s1810 = scalar_select %p1794, %s1809, 0.0
            %s1811 = scalar_lea.smem [#allocation4], 11
            %1812 = sst [smem:[%s1811]] %s1810
            %s1813 = scalar_select %p1794, 1, 0
            %s1814 = scvt.s32.f32 %s1813
            %s1815 = sadd.f32 %s1791, %s1814
            %s1816 = sld [smem:[#allocation2 + $0xd]]
            %s1817 = ssub.f32 %s1792, %s1816
            %p1818 = scmp.gt.f32.partialorder %s1817, 0.0
            %s1819 = sld [smem:[#allocation15 + $0xc]]
            %p1820 = pnand %p1818, %p517
            %p1821 = pneg %p1820
            %s1822 = smul.f32 %s1819, 0.75
            %s1823 = smul.f32 %s1817, 0.25
            %s1824 = sadd.f32 %s1822, %s1823
            %s1825 = scalar_select %p1821, %s1824, %s1819
            %s1826 = scalar_lea.smem [#allocation15], 12
            %1827 = sst [smem:[%s1826]] %s1825
            %s1828 = scalar_select %p1818, %s1825, 1.0
            %s1829 = smax.f32 %s1828, 1e-12
            %v1830 = vstv %s1829
            %v1831 = vrcp.pop %v1830
            %s1832 = vtos %v1831
            %s1833 = smul.f32 256.0, %s1832
            %s1834 = scalar_select %p1818, %s1833, 0.0
            %s1835 = scalar_lea.smem [#allocation4], 12
            %1836 = sst [smem:[%s1835]] %s1834
            %s1837 = scalar_select %p1818, 1, 0
            %s1838 = scvt.s32.f32 %s1837
            %s1839 = sadd.f32 %s1815, %s1838
            %s1840 = sld [smem:[#allocation2 + $0xe]]
            %s1841 = ssub.f32 %s1816, %s1840
            %p1842 = scmp.gt.f32.partialorder %s1841, 0.0
            %s1843 = sld [smem:[#allocation15 + $0xd]]
            %p1844 = pnand %p1842, %p517
            %p1845 = pneg %p1844
            %s1846 = smul.f32 %s1843, 0.75
            %s1847 = smul.f32 %s1841, 0.25
            %s1848 = sadd.f32 %s1846, %s1847
            %s1849 = scalar_select %p1845, %s1848, %s1843
            %s1850 = scalar_lea.smem [#allocation15], 13
            %1851 = sst [smem:[%s1850]] %s1849
            %s1852 = scalar_select %p1842, %s1849, 1.0
            %s1853 = smax.f32 %s1852, 1e-12
            %v1854 = vstv %s1853
            %v1855 = vrcp.pop %v1854
            %s1856 = vtos %v1855
            %s1857 = smul.f32 256.0, %s1856
            %s1858 = scalar_select %p1842, %s1857, 0.0
            %s1859 = scalar_lea.smem [#allocation4], 13
            %1860 = sst [smem:[%s1859]] %s1858
            %s1861 = scalar_select %p1842, 1, 0
            %s1862 = scvt.s32.f32 %s1861
            %s1863 = sadd.f32 %s1839, %s1862
            %s1864 = sld [smem:[#allocation2 + $0xf]]
            %s1865 = ssub.f32 %s1840, %s1864
            %p1866 = scmp.gt.f32.partialorder %s1865, 0.0
            %s1867 = sld [smem:[#allocation15 + $0xe]]
            %p1868 = pnand %p1866, %p517
            %p1869 = pneg %p1868
            %s1870 = smul.f32 %s1867, 0.75
            %s1871 = smul.f32 %s1865, 0.25
            %s1872 = sadd.f32 %s1870, %s1871
            %s1873 = scalar_select %p1869, %s1872, %s1867
            %s1874 = scalar_lea.smem [#allocation15], 14
            %1875 = sst [smem:[%s1874]] %s1873
            %s1876 = scalar_select %p1866, %s1873, 1.0
            %s1877 = smax.f32 %s1876, 1e-12
            %v1878 = vstv %s1877
            %v1879 = vrcp.pop %v1878
            %s1880 = vtos %v1879
            %s1881 = smul.f32 256.0, %s1880
            %s1882 = scalar_select %p1866, %s1881, 0.0
            %s1883 = scalar_lea.smem [#allocation4], 14
            %1884 = sst [smem:[%s1883]] %s1882
            %s1885 = scalar_select %p1866, 1, 0
            %s1886 = scvt.s32.f32 %s1885
            %s1887 = sadd.f32 %s1863, %s1886
            %s1888 = sld [smem:[#allocation2 + $0x10]]
            %s1889 = ssub.f32 %s1864, %s1888
            %p1890 = scmp.gt.f32.partialorder %s1889, 0.0
            %s1891 = sld [smem:[#allocation15 + $0xf]]
            %p1892 = pnand %p1890, %p517
            %p1893 = pneg %p1892
            %s1894 = smul.f32 %s1891, 0.75
            %s1895 = smul.f32 %s1889, 0.25
            %s1896 = sadd.f32 %s1894, %s1895
            %s1897 = scalar_select %p1893, %s1896, %s1891
            %s1898 = scalar_lea.smem [#allocation15], 15
            %1899 = sst [smem:[%s1898]] %s1897
            %s1900 = scalar_select %p1890, %s1897, 1.0
            %s1901 = smax.f32 %s1900, 1e-12
            %v1902 = vstv %s1901
            %v1903 = vrcp.pop %v1902
            %s1904 = vtos %v1903
            %s1905 = smul.f32 256.0, %s1904
            %s1906 = scalar_select %p1890, %s1905, 0.0
            %s1907 = scalar_lea.smem [#allocation4], 15
            %1908 = sst [smem:[%s1907]] %s1906
            %s1909 = scalar_select %p1890, 1, 0
            %s1910 = scvt.s32.f32 %s1909
            %s1911 = sadd.f32 %s1887, %s1910
            %s1912 = sld [smem:[#allocation2 + $0x11]]
            %s1913 = ssub.f32 %s1888, %s1912
            %p1914 = scmp.gt.f32.partialorder %s1913, 0.0
            %s1915 = sld [smem:[#allocation15 + $0x10]]
            %p1916 = pnand %p1914, %p517
            %p1917 = pneg %p1916
            %s1918 = smul.f32 %s1915, 0.75
            %s1919 = smul.f32 %s1913, 0.25
            %s1920 = sadd.f32 %s1918, %s1919
            %s1921 = scalar_select %p1917, %s1920, %s1915
            %s1922 = scalar_lea.smem [#allocation15], 16
            %1923 = sst [smem:[%s1922]] %s1921
            %s1924 = scalar_select %p1914, %s1921, 1.0
            %s1925 = smax.f32 %s1924, 1e-12
            %v1926 = vstv %s1925
            %v1927 = vrcp.pop %v1926
            %s1928 = vtos %v1927
            %s1929 = smul.f32 256.0, %s1928
            %s1930 = scalar_select %p1914, %s1929, 0.0
            %s1931 = scalar_lea.smem [#allocation4], 16
            %1932 = sst [smem:[%s1931]] %s1930
            %s1933 = scalar_select %p1914, 1, 0
            %s1934 = scvt.s32.f32 %s1933
            %s1935 = sadd.f32 %s1911, %s1934
            %s1936 = sld [smem:[#allocation2 + $0x12]]
            %s1937 = ssub.f32 %s1912, %s1936
            %p1938 = scmp.gt.f32.partialorder %s1937, 0.0
            %s1939 = sld [smem:[#allocation15 + $0x11]]
            %p1940 = pnand %p1938, %p517
            %p1941 = pneg %p1940
            %s1942 = smul.f32 %s1939, 0.75
            %s1943 = smul.f32 %s1937, 0.25
            %s1944 = sadd.f32 %s1942, %s1943
            %s1945 = scalar_select %p1941, %s1944, %s1939
            %s1946 = scalar_lea.smem [#allocation15], 17
            %1947 = sst [smem:[%s1946]] %s1945
            %s1948 = scalar_select %p1938, %s1945, 1.0
            %s1949 = smax.f32 %s1948, 1e-12
            %v1950 = vstv %s1949
            %v1951 = vrcp.pop %v1950
            %s1952 = vtos %v1951
            %s1953 = smul.f32 256.0, %s1952
            %s1954 = scalar_select %p1938, %s1953, 0.0
            %s1955 = scalar_lea.smem [#allocation4], 17
            %1956 = sst [smem:[%s1955]] %s1954
            %s1957 = scalar_select %p1938, 1, 0
            %s1958 = scvt.s32.f32 %s1957
            %s1959 = sadd.f32 %s1935, %s1958
            %s1960 = sld [smem:[#allocation2 + $0x13]]
            %s1961 = ssub.f32 %s1936, %s1960
            %p1962 = scmp.gt.f32.partialorder %s1961, 0.0
            %s1963 = sld [smem:[#allocation15 + $0x12]]
            %p1964 = pnand %p1962, %p517
            %p1965 = pneg %p1964
            %s1966 = smul.f32 %s1963, 0.75
            %s1967 = smul.f32 %s1961, 0.25
            %s1968 = sadd.f32 %s1966, %s1967
            %s1969 = scalar_select %p1965, %s1968, %s1963
            %s1970 = scalar_lea.smem [#allocation15], 18
            %1971 = sst [smem:[%s1970]] %s1969
            %s1972 = scalar_select %p1962, %s1969, 1.0
            %s1973 = smax.f32 %s1972, 1e-12
            %v1974 = vstv %s1973
            %v1975 = vrcp.pop %v1974
            %s1976 = vtos %v1975
            %s1977 = smul.f32 256.0, %s1976
            %s1978 = scalar_select %p1962, %s1977, 0.0
            %s1979 = scalar_lea.smem [#allocation4], 18
            %1980 = sst [smem:[%s1979]] %s1978
            %s1981 = scalar_select %p1962, 1, 0
            %s1982 = scvt.s32.f32 %s1981
            %s1983 = sadd.f32 %s1959, %s1982
            %s1984 = sld [smem:[#allocation2 + $0x14]]
            %s1985 = ssub.f32 %s1960, %s1984
            %p1986 = scmp.gt.f32.partialorder %s1985, 0.0
            %s1987 = sld [smem:[#allocation15 + $0x13]]
            %p1988 = pnand %p1986, %p517
            %p1989 = pneg %p1988
            %s1990 = smul.f32 %s1987, 0.75
            %s1991 = smul.f32 %s1985, 0.25
            %s1992 = sadd.f32 %s1990, %s1991
            %s1993 = scalar_select %p1989, %s1992, %s1987
            %s1994 = scalar_lea.smem [#allocation15], 19
            %1995 = sst [smem:[%s1994]] %s1993
            %s1996 = scalar_select %p1986, %s1993, 1.0
            %s1997 = smax.f32 %s1996, 1e-12
            %v1998 = vstv %s1997
            %v1999 = vrcp.pop %v1998
            %s2000 = vtos %v1999
            %s2001 = smul.f32 256.0, %s2000
            %s2002 = scalar_select %p1986, %s2001, 0.0
            %s2003 = scalar_lea.smem [#allocation4], 19
            %2004 = sst [smem:[%s2003]] %s2002
            %s2005 = scalar_select %p1986, 1, 0
            %s2006 = scvt.s32.f32 %s2005
            %s2007 = sadd.f32 %s1983, %s2006
            %s2008 = sld [smem:[#allocation2 + $0x15]]
            %s2009 = ssub.f32 %s1984, %s2008
            %p2010 = scmp.gt.f32.partialorder %s2009, 0.0
            %s2011 = sld [smem:[#allocation15 + $0x14]]
            %p2012 = pnand %p2010, %p517
            %p2013 = pneg %p2012
            %s2014 = smul.f32 %s2011, 0.75
            %s2015 = smul.f32 %s2009, 0.25
            %s2016 = sadd.f32 %s2014, %s2015
            %s2017 = scalar_select %p2013, %s2016, %s2011
            %s2018 = scalar_lea.smem [#allocation15], 20
            %2019 = sst [smem:[%s2018]] %s2017
            %s2020 = scalar_select %p2010, %s2017, 1.0
            %s2021 = smax.f32 %s2020, 1e-12
            %v2022 = vstv %s2021
            %v2023 = vrcp.pop %v2022
            %s2024 = vtos %v2023
            %s2025 = smul.f32 256.0, %s2024
            %s2026 = scalar_select %p2010, %s2025, 0.0
            %s2027 = scalar_lea.smem [#allocation4], 20
            %2028 = sst [smem:[%s2027]] %s2026
            %s2029 = scalar_select %p2010, 1, 0
            %s2030 = scvt.s32.f32 %s2029
            %s2031 = sadd.f32 %s2007, %s2030
            %s2032 = sld [smem:[#allocation2 + $0x16]]
            %s2033 = ssub.f32 %s2008, %s2032
            %p2034 = scmp.gt.f32.partialorder %s2033, 0.0
            %s2035 = sld [smem:[#allocation15 + $0x15]]
            %p2036 = pnand %p2034, %p517
            %p2037 = pneg %p2036
            %s2038 = smul.f32 %s2035, 0.75
            %s2039 = smul.f32 %s2033, 0.25
            %s2040 = sadd.f32 %s2038, %s2039
            %s2041 = scalar_select %p2037, %s2040, %s2035
            %s2042 = scalar_lea.smem [#allocation15], 21
            %2043 = sst [smem:[%s2042]] %s2041
            %s2044 = scalar_select %p2034, %s2041, 1.0
            %s2045 = smax.f32 %s2044, 1e-12
            %v2046 = vstv %s2045
            %v2047 = vrcp.pop %v2046
            %s2048 = vtos %v2047
            %s2049 = smul.f32 256.0, %s2048
            %s2050 = scalar_select %p2034, %s2049, 0.0
            %s2051 = scalar_lea.smem [#allocation4], 21
            %2052 = sst [smem:[%s2051]] %s2050
            %s2053 = scalar_select %p2034, 1, 0
            %s2054 = scvt.s32.f32 %s2053
            %s2055 = sadd.f32 %s2031, %s2054
            %s2056 = sld [smem:[#allocation2 + $0x17]]
            %s2057 = ssub.f32 %s2032, %s2056
            %p2058 = scmp.gt.f32.partialorder %s2057, 0.0
            %s2059 = sld [smem:[#allocation15 + $0x16]]
            %p2060 = pnand %p2058, %p517
            %p2061 = pneg %p2060
            %s2062 = smul.f32 %s2059, 0.75
            %s2063 = smul.f32 %s2057, 0.25
            %s2064 = sadd.f32 %s2062, %s2063
            %s2065 = scalar_select %p2061, %s2064, %s2059
            %s2066 = scalar_lea.smem [#allocation15], 22
            %2067 = sst [smem:[%s2066]] %s2065
            %s2068 = scalar_select %p2058, %s2065, 1.0
            %s2069 = smax.f32 %s2068, 1e-12
            %v2070 = vstv %s2069
            %v2071 = vrcp.pop %v2070
            %s2072 = vtos %v2071
            %s2073 = smul.f32 256.0, %s2072
            %s2074 = scalar_select %p2058, %s2073, 0.0
            %s2075 = scalar_lea.smem [#allocation4], 22
            %2076 = sst [smem:[%s2075]] %s2074
            %s2077 = scalar_select %p2058, 1, 0
            %s2078 = scvt.s32.f32 %s2077
            %s2079 = sadd.f32 %s2055, %s2078
            %s2080 = sld [smem:[#allocation2 + $0x18]]
            %s2081 = ssub.f32 %s2056, %s2080
            %p2082 = scmp.gt.f32.partialorder %s2081, 0.0
            %s2083 = sld [smem:[#allocation15 + $0x17]]
            %p2084 = pnand %p2082, %p517
            %p2085 = pneg %p2084
            %s2086 = smul.f32 %s2083, 0.75
            %s2087 = smul.f32 %s2081, 0.25
            %s2088 = sadd.f32 %s2086, %s2087
            %s2089 = scalar_select %p2085, %s2088, %s2083
            %s2090 = scalar_lea.smem [#allocation15], 23
            %2091 = sst [smem:[%s2090]] %s2089
            %s2092 = scalar_select %p2082, %s2089, 1.0
            %s2093 = smax.f32 %s2092, 1e-12
            %v2094 = vstv %s2093
            %v2095 = vrcp.pop %v2094
            %s2096 = vtos %v2095
            %s2097 = smul.f32 256.0, %s2096
            %s2098 = scalar_select %p2082, %s2097, 0.0
            %s2099 = scalar_lea.smem [#allocation4], 23
            %2100 = sst [smem:[%s2099]] %s2098
            %s2101 = scalar_select %p2082, 1, 0
            %s2102 = scvt.s32.f32 %s2101
            %s2103 = sadd.f32 %s2079, %s2102
            %s2104 = sld [smem:[#allocation2 + $0x19]]
            %s2105 = ssub.f32 %s2080, %s2104
            %p2106 = scmp.gt.f32.partialorder %s2105, 0.0
            %s2107 = sld [smem:[#allocation15 + $0x18]]
            %p2108 = pnand %p2106, %p517
            %p2109 = pneg %p2108
            %s2110 = smul.f32 %s2107, 0.75
            %s2111 = smul.f32 %s2105, 0.25
            %s2112 = sadd.f32 %s2110, %s2111
            %s2113 = scalar_select %p2109, %s2112, %s2107
            %s2114 = scalar_lea.smem [#allocation15], 24
            %2115 = sst [smem:[%s2114]] %s2113
            %s2116 = scalar_select %p2106, %s2113, 1.0
            %s2117 = smax.f32 %s2116, 1e-12
            %v2118 = vstv %s2117
            %v2119 = vrcp.pop %v2118
            %s2120 = vtos %v2119
            %s2121 = smul.f32 256.0, %s2120
            %s2122 = scalar_select %p2106, %s2121, 0.0
            %s2123 = scalar_lea.smem [#allocation4], 24
            %2124 = sst [smem:[%s2123]] %s2122
            %s2125 = scalar_select %p2106, 1, 0
            %s2126 = scvt.s32.f32 %s2125
            %s2127 = sadd.f32 %s2103, %s2126
            %s2128 = sld [smem:[#allocation2 + $0x1a]]
            %s2129 = ssub.f32 %s2104, %s2128
            %p2130 = scmp.gt.f32.partialorder %s2129, 0.0
            %s2131 = sld [smem:[#allocation15 + $0x19]]
            %p2132 = pnand %p2130, %p517
            %p2133 = pneg %p2132
            %s2134 = smul.f32 %s2131, 0.75
            %s2135 = smul.f32 %s2129, 0.25
            %s2136 = sadd.f32 %s2134, %s2135
            %s2137 = scalar_select %p2133, %s2136, %s2131
            %s2138 = scalar_lea.smem [#allocation15], 25
            %2139 = sst [smem:[%s2138]] %s2137
            %s2140 = scalar_select %p2130, %s2137, 1.0
            %s2141 = smax.f32 %s2140, 1e-12
            %v2142 = vstv %s2141
            %v2143 = vrcp.pop %v2142
            %s2144 = vtos %v2143
            %s2145 = smul.f32 256.0, %s2144
            %s2146 = scalar_select %p2130, %s2145, 0.0
            %s2147 = scalar_lea.smem [#allocation4], 25
            %2148 = sst [smem:[%s2147]] %s2146
            %s2149 = scalar_select %p2130, 1, 0
            %s2150 = scvt.s32.f32 %s2149
            %s2151 = sadd.f32 %s2127, %s2150
            %s2152 = sld [smem:[#allocation2 + $0x1b]]
            %s2153 = ssub.f32 %s2128, %s2152
            %p2154 = scmp.gt.f32.partialorder %s2153, 0.0
            %s2155 = sld [smem:[#allocation15 + $0x1a]]
            %p2156 = pnand %p2154, %p517
            %p2157 = pneg %p2156
            %s2158 = smul.f32 %s2155, 0.75
            %s2159 = smul.f32 %s2153, 0.25
            %s2160 = sadd.f32 %s2158, %s2159
            %s2161 = scalar_select %p2157, %s2160, %s2155
            %s2162 = scalar_lea.smem [#allocation15], 26
            %2163 = sst [smem:[%s2162]] %s2161
            %s2164 = scalar_select %p2154, %s2161, 1.0
            %s2165 = smax.f32 %s2164, 1e-12
            %v2166 = vstv %s2165
            %v2167 = vrcp.pop %v2166
            %s2168 = vtos %v2167
            %s2169 = smul.f32 256.0, %s2168
            %s2170 = scalar_select %p2154, %s2169, 0.0
            %s2171 = scalar_lea.smem [#allocation4], 26
            %2172 = sst [smem:[%s2171]] %s2170
            %s2173 = scalar_select %p2154, 1, 0
            %s2174 = scvt.s32.f32 %s2173
            %s2175 = sadd.f32 %s2151, %s2174
            %s2176 = sld [smem:[#allocation2 + $0x1c]]
            %s2177 = ssub.f32 %s2152, %s2176
            %p2178 = scmp.gt.f32.partialorder %s2177, 0.0
            %s2179 = sld [smem:[#allocation15 + $0x1b]]
            %p2180 = pnand %p2178, %p517
            %p2181 = pneg %p2180
            %s2182 = smul.f32 %s2179, 0.75
            %s2183 = smul.f32 %s2177, 0.25
            %s2184 = sadd.f32 %s2182, %s2183
            %s2185 = scalar_select %p2181, %s2184, %s2179
            %s2186 = scalar_lea.smem [#allocation15], 27
            %2187 = sst [smem:[%s2186]] %s2185
            %s2188 = scalar_select %p2178, %s2185, 1.0
            %s2189 = smax.f32 %s2188, 1e-12
            %v2190 = vstv %s2189
            %v2191 = vrcp.pop %v2190
            %s2192 = vtos %v2191
            %s2193 = smul.f32 256.0, %s2192
            %s2194 = scalar_select %p2178, %s2193, 0.0
            %s2195 = scalar_lea.smem [#allocation4], 27
            %2196 = sst [smem:[%s2195]] %s2194
            %s2197 = scalar_select %p2178, 1, 0
            %s2198 = scvt.s32.f32 %s2197
            %s2199 = sadd.f32 %s2175, %s2198
            %s2200 = sld [smem:[#allocation2 + $0x1d]]
            %s2201 = ssub.f32 %s2176, %s2200
            %p2202 = scmp.gt.f32.partialorder %s2201, 0.0
            %s2203 = sld [smem:[#allocation15 + $0x1c]]
            %p2204 = pnand %p2202, %p517
            %p2205 = pneg %p2204
            %s2206 = smul.f32 %s2203, 0.75
            %s2207 = smul.f32 %s2201, 0.25
            %s2208 = sadd.f32 %s2206, %s2207
            %s2209 = scalar_select %p2205, %s2208, %s2203
            %s2210 = scalar_lea.smem [#allocation15], 28
            %2211 = sst [smem:[%s2210]] %s2209
            %s2212 = scalar_select %p2202, %s2209, 1.0
            %s2213 = smax.f32 %s2212, 1e-12
            %v2214 = vstv %s2213
            %v2215 = vrcp.pop %v2214
            %s2216 = vtos %v2215
            %s2217 = smul.f32 256.0, %s2216
            %s2218 = scalar_select %p2202, %s2217, 0.0
            %s2219 = scalar_lea.smem [#allocation4], 28
            %2220 = sst [smem:[%s2219]] %s2218
            %s2221 = scalar_select %p2202, 1, 0
            %s2222 = scvt.s32.f32 %s2221
            %s2223 = sadd.f32 %s2199, %s2222
            %s2224 = sld [smem:[#allocation2 + $0x1e]]
            %s2225 = ssub.f32 %s2200, %s2224
            %p2226 = scmp.gt.f32.partialorder %s2225, 0.0
            %s2227 = sld [smem:[#allocation15 + $0x1d]]
            %p2228 = pnand %p2226, %p517
            %p2229 = pneg %p2228
            %s2230 = smul.f32 %s2227, 0.75
            %s2231 = smul.f32 %s2225, 0.25
            %s2232 = sadd.f32 %s2230, %s2231
            %s2233 = scalar_select %p2229, %s2232, %s2227
            %s2234 = scalar_lea.smem [#allocation15], 29
            %2235 = sst [smem:[%s2234]] %s2233
            %s2236 = scalar_select %p2226, %s2233, 1.0
            %s2237 = smax.f32 %s2236, 1e-12
            %v2238 = vstv %s2237
            %v2239 = vrcp.pop %v2238
            %s2240 = vtos %v2239
            %s2241 = smul.f32 256.0, %s2240
            %s2242 = scalar_select %p2226, %s2241, 0.0
            %s2243 = scalar_lea.smem [#allocation4], 29
            %2244 = sst [smem:[%s2243]] %s2242
            %s2245 = scalar_select %p2226, 1, 0
            %s2246 = scvt.s32.f32 %s2245
            %s2247 = sadd.f32 %s2223, %s2246
            %s2248 = scalar_lea.smem [#allocation6], 1
            %2249 = sst [smem:[%s2248]] %s2247
            %s2250 = sld [smem:[#allocation3 + $0x1]]
            %s2251 = ssub.f32 128.0, %s2250
            %p2252 = scmp.gt.f32.partialorder %s2251, 0.0
            %s2253 = sld [smem:[#allocation16]]
            %p2254 = pnand %p2252, %p1527
            %p2255 = pneg %p2254
            %s2256 = smul.f32 %s2253, 0.7
            %s2257 = smul.f32 %s2251, 0.3
            %s2258 = sadd.f32 %s2256, %s2257
            %s2259 = scalar_select %p2255, %s2258, %s2253
            %s2260 = scalar_lea.smem [#allocation16], 0
            %2261 = sst [smem:[%s2260]] %s2259
            %s2262 = scalar_select %p2252, %s2259, 1.0
            %s2263 = smax.f32 %s2262, 1e-12
            %v2264 = vstv %s2263
            %v2265 = vrcp.pop %v2264
            %s2266 = vtos %v2265
            %s2267 = smul.f32 128.0, %s2266
            %s2268 = scalar_select %p2252, %s2267, 0.0
            %s2269 = scalar_lea.smem [#allocation5], 0
            %2270 = sst [smem:[%s2269]] %s2268
            %s2271 = scalar_select %p2252, 1, 0
            %s2272 = scvt.s32.f32 %s2271
            %s2273 = sadd.f32 %s2272, 0.0
            %s2274 = sld [smem:[#allocation3 + $0x2]]
            %s2275 = ssub.f32 %s2250, %s2274
            %p2276 = scmp.gt.f32.partialorder %s2275, 0.0
            %s2277 = sld [smem:[#allocation16 + $0x1]]
            %p2278 = pnand %p2276, %p1527
            %p2279 = pneg %p2278
            %s2280 = smul.f32 %s2277, 0.7
            %s2281 = smul.f32 %s2275, 0.3
            %s2282 = sadd.f32 %s2280, %s2281
            %s2283 = scalar_select %p2279, %s2282, %s2277
            %s2284 = scalar_lea.smem [#allocation16], 1
            %2285 = sst [smem:[%s2284]] %s2283
            %s2286 = scalar_select %p2276, %s2283, 1.0
            %s2287 = smax.f32 %s2286, 1e-12
            %v2288 = vstv %s2287
            %v2289 = vrcp.pop %v2288
            %s2290 = vtos %v2289
            %s2291 = smul.f32 128.0, %s2290
            %s2292 = scalar_select %p2276, %s2291, 0.0
            %s2293 = scalar_lea.smem [#allocation5], 1
            %2294 = sst [smem:[%s2293]] %s2292
            %s2295 = scalar_select %p2276, 1, 0
            %s2296 = scvt.s32.f32 %s2295
            %s2297 = sadd.f32 %s2273, %s2296
            %s2298 = sld [smem:[#allocation3 + $0x3]]
            %s2299 = ssub.f32 %s2274, %s2298
            %p2300 = scmp.gt.f32.partialorder %s2299, 0.0
            %s2301 = sld [smem:[#allocation16 + $0x2]]
            %p2302 = pnand %p2300, %p1527
            %p2303 = pneg %p2302
            %s2304 = smul.f32 %s2301, 0.7
            %s2305 = smul.f32 %s2299, 0.3
            %s2306 = sadd.f32 %s2304, %s2305
            %s2307 = scalar_select %p2303, %s2306, %s2301
            %s2308 = scalar_lea.smem [#allocation16], 2
            %2309 = sst [smem:[%s2308]] %s2307
            %s2310 = scalar_select %p2300, %s2307, 1.0
            %s2311 = smax.f32 %s2310, 1e-12
            %v2312 = vstv %s2311
            %v2313 = vrcp.pop %v2312
            %s2314 = vtos %v2313
            %s2315 = smul.f32 128.0, %s2314
            %s2316 = scalar_select %p2300, %s2315, 0.0
            %s2317 = scalar_lea.smem [#allocation5], 2
            %2318 = sst [smem:[%s2317]] %s2316
            %s2319 = scalar_select %p2300, 1, 0
            %s2320 = scvt.s32.f32 %s2319
            %s2321 = sadd.f32 %s2297, %s2320
            %s2322 = sld [smem:[#allocation3 + $0x4]]
            %s2323 = ssub.f32 %s2298, %s2322
            %p2324 = scmp.gt.f32.partialorder %s2323, 0.0
            %s2325 = sld [smem:[#allocation16 + $0x3]]
            %p2326 = pnand %p2324, %p1527
            %p2327 = pneg %p2326
            %s2328 = smul.f32 %s2325, 0.7
            %s2329 = smul.f32 %s2323, 0.3
            %s2330 = sadd.f32 %s2328, %s2329
            %s2331 = scalar_select %p2327, %s2330, %s2325
            %s2332 = scalar_lea.smem [#allocation16], 3
            %2333 = sst [smem:[%s2332]] %s2331
            %s2334 = scalar_select %p2324, %s2331, 1.0
            %s2335 = smax.f32 %s2334, 1e-12
            %v2336 = vstv %s2335
            %v2337 = vrcp.pop %v2336
            %s2338 = vtos %v2337
            %s2339 = smul.f32 128.0, %s2338
            %s2340 = scalar_select %p2324, %s2339, 0.0
            %s2341 = scalar_lea.smem [#allocation5], 3
            %2342 = sst [smem:[%s2341]] %s2340
            %s2343 = scalar_select %p2324, 1, 0
            %s2344 = scvt.s32.f32 %s2343
            %s2345 = sadd.f32 %s2321, %s2344
            %s2346 = sld [smem:[#allocation3 + $0x5]]
            %s2347 = ssub.f32 %s2322, %s2346
            %p2348 = scmp.gt.f32.partialorder %s2347, 0.0
            %s2349 = sld [smem:[#allocation16 + $0x4]]
            %p2350 = pnand %p2348, %p1527
            %p2351 = pneg %p2350
            %s2352 = smul.f32 %s2349, 0.7
            %s2353 = smul.f32 %s2347, 0.3
            %s2354 = sadd.f32 %s2352, %s2353
            %s2355 = scalar_select %p2351, %s2354, %s2349
            %s2356 = scalar_lea.smem [#allocation16], 4
            %2357 = sst [smem:[%s2356]] %s2355
            %s2358 = scalar_select %p2348, %s2355, 1.0
            %s2359 = smax.f32 %s2358, 1e-12
            %v2360 = vstv %s2359
            %v2361 = vrcp.pop %v2360
            %s2362 = vtos %v2361
            %s2363 = smul.f32 128.0, %s2362
            %s2364 = scalar_select %p2348, %s2363, 0.0
            %s2365 = scalar_lea.smem [#allocation5], 4
            %2366 = sst [smem:[%s2365]] %s2364
            %s2367 = scalar_select %p2348, 1, 0
            %s2368 = scvt.s32.f32 %s2367
            %s2369 = sadd.f32 %s2345, %s2368
            %s2370 = sld [smem:[#allocation3 + $0x6]]
            %s2371 = ssub.f32 %s2346, %s2370
            %p2372 = scmp.gt.f32.partialorder %s2371, 0.0
            %s2373 = sld [smem:[#allocation16 + $0x5]]
            %p2374 = pnand %p2372, %p1527
            %p2375 = pneg %p2374
            %s2376 = smul.f32 %s2373, 0.7
            %s2377 = smul.f32 %s2371, 0.3
            %s2378 = sadd.f32 %s2376, %s2377
            %s2379 = scalar_select %p2375, %s2378, %s2373
            %s2380 = scalar_lea.smem [#allocation16], 5
            %2381 = sst [smem:[%s2380]] %s2379
            %s2382 = scalar_select %p2372, %s2379, 1.0
            %s2383 = smax.f32 %s2382, 1e-12
            %v2384 = vstv %s2383
            %v2385 = vrcp.pop %v2384
            %s2386 = vtos %v2385
            %s2387 = smul.f32 128.0, %s2386
            %s2388 = scalar_select %p2372, %s2387, 0.0
            %s2389 = scalar_lea.smem [#allocation5], 5
            %2390 = sst [smem:[%s2389]] %s2388
            %s2391 = scalar_select %p2372, 1, 0
            %s2392 = scvt.s32.f32 %s2391
            %s2393 = sadd.f32 %s2369, %s2392
            %s2394 = sld [smem:[#allocation3 + $0x7]]
            %s2395 = ssub.f32 %s2370, %s2394
            %p2396 = scmp.gt.f32.partialorder %s2395, 0.0
            %s2397 = sld [smem:[#allocation16 + $0x6]]
            %p2398 = pnand %p2396, %p1527
            %p2399 = pneg %p2398
            %s2400 = smul.f32 %s2397, 0.7
            %s2401 = smul.f32 %s2395, 0.3
            %s2402 = sadd.f32 %s2400, %s2401
            %s2403 = scalar_select %p2399, %s2402, %s2397
            %s2404 = scalar_lea.smem [#allocation16], 6
            %2405 = sst [smem:[%s2404]] %s2403
            %s2406 = scalar_select %p2396, %s2403, 1.0
            %s2407 = smax.f32 %s2406, 1e-12
            %v2408 = vstv %s2407
            %v2409 = vrcp.pop %v2408
            %s2410 = vtos %v2409
            %s2411 = smul.f32 128.0, %s2410
            %s2412 = scalar_select %p2396, %s2411, 0.0
            %s2413 = scalar_lea.smem [#allocation5], 6
            %2414 = sst [smem:[%s2413]] %s2412
            %s2415 = scalar_select %p2396, 1, 0
            %s2416 = scvt.s32.f32 %s2415
            %s2417 = sadd.f32 %s2393, %s2416
            %s2418 = sld [smem:[#allocation3 + $0x8]]
            %s2419 = ssub.f32 %s2394, %s2418
            %p2420 = scmp.gt.f32.partialorder %s2419, 0.0
            %s2421 = sld [smem:[#allocation16 + $0x7]]
            %p2422 = pnand %p2420, %p1527
            %p2423 = pneg %p2422
            %s2424 = smul.f32 %s2421, 0.7
            %s2425 = smul.f32 %s2419, 0.3
            %s2426 = sadd.f32 %s2424, %s2425
            %s2427 = scalar_select %p2423, %s2426, %s2421
            %s2428 = scalar_lea.smem [#allocation16], 7
            %2429 = sst [smem:[%s2428]] %s2427
            %s2430 = scalar_select %p2420, %s2427, 1.0
            %s2431 = smax.f32 %s2430, 1e-12
            %v2432 = vstv %s2431
            %v2433 = vrcp.pop %v2432
            %s2434 = vtos %v2433
            %s2435 = smul.f32 128.0, %s2434
            %s2436 = scalar_select %p2420, %s2435, 0.0
            %s2437 = scalar_lea.smem [#allocation5], 7
            %2438 = sst [smem:[%s2437]] %s2436
            %s2439 = scalar_select %p2420, 1, 0
            %s2440 = scvt.s32.f32 %s2439
            %s2441 = sadd.f32 %s2417, %s2440
            %s2442 = sld [smem:[#allocation3 + $0x9]]
            %s2443 = ssub.f32 %s2418, %s2442
            %p2444 = scmp.gt.f32.partialorder %s2443, 0.0
            %s2445 = sld [smem:[#allocation16 + $0x8]]
            %p2446 = pnand %p2444, %p1527
            %p2447 = pneg %p2446
            %s2448 = smul.f32 %s2445, 0.7
            %s2449 = smul.f32 %s2443, 0.3
            %s2450 = sadd.f32 %s2448, %s2449
            %s2451 = scalar_select %p2447, %s2450, %s2445
            %s2452 = scalar_lea.smem [#allocation16], 8
            %2453 = sst [smem:[%s2452]] %s2451
            %s2454 = scalar_select %p2444, %s2451, 1.0
            %s2455 = smax.f32 %s2454, 1e-12
            %v2456 = vstv %s2455
            %v2457 = vrcp.pop %v2456
            %s2458 = vtos %v2457
            %s2459 = smul.f32 128.0, %s2458
            %s2460 = scalar_select %p2444, %s2459, 0.0
            %s2461 = scalar_lea.smem [#allocation5], 8
            %2462 = sst [smem:[%s2461]] %s2460
            %s2463 = scalar_select %p2444, 1, 0
            %s2464 = scvt.s32.f32 %s2463
            %s2465 = sadd.f32 %s2441, %s2464
            %s2466 = sld [smem:[#allocation3 + $0xa]]
            %s2467 = ssub.f32 %s2442, %s2466
            %p2468 = scmp.gt.f32.partialorder %s2467, 0.0
            %s2469 = sld [smem:[#allocation16 + $0x9]]
            %p2470 = pnand %p2468, %p1527
            %p2471 = pneg %p2470
            %s2472 = smul.f32 %s2469, 0.7
            %s2473 = smul.f32 %s2467, 0.3
            %s2474 = sadd.f32 %s2472, %s2473
            %s2475 = scalar_select %p2471, %s2474, %s2469
            %s2476 = scalar_lea.smem [#allocation16], 9
            %2477 = sst [smem:[%s2476]] %s2475
            %s2478 = scalar_select %p2468, %s2475, 1.0
            %s2479 = smax.f32 %s2478, 1e-12
            %v2480 = vstv %s2479
            %v2481 = vrcp.pop %v2480
            %s2482 = vtos %v2481
            %s2483 = smul.f32 128.0, %s2482
            %s2484 = scalar_select %p2468, %s2483, 0.0
            %s2485 = scalar_lea.smem [#allocation5], 9
            %2486 = sst [smem:[%s2485]] %s2484
            %s2487 = scalar_select %p2468, 1, 0
            %s2488 = scvt.s32.f32 %s2487
            %s2489 = sadd.f32 %s2465, %s2488
            %s2490 = scalar_lea.smem [#allocation6], 2
            %2491 = sst [smem:[%s2490]] %s2489
          $region52: #{ghm_loss_forward.1} parent=43 // pred_fallthru
            _
        $region44: #{ghm_loss_forward.1} parent=35 // pred_fallthru
          _
        %p2492 = scmp.eq.s32.totalorder %s40, 1
        // Predicated region
        $region53: #{ghm_loss_forward.1} parent=35 // pred_check
          %p2493 = pneg %p2492
        $region54: #{ghm_loss_forward.1} parent=35 // pred_check_branch
          %2495 = sbr.rel (%p2493) target = $region56
        $region55: #{ghm_loss_forward.1} parent=35 // pred_region
          %v2496 = vmax.f32 %v497, 0.0
          %v2497 = vmul.f32 %v497, %v668
          %v2498 = vsub.f32 %v2496, %v2497
          %v2499 = vlog2.pop %v673
          %v2500 = vmul.f32 %v2499, 0.6931472
          %v2501 = vadd.f32 %v2498, %v2500
          %s2502 = sld [smem:[#allocation4]]
          %v2503 = vstv %s2502
          %s2504 = sld [smem:[#allocation4 + $0x1]]
          %vm2505 = vcmp.ge.f32.partialorder %v680, 0.033333335
          %s2506 = ssub.f32 %s2504, %s2502
          %v2507 = vstv %s2506
          %v2508 = vsel %vm2505, %v2507, 0.0
          %v2509 = vadd.f32 %v2503, %v2508
          %s2510 = sld [smem:[#allocation4 + $0x2]]
          %vm2511 = vcmp.ge.f32.partialorder %v680, 0.06666667
          %s2512 = ssub.f32 %s2510, %s2504
          %v2513 = vstv %s2512
          %v2514 = vsel %vm2511, %v2513, 0.0
          %v2515 = vadd.f32 %v2509, %v2514
          %s2516 = sld [smem:[#allocation4 + $0x3]]
          %vm2517 = vcmp.ge.f32.partialorder %v680, 0.1
          %s2518 = ssub.f32 %s2516, %s2510
          %v2519 = vstv %s2518
          %v2520 = vsel %vm2517, %v2519, 0.0
          %v2521 = vadd.f32 %v2515, %v2520
          %s2522 = sld [smem:[#allocation4 + $0x4]]
          %vm2523 = vcmp.ge.f32.partialorder %v680, 0.13333334
          %s2524 = ssub.f32 %s2522, %s2516
          %v2525 = vstv %s2524
          %v2526 = vsel %vm2523, %v2525, 0.0
          %v2527 = vadd.f32 %v2521, %v2526
          %s2528 = sld [smem:[#allocation4 + $0x5]]
          %vm2529 = vcmp.ge.f32.partialorder %v680, 0.16666667
          %s2530 = ssub.f32 %s2528, %s2522
          %v2531 = vstv %s2530
          %v2532 = vsel %vm2529, %v2531, 0.0
          %v2533 = vadd.f32 %v2527, %v2532
          %s2534 = sld [smem:[#allocation4 + $0x6]]
          %vm2535 = vcmp.ge.f32.partialorder %v680, 0.2
          %s2536 = ssub.f32 %s2534, %s2528
          %v2537 = vstv %s2536
          %v2538 = vsel %vm2535, %v2537, 0.0
          %v2539 = vadd.f32 %v2533, %v2538
          %s2540 = sld [smem:[#allocation4 + $0x7]]
          %vm2541 = vcmp.ge.f32.partialorder %v680, 0.23333333
          %s2542 = ssub.f32 %s2540, %s2534
          %v2543 = vstv %s2542
          %v2544 = vsel %vm2541, %v2543, 0.0
          %v2545 = vadd.f32 %v2539, %v2544
          %s2546 = sld [smem:[#allocation4 + $0x8]]
          %vm2547 = vcmp.ge.f32.partialorder %v680, 0.26666668
          %s2548 = ssub.f32 %s2546, %s2540
          %v2549 = vstv %s2548
          %v2550 = vsel %vm2547, %v2549, 0.0
          %v2551 = vadd.f32 %v2545, %v2550
          %s2552 = sld [smem:[#allocation4 + $0x9]]
          %vm2553 = vcmp.ge.f32.partialorder %v680, 0.3
          %s2554 = ssub.f32 %s2552, %s2546
          %v2555 = vstv %s2554
          %v2556 = vsel %vm2553, %v2555, 0.0
          %v2557 = vadd.f32 %v2551, %v2556
          %s2558 = sld [smem:[#allocation4 + $0xa]]
          %vm2559 = vcmp.ge.f32.partialorder %v680, 0.33333334
          %s2560 = ssub.f32 %s2558, %s2552
          %v2561 = vstv %s2560
          %v2562 = vsel %vm2559, %v2561, 0.0
          %v2563 = vadd.f32 %v2557, %v2562
          %s2564 = sld [smem:[#allocation4 + $0xb]]
          %vm2565 = vcmp.ge.f32.partialorder %v680, 0.36666667
          %s2566 = ssub.f32 %s2564, %s2558
          %v2567 = vstv %s2566
          %v2568 = vsel %vm2565, %v2567, 0.0
          %v2569 = vadd.f32 %v2563, %v2568
          %s2570 = sld [smem:[#allocation4 + $0xc]]
          %vm2571 = vcmp.ge.f32.partialorder %v680, 0.4
          %s2572 = ssub.f32 %s2570, %s2564
          %v2573 = vstv %s2572
          %v2574 = vsel %vm2571, %v2573, 0.0
          %v2575 = vadd.f32 %v2569, %v2574
          %s2576 = sld [smem:[#allocation4 + $0xd]]
          %vm2577 = vcmp.ge.f32.partialorder %v680, 0.43333334
          %s2578 = ssub.f32 %s2576, %s2570
          %v2579 = vstv %s2578
          %v2580 = vsel %vm2577, %v2579, 0.0
          %v2581 = vadd.f32 %v2575, %v2580
          %s2582 = sld [smem:[#allocation4 + $0xe]]
          %vm2583 = vcmp.ge.f32.partialorder %v680, 0.46666667
          %s2584 = ssub.f32 %s2582, %s2576
          %v2585 = vstv %s2584
          %v2586 = vsel %vm2583, %v2585, 0.0
          %v2587 = vadd.f32 %v2581, %v2586
          %s2588 = sld [smem:[#allocation4 + $0xf]]
          %vm2589 = vcmp.ge.f32.partialorder %v680, 0.5
          %s2590 = ssub.f32 %s2588, %s2582
          %v2591 = vstv %s2590
          %v2592 = vsel %vm2589, %v2591, 0.0
          %v2593 = vadd.f32 %v2587, %v2592
          %s2594 = sld [smem:[#allocation4 + $0x10]]
          %vm2595 = vcmp.ge.f32.partialorder %v680, 0.53333336
          %s2596 = ssub.f32 %s2594, %s2588
          %v2597 = vstv %s2596
          %v2598 = vsel %vm2595, %v2597, 0.0
          %v2599 = vadd.f32 %v2593, %v2598
          %s2600 = sld [smem:[#allocation4 + $0x11]]
          %vm2601 = vcmp.ge.f32.partialorder %v680, 0.56666666
          %s2602 = ssub.f32 %s2600, %s2594
          %v2603 = vstv %s2602
          %v2604 = vsel %vm2601, %v2603, 0.0
          %v2605 = vadd.f32 %v2599, %v2604
          %s2606 = sld [smem:[#allocation4 + $0x12]]
          %vm2607 = vcmp.ge.f32.partialorder %v680, 0.6
          %s2608 = ssub.f32 %s2606, %s2600
          %v2609 = vstv %s2608
          %v2610 = vsel %vm2607, %v2609, 0.0
          %v2611 = vadd.f32 %v2605, %v2610
          %s2612 = sld [smem:[#allocation4 + $0x13]]
          %vm2613 = vcmp.ge.f32.partialorder %v680, 0.6333333
          %s2614 = ssub.f32 %s2612, %s2606
          %v2615 = vstv %s2614
          %v2616 = vsel %vm2613, %v2615, 0.0
          %v2617 = vadd.f32 %v2611, %v2616
          %s2618 = sld [smem:[#allocation4 + $0x14]]
          %vm2619 = vcmp.ge.f32.partialorder %v680, 0.6666667
          %s2620 = ssub.f32 %s2618, %s2612
          %v2621 = vstv %s2620
          %v2622 = vsel %vm2619, %v2621, 0.0
          %v2623 = vadd.f32 %v2617, %v2622
          %s2624 = sld [smem:[#allocation4 + $0x15]]
          %vm2625 = vcmp.ge.f32.partialorder %v680, 0.7
          %s2626 = ssub.f32 %s2624, %s2618
          %v2627 = vstv %s2626
          %v2628 = vsel %vm2625, %v2627, 0.0
          %v2629 = vadd.f32 %v2623, %v2628
          %s2630 = sld [smem:[#allocation4 + $0x16]]
          %vm2631 = vcmp.ge.f32.partialorder %v680, 0.73333335
          %s2632 = ssub.f32 %s2630, %s2624
          %v2633 = vstv %s2632
          %v2634 = vsel %vm2631, %v2633, 0.0
          %v2635 = vadd.f32 %v2629, %v2634
          %s2636 = sld [smem:[#allocation4 + $0x17]]
          %vm2637 = vcmp.ge.f32.partialorder %v680, 0.76666665
          %s2638 = ssub.f32 %s2636, %s2630
          %v2639 = vstv %s2638
          %v2640 = vsel %vm2637, %v2639, 0.0
          %v2641 = vadd.f32 %v2635, %v2640
          %s2642 = sld [smem:[#allocation4 + $0x18]]
          %vm2643 = vcmp.ge.f32.partialorder %v680, 0.8
          %s2644 = ssub.f32 %s2642, %s2636
          %v2645 = vstv %s2644
          %v2646 = vsel %vm2643, %v2645, 0.0
          %v2647 = vadd.f32 %v2641, %v2646
          %s2648 = sld [smem:[#allocation4 + $0x19]]
          %vm2649 = vcmp.ge.f32.partialorder %v680, 0.8333333
          %s2650 = ssub.f32 %s2648, %s2642
          %v2651 = vstv %s2650
          %v2652 = vsel %vm2649, %v2651, 0.0
          %v2653 = vadd.f32 %v2647, %v2652
          %s2654 = sld [smem:[#allocation4 + $0x1a]]
          %vm2655 = vcmp.ge.f32.partialorder %v680, 0.8666667
          %s2656 = ssub.f32 %s2654, %s2648
          %v2657 = vstv %s2656
          %v2658 = vsel %vm2655, %v2657, 0.0
          %v2659 = vadd.f32 %v2653, %v2658
          %s2660 = sld [smem:[#allocation4 + $0x1b]]
          %vm2661 = vcmp.ge.f32.partialorder %v680, 0.9
          %s2662 = ssub.f32 %s2660, %s2654
          %v2663 = vstv %s2662
          %v2664 = vsel %vm2661, %v2663, 0.0
          %v2665 = vadd.f32 %v2659, %v2664
          %s2666 = sld [smem:[#allocation4 + $0x1c]]
          %vm2667 = vcmp.ge.f32.partialorder %v680, 0.93333334
          %s2668 = ssub.f32 %s2666, %s2660
          %v2669 = vstv %s2668
          %v2670 = vsel %vm2667, %v2669, 0.0
          %v2671 = vadd.f32 %v2665, %v2670
          %s2672 = sld [smem:[#allocation4 + $0x1d]]
          %vm2673 = vcmp.ge.f32.partialorder %v680, 0.96666664
          %s2674 = ssub.f32 %s2672, %s2666
          %v2675 = vstv %s2674
          %v2676 = vsel %vm2673, %v2675, 0.0
          %v2677 = vadd.f32 %v2671, %v2676
          %vm2678 = vcmp.ge.f32.partialorder %v680, 1.000001
          %s2679 = ssub.f32 0.0, %s2672
          %v2680 = vstv %s2679
          %v2681 = vsel %vm2678, %v2680, 0.0
          %v2682 = vadd.f32 %v2677, %v2681
          %s2683 = sld [smem:[#allocation6 + $0x1]]
          %s2684 = smax.f32 %s2683, 1.0
          %v2685 = vstv %s2684
          %v2686 = vrcp.pop %v2685
          %s2687 = vtos %v2686
          %s2688 = smul.f32 0.00390625, %s2687
          %s2689 = sld [smem:[#allocation11]]
          %v2690 = vmul.f32 %v2501, %v2682
          %vm2691 = vcmask 261120
          %v2692 = vsel %vm2691, %v2690, 0.0
          %2693 = vadd.xlane.f32.xlu0 %v2692
          %v2694 = vpop.xlane.xlu0 %2693
          %v2695 = vrot.slane %v2694, 4
          %v2696 = vadd.f32 %v2694, %v2695
          %v2697 = vrot.slane %v2696, 2
          %v2698 = vadd.f32 %v2696, %v2697
          %v2699 = vrot.slane %v2698, 1
          %v2700 = vadd.f32 %v2698, %v2699
          %s2701 = vtos %v2700
          %s2702 = smul.f32 %s2701, %s2688
          %s2703 = scalar_select %p517, %s2702, 0.0
          %s2704 = sadd.f32 %s2689, %s2703
          %s2705 = scalar_lea.smem [#allocation11], 0
          %2706 = sst [smem:[%s2705]] %s2704
          %v2707 = vmul.f32 %v733, %v734
          %s2708 = sld [smem:[#allocation5]]
          %v2709 = vstv %s2708
          %s2710 = sld [smem:[#allocation5 + $0x1]]
          %vm2711 = vcmp.ge.f32.partialorder %v736, 0.1
          %s2712 = ssub.f32 %s2710, %s2708
          %v2713 = vstv %s2712
          %v2714 = vsel %vm2711, %v2713, 0.0
          %v2715 = vadd.f32 %v2709, %v2714
          %s2716 = sld [smem:[#allocation5 + $0x2]]
          %vm2717 = vcmp.ge.f32.partialorder %v736, 0.2
          %s2718 = ssub.f32 %s2716, %s2710
          %v2719 = vstv %s2718
          %v2720 = vsel %vm2717, %v2719, 0.0
          %v2721 = vadd.f32 %v2715, %v2720
          %s2722 = sld [smem:[#allocation5 + $0x3]]
          %vm2723 = vcmp.ge.f32.partialorder %v736, 0.3
          %s2724 = ssub.f32 %s2722, %s2716
          %v2725 = vstv %s2724
          %v2726 = vsel %vm2723, %v2725, 0.0
          %v2727 = vadd.f32 %v2721, %v2726
          %s2728 = sld [smem:[#allocation5 + $0x4]]
          %vm2729 = vcmp.ge.f32.partialorder %v736, 0.4
          %s2730 = ssub.f32 %s2728, %s2722
          %v2731 = vstv %s2730
          %v2732 = vsel %vm2729, %v2731, 0.0
          %v2733 = vadd.f32 %v2727, %v2732
          %s2734 = sld [smem:[#allocation5 + $0x5]]
          %vm2735 = vcmp.ge.f32.partialorder %v736, 0.5
          %s2736 = ssub.f32 %s2734, %s2728
          %v2737 = vstv %s2736
          %v2738 = vsel %vm2735, %v2737, 0.0
          %v2739 = vadd.f32 %v2733, %v2738
          %s2740 = sld [smem:[#allocation5 + $0x6]]
          %vm2741 = vcmp.ge.f32.partialorder %v736, 0.6
          %s2742 = ssub.f32 %s2740, %s2734
          %v2743 = vstv %s2742
          %v2744 = vsel %vm2741, %v2743, 0.0
          %v2745 = vadd.f32 %v2739, %v2744
          %s2746 = sld [smem:[#allocation5 + $0x7]]
          %vm2747 = vcmp.ge.f32.partialorder %v736, 0.7
          %s2748 = ssub.f32 %s2746, %s2740
          %v2749 = vstv %s2748
          %v2750 = vsel %vm2747, %v2749, 0.0
          %v2751 = vadd.f32 %v2745, %v2750
          %s2752 = sld [smem:[#allocation5 + $0x8]]
          %vm2753 = vcmp.ge.f32.partialorder %v736, 0.8
          %s2754 = ssub.f32 %s2752, %s2746
          %v2755 = vstv %s2754
          %v2756 = vsel %vm2753, %v2755, 0.0
          %v2757 = vadd.f32 %v2751, %v2756
          %s2758 = sld [smem:[#allocation5 + $0x9]]
          %vm2759 = vcmp.ge.f32.partialorder %v736, 0.9
          %s2760 = ssub.f32 %s2758, %s2752
          %v2761 = vstv %s2760
          %v2762 = vsel %vm2759, %v2761, 0.0
          %v2763 = vadd.f32 %v2757, %v2762
          %vm2764 = vcmp.ge.f32.partialorder %v736, 1000.0
          %s2765 = ssub.f32 0.0, %s2758
          %v2766 = vstv %s2765
          %v2767 = vsel %vm2764, %v2766, 0.0
          %v2768 = vadd.f32 %v2763, %v2767
          %s2769 = sld [smem:[#allocation6]]
          %p2770 = scmp.gt.f32.partialorder %s2769, 0.0
          %p2771 = pnand %p517, %p2770
          %p2772 = pneg %p2771
          %s2773 = sld [smem:[#allocation6 + $0x2]]
          %s2774 = smax.f32 %s2773, 1.0
          %v2775 = vstv %s2774
          %v2776 = vrcp.pop %v2775
          %s2777 = vtos %v2776
          %s2778 = smul.f32 0.0078125, %s2777
          %s2779 = sld [smem:[#allocation13]]
          %v2780 = vsub.f32 %v2707, 0.02
          %v2781 = vmul.f32 %v2780, %v2768
          %v2782 = vsel %vm592, %v2781, 0.0
          %2783 = vadd.xlane.f32.xlu0 %v2782
          %v2784 = vpop.xlane.xlu0 %2783
          %v2785 = vrot.slane %v2784, 4
          %v2786 = vadd.f32 %v2784, %v2785
          %v2787 = vrot.slane %v2786, 2
          %v2788 = vadd.f32 %v2786, %v2787
          %v2789 = vrot.slane %v2788, 1
          %v2790 = vadd.f32 %v2788, %v2789
          %s2791 = vtos %v2790
          %s2792 = smul.f32 %s2791, %s2778
          %s2793 = scalar_select %p2772, %s2792, 0.0
          %s2794 = sadd.f32 %s2779, %s2793
          %s2795 = scalar_lea.smem [#allocation13], 0
          %2796 = sst [smem:[%s2795]] %s2794
        $region56: #{ghm_loss_forward.1} parent=35 // pred_fallthru
          _
        // Predicated region
        $region57: #{ghm_loss_forward.1} parent=35 // pred_check
          %p2797 = pneg %p174
        $region58: #{ghm_loss_forward.1} parent=35 // pred_check_branch
          %2799 = sbr.rel (%p2797) target = $region60
        $region59: #{ghm_loss_forward.1} parent=35 // pred_region
          %s2801 = ssub.s32 16, 16
          %2802 = vsyncadd [#allocation12], %s2801
          %2805 = dma.smem_to_hbm [#allocation11], 16, %s6, [#allocation12]
        $region60: #{ghm_loss_forward.1} parent=35 // pred_fallthru
          _
        // Predicated region
        $region61: #{ghm_loss_forward.1} parent=35 // pred_check
          %p2806 = pneg %p195
        $region62: #{ghm_loss_forward.1} parent=35 // pred_check_branch
          %2808 = sbr.rel (%p2806) target = $region64
        $region63: #{ghm_loss_forward.1} parent=35 // pred_region
          %s2810 = ssub.s32 16, 16
          %2811 = vsyncadd [#allocation14], %s2810
          %2814 = dma.smem_to_hbm [#allocation13], 16, %s7, [#allocation14]
        $region64: #{ghm_loss_forward.1} parent=35 // pred_fallthru
          _
        // Predicated region
        $region65: #{ghm_loss_forward.1} parent=35 // pred_check
          %p2815 = pneg %p216
        $region66: #{ghm_loss_forward.1} parent=35 // pred_check_branch
          %2817 = sbr.rel (%p2815) target = $region68
        $region67: #{ghm_loss_forward.1} parent=35 // pred_region
          %s2819 = ssub.s32 16, 16
          %2820 = vsyncadd [#allocation14], %s2819
          %2823 = dma.smem_to_hbm [#allocation15], 16, %s8, [#allocation14]
        $region68: #{ghm_loss_forward.1} parent=35 // pred_fallthru
          _
        // Predicated region
        $region69: #{ghm_loss_forward.1} parent=35 // pred_check
          %p2824 = pneg %p237
        $region70: #{ghm_loss_forward.1} parent=35 // pred_check_branch
          %2826 = sbr.rel (%p2824) target = $region72
        $region71: #{ghm_loss_forward.1} parent=35 // pred_region
          %s2828 = ssub.s32 16, 16
          %2829 = vsyncadd [#allocation17], %s2828
          %2832 = dma.smem_to_hbm [#allocation16], 16, %s9, [#allocation17]
        $region72: #{ghm_loss_forward.1} parent=35 // pred_fallthru
          _
        // Predicated region
        $region73: #{ghm_loss_forward.1} parent=35 // pred_check
          %p2833 = pneg %p174
        $region74: #{ghm_loss_forward.1} parent=35 // pred_check_branch
          %2835 = sbr.rel (%p2833) target = $region76
        $region75: #{ghm_loss_forward.1} parent=35 // pred_region
          %2836 = dma.done [#allocation12], 16
        $region76: #{ghm_loss_forward.1} parent=35 // pred_fallthru
          _
        // Predicated region
        $region77: #{ghm_loss_forward.1} parent=35 // pred_check
          %p2837 = pneg %p195
        $region78: #{ghm_loss_forward.1} parent=35 // pred_check_branch
          %2839 = sbr.rel (%p2837) target = $region80
        $region79: #{ghm_loss_forward.1} parent=35 // pred_region
          %2840 = dma.done [#allocation14], 16
        $region80: #{ghm_loss_forward.1} parent=35 // pred_fallthru
          _
        // Predicated region
        $region81: #{ghm_loss_forward.1} parent=35 // pred_check
          %p2841 = pneg %p216
        $region82: #{ghm_loss_forward.1} parent=35 // pred_check_branch
          %2843 = sbr.rel (%p2841) target = $region84
        $region83: #{ghm_loss_forward.1} parent=35 // pred_region
          %2844 = dma.done [#allocation14], 16
        $region84: #{ghm_loss_forward.1} parent=35 // pred_fallthru
          _
        // Predicated region
        $region85: #{ghm_loss_forward.1} parent=35 // pred_check
          %p2845 = pneg %p237
        $region86: #{ghm_loss_forward.1} parent=35 // pred_check_branch
          %2847 = sbr.rel (%p2845) target = $region88
        $region87: #{ghm_loss_forward.1} parent=35 // pred_region
          %2848 = dma.done [#allocation17], 16
        $region88: #{ghm_loss_forward.1} parent=35 // pred_fallthru
          _
        %2849 = sfence
      $region36: #{ghm_loss_forward.1} parent=5 // pred_fallthru
        _
      %p2850 = scmp.le.s32.totalorder 2, %s29
      // Predicated region
      $region89: #{ghm_loss_forward.1} parent=5 // pred_check
        %p2851 = pneg %p2850
      $region90: #{ghm_loss_forward.1} parent=5 // pred_check_branch
        %2853 = sbr.rel (%p2851) target = $region92
      $region91: #{ghm_loss_forward.1} parent=5 // pred_region
        %s2854 = ssub.s32 %s29, 2
      $region92: #{ghm_loss_forward.1} parent=5 // pred_fallthru
        _
    $region6: #{ghm_loss_forward.1} parent=1 // loop_footer
      %s33 = sadd.s32 1, %s29
    $region7: #{ghm_loss_forward.1} parent=1 // loop_footer_branch
      %28 = sbr.rel target = $region3
    $region8: #{ghm_loss_forward.1} parent=1 // loop_exit
      _
    %2855 = vsyncpa [#allocation12], 1
    %s2856 = scalar_lea.sflag [#allocation12], 1
    %2857 = vsyncpa %s2856, 1
    %2858 = vsyncpa [#allocation14], 1
    %2859 = vsyncpa [#allocation17], 1

</llo_original>
